<compile_context>
chip_gen: v7x
topology: tpu7x:2x2x1
jax: 0.10.0
libtpu: 0.0.40
codegen_flags: <defaults>
</compile_context>

<pallas_src>
import jax
import jax.numpy as jnp
from jax.experimental import pallas as pl
from jax.experimental.pallas import tpu as pltpu


def convgru_kernel(x_pad_ref, h_pad_ref, w_x_ref, w_hzr_ref, w_hh_ref,
                   b_zr_ref, b_h_ref, out_ref,
                   patch_x_scr, patch_h_scr, rh_pad_scr):
    # x_pad_ref / h_pad_ref: (B_blk, H+2, W+2, C) f32   zero-padded NHWC x / h
    # w_x_ref:   (9C, 3C) bf16   x-half im2col weights, [z | r | h] on out-chan
    # w_hzr_ref: (9C, 2C) bf16   h-half im2col weights for z, r
    # w_hh_ref:  (9C,  C) bf16   (r*h)-half im2col weights for h_hat
    # b_zr_ref:  (1, 2C) f32, b_h_ref: (1, C) f32
    # out_ref:   (B_blk, C, H*W) f32      channel-major -> lane-dense store
    # patch_x_scr: (B_blk*H*W, 9C) bf16   im2col patches of x
    # patch_h_scr: (B_blk*H*W, 9C) bf16   im2col patches of h, reused for r*h
    # rh_pad_scr:  (B_blk, H+2, W+2, C) f32   zero-padded r*h image
    b_blk, C, HW = out_ref.shape
    H = x_pad_ref.shape[1] - 2
    W = x_pad_ref.shape[2] - 2

    # ---- im2col patches for x and h (bf16 cast at write time) ----------------
    for b in range(b_blk):
        for t in range(9):
            ky, kx = t // 3, t % 3
            xt = x_pad_ref[b, ky:ky + H, kx:kx + W, :].reshape(HW, C)
            ht = h_pad_ref[b, ky:ky + H, kx:kx + W, :].reshape(HW, C)
            patch_x_scr[b * HW:(b + 1) * HW, t * C:(t + 1) * C] = (
                xt.astype(jnp.bfloat16))
            patch_h_scr[b * HW:(b + 1) * HW, t * C:(t + 1) * C] = (
                ht.astype(jnp.bfloat16))

    # ---- x-half contributions to z, r, h_hat: one matmul, N = 3C -------------
    xc = jnp.dot(patch_x_scr[...], w_x_ref[...],
                 preferred_element_type=jnp.float32)                  # (M, 3C)

    # ---- z, r: add the h-half contribution, sigmoid in f32 -------------------
    zr = jax.nn.sigmoid(
        xc[:, :2 * C]
        + jnp.dot(patch_h_scr[...], w_hzr_ref[...],
                  preferred_element_type=jnp.float32)
        + b_zr_ref[...])
    z = zr[:, :C]
    r = zr[:, C:]

    # ---- exact-f32 hidden state (center tap) for r*h and the GRU blend -------
    h_int = jnp.concatenate(
        [h_pad_ref[b, 1:1 + H, 1:1 + W, :].reshape(HW, C)
         for b in range(b_blk)], axis=0)                               # (M, C)
    rh = r * h_int                                                     # f32

    # ---- padded r*h: zero only the 1-pixel border, overwrite the interior ----
    # (re-done every grid step so the kernel stays correct if the "parallel"
    #  batch axis is split across TensorCores)
    zrow = jnp.zeros((1, W + 2, C), jnp.float32)
    zcol = jnp.zeros((H + 2, 1, C), jnp.float32)
    for b in range(b_blk):
        rh_pad_scr[b, 0:1, :, :] = zrow
        rh_pad_scr[b, H + 1:H + 2, :, :] = zrow
        rh_pad_scr[b, :, 0:1, :] = zcol
        rh_pad_scr[b, :, W + 1:W + 2, :] = zcol
        rh_pad_scr[b, 1:1 + H, 1:1 + W, :] = (
            rh[b * HW:(b + 1) * HW, :].reshape(H, W, C))

    # ---- r*h patches overwrite patch_h_scr (its z/r use is already consumed) -
    for b in range(b_blk):
        for t in range(9):
            ky, kx = t // 3, t % 3
            patch_h_scr[b * HW:(b + 1) * HW, t * C:(t + 1) * C] = (
                rh_pad_scr[b, ky:ky + H, kx:kx + W, :]
                .reshape(HW, C).astype(jnp.bfloat16))

    # ---- h_hat and GRU blend (all elementwise in f32) -------------------------
    h_hat = jnp.tanh(
        xc[:, 2 * C:]
        + jnp.dot(patch_h_scr[...], w_hh_ref[...],
                  preferred_element_type=jnp.float32)
        + b_h_ref[...])
    out = (1.0 - z) * h_int + z * h_hat                                # (M, C)

    # ---- lane-dense (C, HW) store (C << 128 in this regime) -------------------
    for b in range(b_blk):
        out_ref[b] = out[b * HW:(b + 1) * HW, :].T


def _pick_batch_block(batch, max_block=8):
    blk = min(batch, max_block)
    while batch % blk:
        blk -= 1
    return blk


def recurrent_refinement(x_nchw, h_nchw, params, batch_block=None):
    """Pallas forward. x_nchw/h_nchw: (B, C, H, W); h_nchw may be None."""
    B, C, H, W = x_nchw.shape
    if h_nchw is None:
        h_nchw = jnp.zeros_like(x_nchw)
    if batch_block is None:
        batch_block = _pick_batch_block(B)

    # Separate padded NHWC inputs: no cat([x, h]) HBM pass.
    # TODO(synk): at production H/W, padding + halo rows belong inside a
    #             row-strip-tiled kernel instead of the wrapper (review #2/#5).
    x = jnp.transpose(x_nchw, (0, 2, 3, 1)).astype(jnp.float32)
    h = jnp.transpose(h_nchw, (0, 2, 3, 1)).astype(jnp.float32)
    x_pad = jnp.pad(x, ((0, 0), (1, 1), (1, 1), (0, 0)))
    h_pad = jnp.pad(h, ((0, 0), (1, 1), (1, 1), (0, 0)))

    wz, bz = params["conv_z"]
    wr, br = params["conv_r"]
    wh, bh = params["conv_h"]

    # HWIO (3,3,2C,C): split the input-channel axis into x-half / h-half and
    # flatten each to im2col layout (9C, C); stack along output channels.
    def split_xh(w):
        return (w[:, :, :C, :].reshape(9 * C, C),
                w[:, :, C:, :].reshape(9 * C, C))

    wz_x, wz_h = split_xh(wz)
    wr_x, wr_h = split_xh(wr)
    wh_x, wh_h = split_xh(wh)

    w_x = jnp.concatenate([wz_x, wr_x, wh_x], axis=1).astype(jnp.bfloat16)  # (9C,3C)
    w_hzr = jnp.concatenate([wz_h, wr_h], axis=1).astype(jnp.bfloat16)      # (9C,2C)
    w_hh = wh_h.astype(jnp.bfloat16)                                        # (9C, C)
    b_zr = jnp.concatenate([bz, br]).reshape(1, 2 * C).astype(jnp.float32)
    b_h = bh.reshape(1, C).astype(jnp.float32)

    K = 9 * C
    grid = (B // batch_block,)

    out = pl.pallas_call(
        convgru_kernel,
        out_shape=jax.ShapeDtypeStruct((B, C, H * W), jnp.float32),
        grid_spec=pltpu.PrefetchScalarGridSpec(
            num_scalar_prefetch=0,
            grid=grid,
            in_specs=[
                pl.BlockSpec((batch_block, H + 2, W + 2, C),
                             lambda g: (g, 0, 0, 0)),
                pl.BlockSpec((batch_block, H + 2, W + 2, C),
                             lambda g: (g, 0, 0, 0)),
                pl.BlockSpec((K, 3 * C), lambda g: (0, 0)),
                pl.BlockSpec((K, 2 * C), lambda g: (0, 0)),
                pl.BlockSpec((K, C), lambda g: (0, 0)),
                pl.BlockSpec((1, 2 * C), lambda g: (0, 0)),
                pl.BlockSpec((1, C), lambda g: (0, 0)),
            ],
            out_specs=pl.BlockSpec((batch_block, C, H * W),
                                   lambda g: (g, 0, 0)),
            scratch_shapes=[
                pltpu.VMEM((batch_block * H * W, K), jnp.bfloat16),      # x patches
                pltpu.VMEM((batch_block * H * W, K), jnp.bfloat16),      # h / r*h patches
                pltpu.VMEM((batch_block, H + 2, W + 2, C), jnp.float32),  # padded r*h
            ],
        ),
        compiler_params=pltpu.CompilerParams(
            dimension_semantics=("parallel",),
            vmem_limit_bytes=32 * 1024 * 1024),
    )(x_pad, h_pad, w_x, w_hzr, w_hh, b_zr, b_h)

    return out.reshape(B, C, H, W)


def reference_forward(x_nchw, h_nchw, params, matmul_dtype=jnp.float32):
    """Pure-JAX reference matching the PyTorch module semantics.

    With matmul_dtype=bf16 it mirrors the kernel's mixed precision: bf16 conv
    operands, f32 accumulation, f32 bias / activations / GRU blend.
    """
    if h_nchw is None:
        h_nchw = jnp.zeros_like(x_nchw)
    x = jnp.transpose(x_nchw, (0, 2, 3, 1)).astype(jnp.float32)
    h = jnp.transpose(h_nchw, (0, 2, 3, 1)).astype(jnp.float32)

    def conv(inp, w, b):
        y = jax.lax.conv_general_dilated(
            inp.astype(matmul_dtype), w.astype(matmul_dtype),
            window_strides=(1, 1), padding="SAME",
            dimension_numbers=("NHWC", "HWIO", "NHWC"),
            preferred_element_type=jnp.float32)
        return y + b

    wz, bz = params["conv_z"]
    wr, br = params["conv_r"]
    wh, bh = params["conv_h"]

    xh = jnp.concatenate([x, h], axis=-1)
    z = jax.nn.sigmoid(conv(xh, wz, bz))
    r = jax.nn.sigmoid(conv(xh, wr, br))
    h_hat = jnp.tanh(conv(jnp.concatenate([x, r * h], axis=-1), wh, bh))
    out = (1.0 - z) * h + z * h_hat
    return jnp.transpose(out, (0, 3, 1, 2))


def init_params(key, channels):
    """Deterministic Conv2d(2C -> C, 3x3) params, stored as HWIO (3,3,2C,C)."""
    fan_in = 2 * channels * 3 * 3
    bound = 1.0 / jnp.sqrt(jnp.float32(fan_in))
    params = {}
    for i, name in enumerate(["conv_z", "conv_r", "conv_h"]):
        kw, kb = jax.random.split(jax.random.fold_in(key, i))
        # torch layout (Cout, Cin, 3, 3) -> HWIO (3, 3, Cin, Cout)
        w_oihw = jax.random.uniform(kw, (channels, 2 * channels, 3, 3),
                                    jnp.float32, -bound, bound)
        w_hwio = jnp.transpose(w_oihw, (2, 3, 1, 0))
        b = jax.random.uniform(kb, (channels,), jnp.float32, -bound, bound)
        params[name] = (w_hwio, b)
    return params


if __name__ == "__main__":
    B, C, H, W = 2, 4, 16, 16

    key = jax.random.PRNGKey(0)
    kx, kh, kp = jax.random.split(key, 3)
    x = jax.random.normal(kx, (B, C, H, W), jnp.float32)
    h = jax.random.normal(kh, (B, C, H, W), jnp.float32)
    params = init_params(kp, C)

    out = jax.block_until_ready(recurrent_refinement(x, h, params))
    assert out.shape == (B, C, H, W)

    # Check vs. a reference that uses the same mixed precision
    # (bf16 matmul operands, f32 accumulation / elementwise).
    ref_mixed = reference_forward(x, h, params, matmul_dtype=jnp.bfloat16)
    err_mixed = float(jnp.max(jnp.abs(out - ref_mixed)))
    assert err_mixed < 1e-2, f"mixed-precision mismatch: max abs err {err_mixed}"

    # Loose check vs. the full-f32 reference (kernel uses bf16 matmul operands).
    ref_f32 = reference_forward(x, h, params, matmul_dtype=jnp.float32)
    err_f32 = float(jnp.max(jnp.abs(out - ref_f32)))
    assert err_f32 < 5e-2, f"f32 reference mismatch: max abs err {err_f32}"

    # Also exercise the h=None path (h initialized to zeros, as in the module).
    out_none = jax.block_until_ready(recurrent_refinement(x, None, params))
    ref_none = reference_forward(x, None, params, matmul_dtype=jnp.bfloat16)
    err_none = float(jnp.max(jnp.abs(out_none - ref_none)))
    assert err_none < 1e-2, f"h=None path mismatch: max abs err {err_none}"

    print("KERNEL_OK")
</pallas_src>

<mosaic_0001>
module attributes {stable_mosaic.version = 11 : i64} {
  func.func @convgru_kernel(%arg0: i32, %arg1: memref<2x18x18x4xf32, #tpu.memory_space<vmem>>, %arg2: memref<2x18x18x4xf32, #tpu.memory_space<vmem>>, %arg3: memref<36x12xbf16, #tpu.memory_space<vmem>>, %arg4: memref<36x8xbf16, #tpu.memory_space<vmem>>, %arg5: memref<36x4xbf16, #tpu.memory_space<vmem>>, %arg6: memref<1x8xf32, #tpu.memory_space<vmem>>, %arg7: memref<1x4xf32, #tpu.memory_space<vmem>>, %arg8: memref<2x4x256xf32, #tpu.memory_space<vmem>>, %arg9: memref<512x36xbf16, #tpu.memory_space<vmem>>, %arg10: memref<512x36xbf16, #tpu.memory_space<vmem>>, %arg11: memref<2x18x18x4xf32, #tpu.memory_space<vmem>>) attributes {dimension_semantics = [#tpu.dimension_semantics<parallel>], iteration_bounds = array<i64: 1>, scalar_prefetch = 0 : i64, scratch_operands = 3 : i64, tpu.core_type = #tpu.core_type<tc>, window_params = [{transform_indices = @transform_0, window_bounds = array<i64: 2, 18, 18, 4>}, {transform_indices = @transform_1, window_bounds = array<i64: 2, 18, 18, 4>}, {pipeline_mode = #tpu.pipeline_mode<synchronous>, transform_indices = @transform_2, window_bounds = array<i64: 36, 12>}, {pipeline_mode = #tpu.pipeline_mode<synchronous>, transform_indices = @transform_3, window_bounds = array<i64: 36, 8>}, {pipeline_mode = #tpu.pipeline_mode<synchronous>, transform_indices = @transform_4, window_bounds = array<i64: 36, 4>}, {pipeline_mode = #tpu.pipeline_mode<synchronous>, transform_indices = @transform_5, window_bounds = array<i64: 1, 8>}, {pipeline_mode = #tpu.pipeline_mode<synchronous>, transform_indices = @transform_6, window_bounds = array<i64: 1, 4>}, {transform_indices = @transform_7, window_bounds = array<i64: 2, 4, 256>}]} {
    %c0 = arith.constant 0 : index
    %c0_0 = arith.constant 0 : index
    %c0_1 = arith.constant 0 : index
    %c0_2 = arith.constant 0 : index
    %0 = vector.load %arg1[%c0, %c0_0, %c0_1, %c0_2] : memref<2x18x18x4xf32, #tpu.memory_space<vmem>>, vector<1x16x16x4xf32>
    %1 = vector.shape_cast %0 : vector<1x16x16x4xf32> to vector<16x16x4xf32>
    %2 = vector.shape_cast %1 : vector<16x16x4xf32> to vector<256x4xf32>
    %c0_3 = arith.constant 0 : index
    %c0_4 = arith.constant 0 : index
    %c0_5 = arith.constant 0 : index
    %c0_6 = arith.constant 0 : index
    %3 = vector.load %arg2[%c0_3, %c0_4, %c0_5, %c0_6] : memref<2x18x18x4xf32, #tpu.memory_space<vmem>>, vector<1x16x16x4xf32>
    %4 = vector.shape_cast %3 : vector<1x16x16x4xf32> to vector<16x16x4xf32>
    %5 = vector.shape_cast %4 : vector<16x16x4xf32> to vector<256x4xf32>
    %6 = arith.truncf %2 : vector<256x4xf32> to vector<256x4xbf16>
    %c0_7 = arith.constant 0 : index
    %c0_8 = arith.constant 0 : index
    %7 = vector.load %arg9[%c0_7, %c0_8] : memref<512x36xbf16, #tpu.memory_space<vmem>>, vector<256x4xbf16>
    tpu.vector_store %arg9[%c0_7, %c0_8], %6 {strides = array<i32>} : memref<512x36xbf16, #tpu.memory_space<vmem>>, vector<256x4xbf16>,
    %8 = arith.truncf %5 : vector<256x4xf32> to vector<256x4xbf16>
    %c0_9 = arith.constant 0 : index
    %c0_10 = arith.constant 0 : index
    %9 = vector.load %arg10[%c0_9, %c0_10] : memref<512x36xbf16, #tpu.memory_space<vmem>>, vector<256x4xbf16>
    tpu.vector_store %arg10[%c0_9, %c0_10], %8 {strides = array<i32>} : memref<512x36xbf16, #tpu.memory_space<vmem>>, vector<256x4xbf16>,
    %c0_11 = arith.constant 0 : index
    %c0_12 = arith.constant 0 : index
    %c1 = arith.constant 1 : index
    %c0_13 = arith.constant 0 : index
    %10 = vector.load %arg1[%c0_11, %c0_12, %c1, %c0_13] : memref<2x18x18x4xf32, #tpu.memory_space<vmem>>, vector<1x16x16x4xf32>
    %11 = vector.shape_cast %10 : vector<1x16x16x4xf32> to vector<16x16x4xf32>
    %12 = vector.shape_cast %11 : vector<16x16x4xf32> to vector<256x4xf32>
    %c0_14 = arith.constant 0 : index
    %c0_15 = arith.constant 0 : index
    %c1_16 = arith.constant 1 : index
    %c0_17 = arith.constant 0 : index
    %13 = vector.load %arg2[%c0_14, %c0_15, %c1_16, %c0_17] : memref<2x18x18x4xf32, #tpu.memory_space<vmem>>, vector<1x16x16x4xf32>
    %14 = vector.shape_cast %13 : vector<1x16x16x4xf32> to vector<16x16x4xf32>
    %15 = vector.shape_cast %14 : vector<16x16x4xf32> to vector<256x4xf32>
    %16 = arith.truncf %12 : vector<256x4xf32> to vector<256x4xbf16>
    %c0_18 = arith.constant 0 : index
    %c4 = arith.constant 4 : index
    %17 = vector.load %arg9[%c0_18, %c4] : memref<512x36xbf16, #tpu.memory_space<vmem>>, vector<256x4xbf16>
    tpu.vector_store %arg9[%c0_18, %c4], %16 {strides = array<i32>} : memref<512x36xbf16, #tpu.memory_space<vmem>>, vector<256x4xbf16>,
    %18 = arith.truncf %15 : vector<256x4xf32> to vector<256x4xbf16>
    %c0_19 = arith.constant 0 : index
    %c4_20 = arith.constant 4 : index
    %19 = vector.load %arg10[%c0_19, %c4_20] : memref<512x36xbf16, #tpu.memory_space<vmem>>, vector<256x4xbf16>
    tpu.vector_store %arg10[%c0_19, %c4_20], %18 {strides = array<i32>} : memref<512x36xbf16, #tpu.memory_space<vmem>>, vector<256x4xbf16>,
    %c0_21 = arith.constant 0 : index
    %c0_22 = arith.constant 0 : index
    %c2 = arith.constant 2 : index
    %c0_23 = arith.constant 0 : index
    %20 = vector.load %arg1[%c0_21, %c0_22, %c2, %c0_23] : memref<2x18x18x4xf32, #tpu.memory_space<vmem>>, vector<1x16x16x4xf32>
    %21 = vector.shape_cast %20 : vector<1x16x16x4xf32> to vector<16x16x4xf32>
    %22 = vector.shape_cast %21 : vector<16x16x4xf32> to vector<256x4xf32>
    %c0_24 = arith.constant 0 : index
    %c0_25 = arith.constant 0 : index
    %c2_26 = arith.constant 2 : index
    %c0_27 = arith.constant 0 : index
    %23 = vector.load %arg2[%c0_24, %c0_25, %c2_26, %c0_27] : memref<2x18x18x4xf32, #tpu.memory_space<vmem>>, vector<1x16x16x4xf32>
    %24 = vector.shape_cast %23 : vector<1x16x16x4xf32> to vector<16x16x4xf32>
    %25 = vector.shape_cast %24 : vector<16x16x4xf32> to vector<256x4xf32>
    %26 = arith.truncf %22 : vector<256x4xf32> to vector<256x4xbf16>
    %c0_28 = arith.constant 0 : index
    %c8 = arith.constant 8 : index
    %27 = vector.load %arg9[%c0_28, %c8] : memref<512x36xbf16, #tpu.memory_space<vmem>>, vector<256x4xbf16>
    tpu.vector_store %arg9[%c0_28, %c8], %26 {strides = array<i32>} : memref<512x36xbf16, #tpu.memory_space<vmem>>, vector<256x4xbf16>,
    %28 = arith.truncf %25 : vector<256x4xf32> to vector<256x4xbf16>
    %c0_29 = arith.constant 0 : index
    %c8_30 = arith.constant 8 : index
    %29 = vector.load %arg10[%c0_29, %c8_30] : memref<512x36xbf16, #tpu.memory_space<vmem>>, vector<256x4xbf16>
    tpu.vector_store %arg10[%c0_29, %c8_30], %28 {strides = array<i32>} : memref<512x36xbf16, #tpu.memory_space<vmem>>, vector<256x4xbf16>,
    %c0_31 = arith.constant 0 : index
    %c1_32 = arith.constant 1 : index
    %c0_33 = arith.constant 0 : index
    %c0_34 = arith.constant 0 : index
    %30 = vector.load %arg1[%c0_31, %c1_32, %c0_33, %c0_34] : memref<2x18x18x4xf32, #tpu.memory_space<vmem>>, vector<1x16x16x4xf32>
    %31 = vector.shape_cast %30 : vector<1x16x16x4xf32> to vector<16x16x4xf32>
    %32 = vector.shape_cast %31 : vector<16x16x4xf32> to vector<256x4xf32>
    %c0_35 = arith.constant 0 : index
    %c1_36 = arith.constant 1 : index
    %c0_37 = arith.constant 0 : index
    %c0_38 = arith.constant 0 : index
    %33 = vector.load %arg2[%c0_35, %c1_36, %c0_37, %c0_38] : memref<2x18x18x4xf32, #tpu.memory_space<vmem>>, vector<1x16x16x4xf32>
    %34 = vector.shape_cast %33 : vector<1x16x16x4xf32> to vector<16x16x4xf32>
    %35 = vector.shape_cast %34 : vector<16x16x4xf32> to vector<256x4xf32>
    %36 = arith.truncf %32 : vector<256x4xf32> to vector<256x4xbf16>
    %c0_39 = arith.constant 0 : index
    %c12 = arith.constant 12 : index
    %37 = vector.load %arg9[%c0_39, %c12] : memref<512x36xbf16, #tpu.memory_space<vmem>>, vector<256x4xbf16>
    tpu.vector_store %arg9[%c0_39, %c12], %36 {strides = array<i32>} : memref<512x36xbf16, #tpu.memory_space<vmem>>, vector<256x4xbf16>,
    %38 = arith.truncf %35 : vector<256x4xf32> to vector<256x4xbf16>
    %c0_40 = arith.constant 0 : index
    %c12_41 = arith.constant 12 : index
    %39 = vector.load %arg10[%c0_40, %c12_41] : memref<512x36xbf16, #tpu.memory_space<vmem>>, vector<256x4xbf16>
    tpu.vector_store %arg10[%c0_40, %c12_41], %38 {strides = array<i32>} : memref<512x36xbf16, #tpu.memory_space<vmem>>, vector<256x4xbf16>,
    %c0_42 = arith.constant 0 : index
    %c1_43 = arith.constant 1 : index
    %c1_44 = arith.constant 1 : index
    %c0_45 = arith.constant 0 : index
    %40 = vector.load %arg1[%c0_42, %c1_43, %c1_44, %c0_45] : memref<2x18x18x4xf32, #tpu.memory_space<vmem>>, vector<1x16x16x4xf32>
    %41 = vector.shape_cast %40 : vector<1x16x16x4xf32> to vector<16x16x4xf32>
    %42 = vector.shape_cast %41 : vector<16x16x4xf32> to vector<256x4xf32>
    %c0_46 = arith.constant 0 : index
    %c1_47 = arith.constant 1 : index
    %c1_48 = arith.constant 1 : index
    %c0_49 = arith.constant 0 : index
    %43 = vector.load %arg2[%c0_46, %c1_47, %c1_48, %c0_49] : memref<2x18x18x4xf32, #tpu.memory_space<vmem>>, vector<1x16x16x4xf32>
    %44 = vector.shape_cast %43 : vector<1x16x16x4xf32> to vector<16x16x4xf32>
    %45 = vector.shape_cast %44 : vector<16x16x4xf32> to vector<256x4xf32>
    %46 = arith.truncf %42 : vector<256x4xf32> to vector<256x4xbf16>
    %c0_50 = arith.constant 0 : index
    %c16 = arith.constant 16 : index
    %47 = vector.load %arg9[%c0_50, %c16] : memref<512x36xbf16, #tpu.memory_space<vmem>>, vector<256x4xbf16>
    tpu.vector_store %arg9[%c0_50, %c16], %46 {strides = array<i32>} : memref<512x36xbf16, #tpu.memory_space<vmem>>, vector<256x4xbf16>,
    %48 = arith.truncf %45 : vector<256x4xf32> to vector<256x4xbf16>
    %c0_51 = arith.constant 0 : index
    %c16_52 = arith.constant 16 : index
    %49 = vector.load %arg10[%c0_51, %c16_52] : memref<512x36xbf16, #tpu.memory_space<vmem>>, vector<256x4xbf16>
    tpu.vector_store %arg10[%c0_51, %c16_52], %48 {strides = array<i32>} : memref<512x36xbf16, #tpu.memory_space<vmem>>, vector<256x4xbf16>,
    %c0_53 = arith.constant 0 : index
    %c1_54 = arith.constant 1 : index
    %c2_55 = arith.constant 2 : index
    %c0_56 = arith.constant 0 : index
    %50 = vector.load %arg1[%c0_53, %c1_54, %c2_55, %c0_56] : memref<2x18x18x4xf32, #tpu.memory_space<vmem>>, vector<1x16x16x4xf32>
    %51 = vector.shape_cast %50 : vector<1x16x16x4xf32> to vector<16x16x4xf32>
    %52 = vector.shape_cast %51 : vector<16x16x4xf32> to vector<256x4xf32>
    %c0_57 = arith.constant 0 : index
    %c1_58 = arith.constant 1 : index
    %c2_59 = arith.constant 2 : index
    %c0_60 = arith.constant 0 : index
    %53 = vector.load %arg2[%c0_57, %c1_58, %c2_59, %c0_60] : memref<2x18x18x4xf32, #tpu.memory_space<vmem>>, vector<1x16x16x4xf32>
    %54 = vector.shape_cast %53 : vector<1x16x16x4xf32> to vector<16x16x4xf32>
    %55 = vector.shape_cast %54 : vector<16x16x4xf32> to vector<256x4xf32>
    %56 = arith.truncf %52 : vector<256x4xf32> to vector<256x4xbf16>
    %c0_61 = arith.constant 0 : index
    %c20 = arith.constant 20 : index
    %57 = vector.load %arg9[%c0_61, %c20] : memref<512x36xbf16, #tpu.memory_space<vmem>>, vector<256x4xbf16>
    tpu.vector_store %arg9[%c0_61, %c20], %56 {strides = array<i32>} : memref<512x36xbf16, #tpu.memory_space<vmem>>, vector<256x4xbf16>,
    %58 = arith.truncf %55 : vector<256x4xf32> to vector<256x4xbf16>
    %c0_62 = arith.constant 0 : index
    %c20_63 = arith.constant 20 : index
    %59 = vector.load %arg10[%c0_62, %c20_63] : memref<512x36xbf16, #tpu.memory_space<vmem>>, vector<256x4xbf16>
    tpu.vector_store %arg10[%c0_62, %c20_63], %58 {strides = array<i32>} : memref<512x36xbf16, #tpu.memory_space<vmem>>, vector<256x4xbf16>,
    %c0_64 = arith.constant 0 : index
    %c2_65 = arith.constant 2 : index
    %c0_66 = arith.constant 0 : index
    %c0_67 = arith.constant 0 : index
    %60 = vector.load %arg1[%c0_64, %c2_65, %c0_66, %c0_67] : memref<2x18x18x4xf32, #tpu.memory_space<vmem>>, vector<1x16x16x4xf32>
    %61 = vector.shape_cast %60 : vector<1x16x16x4xf32> to vector<16x16x4xf32>
    %62 = vector.shape_cast %61 : vector<16x16x4xf32> to vector<256x4xf32>
    %c0_68 = arith.constant 0 : index
    %c2_69 = arith.constant 2 : index
    %c0_70 = arith.constant 0 : index
    %c0_71 = arith.constant 0 : index
    %63 = vector.load %arg2[%c0_68, %c2_69, %c0_70, %c0_71] : memref<2x18x18x4xf32, #tpu.memory_space<vmem>>, vector<1x16x16x4xf32>
    %64 = vector.shape_cast %63 : vector<1x16x16x4xf32> to vector<16x16x4xf32>
    %65 = vector.shape_cast %64 : vector<16x16x4xf32> to vector<256x4xf32>
    %66 = arith.truncf %62 : vector<256x4xf32> to vector<256x4xbf16>
    %c0_72 = arith.constant 0 : index
    %c24 = arith.constant 24 : index
    %67 = vector.load %arg9[%c0_72, %c24] : memref<512x36xbf16, #tpu.memory_space<vmem>>, vector<256x4xbf16>
    tpu.vector_store %arg9[%c0_72, %c24], %66 {strides = array<i32>} : memref<512x36xbf16, #tpu.memory_space<vmem>>, vector<256x4xbf16>,
    %68 = arith.truncf %65 : vector<256x4xf32> to vector<256x4xbf16>
    %c0_73 = arith.constant 0 : index
    %c24_74 = arith.constant 24 : index
    %69 = vector.load %arg10[%c0_73, %c24_74] : memref<512x36xbf16, #tpu.memory_space<vmem>>, vector<256x4xbf16>
    tpu.vector_store %arg10[%c0_73, %c24_74], %68 {strides = array<i32>} : memref<512x36xbf16, #tpu.memory_space<vmem>>, vector<256x4xbf16>,
    %c0_75 = arith.constant 0 : index
    %c2_76 = arith.constant 2 : index
    %c1_77 = arith.constant 1 : index
    %c0_78 = arith.constant 0 : index
    %70 = vector.load %arg1[%c0_75, %c2_76, %c1_77, %c0_78] : memref<2x18x18x4xf32, #tpu.memory_space<vmem>>, vector<1x16x16x4xf32>
    %71 = vector.shape_cast %70 : vector<1x16x16x4xf32> to vector<16x16x4xf32>
    %72 = vector.shape_cast %71 : vector<16x16x4xf32> to vector<256x4xf32>
    %c0_79 = arith.constant 0 : index
    %c2_80 = arith.constant 2 : index
    %c1_81 = arith.constant 1 : index
    %c0_82 = arith.constant 0 : index
    %73 = vector.load %arg2[%c0_79, %c2_80, %c1_81, %c0_82] : memref<2x18x18x4xf32, #tpu.memory_space<vmem>>, vector<1x16x16x4xf32>
    %74 = vector.shape_cast %73 : vector<1x16x16x4xf32> to vector<16x16x4xf32>
    %75 = vector.shape_cast %74 : vector<16x16x4xf32> to vector<256x4xf32>
    %76 = arith.truncf %72 : vector<256x4xf32> to vector<256x4xbf16>
    %c0_83 = arith.constant 0 : index
    %c28 = arith.constant 28 : index
    %77 = vector.load %arg9[%c0_83, %c28] : memref<512x36xbf16, #tpu.memory_space<vmem>>, vector<256x4xbf16>
    tpu.vector_store %arg9[%c0_83, %c28], %76 {strides = array<i32>} : memref<512x36xbf16, #tpu.memory_space<vmem>>, vector<256x4xbf16>,
    %78 = arith.truncf %75 : vector<256x4xf32> to vector<256x4xbf16>
    %c0_84 = arith.constant 0 : index
    %c28_85 = arith.constant 28 : index
    %79 = vector.load %arg10[%c0_84, %c28_85] : memref<512x36xbf16, #tpu.memory_space<vmem>>, vector<256x4xbf16>
    tpu.vector_store %arg10[%c0_84, %c28_85], %78 {strides = array<i32>} : memref<512x36xbf16, #tpu.memory_space<vmem>>, vector<256x4xbf16>,
    %c0_86 = arith.constant 0 : index
    %c2_87 = arith.constant 2 : index
    %c2_88 = arith.constant 2 : index
    %c0_89 = arith.constant 0 : index
    %80 = vector.load %arg1[%c0_86, %c2_87, %c2_88, %c0_89] : memref<2x18x18x4xf32, #tpu.memory_space<vmem>>, vector<1x16x16x4xf32>
    %81 = vector.shape_cast %80 : vector<1x16x16x4xf32> to vector<16x16x4xf32>
    %82 = vector.shape_cast %81 : vector<16x16x4xf32> to vector<256x4xf32>
    %c0_90 = arith.constant 0 : index
    %c2_91 = arith.constant 2 : index
    %c2_92 = arith.constant 2 : index
    %c0_93 = arith.constant 0 : index
    %83 = vector.load %arg2[%c0_90, %c2_91, %c2_92, %c0_93] : memref<2x18x18x4xf32, #tpu.memory_space<vmem>>, vector<1x16x16x4xf32>
    %84 = vector.shape_cast %83 : vector<1x16x16x4xf32> to vector<16x16x4xf32>
    %85 = vector.shape_cast %84 : vector<16x16x4xf32> to vector<256x4xf32>
    %86 = arith.truncf %82 : vector<256x4xf32> to vector<256x4xbf16>
    %c0_94 = arith.constant 0 : index
    %c32 = arith.constant 32 : index
    %87 = vector.load %arg9[%c0_94, %c32] : memref<512x36xbf16, #tpu.memory_space<vmem>>, vector<256x4xbf16>
    tpu.vector_store %arg9[%c0_94, %c32], %86 {strides = array<i32>} : memref<512x36xbf16, #tpu.memory_space<vmem>>, vector<256x4xbf16>,
    %88 = arith.truncf %85 : vector<256x4xf32> to vector<256x4xbf16>
    %c0_95 = arith.constant 0 : index
    %c32_96 = arith.constant 32 : index
    %89 = vector.load %arg10[%c0_95, %c32_96] : memref<512x36xbf16, #tpu.memory_space<vmem>>, vector<256x4xbf16>
    tpu.vector_store %arg10[%c0_95, %c32_96], %88 {strides = array<i32>} : memref<512x36xbf16, #tpu.memory_space<vmem>>, vector<256x4xbf16>,
    %c1_97 = arith.constant 1 : index
    %c0_98 = arith.constant 0 : index
    %c0_99 = arith.constant 0 : index
    %c0_100 = arith.constant 0 : index
    %90 = vector.load %arg1[%c1_97, %c0_98, %c0_99, %c0_100] : memref<2x18x18x4xf32, #tpu.memory_space<vmem>>, vector<1x16x16x4xf32>
    %91 = vector.shape_cast %90 : vector<1x16x16x4xf32> to vector<16x16x4xf32>
    %92 = vector.shape_cast %91 : vector<16x16x4xf32> to vector<256x4xf32>
    %c1_101 = arith.constant 1 : index
    %c0_102 = arith.constant 0 : index
    %c0_103 = arith.constant 0 : index
    %c0_104 = arith.constant 0 : index
    %93 = vector.load %arg2[%c1_101, %c0_102, %c0_103, %c0_104] : memref<2x18x18x4xf32, #tpu.memory_space<vmem>>, vector<1x16x16x4xf32>
    %94 = vector.shape_cast %93 : vector<1x16x16x4xf32> to vector<16x16x4xf32>
    %95 = vector.shape_cast %94 : vector<16x16x4xf32> to vector<256x4xf32>
    %96 = arith.truncf %92 : vector<256x4xf32> to vector<256x4xbf16>
    %c256 = arith.constant 256 : index
    %c0_105 = arith.constant 0 : index
    %97 = vector.load %arg9[%c256, %c0_105] : memref<512x36xbf16, #tpu.memory_space<vmem>>, vector<256x4xbf16>
    tpu.vector_store %arg9[%c256, %c0_105], %96 {strides = array<i32>} : memref<512x36xbf16, #tpu.memory_space<vmem>>, vector<256x4xbf16>,
    %98 = arith.truncf %95 : vector<256x4xf32> to vector<256x4xbf16>
    %c256_106 = arith.constant 256 : index
    %c0_107 = arith.constant 0 : index
    %99 = vector.load %arg10[%c256_106, %c0_107] : memref<512x36xbf16, #tpu.memory_space<vmem>>, vector<256x4xbf16>
    tpu.vector_store %arg10[%c256_106, %c0_107], %98 {strides = array<i32>} : memref<512x36xbf16, #tpu.memory_space<vmem>>, vector<256x4xbf16>,
    %c1_108 = arith.constant 1 : index
    %c0_109 = arith.constant 0 : index
    %c1_110 = arith.constant 1 : index
    %c0_111 = arith.constant 0 : index
    %100 = vector.load %arg1[%c1_108, %c0_109, %c1_110, %c0_111] : memref<2x18x18x4xf32, #tpu.memory_space<vmem>>, vector<1x16x16x4xf32>
    %101 = vector.shape_cast %100 : vector<1x16x16x4xf32> to vector<16x16x4xf32>
    %102 = vector.shape_cast %101 : vector<16x16x4xf32> to vector<256x4xf32>
    %c1_112 = arith.constant 1 : index
    %c0_113 = arith.constant 0 : index
    %c1_114 = arith.constant 1 : index
    %c0_115 = arith.constant 0 : index
    %103 = vector.load %arg2[%c1_112, %c0_113, %c1_114, %c0_115] : memref<2x18x18x4xf32, #tpu.memory_space<vmem>>, vector<1x16x16x4xf32>
    %104 = vector.shape_cast %103 : vector<1x16x16x4xf32> to vector<16x16x4xf32>
    %105 = vector.shape_cast %104 : vector<16x16x4xf32> to vector<256x4xf32>
    %106 = arith.truncf %102 : vector<256x4xf32> to vector<256x4xbf16>
    %c256_116 = arith.constant 256 : index
    %c4_117 = arith.constant 4 : index
    %107 = vector.load %arg9[%c256_116, %c4_117] : memref<512x36xbf16, #tpu.memory_space<vmem>>, vector<256x4xbf16>
    tpu.vector_store %arg9[%c256_116, %c4_117], %106 {strides = array<i32>} : memref<512x36xbf16, #tpu.memory_space<vmem>>, vector<256x4xbf16>,
    %108 = arith.truncf %105 : vector<256x4xf32> to vector<256x4xbf16>
    %c256_118 = arith.constant 256 : index
    %c4_119 = arith.constant 4 : index
    %109 = vector.load %arg10[%c256_118, %c4_119] : memref<512x36xbf16, #tpu.memory_space<vmem>>, vector<256x4xbf16>
    tpu.vector_store %arg10[%c256_118, %c4_119], %108 {strides = array<i32>} : memref<512x36xbf16, #tpu.memory_space<vmem>>, vector<256x4xbf16>,
    %c1_120 = arith.constant 1 : index
    %c0_121 = arith.constant 0 : index
    %c2_122 = arith.constant 2 : index
    %c0_123 = arith.constant 0 : index
    %110 = vector.load %arg1[%c1_120, %c0_121, %c2_122, %c0_123] : memref<2x18x18x4xf32, #tpu.memory_space<vmem>>, vector<1x16x16x4xf32>
    %111 = vector.shape_cast %110 : vector<1x16x16x4xf32> to vector<16x16x4xf32>
    %112 = vector.shape_cast %111 : vector<16x16x4xf32> to vector<256x4xf32>
    %c1_124 = arith.constant 1 : index
    %c0_125 = arith.constant 0 : index
    %c2_126 = arith.constant 2 : index
    %c0_127 = arith.constant 0 : index
    %113 = vector.load %arg2[%c1_124, %c0_125, %c2_126, %c0_127] : memref<2x18x18x4xf32, #tpu.memory_space<vmem>>, vector<1x16x16x4xf32>
    %114 = vector.shape_cast %113 : vector<1x16x16x4xf32> to vector<16x16x4xf32>
    %115 = vector.shape_cast %114 : vector<16x16x4xf32> to vector<256x4xf32>
    %116 = arith.truncf %112 : vector<256x4xf32> to vector<256x4xbf16>
    %c256_128 = arith.constant 256 : index
    %c8_129 = arith.constant 8 : index
    %117 = vector.load %arg9[%c256_128, %c8_129] : memref<512x36xbf16, #tpu.memory_space<vmem>>, vector<256x4xbf16>
    tpu.vector_store %arg9[%c256_128, %c8_129], %116 {strides = array<i32>} : memref<512x36xbf16, #tpu.memory_space<vmem>>, vector<256x4xbf16>,
    %118 = arith.truncf %115 : vector<256x4xf32> to vector<256x4xbf16>
    %c256_130 = arith.constant 256 : index
    %c8_131 = arith.constant 8 : index
    %119 = vector.load %arg10[%c256_130, %c8_131] : memref<512x36xbf16, #tpu.memory_space<vmem>>, vector<256x4xbf16>
    tpu.vector_store %arg10[%c256_130, %c8_131], %118 {strides = array<i32>} : memref<512x36xbf16, #tpu.memory_space<vmem>>, vector<256x4xbf16>,
    %c1_132 = arith.constant 1 : index
    %c1_133 = arith.constant 1 : index
    %c0_134 = arith.constant 0 : index
    %c0_135 = arith.constant 0 : index
    %120 = vector.load %arg1[%c1_132, %c1_133, %c0_134, %c0_135] : memref<2x18x18x4xf32, #tpu.memory_space<vmem>>, vector<1x16x16x4xf32>
    %121 = vector.shape_cast %120 : vector<1x16x16x4xf32> to vector<16x16x4xf32>
    %122 = vector.shape_cast %121 : vector<16x16x4xf32> to vector<256x4xf32>
    %c1_136 = arith.constant 1 : index
    %c1_137 = arith.constant 1 : index
    %c0_138 = arith.constant 0 : index
    %c0_139 = arith.constant 0 : index
    %123 = vector.load %arg2[%c1_136, %c1_137, %c0_138, %c0_139] : memref<2x18x18x4xf32, #tpu.memory_space<vmem>>, vector<1x16x16x4xf32>
    %124 = vector.shape_cast %123 : vector<1x16x16x4xf32> to vector<16x16x4xf32>
    %125 = vector.shape_cast %124 : vector<16x16x4xf32> to vector<256x4xf32>
    %126 = arith.truncf %122 : vector<256x4xf32> to vector<256x4xbf16>
    %c256_140 = arith.constant 256 : index
    %c12_141 = arith.constant 12 : index
    %127 = vector.load %arg9[%c256_140, %c12_141] : memref<512x36xbf16, #tpu.memory_space<vmem>>, vector<256x4xbf16>
    tpu.vector_store %arg9[%c256_140, %c12_141], %126 {strides = array<i32>} : memref<512x36xbf16, #tpu.memory_space<vmem>>, vector<256x4xbf16>,
    %128 = arith.truncf %125 : vector<256x4xf32> to vector<256x4xbf16>
    %c256_142 = arith.constant 256 : index
    %c12_143 = arith.constant 12 : index
    %129 = vector.load %arg10[%c256_142, %c12_143] : memref<512x36xbf16, #tpu.memory_space<vmem>>, vector<256x4xbf16>
    tpu.vector_store %arg10[%c256_142, %c12_143], %128 {strides = array<i32>} : memref<512x36xbf16, #tpu.memory_space<vmem>>, vector<256x4xbf16>,
    %c1_144 = arith.constant 1 : index
    %c1_145 = arith.constant 1 : index
    %c1_146 = arith.constant 1 : index
    %c0_147 = arith.constant 0 : index
    %130 = vector.load %arg1[%c1_144, %c1_145, %c1_146, %c0_147] : memref<2x18x18x4xf32, #tpu.memory_space<vmem>>, vector<1x16x16x4xf32>
    %131 = vector.shape_cast %130 : vector<1x16x16x4xf32> to vector<16x16x4xf32>
    %132 = vector.shape_cast %131 : vector<16x16x4xf32> to vector<256x4xf32>
    %c1_148 = arith.constant 1 : index
    %c1_149 = arith.constant 1 : index
    %c1_150 = arith.constant 1 : index
    %c0_151 = arith.constant 0 : index
    %133 = vector.load %arg2[%c1_148, %c1_149, %c1_150, %c0_151] : memref<2x18x18x4xf32, #tpu.memory_space<vmem>>, vector<1x16x16x4xf32>
    %134 = vector.shape_cast %133 : vector<1x16x16x4xf32> to vector<16x16x4xf32>
    %135 = vector.shape_cast %134 : vector<16x16x4xf32> to vector<256x4xf32>
    %136 = arith.truncf %132 : vector<256x4xf32> to vector<256x4xbf16>
    %c256_152 = arith.constant 256 : index
    %c16_153 = arith.constant 16 : index
    %137 = vector.load %arg9[%c256_152, %c16_153] : memref<512x36xbf16, #tpu.memory_space<vmem>>, vector<256x4xbf16>
    tpu.vector_store %arg9[%c256_152, %c16_153], %136 {strides = array<i32>} : memref<512x36xbf16, #tpu.memory_space<vmem>>, vector<256x4xbf16>,
    %138 = arith.truncf %135 : vector<256x4xf32> to vector<256x4xbf16>
    %c256_154 = arith.constant 256 : index
    %c16_155 = arith.constant 16 : index
    %139 = vector.load %arg10[%c256_154, %c16_155] : memref<512x36xbf16, #tpu.memory_space<vmem>>, vector<256x4xbf16>
    tpu.vector_store %arg10[%c256_154, %c16_155], %138 {strides = array<i32>} : memref<512x36xbf16, #tpu.memory_space<vmem>>, vector<256x4xbf16>,
    %c1_156 = arith.constant 1 : index
    %c1_157 = arith.constant 1 : index
    %c2_158 = arith.constant 2 : index
    %c0_159 = arith.constant 0 : index
    %140 = vector.load %arg1[%c1_156, %c1_157, %c2_158, %c0_159] : memref<2x18x18x4xf32, #tpu.memory_space<vmem>>, vector<1x16x16x4xf32>
    %141 = vector.shape_cast %140 : vector<1x16x16x4xf32> to vector<16x16x4xf32>
    %142 = vector.shape_cast %141 : vector<16x16x4xf32> to vector<256x4xf32>
    %c1_160 = arith.constant 1 : index
    %c1_161 = arith.constant 1 : index
    %c2_162 = arith.constant 2 : index
    %c0_163 = arith.constant 0 : index
    %143 = vector.load %arg2[%c1_160, %c1_161, %c2_162, %c0_163] : memref<2x18x18x4xf32, #tpu.memory_space<vmem>>, vector<1x16x16x4xf32>
    %144 = vector.shape_cast %143 : vector<1x16x16x4xf32> to vector<16x16x4xf32>
    %145 = vector.shape_cast %144 : vector<16x16x4xf32> to vector<256x4xf32>
    %146 = arith.truncf %142 : vector<256x4xf32> to vector<256x4xbf16>
    %c256_164 = arith.constant 256 : index
    %c20_165 = arith.constant 20 : index
    %147 = vector.load %arg9[%c256_164, %c20_165] : memref<512x36xbf16, #tpu.memory_space<vmem>>, vector<256x4xbf16>
    tpu.vector_store %arg9[%c256_164, %c20_165], %146 {strides = array<i32>} : memref<512x36xbf16, #tpu.memory_space<vmem>>, vector<256x4xbf16>,
    %148 = arith.truncf %145 : vector<256x4xf32> to vector<256x4xbf16>
    %c256_166 = arith.constant 256 : index
    %c20_167 = arith.constant 20 : index
    %149 = vector.load %arg10[%c256_166, %c20_167] : memref<512x36xbf16, #tpu.memory_space<vmem>>, vector<256x4xbf16>
    tpu.vector_store %arg10[%c256_166, %c20_167], %148 {strides = array<i32>} : memref<512x36xbf16, #tpu.memory_space<vmem>>, vector<256x4xbf16>,
    %c1_168 = arith.constant 1 : index
    %c2_169 = arith.constant 2 : index
    %c0_170 = arith.constant 0 : index
    %c0_171 = arith.constant 0 : index
    %150 = vector.load %arg1[%c1_168, %c2_169, %c0_170, %c0_171] : memref<2x18x18x4xf32, #tpu.memory_space<vmem>>, vector<1x16x16x4xf32>
    %151 = vector.shape_cast %150 : vector<1x16x16x4xf32> to vector<16x16x4xf32>
    %152 = vector.shape_cast %151 : vector<16x16x4xf32> to vector<256x4xf32>
    %c1_172 = arith.constant 1 : index
    %c2_173 = arith.constant 2 : index
    %c0_174 = arith.constant 0 : index
    %c0_175 = arith.constant 0 : index
    %153 = vector.load %arg2[%c1_172, %c2_173, %c0_174, %c0_175] : memref<2x18x18x4xf32, #tpu.memory_space<vmem>>, vector<1x16x16x4xf32>
    %154 = vector.shape_cast %153 : vector<1x16x16x4xf32> to vector<16x16x4xf32>
    %155 = vector.shape_cast %154 : vector<16x16x4xf32> to vector<256x4xf32>
    %156 = arith.truncf %152 : vector<256x4xf32> to vector<256x4xbf16>
    %c256_176 = arith.constant 256 : index
    %c24_177 = arith.constant 24 : index
    %157 = vector.load %arg9[%c256_176, %c24_177] : memref<512x36xbf16, #tpu.memory_space<vmem>>, vector<256x4xbf16>
    tpu.vector_store %arg9[%c256_176, %c24_177], %156 {strides = array<i32>} : memref<512x36xbf16, #tpu.memory_space<vmem>>, vector<256x4xbf16>,
    %158 = arith.truncf %155 : vector<256x4xf32> to vector<256x4xbf16>
    %c256_178 = arith.constant 256 : index
    %c24_179 = arith.constant 24 : index
    %159 = vector.load %arg10[%c256_178, %c24_179] : memref<512x36xbf16, #tpu.memory_space<vmem>>, vector<256x4xbf16>
    tpu.vector_store %arg10[%c256_178, %c24_179], %158 {strides = array<i32>} : memref<512x36xbf16, #tpu.memory_space<vmem>>, vector<256x4xbf16>,
    %c1_180 = arith.constant 1 : index
    %c2_181 = arith.constant 2 : index
    %c1_182 = arith.constant 1 : index
    %c0_183 = arith.constant 0 : index
    %160 = vector.load %arg1[%c1_180, %c2_181, %c1_182, %c0_183] : memref<2x18x18x4xf32, #tpu.memory_space<vmem>>, vector<1x16x16x4xf32>
    %161 = vector.shape_cast %160 : vector<1x16x16x4xf32> to vector<16x16x4xf32>
    %162 = vector.shape_cast %161 : vector<16x16x4xf32> to vector<256x4xf32>
    %c1_184 = arith.constant 1 : index
    %c2_185 = arith.constant 2 : index
    %c1_186 = arith.constant 1 : index
    %c0_187 = arith.constant 0 : index
    %163 = vector.load %arg2[%c1_184, %c2_185, %c1_186, %c0_187] : memref<2x18x18x4xf32, #tpu.memory_space<vmem>>, vector<1x16x16x4xf32>
    %164 = vector.shape_cast %163 : vector<1x16x16x4xf32> to vector<16x16x4xf32>
    %165 = vector.shape_cast %164 : vector<16x16x4xf32> to vector<256x4xf32>
    %166 = arith.truncf %162 : vector<256x4xf32> to vector<256x4xbf16>
    %c256_188 = arith.constant 256 : index
    %c28_189 = arith.constant 28 : index
    %167 = vector.load %arg9[%c256_188, %c28_189] : memref<512x36xbf16, #tpu.memory_space<vmem>>, vector<256x4xbf16>
    tpu.vector_store %arg9[%c256_188, %c28_189], %166 {strides = array<i32>} : memref<512x36xbf16, #tpu.memory_space<vmem>>, vector<256x4xbf16>,
    %168 = arith.truncf %165 : vector<256x4xf32> to vector<256x4xbf16>
    %c256_190 = arith.constant 256 : index
    %c28_191 = arith.constant 28 : index
    %169 = vector.load %arg10[%c256_190, %c28_191] : memref<512x36xbf16, #tpu.memory_space<vmem>>, vector<256x4xbf16>
    tpu.vector_store %arg10[%c256_190, %c28_191], %168 {strides = array<i32>} : memref<512x36xbf16, #tpu.memory_space<vmem>>, vector<256x4xbf16>,
    %c1_192 = arith.constant 1 : index
    %c2_193 = arith.constant 2 : index
    %c2_194 = arith.constant 2 : index
    %c0_195 = arith.constant 0 : index
    %170 = vector.load %arg1[%c1_192, %c2_193, %c2_194, %c0_195] : memref<2x18x18x4xf32, #tpu.memory_space<vmem>>, vector<1x16x16x4xf32>
    %171 = vector.shape_cast %170 : vector<1x16x16x4xf32> to vector<16x16x4xf32>
    %172 = vector.shape_cast %171 : vector<16x16x4xf32> to vector<256x4xf32>
    %c1_196 = arith.constant 1 : index
    %c2_197 = arith.constant 2 : index
    %c2_198 = arith.constant 2 : index
    %c0_199 = arith.constant 0 : index
    %173 = vector.load %arg2[%c1_196, %c2_197, %c2_198, %c0_199] : memref<2x18x18x4xf32, #tpu.memory_space<vmem>>, vector<1x16x16x4xf32>
    %174 = vector.shape_cast %173 : vector<1x16x16x4xf32> to vector<16x16x4xf32>
    %175 = vector.shape_cast %174 : vector<16x16x4xf32> to vector<256x4xf32>
    %176 = arith.truncf %172 : vector<256x4xf32> to vector<256x4xbf16>
    %c256_200 = arith.constant 256 : index
    %c32_201 = arith.constant 32 : index
    %177 = vector.load %arg9[%c256_200, %c32_201] : memref<512x36xbf16, #tpu.memory_space<vmem>>, vector<256x4xbf16>
    tpu.vector_store %arg9[%c256_200, %c32_201], %176 {strides = array<i32>} : memref<512x36xbf16, #tpu.memory_space<vmem>>, vector<256x4xbf16>,
    %178 = arith.truncf %175 : vector<256x4xf32> to vector<256x4xbf16>
    %c256_202 = arith.constant 256 : index
    %c32_203 = arith.constant 32 : index
    %179 = vector.load %arg10[%c256_202, %c32_203] : memref<512x36xbf16, #tpu.memory_space<vmem>>, vector<256x4xbf16>
    tpu.vector_store %arg10[%c256_202, %c32_203], %178 {strides = array<i32>} : memref<512x36xbf16, #tpu.memory_space<vmem>>, vector<256x4xbf16>,
    %c0_204 = arith.constant 0 : index
    %c0_205 = arith.constant 0 : index
    %180 = vector.load %arg9[%c0_204, %c0_205] : memref<512x36xbf16, #tpu.memory_space<vmem>>, vector<512x36xbf16>
    %c0_206 = arith.constant 0 : index
    %c0_207 = arith.constant 0 : index
    %181 = vector.load %arg3[%c0_206, %c0_207] : memref<36x12xbf16, #tpu.memory_space<vmem>>, vector<36x12xbf16>
    %cst = arith.constant dense<0.000000e+00> : vector<512x12xf32>
    %182 = tpu.matmul %180, %181, %cst {dimension_numbers = #tpu.dot_dimension_numbers<[1], [0], [0], [1], [0, 0, 1, 1], [], []>} : vector<512x36xbf16>, vector<36x12xbf16>, vector<512x12xf32> -> vector<512x12xf32>
    %183 = vector.extract_strided_slice %182 {offsets = [0, 0], sizes = [512, 8], strides = [1, 1]} : vector<512x12xf32> to vector<512x8xf32>
    %c0_208 = arith.constant 0 : index
    %c0_209 = arith.constant 0 : index
    %184 = vector.load %arg10[%c0_208, %c0_209] : memref<512x36xbf16, #tpu.memory_space<vmem>>, vector<512x36xbf16>
    %c0_210 = arith.constant 0 : index
    %c0_211 = arith.constant 0 : index
    %185 = vector.load %arg4[%c0_210, %c0_211] : memref<36x8xbf16, #tpu.memory_space<vmem>>, vector<36x8xbf16>
    %cst_212 = arith.constant dense<0.000000e+00> : vector<512x8xf32>
    %186 = tpu.matmul %184, %185, %cst_212 {dimension_numbers = #tpu.dot_dimension_numbers<[1], [0], [0], [1], [0, 0, 1, 1], [], []>} : vector<512x36xbf16>, vector<36x8xbf16>, vector<512x8xf32> -> vector<512x8xf32>
    %187 = arith.addf %183, %186 : vector<512x8xf32>
    %c0_213 = arith.constant 0 : index
    %c0_214 = arith.constant 0 : index
    %188 = vector.load %arg6[%c0_213, %c0_214] : memref<1x8xf32, #tpu.memory_space<vmem>>, vector<1x8xf32>
    %189 = vector.broadcast %188 : vector<1x8xf32> to vector<512x8xf32>
    %190 = arith.addf %187, %189 : vector<512x8xf32>
    %191 = arith.negf %190 : vector<512x8xf32>
    %192 = math.exp %191 : vector<512x8xf32>
    %cst_215 = arith.constant 1.000000e+00 : f32
    %193 = vector.broadcast %cst_215 : f32 to vector<512x8xf32>
    %194 = arith.addf %193, %192 : vector<512x8xf32>
    %195 = arith.divf %193, %194 : vector<512x8xf32>
    %196 = vector.extract_strided_slice %195 {offsets = [0, 0], sizes = [512, 4], strides = [1, 1]} : vector<512x8xf32> to vector<512x4xf32>
    %197 = vector.extract_strided_slice %195 {offsets = [0, 4], sizes = [512, 4], strides = [1, 1]} : vector<512x8xf32> to vector<512x4xf32>
    %c0_216 = arith.constant 0 : index
    %c1_217 = arith.constant 1 : index
    %c1_218 = arith.constant 1 : index
    %c0_219 = arith.constant 0 : index
    %198 = vector.load %arg2[%c0_216, %c1_217, %c1_218, %c0_219] : memref<2x18x18x4xf32, #tpu.memory_space<vmem>>, vector<1x16x16x4xf32>
    %199 = vector.shape_cast %198 : vector<1x16x16x4xf32> to vector<16x16x4xf32>
    %200 = vector.shape_cast %199 : vector<16x16x4xf32> to vector<256x4xf32>
    %c1_220 = arith.constant 1 : index
    %c1_221 = arith.constant 1 : index
    %c1_222 = arith.constant 1 : index
    %c0_223 = arith.constant 0 : index
    %201 = vector.load %arg2[%c1_220, %c1_221, %c1_222, %c0_223] : memref<2x18x18x4xf32, #tpu.memory_space<vmem>>, vector<1x16x16x4xf32>
    %202 = vector.shape_cast %201 : vector<1x16x16x4xf32> to vector<16x16x4xf32>
    %203 = vector.shape_cast %202 : vector<16x16x4xf32> to vector<256x4xf32>
    %204 = tpu.concatenate %200, %203 in 0 : vector<256x4xf32>, vector<256x4xf32> -> vector<512x4xf32>
    %205 = arith.mulf %197, %204 : vector<512x4xf32>
    %cst_224 = arith.constant 0.000000e+00 : f32
    %206 = vector.broadcast %cst_224 : f32 to vector<1x18x4xf32>
    %cst_225 = arith.constant 0.000000e+00 : f32
    %207 = vector.broadcast %cst_225 : f32 to vector<18x1x4xf32>
    %c0_226 = arith.constant 0 : index
    %c0_227 = arith.constant 0 : index
    %c0_228 = arith.constant 0 : index
    %c0_229 = arith.constant 0 : index
    %208 = vector.load %arg11[%c0_226, %c0_227, %c0_228, %c0_229] : memref<2x18x18x4xf32, #tpu.memory_space<vmem>>, vector<1x1x18x4xf32>
    %209 = vector.shape_cast %208 : vector<1x1x18x4xf32> to vector<1x18x4xf32>
    %210 = vector.shape_cast %206 : vector<1x18x4xf32> to vector<1x1x18x4xf32>
    tpu.vector_store %arg11[%c0_226, %c0_227, %c0_228, %c0_229], %210 {strides = array<i32>} : memref<2x18x18x4xf32, #tpu.memory_space<vmem>>, vector<1x1x18x4xf32>,
    %c0_230 = arith.constant 0 : index
    %c17 = arith.constant 17 : index
    %c0_231 = arith.constant 0 : index
    %c0_232 = arith.constant 0 : index
    %211 = vector.load %arg11[%c0_230, %c17, %c0_231, %c0_232] : memref<2x18x18x4xf32, #tpu.memory_space<vmem>>, vector<1x1x18x4xf32>
    %212 = vector.shape_cast %211 : vector<1x1x18x4xf32> to vector<1x18x4xf32>
    %213 = vector.shape_cast %206 : vector<1x18x4xf32> to vector<1x1x18x4xf32>
    tpu.vector_store %arg11[%c0_230, %c17, %c0_231, %c0_232], %213 {strides = array<i32>} : memref<2x18x18x4xf32, #tpu.memory_space<vmem>>, vector<1x1x18x4xf32>,
    %c0_233 = arith.constant 0 : index
    %c0_234 = arith.constant 0 : index
    %c0_235 = arith.constant 0 : index
    %c0_236 = arith.constant 0 : index
    %214 = vector.load %arg11[%c0_233, %c0_234, %c0_235, %c0_236] : memref<2x18x18x4xf32, #tpu.memory_space<vmem>>, vector<1x18x1x4xf32>
    %215 = vector.shape_cast %214 : vector<1x18x1x4xf32> to vector<18x1x4xf32>
    %216 = vector.shape_cast %207 : vector<18x1x4xf32> to vector<1x18x1x4xf32>
    tpu.vector_store %arg11[%c0_233, %c0_234, %c0_235, %c0_236], %216 {strides = array<i32>} : memref<2x18x18x4xf32, #tpu.memory_space<vmem>>, vector<1x18x1x4xf32>,
    %c0_237 = arith.constant 0 : index
    %c0_238 = arith.constant 0 : index
    %c17_239 = arith.constant 17 : index
    %c0_240 = arith.constant 0 : index
    %217 = vector.load %arg11[%c0_237, %c0_238, %c17_239, %c0_240] : memref<2x18x18x4xf32, #tpu.memory_space<vmem>>, vector<1x18x1x4xf32>
    %218 = vector.shape_cast %217 : vector<1x18x1x4xf32> to vector<18x1x4xf32>
    %219 = vector.shape_cast %207 : vector<18x1x4xf32> to vector<1x18x1x4xf32>
    tpu.vector_store %arg11[%c0_237, %c0_238, %c17_239, %c0_240], %219 {strides = array<i32>} : memref<2x18x18x4xf32, #tpu.memory_space<vmem>>, vector<1x18x1x4xf32>,
    %220 = vector.extract_strided_slice %205 {offsets = [0, 0], sizes = [256, 4], strides = [1, 1]} : vector<512x4xf32> to vector<256x4xf32>
    %221 = vector.shape_cast %220 : vector<256x4xf32> to vector<16x16x4xf32>
    %c0_241 = arith.constant 0 : index
    %c1_242 = arith.constant 1 : index
    %c1_243 = arith.constant 1 : index
    %c0_244 = arith.constant 0 : index
    %222 = vector.load %arg11[%c0_241, %c1_242, %c1_243, %c0_244] : memref<2x18x18x4xf32, #tpu.memory_space<vmem>>, vector<1x16x16x4xf32>
    %223 = vector.shape_cast %222 : vector<1x16x16x4xf32> to vector<16x16x4xf32>
    %224 = vector.shape_cast %221 : vector<16x16x4xf32> to vector<1x16x16x4xf32>
    tpu.vector_store %arg11[%c0_241, %c1_242, %c1_243, %c0_244], %224 {strides = array<i32>} : memref<2x18x18x4xf32, #tpu.memory_space<vmem>>, vector<1x16x16x4xf32>,
    %c1_245 = arith.constant 1 : index
    %c0_246 = arith.constant 0 : index
    %c0_247 = arith.constant 0 : index
    %c0_248 = arith.constant 0 : index
    %225 = vector.load %arg11[%c1_245, %c0_246, %c0_247, %c0_248] : memref<2x18x18x4xf32, #tpu.memory_space<vmem>>, vector<1x1x18x4xf32>
    %226 = vector.shape_cast %225 : vector<1x1x18x4xf32> to vector<1x18x4xf32>
    %227 = vector.shape_cast %206 : vector<1x18x4xf32> to vector<1x1x18x4xf32>
    tpu.vector_store %arg11[%c1_245, %c0_246, %c0_247, %c0_248], %227 {strides = array<i32>} : memref<2x18x18x4xf32, #tpu.memory_space<vmem>>, vector<1x1x18x4xf32>,
    %c1_249 = arith.constant 1 : index
    %c17_250 = arith.constant 17 : index
    %c0_251 = arith.constant 0 : index
    %c0_252 = arith.constant 0 : index
    %228 = vector.load %arg11[%c1_249, %c17_250, %c0_251, %c0_252] : memref<2x18x18x4xf32, #tpu.memory_space<vmem>>, vector<1x1x18x4xf32>
    %229 = vector.shape_cast %228 : vector<1x1x18x4xf32> to vector<1x18x4xf32>
    %230 = vector.shape_cast %206 : vector<1x18x4xf32> to vector<1x1x18x4xf32>
    tpu.vector_store %arg11[%c1_249, %c17_250, %c0_251, %c0_252], %230 {strides = array<i32>} : memref<2x18x18x4xf32, #tpu.memory_space<vmem>>, vector<1x1x18x4xf32>,
    %c1_253 = arith.constant 1 : index
    %c0_254 = arith.constant 0 : index
    %c0_255 = arith.constant 0 : index
    %c0_256 = arith.constant 0 : index
    %231 = vector.load %arg11[%c1_253, %c0_254, %c0_255, %c0_256] : memref<2x18x18x4xf32, #tpu.memory_space<vmem>>, vector<1x18x1x4xf32>
    %232 = vector.shape_cast %231 : vector<1x18x1x4xf32> to vector<18x1x4xf32>
    %233 = vector.shape_cast %207 : vector<18x1x4xf32> to vector<1x18x1x4xf32>
    tpu.vector_store %arg11[%c1_253, %c0_254, %c0_255, %c0_256], %233 {strides = array<i32>} : memref<2x18x18x4xf32, #tpu.memory_space<vmem>>, vector<1x18x1x4xf32>,
    %c1_257 = arith.constant 1 : index
    %c0_258 = arith.constant 0 : index
    %c17_259 = arith.constant 17 : index
    %c0_260 = arith.constant 0 : index
    %234 = vector.load %arg11[%c1_257, %c0_258, %c17_259, %c0_260] : memref<2x18x18x4xf32, #tpu.memory_space<vmem>>, vector<1x18x1x4xf32>
    %235 = vector.shape_cast %234 : vector<1x18x1x4xf32> to vector<18x1x4xf32>
    %236 = vector.shape_cast %207 : vector<18x1x4xf32> to vector<1x18x1x4xf32>
    tpu.vector_store %arg11[%c1_257, %c0_258, %c17_259, %c0_260], %236 {strides = array<i32>} : memref<2x18x18x4xf32, #tpu.memory_space<vmem>>, vector<1x18x1x4xf32>,
    %237 = vector.extract_strided_slice %205 {offsets = [256, 0], sizes = [256, 4], strides = [1, 1]} : vector<512x4xf32> to vector<256x4xf32>
    %238 = vector.shape_cast %237 : vector<256x4xf32> to vector<16x16x4xf32>
    %c1_261 = arith.constant 1 : index
    %c1_262 = arith.constant 1 : index
    %c1_263 = arith.constant 1 : index
    %c0_264 = arith.constant 0 : index
    %239 = vector.load %arg11[%c1_261, %c1_262, %c1_263, %c0_264] : memref<2x18x18x4xf32, #tpu.memory_space<vmem>>, vector<1x16x16x4xf32>
    %240 = vector.shape_cast %239 : vector<1x16x16x4xf32> to vector<16x16x4xf32>
    %241 = vector.shape_cast %238 : vector<16x16x4xf32> to vector<1x16x16x4xf32>
    tpu.vector_store %arg11[%c1_261, %c1_262, %c1_263, %c0_264], %241 {strides = array<i32>} : memref<2x18x18x4xf32, #tpu.memory_space<vmem>>, vector<1x16x16x4xf32>,
    %c0_265 = arith.constant 0 : index
    %c0_266 = arith.constant 0 : index
    %c0_267 = arith.constant 0 : index
    %c0_268 = arith.constant 0 : index
    %242 = vector.load %arg11[%c0_265, %c0_266, %c0_267, %c0_268] : memref<2x18x18x4xf32, #tpu.memory_space<vmem>>, vector<1x16x16x4xf32>
    %243 = vector.shape_cast %242 : vector<1x16x16x4xf32> to vector<16x16x4xf32>
    %244 = vector.shape_cast %243 : vector<16x16x4xf32> to vector<256x4xf32>
    %245 = arith.truncf %244 : vector<256x4xf32> to vector<256x4xbf16>
    %c0_269 = arith.constant 0 : index
    %c0_270 = arith.constant 0 : index
    %246 = vector.load %arg10[%c0_269, %c0_270] : memref<512x36xbf16, #tpu.memory_space<vmem>>, vector<256x4xbf16>
    tpu.vector_store %arg10[%c0_269, %c0_270], %245 {strides = array<i32>} : memref<512x36xbf16, #tpu.memory_space<vmem>>, vector<256x4xbf16>,
    %c0_271 = arith.constant 0 : index
    %c0_272 = arith.constant 0 : index
    %c1_273 = arith.constant 1 : index
    %c0_274 = arith.constant 0 : index
    %247 = vector.load %arg11[%c0_271, %c0_272, %c1_273, %c0_274] : memref<2x18x18x4xf32, #tpu.memory_space<vmem>>, vector<1x16x16x4xf32>
    %248 = vector.shape_cast %247 : vector<1x16x16x4xf32> to vector<16x16x4xf32>
    %249 = vector.shape_cast %248 : vector<16x16x4xf32> to vector<256x4xf32>
    %250 = arith.truncf %249 : vector<256x4xf32> to vector<256x4xbf16>
    %c0_275 = arith.constant 0 : index
    %c4_276 = arith.constant 4 : index
    %251 = vector.load %arg10[%c0_275, %c4_276] : memref<512x36xbf16, #tpu.memory_space<vmem>>, vector<256x4xbf16>
    tpu.vector_store %arg10[%c0_275, %c4_276], %250 {strides = array<i32>} : memref<512x36xbf16, #tpu.memory_space<vmem>>, vector<256x4xbf16>,
    %c0_277 = arith.constant 0 : index
    %c0_278 = arith.constant 0 : index
    %c2_279 = arith.constant 2 : index
    %c0_280 = arith.constant 0 : index
    %252 = vector.load %arg11[%c0_277, %c0_278, %c2_279, %c0_280] : memref<2x18x18x4xf32, #tpu.memory_space<vmem>>, vector<1x16x16x4xf32>
    %253 = vector.shape_cast %252 : vector<1x16x16x4xf32> to vector<16x16x4xf32>
    %254 = vector.shape_cast %253 : vector<16x16x4xf32> to vector<256x4xf32>
    %255 = arith.truncf %254 : vector<256x4xf32> to vector<256x4xbf16>
    %c0_281 = arith.constant 0 : index
    %c8_282 = arith.constant 8 : index
    %256 = vector.load %arg10[%c0_281, %c8_282] : memref<512x36xbf16, #tpu.memory_space<vmem>>, vector<256x4xbf16>
    tpu.vector_store %arg10[%c0_281, %c8_282], %255 {strides = array<i32>} : memref<512x36xbf16, #tpu.memory_space<vmem>>, vector<256x4xbf16>,
    %c0_283 = arith.constant 0 : index
    %c1_284 = arith.constant 1 : index
    %c0_285 = arith.constant 0 : index
    %c0_286 = arith.constant 0 : index
    %257 = vector.load %arg11[%c0_283, %c1_284, %c0_285, %c0_286] : memref<2x18x18x4xf32, #tpu.memory_space<vmem>>, vector<1x16x16x4xf32>
    %258 = vector.shape_cast %257 : vector<1x16x16x4xf32> to vector<16x16x4xf32>
    %259 = vector.shape_cast %258 : vector<16x16x4xf32> to vector<256x4xf32>
    %260 = arith.truncf %259 : vector<256x4xf32> to vector<256x4xbf16>
    %c0_287 = arith.constant 0 : index
    %c12_288 = arith.constant 12 : index
    %261 = vector.load %arg10[%c0_287, %c12_288] : memref<512x36xbf16, #tpu.memory_space<vmem>>, vector<256x4xbf16>
    tpu.vector_store %arg10[%c0_287, %c12_288], %260 {strides = array<i32>} : memref<512x36xbf16, #tpu.memory_space<vmem>>, vector<256x4xbf16>,
    %c0_289 = arith.constant 0 : index
    %c1_290 = arith.constant 1 : index
    %c1_291 = arith.constant 1 : index
    %c0_292 = arith.constant 0 : index
    %262 = vector.load %arg11[%c0_289, %c1_290, %c1_291, %c0_292] : memref<2x18x18x4xf32, #tpu.memory_space<vmem>>, vector<1x16x16x4xf32>
    %263 = vector.shape_cast %262 : vector<1x16x16x4xf32> to vector<16x16x4xf32>
    %264 = vector.shape_cast %263 : vector<16x16x4xf32> to vector<256x4xf32>
    %265 = arith.truncf %264 : vector<256x4xf32> to vector<256x4xbf16>
    %c0_293 = arith.constant 0 : index
    %c16_294 = arith.constant 16 : index
    %266 = vector.load %arg10[%c0_293, %c16_294] : memref<512x36xbf16, #tpu.memory_space<vmem>>, vector<256x4xbf16>
    tpu.vector_store %arg10[%c0_293, %c16_294], %265 {strides = array<i32>} : memref<512x36xbf16, #tpu.memory_space<vmem>>, vector<256x4xbf16>,
    %c0_295 = arith.constant 0 : index
    %c1_296 = arith.constant 1 : index
    %c2_297 = arith.constant 2 : index
    %c0_298 = arith.constant 0 : index
    %267 = vector.load %arg11[%c0_295, %c1_296, %c2_297, %c0_298] : memref<2x18x18x4xf32, #tpu.memory_space<vmem>>, vector<1x16x16x4xf32>
    %268 = vector.shape_cast %267 : vector<1x16x16x4xf32> to vector<16x16x4xf32>
    %269 = vector.shape_cast %268 : vector<16x16x4xf32> to vector<256x4xf32>
    %270 = arith.truncf %269 : vector<256x4xf32> to vector<256x4xbf16>
    %c0_299 = arith.constant 0 : index
    %c20_300 = arith.constant 20 : index
    %271 = vector.load %arg10[%c0_299, %c20_300] : memref<512x36xbf16, #tpu.memory_space<vmem>>, vector<256x4xbf16>
    tpu.vector_store %arg10[%c0_299, %c20_300], %270 {strides = array<i32>} : memref<512x36xbf16, #tpu.memory_space<vmem>>, vector<256x4xbf16>,
    %c0_301 = arith.constant 0 : index
    %c2_302 = arith.constant 2 : index
    %c0_303 = arith.constant 0 : index
    %c0_304 = arith.constant 0 : index
    %272 = vector.load %arg11[%c0_301, %c2_302, %c0_303, %c0_304] : memref<2x18x18x4xf32, #tpu.memory_space<vmem>>, vector<1x16x16x4xf32>
    %273 = vector.shape_cast %272 : vector<1x16x16x4xf32> to vector<16x16x4xf32>
    %274 = vector.shape_cast %273 : vector<16x16x4xf32> to vector<256x4xf32>
    %275 = arith.truncf %274 : vector<256x4xf32> to vector<256x4xbf16>
    %c0_305 = arith.constant 0 : index
    %c24_306 = arith.constant 24 : index
    %276 = vector.load %arg10[%c0_305, %c24_306] : memref<512x36xbf16, #tpu.memory_space<vmem>>, vector<256x4xbf16>
    tpu.vector_store %arg10[%c0_305, %c24_306], %275 {strides = array<i32>} : memref<512x36xbf16, #tpu.memory_space<vmem>>, vector<256x4xbf16>,
    %c0_307 = arith.constant 0 : index
    %c2_308 = arith.constant 2 : index
    %c1_309 = arith.constant 1 : index
    %c0_310 = arith.constant 0 : index
    %277 = vector.load %arg11[%c0_307, %c2_308, %c1_309, %c0_310] : memref<2x18x18x4xf32, #tpu.memory_space<vmem>>, vector<1x16x16x4xf32>
    %278 = vector.shape_cast %277 : vector<1x16x16x4xf32> to vector<16x16x4xf32>
    %279 = vector.shape_cast %278 : vector<16x16x4xf32> to vector<256x4xf32>
    %280 = arith.truncf %279 : vector<256x4xf32> to vector<256x4xbf16>
    %c0_311 = arith.constant 0 : index
    %c28_312 = arith.constant 28 : index
    %281 = vector.load %arg10[%c0_311, %c28_312] : memref<512x36xbf16, #tpu.memory_space<vmem>>, vector<256x4xbf16>
    tpu.vector_store %arg10[%c0_311, %c28_312], %280 {strides = array<i32>} : memref<512x36xbf16, #tpu.memory_space<vmem>>, vector<256x4xbf16>,
    %c0_313 = arith.constant 0 : index
    %c2_314 = arith.constant 2 : index
    %c2_315 = arith.constant 2 : index
    %c0_316 = arith.constant 0 : index
    %282 = vector.load %arg11[%c0_313, %c2_314, %c2_315, %c0_316] : memref<2x18x18x4xf32, #tpu.memory_space<vmem>>, vector<1x16x16x4xf32>
    %283 = vector.shape_cast %282 : vector<1x16x16x4xf32> to vector<16x16x4xf32>
    %284 = vector.shape_cast %283 : vector<16x16x4xf32> to vector<256x4xf32>
    %285 = arith.truncf %284 : vector<256x4xf32> to vector<256x4xbf16>
    %c0_317 = arith.constant 0 : index
    %c32_318 = arith.constant 32 : index
    %286 = vector.load %arg10[%c0_317, %c32_318] : memref<512x36xbf16, #tpu.memory_space<vmem>>, vector<256x4xbf16>
    tpu.vector_store %arg10[%c0_317, %c32_318], %285 {strides = array<i32>} : memref<512x36xbf16, #tpu.memory_space<vmem>>, vector<256x4xbf16>,
    %c1_319 = arith.constant 1 : index
    %c0_320 = arith.constant 0 : index
    %c0_321 = arith.constant 0 : index
    %c0_322 = arith.constant 0 : index
    %287 = vector.load %arg11[%c1_319, %c0_320, %c0_321, %c0_322] : memref<2x18x18x4xf32, #tpu.memory_space<vmem>>, vector<1x16x16x4xf32>
    %288 = vector.shape_cast %287 : vector<1x16x16x4xf32> to vector<16x16x4xf32>
    %289 = vector.shape_cast %288 : vector<16x16x4xf32> to vector<256x4xf32>
    %290 = arith.truncf %289 : vector<256x4xf32> to vector<256x4xbf16>
    %c256_323 = arith.constant 256 : index
    %c0_324 = arith.constant 0 : index
    %291 = vector.load %arg10[%c256_323, %c0_324] : memref<512x36xbf16, #tpu.memory_space<vmem>>, vector<256x4xbf16>
    tpu.vector_store %arg10[%c256_323, %c0_324], %290 {strides = array<i32>} : memref<512x36xbf16, #tpu.memory_space<vmem>>, vector<256x4xbf16>,
    %c1_325 = arith.constant 1 : index
    %c0_326 = arith.constant 0 : index
    %c1_327 = arith.constant 1 : index
    %c0_328 = arith.constant 0 : index
    %292 = vector.load %arg11[%c1_325, %c0_326, %c1_327, %c0_328] : memref<2x18x18x4xf32, #tpu.memory_space<vmem>>, vector<1x16x16x4xf32>
    %293 = vector.shape_cast %292 : vector<1x16x16x4xf32> to vector<16x16x4xf32>
    %294 = vector.shape_cast %293 : vector<16x16x4xf32> to vector<256x4xf32>
    %295 = arith.truncf %294 : vector<256x4xf32> to vector<256x4xbf16>
    %c256_329 = arith.constant 256 : index
    %c4_330 = arith.constant 4 : index
    %296 = vector.load %arg10[%c256_329, %c4_330] : memref<512x36xbf16, #tpu.memory_space<vmem>>, vector<256x4xbf16>
    tpu.vector_store %arg10[%c256_329, %c4_330], %295 {strides = array<i32>} : memref<512x36xbf16, #tpu.memory_space<vmem>>, vector<256x4xbf16>,
    %c1_331 = arith.constant 1 : index
    %c0_332 = arith.constant 0 : index
    %c2_333 = arith.constant 2 : index
    %c0_334 = arith.constant 0 : index
    %297 = vector.load %arg11[%c1_331, %c0_332, %c2_333, %c0_334] : memref<2x18x18x4xf32, #tpu.memory_space<vmem>>, vector<1x16x16x4xf32>
    %298 = vector.shape_cast %297 : vector<1x16x16x4xf32> to vector<16x16x4xf32>
    %299 = vector.shape_cast %298 : vector<16x16x4xf32> to vector<256x4xf32>
    %300 = arith.truncf %299 : vector<256x4xf32> to vector<256x4xbf16>
    %c256_335 = arith.constant 256 : index
    %c8_336 = arith.constant 8 : index
    %301 = vector.load %arg10[%c256_335, %c8_336] : memref<512x36xbf16, #tpu.memory_space<vmem>>, vector<256x4xbf16>
    tpu.vector_store %arg10[%c256_335, %c8_336], %300 {strides = array<i32>} : memref<512x36xbf16, #tpu.memory_space<vmem>>, vector<256x4xbf16>,
    %c1_337 = arith.constant 1 : index
    %c1_338 = arith.constant 1 : index
    %c0_339 = arith.constant 0 : index
    %c0_340 = arith.constant 0 : index
    %302 = vector.load %arg11[%c1_337, %c1_338, %c0_339, %c0_340] : memref<2x18x18x4xf32, #tpu.memory_space<vmem>>, vector<1x16x16x4xf32>
    %303 = vector.shape_cast %302 : vector<1x16x16x4xf32> to vector<16x16x4xf32>
    %304 = vector.shape_cast %303 : vector<16x16x4xf32> to vector<256x4xf32>
    %305 = arith.truncf %304 : vector<256x4xf32> to vector<256x4xbf16>
    %c256_341 = arith.constant 256 : index
    %c12_342 = arith.constant 12 : index
    %306 = vector.load %arg10[%c256_341, %c12_342] : memref<512x36xbf16, #tpu.memory_space<vmem>>, vector<256x4xbf16>
    tpu.vector_store %arg10[%c256_341, %c12_342], %305 {strides = array<i32>} : memref<512x36xbf16, #tpu.memory_space<vmem>>, vector<256x4xbf16>,
    %c1_343 = arith.constant 1 : index
    %c1_344 = arith.constant 1 : index
    %c1_345 = arith.constant 1 : index
    %c0_346 = arith.constant 0 : index
    %307 = vector.load %arg11[%c1_343, %c1_344, %c1_345, %c0_346] : memref<2x18x18x4xf32, #tpu.memory_space<vmem>>, vector<1x16x16x4xf32>
    %308 = vector.shape_cast %307 : vector<1x16x16x4xf32> to vector<16x16x4xf32>
    %309 = vector.shape_cast %308 : vector<16x16x4xf32> to vector<256x4xf32>
    %310 = arith.truncf %309 : vector<256x4xf32> to vector<256x4xbf16>
    %c256_347 = arith.constant 256 : index
    %c16_348 = arith.constant 16 : index
    %311 = vector.load %arg10[%c256_347, %c16_348] : memref<512x36xbf16, #tpu.memory_space<vmem>>, vector<256x4xbf16>
    tpu.vector_store %arg10[%c256_347, %c16_348], %310 {strides = array<i32>} : memref<512x36xbf16, #tpu.memory_space<vmem>>, vector<256x4xbf16>,
    %c1_349 = arith.constant 1 : index
    %c1_350 = arith.constant 1 : index
    %c2_351 = arith.constant 2 : index
    %c0_352 = arith.constant 0 : index
    %312 = vector.load %arg11[%c1_349, %c1_350, %c2_351, %c0_352] : memref<2x18x18x4xf32, #tpu.memory_space<vmem>>, vector<1x16x16x4xf32>
    %313 = vector.shape_cast %312 : vector<1x16x16x4xf32> to vector<16x16x4xf32>
    %314 = vector.shape_cast %313 : vector<16x16x4xf32> to vector<256x4xf32>
    %315 = arith.truncf %314 : vector<256x4xf32> to vector<256x4xbf16>
    %c256_353 = arith.constant 256 : index
    %c20_354 = arith.constant 20 : index
    %316 = vector.load %arg10[%c256_353, %c20_354] : memref<512x36xbf16, #tpu.memory_space<vmem>>, vector<256x4xbf16>
    tpu.vector_store %arg10[%c256_353, %c20_354], %315 {strides = array<i32>} : memref<512x36xbf16, #tpu.memory_space<vmem>>, vector<256x4xbf16>,
    %c1_355 = arith.constant 1 : index
    %c2_356 = arith.constant 2 : index
    %c0_357 = arith.constant 0 : index
    %c0_358 = arith.constant 0 : index
    %317 = vector.load %arg11[%c1_355, %c2_356, %c0_357, %c0_358] : memref<2x18x18x4xf32, #tpu.memory_space<vmem>>, vector<1x16x16x4xf32>
    %318 = vector.shape_cast %317 : vector<1x16x16x4xf32> to vector<16x16x4xf32>
    %319 = vector.shape_cast %318 : vector<16x16x4xf32> to vector<256x4xf32>
    %320 = arith.truncf %319 : vector<256x4xf32> to vector<256x4xbf16>
    %c256_359 = arith.constant 256 : index
    %c24_360 = arith.constant 24 : index
    %321 = vector.load %arg10[%c256_359, %c24_360] : memref<512x36xbf16, #tpu.memory_space<vmem>>, vector<256x4xbf16>
    tpu.vector_store %arg10[%c256_359, %c24_360], %320 {strides = array<i32>} : memref<512x36xbf16, #tpu.memory_space<vmem>>, vector<256x4xbf16>,
    %c1_361 = arith.constant 1 : index
    %c2_362 = arith.constant 2 : index
    %c1_363 = arith.constant 1 : index
    %c0_364 = arith.constant 0 : index
    %322 = vector.load %arg11[%c1_361, %c2_362, %c1_363, %c0_364] : memref<2x18x18x4xf32, #tpu.memory_space<vmem>>, vector<1x16x16x4xf32>
    %323 = vector.shape_cast %322 : vector<1x16x16x4xf32> to vector<16x16x4xf32>
    %324 = vector.shape_cast %323 : vector<16x16x4xf32> to vector<256x4xf32>
    %325 = arith.truncf %324 : vector<256x4xf32> to vector<256x4xbf16>
    %c256_365 = arith.constant 256 : index
    %c28_366 = arith.constant 28 : index
    %326 = vector.load %arg10[%c256_365, %c28_366] : memref<512x36xbf16, #tpu.memory_space<vmem>>, vector<256x4xbf16>
    tpu.vector_store %arg10[%c256_365, %c28_366], %325 {strides = array<i32>} : memref<512x36xbf16, #tpu.memory_space<vmem>>, vector<256x4xbf16>,
    %c1_367 = arith.constant 1 : index
    %c2_368 = arith.constant 2 : index
    %c2_369 = arith.constant 2 : index
    %c0_370 = arith.constant 0 : index
    %327 = vector.load %arg11[%c1_367, %c2_368, %c2_369, %c0_370] : memref<2x18x18x4xf32, #tpu.memory_space<vmem>>, vector<1x16x16x4xf32>
    %328 = vector.shape_cast %327 : vector<1x16x16x4xf32> to vector<16x16x4xf32>
    %329 = vector.shape_cast %328 : vector<16x16x4xf32> to vector<256x4xf32>
    %330 = arith.truncf %329 : vector<256x4xf32> to vector<256x4xbf16>
    %c256_371 = arith.constant 256 : index
    %c32_372 = arith.constant 32 : index
    %331 = vector.load %arg10[%c256_371, %c32_372] : memref<512x36xbf16, #tpu.memory_space<vmem>>, vector<256x4xbf16>
    tpu.vector_store %arg10[%c256_371, %c32_372], %330 {strides = array<i32>} : memref<512x36xbf16, #tpu.memory_space<vmem>>, vector<256x4xbf16>,
    %332 = vector.extract_strided_slice %182 {offsets = [0, 8], sizes = [512, 4], strides = [1, 1]} : vector<512x12xf32> to vector<512x4xf32>
    %c0_373 = arith.constant 0 : index
    %c0_374 = arith.constant 0 : index
    %333 = vector.load %arg10[%c0_373, %c0_374] : memref<512x36xbf16, #tpu.memory_space<vmem>>, vector<512x36xbf16>
    %c0_375 = arith.constant 0 : index
    %c0_376 = arith.constant 0 : index
    %334 = vector.load %arg5[%c0_375, %c0_376] : memref<36x4xbf16, #tpu.memory_space<vmem>>, vector<36x4xbf16>
    %cst_377 = arith.constant dense<0.000000e+00> : vector<512x4xf32>
    %335 = tpu.matmul %333, %334, %cst_377 {dimension_numbers = #tpu.dot_dimension_numbers<[1], [0], [0], [1], [0, 0, 1, 1], [], []>} : vector<512x36xbf16>, vector<36x4xbf16>, vector<512x4xf32> -> vector<512x4xf32>
    %336 = arith.addf %332, %335 : vector<512x4xf32>
    %c0_378 = arith.constant 0 : index
    %c0_379 = arith.constant 0 : index
    %337 = vector.load %arg7[%c0_378, %c0_379] : memref<1x4xf32, #tpu.memory_space<vmem>>, vector<1x4xf32>
    %338 = vector.broadcast %337 : vector<1x4xf32> to vector<512x4xf32>
    %339 = arith.addf %336, %338 : vector<512x4xf32>
    %340 = math.tanh %339 : vector<512x4xf32>
    %cst_380 = arith.constant 1.000000e+00 : f32
    %341 = vector.broadcast %cst_380 : f32 to vector<512x4xf32>
    %342 = arith.subf %341, %196 : vector<512x4xf32>
    %343 = arith.mulf %342, %204 : vector<512x4xf32>
    %344 = arith.mulf %196, %340 : vector<512x4xf32>
    %345 = arith.addf %343, %344 : vector<512x4xf32>
    %346 = vector.extract_strided_slice %345 {offsets = [0, 0], sizes = [256, 4], strides = [1, 1]} : vector<512x4xf32> to vector<256x4xf32>
    %347 = tpu.transpose %346, [1, 0] : vector<256x4xf32> -> vector<4x256xf32>
    %c0_381 = arith.constant 0 : index
    %c0_382 = arith.constant 0 : index
    %c0_383 = arith.constant 0 : index
    %348 = vector.load %arg8[%c0_381, %c0_382, %c0_383] : memref<2x4x256xf32, #tpu.memory_space<vmem>>, vector<1x4x256xf32>
    %349 = vector.shape_cast %348 : vector<1x4x256xf32> to vector<4x256xf32>
    %350 = vector.shape_cast %347 : vector<4x256xf32> to vector<1x4x256xf32>
    tpu.vector_store %arg8[%c0_381, %c0_382, %c0_383], %350 {strides = array<i32>} : memref<2x4x256xf32, #tpu.memory_space<vmem>>, vector<1x4x256xf32>,
    %351 = vector.extract_strided_slice %345 {offsets = [256, 0], sizes = [256, 4], strides = [1, 1]} : vector<512x4xf32> to vector<256x4xf32>
    %352 = tpu.transpose %351, [1, 0] : vector<256x4xf32> -> vector<4x256xf32>
    %c1_384 = arith.constant 1 : index
    %c0_385 = arith.constant 0 : index
    %c0_386 = arith.constant 0 : index
    %353 = vector.load %arg8[%c1_384, %c0_385, %c0_386] : memref<2x4x256xf32, #tpu.memory_space<vmem>>, vector<1x4x256xf32>
    %354 = vector.shape_cast %353 : vector<1x4x256xf32> to vector<4x256xf32>
    %355 = vector.shape_cast %352 : vector<4x256xf32> to vector<1x4x256xf32>
    tpu.vector_store %arg8[%c1_384, %c0_385, %c0_386], %355 {strides = array<i32>} : memref<2x4x256xf32, #tpu.memory_space<vmem>>, vector<1x4x256xf32>,
    return
  }
  func.func @transform_0(%arg0: i32) -> (i32, i32, i32, i32) {
    %c0_i32 = arith.constant 0 : i32
    %c0_i32_0 = arith.constant 0 : i32
    %c0_i32_1 = arith.constant 0 : i32
    %c0_i32_2 = arith.constant 0 : i32
    return %arg0, %c0_i32, %c0_i32_0, %c0_i32_1 : i32, i32, i32, i32
  }
  func.func @transform_1(%arg0: i32) -> (i32, i32, i32, i32) {
    %c0_i32 = arith.constant 0 : i32
    %c0_i32_0 = arith.constant 0 : i32
    %c0_i32_1 = arith.constant 0 : i32
    %c0_i32_2 = arith.constant 0 : i32
    return %arg0, %c0_i32, %c0_i32_0, %c0_i32_1 : i32, i32, i32, i32
  }
  func.func @transform_2(%arg0: i32) -> (i32, i32) {
    %c0_i32 = arith.constant 0 : i32
    %c0_i32_0 = arith.constant 0 : i32
    %c0_i32_1 = arith.constant 0 : i32
    return %c0_i32, %c0_i32_0 : i32, i32
  }
  func.func @transform_3(%arg0: i32) -> (i32, i32) {
    %c0_i32 = arith.constant 0 : i32
    %c0_i32_0 = arith.constant 0 : i32
    %c0_i32_1 = arith.constant 0 : i32
    return %c0_i32, %c0_i32_0 : i32, i32
  }
  func.func @transform_4(%arg0: i32) -> (i32, i32) {
    %c0_i32 = arith.constant 0 : i32
    %c0_i32_0 = arith.constant 0 : i32
    %c0_i32_1 = arith.constant 0 : i32
    return %c0_i32, %c0_i32_0 : i32, i32
  }
  func.func @transform_5(%arg0: i32) -> (i32, i32) {
    %c0_i32 = arith.constant 0 : i32
    %c0_i32_0 = arith.constant 0 : i32
    %c0_i32_1 = arith.constant 0 : i32
    return %c0_i32, %c0_i32_0 : i32, i32
  }
  func.func @transform_6(%arg0: i32) -> (i32, i32) {
    %c0_i32 = arith.constant 0 : i32
    %c0_i32_0 = arith.constant 0 : i32
    %c0_i32_1 = arith.constant 0 : i32
    return %c0_i32, %c0_i32_0 : i32, i32
  }
  func.func @transform_7(%arg0: i32) -> (i32, i32, i32) {
    %c0_i32 = arith.constant 0 : i32
    %c0_i32_0 = arith.constant 0 : i32
    %c0_i32_1 = arith.constant 0 : i32
    return %arg0, %c0_i32, %c0_i32_0 : i32, i32, i32
  }
}

</mosaic_0001>

<llo_original>
// kernel: tpu_custom_call.1
$region0: #{tpu_custom_call.1}
  #allocation0 [shape = 'u32[]', space=smem, size = 0x4, offset = 0x4, fixed_abs, tag = 'smem constant byte address 0x4 - core index']
  #allocation1 [shape = 'u32[144,128]{1,0:T(1,128)}', space=vmem, size = 0x12000, scoped, tag = 'internal scratch']
  #allocation2 [shape = 'bf16[512,36]{1,0:T(16,128)(2,1)}', space=vmem, size = 0x20000, scoped, tag = 'scratch operand']
  #allocation3 [shape = 'bf16[512,36]{1,0:T(16,128)(2,1)}', space=vmem, size = 0x20000, scoped, tag = 'scratch operand']
  #allocation4 [shape = 'f32[2,18,18,4]{3,2,1,0:T(8,128)}', space=vmem, size = 0x6c000, scoped, tag = 'scratch operand']
  %s0 = inlined_call_operand.vmem [shape: f32[2,18,18,4], index: 0, kind: input, shape index: {}]
  %s1 = inlined_call_operand.vmem [shape: f32[2,18,18,4], index: 1, kind: input, shape index: {}]
  %s2 = inlined_call_operand.vmem [shape: bf16[36,12], index: 2, kind: input, shape index: {}]
  %s3 = inlined_call_operand.vmem [shape: bf16[36,8], index: 3, kind: input, shape index: {}]
  %s4 = inlined_call_operand.vmem [shape: bf16[36,4], index: 4, kind: input, shape index: {}]
  %s5 = inlined_call_operand.vmem [shape: f32[1,8], index: 5, kind: input, shape index: {}]
  %s6 = inlined_call_operand.vmem [shape: f32[1,4], index: 6, kind: input, shape index: {}]
  %s7 = inlined_call_operand.hbm [shape: f32[2,4,256], index: 7, kind: output, shape index: {}]
  %s8 = sld [smem:[#allocation0]]
  $region38: #{tpu_custom_call.1} parent=0
    _
  %s10 = ssub.s32 1, %s8
  %s11 = scalar_select 0, %s10, %s8
  $region1: #{tpu_custom_call.1} parent=0
    #allocation5 [shape = 'u8[8192]{0}', space=vmem, size = 0x2000, scoped, tag = 'output window, operand 0, single buffered']
    #allocation6 [shape = 's32[1]{0}', space=sflag, size = 0x4, scoped, tag = 'scoped memory for tpu_custom_call.1']
    %12 = vsyncpa [#allocation6], 0
    // Predicated region
    $region2: #{tpu_custom_call.1} parent=1 // pred_check
      _
    $region3: #{tpu_custom_call.1} parent=1 // pred_check_branch
      %14 = sbr.rel (0) target = $region5
    $region4: #{tpu_custom_call.1} parent=1 // pred_region
      _
    $region5: #{tpu_custom_call.1} parent=1 // pred_fallthru
      _
    // Predicated region
    $region6: #{tpu_custom_call.1} parent=1 // pred_check
      _
    $region7: #{tpu_custom_call.1} parent=1 // pred_check_branch
      %16 = sbr.rel (0) target = $region9
    $region8: #{tpu_custom_call.1} parent=1 // pred_region
      _
    $region9: #{tpu_custom_call.1} parent=1 // pred_fallthru
      _
    // Predicated region
    $region10: #{tpu_custom_call.1} parent=1 // pred_check
      _
    $region11: #{tpu_custom_call.1} parent=1 // pred_check_branch
      %18 = sbr.rel (0) target = $region13
    $region12: #{tpu_custom_call.1} parent=1 // pred_region
      _
    $region13: #{tpu_custom_call.1} parent=1 // pred_fallthru
      _
    // Predicated region
    $region14: #{tpu_custom_call.1} parent=1 // pred_check
      _
    $region15: #{tpu_custom_call.1} parent=1 // pred_check_branch
      %20 = sbr.rel (0) target = $region17
    $region16: #{tpu_custom_call.1} parent=1 // pred_region
      _
    $region17: #{tpu_custom_call.1} parent=1 // pred_fallthru
      _
    // Predicated region
    $region18: #{tpu_custom_call.1} parent=1 // pred_check
      _
    $region19: #{tpu_custom_call.1} parent=1 // pred_check_branch
      %22 = sbr.rel (0) target = $region21
    $region20: #{tpu_custom_call.1} parent=1 // pred_region
      _
    $region21: #{tpu_custom_call.1} parent=1 // pred_fallthru
      _
    // Predicated region
    $region22: #{tpu_custom_call.1} parent=1 // pred_check
      _
    $region23: #{tpu_custom_call.1} parent=1 // pred_check_branch
      %24 = sbr.rel (0) target = $region25
    $region24: #{tpu_custom_call.1} parent=1 // pred_region
      _
    $region25: #{tpu_custom_call.1} parent=1 // pred_fallthru
      _
    // Predicated region
    $region26: #{tpu_custom_call.1} parent=1 // pred_check
      _
    $region27: #{tpu_custom_call.1} parent=1 // pred_check_branch
      %26 = sbr.rel (0) target = $region29
    $region28: #{tpu_custom_call.1} parent=1 // pred_region
      _
    $region29: #{tpu_custom_call.1} parent=1 // pred_fallthru
      _
    %v28 = vld [vmem:[%s0] sm:$0xff]
    %v29 = vld [vmem:[%s0 + $0x8] sm:$0xff]
    %v30 = vld [vmem:[%s0 + $0x18] sm:$0xff]
    %v31 = vld [vmem:[%s0 + $0x20] sm:$0xff]
    %v32 = vld [vmem:[%s0 + $0x30] sm:$0xff]
    %v33 = vld [vmem:[%s0 + $0x38] sm:$0xff]
    %v34 = vld [vmem:[%s0 + $0x48] sm:$0xff]
    %v35 = vld [vmem:[%s0 + $0x50] sm:$0xff]
    %v36 = vld [vmem:[%s0 + $0x60] sm:$0xff]
    %v37 = vld [vmem:[%s0 + $0x68] sm:$0xff]
    %v38 = vld [vmem:[%s0 + $0x78] sm:$0xff]
    %v39 = vld [vmem:[%s0 + $0x80] sm:$0xff]
    %v40 = vld [vmem:[%s0 + $0x90] sm:$0xff]
    %v41 = vld [vmem:[%s0 + $0x98] sm:$0xff]
    %v42 = vld [vmem:[%s0 + $0xa8] sm:$0xff]
    %v43 = vld [vmem:[%s0 + $0xb0] sm:$0xff]
    %v44 = vld [vmem:[%s0 + $0xc0] sm:$0xff]
    %v45 = vld [vmem:[%s0 + $0xc8] sm:$0xff]
    %v46 = vld [vmem:[%s0 + $0xd8] sm:$0xff]
    %v47 = vld [vmem:[%s0 + $0xe0] sm:$0xff]
    %v48 = vld [vmem:[%s0 + $0xf0] sm:$0xff]
    %v49 = vld [vmem:[%s0 + $0xf8] sm:$0xff]
    %v50 = vld [vmem:[%s0 + $0x108] sm:$0xff]
    %v51 = vld [vmem:[%s0 + $0x110] sm:$0xff]
    %v52 = vld [vmem:[%s0 + $0x120] sm:$0xff]
    %v53 = vld [vmem:[%s0 + $0x128] sm:$0xff]
    %v54 = vld [vmem:[%s0 + $0x138] sm:$0xff]
    %v55 = vld [vmem:[%s0 + $0x140] sm:$0xff]
    %v56 = vld [vmem:[%s0 + $0x150] sm:$0xff]
    %v57 = vld [vmem:[%s0 + $0x158] sm:$0xff]
    %v58 = vld [vmem:[%s0 + $0x168] sm:$0xff]
    %v59 = vld [vmem:[%s0 + $0x170] sm:$0xff]
    %v60 = vld [vmem:[%s1] sm:$0xff]
    %v61 = vld [vmem:[%s1 + $0x8] sm:$0xff]
    %v62 = vld [vmem:[%s1 + $0x18] sm:$0xff]
    %v63 = vld [vmem:[%s1 + $0x20] sm:$0xff]
    %v64 = vld [vmem:[%s1 + $0x30] sm:$0xff]
    %v65 = vld [vmem:[%s1 + $0x38] sm:$0xff]
    %v66 = vld [vmem:[%s1 + $0x48] sm:$0xff]
    %v67 = vld [vmem:[%s1 + $0x50] sm:$0xff]
    %v68 = vld [vmem:[%s1 + $0x60] sm:$0xff]
    %v69 = vld [vmem:[%s1 + $0x68] sm:$0xff]
    %v70 = vld [vmem:[%s1 + $0x78] sm:$0xff]
    %v71 = vld [vmem:[%s1 + $0x80] sm:$0xff]
    %v72 = vld [vmem:[%s1 + $0x90] sm:$0xff]
    %v73 = vld [vmem:[%s1 + $0x98] sm:$0xff]
    %v74 = vld [vmem:[%s1 + $0xa8] sm:$0xff]
    %v75 = vld [vmem:[%s1 + $0xb0] sm:$0xff]
    %v76 = vld [vmem:[%s1 + $0xc0] sm:$0xff]
    %v77 = vld [vmem:[%s1 + $0xc8] sm:$0xff]
    %v78 = vld [vmem:[%s1 + $0xd8] sm:$0xff]
    %v79 = vld [vmem:[%s1 + $0xe0] sm:$0xff]
    %v80 = vld [vmem:[%s1 + $0xf0] sm:$0xff]
    %v81 = vld [vmem:[%s1 + $0xf8] sm:$0xff]
    %v82 = vld [vmem:[%s1 + $0x108] sm:$0xff]
    %v83 = vld [vmem:[%s1 + $0x110] sm:$0xff]
    %v84 = vld [vmem:[%s1 + $0x120] sm:$0xff]
    %v85 = vld [vmem:[%s1 + $0x128] sm:$0xff]
    %v86 = vld [vmem:[%s1 + $0x138] sm:$0xff]
    %v87 = vld [vmem:[%s1 + $0x140] sm:$0xff]
    %v88 = vld [vmem:[%s1 + $0x150] sm:$0xff]
    %v89 = vld [vmem:[%s1 + $0x158] sm:$0xff]
    %v90 = vld [vmem:[%s1 + $0x168] sm:$0xff]
    %v91 = vld [vmem:[%s1 + $0x170] sm:$0xff]
    %v92 = vpack.c.bf16 %v29, %v28
    %v93 = vpack.c.bf16 %v31, %v30
    %v94 = vpack.c.bf16 %v33, %v32
    %v95 = vpack.c.bf16 %v35, %v34
    %v96 = vpack.c.bf16 %v37, %v36
    %v97 = vpack.c.bf16 %v39, %v38
    %v98 = vpack.c.bf16 %v41, %v40
    %v99 = vpack.c.bf16 %v43, %v42
    %v100 = vpack.c.bf16 %v45, %v44
    %v101 = vpack.c.bf16 %v47, %v46
    %v102 = vpack.c.bf16 %v49, %v48
    %v103 = vpack.c.bf16 %v51, %v50
    %v104 = vpack.c.bf16 %v53, %v52
    %v105 = vpack.c.bf16 %v55, %v54
    %v106 = vpack.c.bf16 %v57, %v56
    %v107 = vpack.c.bf16 %v59, %v58
    %vm108 = vcmask 31744
    %109 = vst.msk [vmem:[#allocation2] sm:$0xff] %vm108, %v92
    %110 = vst.msk [vmem:[#allocation2 + $0x8] sm:$0xff] %vm108, %v93
    %111 = vst.msk [vmem:[#allocation2 + $0x10] sm:$0xff] %vm108, %v94
    %112 = vst.msk [vmem:[#allocation2 + $0x18] sm:$0xff] %vm108, %v95
    %113 = vst.msk [vmem:[#allocation2 + $0x20] sm:$0xff] %vm108, %v96
    %114 = vst.msk [vmem:[#allocation2 + $0x28] sm:$0xff] %vm108, %v97
    %115 = vst.msk [vmem:[#allocation2 + $0x30] sm:$0xff] %vm108, %v98
    %116 = vst.msk [vmem:[#allocation2 + $0x38] sm:$0xff] %vm108, %v99
    %117 = vst.msk [vmem:[#allocation2 + $0x40] sm:$0xff] %vm108, %v100
    %118 = vst.msk [vmem:[#allocation2 + $0x48] sm:$0xff] %vm108, %v101
    %119 = vst.msk [vmem:[#allocation2 + $0x50] sm:$0xff] %vm108, %v102
    %120 = vst.msk [vmem:[#allocation2 + $0x58] sm:$0xff] %vm108, %v103
    %121 = vst.msk [vmem:[#allocation2 + $0x60] sm:$0xff] %vm108, %v104
    %122 = vst.msk [vmem:[#allocation2 + $0x68] sm:$0xff] %vm108, %v105
    %123 = vst.msk [vmem:[#allocation2 + $0x70] sm:$0xff] %vm108, %v106
    %124 = vst.msk [vmem:[#allocation2 + $0x78] sm:$0xff] %vm108, %v107
    %v125 = vpack.c.bf16 %v61, %v60
    %v126 = vpack.c.bf16 %v63, %v62
    %v127 = vpack.c.bf16 %v65, %v64
    %v128 = vpack.c.bf16 %v67, %v66
    %v129 = vpack.c.bf16 %v69, %v68
    %v130 = vpack.c.bf16 %v71, %v70
    %v131 = vpack.c.bf16 %v73, %v72
    %v132 = vpack.c.bf16 %v75, %v74
    %v133 = vpack.c.bf16 %v77, %v76
    %v134 = vpack.c.bf16 %v79, %v78
    %v135 = vpack.c.bf16 %v81, %v80
    %v136 = vpack.c.bf16 %v83, %v82
    %v137 = vpack.c.bf16 %v85, %v84
    %v138 = vpack.c.bf16 %v87, %v86
    %v139 = vpack.c.bf16 %v89, %v88
    %v140 = vpack.c.bf16 %v91, %v90
    %141 = vst.msk [vmem:[#allocation3] sm:$0xff] %vm108, %v125
    %142 = vst.msk [vmem:[#allocation3 + $0x8] sm:$0xff] %vm108, %v126
    %143 = vst.msk [vmem:[#allocation3 + $0x10] sm:$0xff] %vm108, %v127
    %144 = vst.msk [vmem:[#allocation3 + $0x18] sm:$0xff] %vm108, %v128
    %145 = vst.msk [vmem:[#allocation3 + $0x20] sm:$0xff] %vm108, %v129
    %146 = vst.msk [vmem:[#allocation3 + $0x28] sm:$0xff] %vm108, %v130
    %147 = vst.msk [vmem:[#allocation3 + $0x30] sm:$0xff] %vm108, %v131
    %148 = vst.msk [vmem:[#allocation3 + $0x38] sm:$0xff] %vm108, %v132
    %149 = vst.msk [vmem:[#allocation3 + $0x40] sm:$0xff] %vm108, %v133
    %150 = vst.msk [vmem:[#allocation3 + $0x48] sm:$0xff] %vm108, %v134
    %151 = vst.msk [vmem:[#allocation3 + $0x50] sm:$0xff] %vm108, %v135
    %152 = vst.msk [vmem:[#allocation3 + $0x58] sm:$0xff] %vm108, %v136
    %153 = vst.msk [vmem:[#allocation3 + $0x60] sm:$0xff] %vm108, %v137
    %154 = vst.msk [vmem:[#allocation3 + $0x68] sm:$0xff] %vm108, %v138
    %155 = vst.msk [vmem:[#allocation3 + $0x70] sm:$0xff] %vm108, %v139
    %156 = vst.msk [vmem:[#allocation3 + $0x78] sm:$0xff] %vm108, %v140
    %v157 = vld [vmem:[%s0 + $0x1] sm:$0xff]
    %v158 = vld [vmem:[%s0 + $0x9] sm:$0xff]
    %v159 = vld [vmem:[%s0 + $0x19] sm:$0xff]
    %v160 = vld [vmem:[%s0 + $0x21] sm:$0xff]
    %v161 = vld [vmem:[%s0 + $0x31] sm:$0xff]
    %v162 = vld [vmem:[%s0 + $0x39] sm:$0xff]
    %v163 = vld [vmem:[%s0 + $0x49] sm:$0xff]
    %v164 = vld [vmem:[%s0 + $0x51] sm:$0xff]
    %v165 = vld [vmem:[%s0 + $0x61] sm:$0xff]
    %v166 = vld [vmem:[%s0 + $0x69] sm:$0xff]
    %v167 = vld [vmem:[%s0 + $0x79] sm:$0xff]
    %v168 = vld [vmem:[%s0 + $0x81] sm:$0xff]
    %v169 = vld [vmem:[%s0 + $0x91] sm:$0xff]
    %v170 = vld [vmem:[%s0 + $0x99] sm:$0xff]
    %v171 = vld [vmem:[%s0 + $0xa9] sm:$0xff]
    %v172 = vld [vmem:[%s0 + $0xb1] sm:$0xff]
    %v173 = vld [vmem:[%s0 + $0xc1] sm:$0xff]
    %v174 = vld [vmem:[%s0 + $0xc9] sm:$0xff]
    %v175 = vld [vmem:[%s0 + $0xd9] sm:$0xff]
    %v176 = vld [vmem:[%s0 + $0xe1] sm:$0xff]
    %v177 = vld [vmem:[%s0 + $0xf1] sm:$0xff]
    %v178 = vld [vmem:[%s0 + $0xf9] sm:$0xff]
    %v179 = vld [vmem:[%s0 + $0x109] sm:$0xff]
    %v180 = vld [vmem:[%s0 + $0x111] sm:$0xff]
    %v181 = vld [vmem:[%s0 + $0x121] sm:$0xff]
    %v182 = vld [vmem:[%s0 + $0x129] sm:$0xff]
    %v183 = vld [vmem:[%s0 + $0x139] sm:$0xff]
    %v184 = vld [vmem:[%s0 + $0x141] sm:$0xff]
    %v185 = vld [vmem:[%s0 + $0x151] sm:$0xff]
    %v186 = vld [vmem:[%s0 + $0x159] sm:$0xff]
    %v187 = vld [vmem:[%s0 + $0x169] sm:$0xff]
    %v188 = vld [vmem:[%s0 + $0x171] sm:$0xff]
    %v189 = vld [vmem:[%s1 + $0x1] sm:$0xff]
    %v190 = vld [vmem:[%s1 + $0x9] sm:$0xff]
    %v191 = vld [vmem:[%s1 + $0x19] sm:$0xff]
    %v192 = vld [vmem:[%s1 + $0x21] sm:$0xff]
    %v193 = vld [vmem:[%s1 + $0x31] sm:$0xff]
    %v194 = vld [vmem:[%s1 + $0x39] sm:$0xff]
    %v195 = vld [vmem:[%s1 + $0x49] sm:$0xff]
    %v196 = vld [vmem:[%s1 + $0x51] sm:$0xff]
    %v197 = vld [vmem:[%s1 + $0x61] sm:$0xff]
    %v198 = vld [vmem:[%s1 + $0x69] sm:$0xff]
    %v199 = vld [vmem:[%s1 + $0x79] sm:$0xff]
    %v200 = vld [vmem:[%s1 + $0x81] sm:$0xff]
    %v201 = vld [vmem:[%s1 + $0x91] sm:$0xff]
    %v202 = vld [vmem:[%s1 + $0x99] sm:$0xff]
    %v203 = vld [vmem:[%s1 + $0xa9] sm:$0xff]
    %v204 = vld [vmem:[%s1 + $0xb1] sm:$0xff]
    %v205 = vld [vmem:[%s1 + $0xc1] sm:$0xff]
    %v206 = vld [vmem:[%s1 + $0xc9] sm:$0xff]
    %v207 = vld [vmem:[%s1 + $0xd9] sm:$0xff]
    %v208 = vld [vmem:[%s1 + $0xe1] sm:$0xff]
    %v209 = vld [vmem:[%s1 + $0xf1] sm:$0xff]
    %v210 = vld [vmem:[%s1 + $0xf9] sm:$0xff]
    %v211 = vld [vmem:[%s1 + $0x109] sm:$0xff]
    %v212 = vld [vmem:[%s1 + $0x111] sm:$0xff]
    %v213 = vld [vmem:[%s1 + $0x121] sm:$0xff]
    %v214 = vld [vmem:[%s1 + $0x129] sm:$0xff]
    %v215 = vld [vmem:[%s1 + $0x139] sm:$0xff]
    %v216 = vld [vmem:[%s1 + $0x141] sm:$0xff]
    %v217 = vld [vmem:[%s1 + $0x151] sm:$0xff]
    %v218 = vld [vmem:[%s1 + $0x159] sm:$0xff]
    %v219 = vld [vmem:[%s1 + $0x169] sm:$0xff]
    %v220 = vld [vmem:[%s1 + $0x171] sm:$0xff]
    %v221 = vpack.c.bf16 %v158, %v157
    %v222 = vpack.c.bf16 %v160, %v159
    %v223 = vpack.c.bf16 %v162, %v161
    %v224 = vpack.c.bf16 %v164, %v163
    %v225 = vpack.c.bf16 %v166, %v165
    %v226 = vpack.c.bf16 %v168, %v167
    %v227 = vpack.c.bf16 %v170, %v169
    %v228 = vpack.c.bf16 %v172, %v171
    %v229 = vpack.c.bf16 %v174, %v173
    %v230 = vpack.c.bf16 %v176, %v175
    %v231 = vpack.c.bf16 %v178, %v177
    %v232 = vpack.c.bf16 %v180, %v179
    %v233 = vpack.c.bf16 %v182, %v181
    %v234 = vpack.c.bf16 %v184, %v183
    %v235 = vpack.c.bf16 %v186, %v185
    %v236 = vpack.c.bf16 %v188, %v187
    %253 = vrot.lane.b32.xlu0 %v221, 4
    %v254 = vpop.permute.xlu0 %253
    %255 = vrot.lane.b32.xlu0 %v222, 4
    %v256 = vpop.permute.xlu0 %255
    %257 = vrot.lane.b32.xlu0 %v223, 4
    %v258 = vpop.permute.xlu0 %257
    %259 = vrot.lane.b32.xlu0 %v224, 4
    %v260 = vpop.permute.xlu0 %259
    %261 = vrot.lane.b32.xlu0 %v225, 4
    %v262 = vpop.permute.xlu0 %261
    %263 = vrot.lane.b32.xlu0 %v226, 4
    %v264 = vpop.permute.xlu0 %263
    %265 = vrot.lane.b32.xlu0 %v227, 4
    %v266 = vpop.permute.xlu0 %265
    %267 = vrot.lane.b32.xlu0 %v228, 4
    %v268 = vpop.permute.xlu0 %267
    %269 = vrot.lane.b32.xlu0 %v229, 4
    %v270 = vpop.permute.xlu0 %269
    %271 = vrot.lane.b32.xlu0 %v230, 4
    %v272 = vpop.permute.xlu0 %271
    %273 = vrot.lane.b32.xlu0 %v231, 4
    %v274 = vpop.permute.xlu0 %273
    %275 = vrot.lane.b32.xlu0 %v232, 4
    %v276 = vpop.permute.xlu0 %275
    %277 = vrot.lane.b32.xlu0 %v233, 4
    %v278 = vpop.permute.xlu0 %277
    %279 = vrot.lane.b32.xlu0 %v234, 4
    %v280 = vpop.permute.xlu0 %279
    %281 = vrot.lane.b32.xlu0 %v235, 4
    %v282 = vpop.permute.xlu0 %281
    %283 = vrot.lane.b32.xlu0 %v236, 4
    %v284 = vpop.permute.xlu0 %283
    %vm301 = vcmask 64544
    %302 = vst.msk [vmem:[#allocation2] sm:$0xff] %vm301, %v254
    %303 = vst.msk [vmem:[#allocation2 + $0x8] sm:$0xff] %vm301, %v256
    %304 = vst.msk [vmem:[#allocation2 + $0x10] sm:$0xff] %vm301, %v258
    %305 = vst.msk [vmem:[#allocation2 + $0x18] sm:$0xff] %vm301, %v260
    %306 = vst.msk [vmem:[#allocation2 + $0x20] sm:$0xff] %vm301, %v262
    %307 = vst.msk [vmem:[#allocation2 + $0x28] sm:$0xff] %vm301, %v264
    %308 = vst.msk [vmem:[#allocation2 + $0x30] sm:$0xff] %vm301, %v266
    %309 = vst.msk [vmem:[#allocation2 + $0x38] sm:$0xff] %vm301, %v268
    %310 = vst.msk [vmem:[#allocation2 + $0x40] sm:$0xff] %vm301, %v270
    %311 = vst.msk [vmem:[#allocation2 + $0x48] sm:$0xff] %vm301, %v272
    %312 = vst.msk [vmem:[#allocation2 + $0x50] sm:$0xff] %vm301, %v274
    %313 = vst.msk [vmem:[#allocation2 + $0x58] sm:$0xff] %vm301, %v276
    %314 = vst.msk [vmem:[#allocation2 + $0x60] sm:$0xff] %vm301, %v278
    %315 = vst.msk [vmem:[#allocation2 + $0x68] sm:$0xff] %vm301, %v280
    %316 = vst.msk [vmem:[#allocation2 + $0x70] sm:$0xff] %vm301, %v282
    %317 = vst.msk [vmem:[#allocation2 + $0x78] sm:$0xff] %vm301, %v284
    %v318 = vpack.c.bf16 %v190, %v189
    %v319 = vpack.c.bf16 %v192, %v191
    %v320 = vpack.c.bf16 %v194, %v193
    %v321 = vpack.c.bf16 %v196, %v195
    %v322 = vpack.c.bf16 %v198, %v197
    %v323 = vpack.c.bf16 %v200, %v199
    %v324 = vpack.c.bf16 %v202, %v201
    %v325 = vpack.c.bf16 %v204, %v203
    %v326 = vpack.c.bf16 %v206, %v205
    %v327 = vpack.c.bf16 %v208, %v207
    %v328 = vpack.c.bf16 %v210, %v209
    %v329 = vpack.c.bf16 %v212, %v211
    %v330 = vpack.c.bf16 %v214, %v213
    %v331 = vpack.c.bf16 %v216, %v215
    %v332 = vpack.c.bf16 %v218, %v217
    %v333 = vpack.c.bf16 %v220, %v219
    %350 = vrot.lane.b32.xlu0 %v318, 4
    %v351 = vpop.permute.xlu0 %350
    %352 = vrot.lane.b32.xlu0 %v319, 4
    %v353 = vpop.permute.xlu0 %352
    %354 = vrot.lane.b32.xlu0 %v320, 4
    %v355 = vpop.permute.xlu0 %354
    %356 = vrot.lane.b32.xlu0 %v321, 4
    %v357 = vpop.permute.xlu0 %356
    %358 = vrot.lane.b32.xlu0 %v322, 4
    %v359 = vpop.permute.xlu0 %358
    %360 = vrot.lane.b32.xlu0 %v323, 4
    %v361 = vpop.permute.xlu0 %360
    %362 = vrot.lane.b32.xlu0 %v324, 4
    %v363 = vpop.permute.xlu0 %362
    %364 = vrot.lane.b32.xlu0 %v325, 4
    %v365 = vpop.permute.xlu0 %364
    %366 = vrot.lane.b32.xlu0 %v326, 4
    %v367 = vpop.permute.xlu0 %366
    %368 = vrot.lane.b32.xlu0 %v327, 4
    %v369 = vpop.permute.xlu0 %368
    %370 = vrot.lane.b32.xlu0 %v328, 4
    %v371 = vpop.permute.xlu0 %370
    %372 = vrot.lane.b32.xlu0 %v329, 4
    %v373 = vpop.permute.xlu0 %372
    %374 = vrot.lane.b32.xlu0 %v330, 4
    %v375 = vpop.permute.xlu0 %374
    %376 = vrot.lane.b32.xlu0 %v331, 4
    %v377 = vpop.permute.xlu0 %376
    %378 = vrot.lane.b32.xlu0 %v332, 4
    %v379 = vpop.permute.xlu0 %378
    %380 = vrot.lane.b32.xlu0 %v333, 4
    %v381 = vpop.permute.xlu0 %380
    %398 = vst.msk [vmem:[#allocation3] sm:$0xff] %vm301, %v351
    %399 = vst.msk [vmem:[#allocation3 + $0x8] sm:$0xff] %vm301, %v353
    %400 = vst.msk [vmem:[#allocation3 + $0x10] sm:$0xff] %vm301, %v355
    %401 = vst.msk [vmem:[#allocation3 + $0x18] sm:$0xff] %vm301, %v357
    %402 = vst.msk [vmem:[#allocation3 + $0x20] sm:$0xff] %vm301, %v359
    %403 = vst.msk [vmem:[#allocation3 + $0x28] sm:$0xff] %vm301, %v361
    %404 = vst.msk [vmem:[#allocation3 + $0x30] sm:$0xff] %vm301, %v363
    %405 = vst.msk [vmem:[#allocation3 + $0x38] sm:$0xff] %vm301, %v365
    %406 = vst.msk [vmem:[#allocation3 + $0x40] sm:$0xff] %vm301, %v367
    %407 = vst.msk [vmem:[#allocation3 + $0x48] sm:$0xff] %vm301, %v369
    %408 = vst.msk [vmem:[#allocation3 + $0x50] sm:$0xff] %vm301, %v371
    %409 = vst.msk [vmem:[#allocation3 + $0x58] sm:$0xff] %vm301, %v373
    %410 = vst.msk [vmem:[#allocation3 + $0x60] sm:$0xff] %vm301, %v375
    %411 = vst.msk [vmem:[#allocation3 + $0x68] sm:$0xff] %vm301, %v377
    %412 = vst.msk [vmem:[#allocation3 + $0x70] sm:$0xff] %vm301, %v379
    %413 = vst.msk [vmem:[#allocation3 + $0x78] sm:$0xff] %vm301, %v381
    %v414 = vld [vmem:[%s0 + $0x2] sm:$0xff]
    %v415 = vld [vmem:[%s0 + $0xa] sm:$0xff]
    %v416 = vld [vmem:[%s0 + $0x1a] sm:$0xff]
    %v417 = vld [vmem:[%s0 + $0x22] sm:$0xff]
    %v418 = vld [vmem:[%s0 + $0x32] sm:$0xff]
    %v419 = vld [vmem:[%s0 + $0x3a] sm:$0xff]
    %v420 = vld [vmem:[%s0 + $0x4a] sm:$0xff]
    %v421 = vld [vmem:[%s0 + $0x52] sm:$0xff]
    %v422 = vld [vmem:[%s0 + $0x62] sm:$0xff]
    %v423 = vld [vmem:[%s0 + $0x6a] sm:$0xff]
    %v424 = vld [vmem:[%s0 + $0x7a] sm:$0xff]
    %v425 = vld [vmem:[%s0 + $0x82] sm:$0xff]
    %v426 = vld [vmem:[%s0 + $0x92] sm:$0xff]
    %v427 = vld [vmem:[%s0 + $0x9a] sm:$0xff]
    %v428 = vld [vmem:[%s0 + $0xaa] sm:$0xff]
    %v429 = vld [vmem:[%s0 + $0xb2] sm:$0xff]
    %v430 = vld [vmem:[%s0 + $0xc2] sm:$0xff]
    %v431 = vld [vmem:[%s0 + $0xca] sm:$0xff]
    %v432 = vld [vmem:[%s0 + $0xda] sm:$0xff]
    %v433 = vld [vmem:[%s0 + $0xe2] sm:$0xff]
    %v434 = vld [vmem:[%s0 + $0xf2] sm:$0xff]
    %v435 = vld [vmem:[%s0 + $0xfa] sm:$0xff]
    %v436 = vld [vmem:[%s0 + $0x10a] sm:$0xff]
    %v437 = vld [vmem:[%s0 + $0x112] sm:$0xff]
    %v438 = vld [vmem:[%s0 + $0x122] sm:$0xff]
    %v439 = vld [vmem:[%s0 + $0x12a] sm:$0xff]
    %v440 = vld [vmem:[%s0 + $0x13a] sm:$0xff]
    %v441 = vld [vmem:[%s0 + $0x142] sm:$0xff]
    %v442 = vld [vmem:[%s0 + $0x152] sm:$0xff]
    %v443 = vld [vmem:[%s0 + $0x15a] sm:$0xff]
    %v444 = vld [vmem:[%s0 + $0x16a] sm:$0xff]
    %v445 = vld [vmem:[%s0 + $0x172] sm:$0xff]
    %v446 = vld [vmem:[%s1 + $0x2] sm:$0xff]
    %v447 = vld [vmem:[%s1 + $0xa] sm:$0xff]
    %v448 = vld [vmem:[%s1 + $0x1a] sm:$0xff]
    %v449 = vld [vmem:[%s1 + $0x22] sm:$0xff]
    %v450 = vld [vmem:[%s1 + $0x32] sm:$0xff]
    %v451 = vld [vmem:[%s1 + $0x3a] sm:$0xff]
    %v452 = vld [vmem:[%s1 + $0x4a] sm:$0xff]
    %v453 = vld [vmem:[%s1 + $0x52] sm:$0xff]
    %v454 = vld [vmem:[%s1 + $0x62] sm:$0xff]
    %v455 = vld [vmem:[%s1 + $0x6a] sm:$0xff]
    %v456 = vld [vmem:[%s1 + $0x7a] sm:$0xff]
    %v457 = vld [vmem:[%s1 + $0x82] sm:$0xff]
    %v458 = vld [vmem:[%s1 + $0x92] sm:$0xff]
    %v459 = vld [vmem:[%s1 + $0x9a] sm:$0xff]
    %v460 = vld [vmem:[%s1 + $0xaa] sm:$0xff]
    %v461 = vld [vmem:[%s1 + $0xb2] sm:$0xff]
    %v462 = vld [vmem:[%s1 + $0xc2] sm:$0xff]
    %v463 = vld [vmem:[%s1 + $0xca] sm:$0xff]
    %v464 = vld [vmem:[%s1 + $0xda] sm:$0xff]
    %v465 = vld [vmem:[%s1 + $0xe2] sm:$0xff]
    %v466 = vld [vmem:[%s1 + $0xf2] sm:$0xff]
    %v467 = vld [vmem:[%s1 + $0xfa] sm:$0xff]
    %v468 = vld [vmem:[%s1 + $0x10a] sm:$0xff]
    %v469 = vld [vmem:[%s1 + $0x112] sm:$0xff]
    %v470 = vld [vmem:[%s1 + $0x122] sm:$0xff]
    %v471 = vld [vmem:[%s1 + $0x12a] sm:$0xff]
    %v472 = vld [vmem:[%s1 + $0x13a] sm:$0xff]
    %v473 = vld [vmem:[%s1 + $0x142] sm:$0xff]
    %v474 = vld [vmem:[%s1 + $0x152] sm:$0xff]
    %v475 = vld [vmem:[%s1 + $0x15a] sm:$0xff]
    %v476 = vld [vmem:[%s1 + $0x16a] sm:$0xff]
    %v477 = vld [vmem:[%s1 + $0x172] sm:$0xff]
    %v478 = vpack.c.bf16 %v415, %v414
    %v479 = vpack.c.bf16 %v417, %v416
    %v480 = vpack.c.bf16 %v419, %v418
    %v481 = vpack.c.bf16 %v421, %v420
    %v482 = vpack.c.bf16 %v423, %v422
    %v483 = vpack.c.bf16 %v425, %v424
    %v484 = vpack.c.bf16 %v427, %v426
    %v485 = vpack.c.bf16 %v429, %v428
    %v486 = vpack.c.bf16 %v431, %v430
    %v487 = vpack.c.bf16 %v433, %v432
    %v488 = vpack.c.bf16 %v435, %v434
    %v489 = vpack.c.bf16 %v437, %v436
    %v490 = vpack.c.bf16 %v439, %v438
    %v491 = vpack.c.bf16 %v441, %v440
    %v492 = vpack.c.bf16 %v443, %v442
    %v493 = vpack.c.bf16 %v445, %v444
    %510 = vrot.lane.b32.xlu0 %v478, 8
    %v511 = vpop.permute.xlu0 %510
    %512 = vrot.lane.b32.xlu0 %v479, 8
    %v513 = vpop.permute.xlu0 %512
    %514 = vrot.lane.b32.xlu0 %v480, 8
    %v515 = vpop.permute.xlu0 %514
    %516 = vrot.lane.b32.xlu0 %v481, 8
    %v517 = vpop.permute.xlu0 %516
    %518 = vrot.lane.b32.xlu0 %v482, 8
    %v519 = vpop.permute.xlu0 %518
    %520 = vrot.lane.b32.xlu0 %v483, 8
    %v521 = vpop.permute.xlu0 %520
    %522 = vrot.lane.b32.xlu0 %v484, 8
    %v523 = vpop.permute.xlu0 %522
    %524 = vrot.lane.b32.xlu0 %v485, 8
    %v525 = vpop.permute.xlu0 %524
    %526 = vrot.lane.b32.xlu0 %v486, 8
    %v527 = vpop.permute.xlu0 %526
    %528 = vrot.lane.b32.xlu0 %v487, 8
    %v529 = vpop.permute.xlu0 %528
    %530 = vrot.lane.b32.xlu0 %v488, 8
    %v531 = vpop.permute.xlu0 %530
    %532 = vrot.lane.b32.xlu0 %v489, 8
    %v533 = vpop.permute.xlu0 %532
    %534 = vrot.lane.b32.xlu0 %v490, 8
    %v535 = vpop.permute.xlu0 %534
    %536 = vrot.lane.b32.xlu0 %v491, 8
    %v537 = vpop.permute.xlu0 %536
    %538 = vrot.lane.b32.xlu0 %v492, 8
    %v539 = vpop.permute.xlu0 %538
    %540 = vrot.lane.b32.xlu0 %v493, 8
    %v541 = vpop.permute.xlu0 %540
    %vm558 = vcmask 97344
    %559 = vst.msk [vmem:[#allocation2] sm:$0xff] %vm558, %v511
    %560 = vst.msk [vmem:[#allocation2 + $0x8] sm:$0xff] %vm558, %v513
    %561 = vst.msk [vmem:[#allocation2 + $0x10] sm:$0xff] %vm558, %v515
    %562 = vst.msk [vmem:[#allocation2 + $0x18] sm:$0xff] %vm558, %v517
    %563 = vst.msk [vmem:[#allocation2 + $0x20] sm:$0xff] %vm558, %v519
    %564 = vst.msk [vmem:[#allocation2 + $0x28] sm:$0xff] %vm558, %v521
    %565 = vst.msk [vmem:[#allocation2 + $0x30] sm:$0xff] %vm558, %v523
    %566 = vst.msk [vmem:[#allocation2 + $0x38] sm:$0xff] %vm558, %v525
    %567 = vst.msk [vmem:[#allocation2 + $0x40] sm:$0xff] %vm558, %v527
    %568 = vst.msk [vmem:[#allocation2 + $0x48] sm:$0xff] %vm558, %v529
    %569 = vst.msk [vmem:[#allocation2 + $0x50] sm:$0xff] %vm558, %v531
    %570 = vst.msk [vmem:[#allocation2 + $0x58] sm:$0xff] %vm558, %v533
    %571 = vst.msk [vmem:[#allocation2 + $0x60] sm:$0xff] %vm558, %v535
    %572 = vst.msk [vmem:[#allocation2 + $0x68] sm:$0xff] %vm558, %v537
    %573 = vst.msk [vmem:[#allocation2 + $0x70] sm:$0xff] %vm558, %v539
    %574 = vst.msk [vmem:[#allocation2 + $0x78] sm:$0xff] %vm558, %v541
    %v575 = vpack.c.bf16 %v447, %v446
    %v576 = vpack.c.bf16 %v449, %v448
    %v577 = vpack.c.bf16 %v451, %v450
    %v578 = vpack.c.bf16 %v453, %v452
    %v579 = vpack.c.bf16 %v455, %v454
    %v580 = vpack.c.bf16 %v457, %v456
    %v581 = vpack.c.bf16 %v459, %v458
    %v582 = vpack.c.bf16 %v461, %v460
    %v583 = vpack.c.bf16 %v463, %v462
    %v584 = vpack.c.bf16 %v465, %v464
    %v585 = vpack.c.bf16 %v467, %v466
    %v586 = vpack.c.bf16 %v469, %v468
    %v587 = vpack.c.bf16 %v471, %v470
    %v588 = vpack.c.bf16 %v473, %v472
    %v589 = vpack.c.bf16 %v475, %v474
    %v590 = vpack.c.bf16 %v477, %v476
    %607 = vrot.lane.b32.xlu0 %v575, 8
    %v608 = vpop.permute.xlu0 %607
    %609 = vrot.lane.b32.xlu0 %v576, 8
    %v610 = vpop.permute.xlu0 %609
    %611 = vrot.lane.b32.xlu0 %v577, 8
    %v612 = vpop.permute.xlu0 %611
    %613 = vrot.lane.b32.xlu0 %v578, 8
    %v614 = vpop.permute.xlu0 %613
    %615 = vrot.lane.b32.xlu0 %v579, 8
    %v616 = vpop.permute.xlu0 %615
    %617 = vrot.lane.b32.xlu0 %v580, 8
    %v618 = vpop.permute.xlu0 %617
    %619 = vrot.lane.b32.xlu0 %v581, 8
    %v620 = vpop.permute.xlu0 %619
    %621 = vrot.lane.b32.xlu0 %v582, 8
    %v622 = vpop.permute.xlu0 %621
    %623 = vrot.lane.b32.xlu0 %v583, 8
    %v624 = vpop.permute.xlu0 %623
    %625 = vrot.lane.b32.xlu0 %v584, 8
    %v626 = vpop.permute.xlu0 %625
    %627 = vrot.lane.b32.xlu0 %v585, 8
    %v628 = vpop.permute.xlu0 %627
    %629 = vrot.lane.b32.xlu0 %v586, 8
    %v630 = vpop.permute.xlu0 %629
    %631 = vrot.lane.b32.xlu0 %v587, 8
    %v632 = vpop.permute.xlu0 %631
    %633 = vrot.lane.b32.xlu0 %v588, 8
    %v634 = vpop.permute.xlu0 %633
    %635 = vrot.lane.b32.xlu0 %v589, 8
    %v636 = vpop.permute.xlu0 %635
    %637 = vrot.lane.b32.xlu0 %v590, 8
    %v638 = vpop.permute.xlu0 %637
    %655 = vst.msk [vmem:[#allocation3] sm:$0xff] %vm558, %v608
    %656 = vst.msk [vmem:[#allocation3 + $0x8] sm:$0xff] %vm558, %v610
    %657 = vst.msk [vmem:[#allocation3 + $0x10] sm:$0xff] %vm558, %v612
    %658 = vst.msk [vmem:[#allocation3 + $0x18] sm:$0xff] %vm558, %v614
    %659 = vst.msk [vmem:[#allocation3 + $0x20] sm:$0xff] %vm558, %v616
    %660 = vst.msk [vmem:[#allocation3 + $0x28] sm:$0xff] %vm558, %v618
    %661 = vst.msk [vmem:[#allocation3 + $0x30] sm:$0xff] %vm558, %v620
    %662 = vst.msk [vmem:[#allocation3 + $0x38] sm:$0xff] %vm558, %v622
    %663 = vst.msk [vmem:[#allocation3 + $0x40] sm:$0xff] %vm558, %v624
    %664 = vst.msk [vmem:[#allocation3 + $0x48] sm:$0xff] %vm558, %v626
    %665 = vst.msk [vmem:[#allocation3 + $0x50] sm:$0xff] %vm558, %v628
    %666 = vst.msk [vmem:[#allocation3 + $0x58] sm:$0xff] %vm558, %v630
    %667 = vst.msk [vmem:[#allocation3 + $0x60] sm:$0xff] %vm558, %v632
    %668 = vst.msk [vmem:[#allocation3 + $0x68] sm:$0xff] %vm558, %v634
    %669 = vst.msk [vmem:[#allocation3 + $0x70] sm:$0xff] %vm558, %v636
    %670 = vst.msk [vmem:[#allocation3 + $0x78] sm:$0xff] %vm558, %v638
    %s671 = scalar_lea.vmem %s0, 24
    %v672 = vld [vmem:[%s671] sm:$0xff]
    %v673 = vld [vmem:[%s671 + $0x8] sm:$0xff]
    %v674 = vld [vmem:[%s671 + $0x18] sm:$0xff]
    %v675 = vld [vmem:[%s671 + $0x20] sm:$0xff]
    %v676 = vld [vmem:[%s671 + $0x30] sm:$0xff]
    %v677 = vld [vmem:[%s671 + $0x38] sm:$0xff]
    %v678 = vld [vmem:[%s671 + $0x48] sm:$0xff]
    %v679 = vld [vmem:[%s671 + $0x50] sm:$0xff]
    %v680 = vld [vmem:[%s671 + $0x60] sm:$0xff]
    %v681 = vld [vmem:[%s671 + $0x68] sm:$0xff]
    %v682 = vld [vmem:[%s671 + $0x78] sm:$0xff]
    %v683 = vld [vmem:[%s671 + $0x80] sm:$0xff]
    %v684 = vld [vmem:[%s671 + $0x90] sm:$0xff]
    %v685 = vld [vmem:[%s671 + $0x98] sm:$0xff]
    %v686 = vld [vmem:[%s671 + $0xa8] sm:$0xff]
    %v687 = vld [vmem:[%s671 + $0xb0] sm:$0xff]
    %v688 = vld [vmem:[%s671 + $0xc0] sm:$0xff]
    %v689 = vld [vmem:[%s671 + $0xc8] sm:$0xff]
    %v690 = vld [vmem:[%s671 + $0xd8] sm:$0xff]
    %v691 = vld [vmem:[%s671 + $0xe0] sm:$0xff]
    %v692 = vld [vmem:[%s671 + $0xf0] sm:$0xff]
    %v693 = vld [vmem:[%s671 + $0xf8] sm:$0xff]
    %v694 = vld [vmem:[%s671 + $0x108] sm:$0xff]
    %v695 = vld [vmem:[%s671 + $0x110] sm:$0xff]
    %v696 = vld [vmem:[%s671 + $0x120] sm:$0xff]
    %v697 = vld [vmem:[%s671 + $0x128] sm:$0xff]
    %v698 = vld [vmem:[%s671 + $0x138] sm:$0xff]
    %v699 = vld [vmem:[%s671 + $0x140] sm:$0xff]
    %v700 = vld [vmem:[%s671 + $0x150] sm:$0xff]
    %v701 = vld [vmem:[%s671 + $0x158] sm:$0xff]
    %v702 = vld [vmem:[%s671 + $0x168] sm:$0xff]
    %v703 = vld [vmem:[%s671 + $0x170] sm:$0xff]
    %s704 = scalar_lea.vmem %s1, 24
    %v705 = vld [vmem:[%s704] sm:$0xff]
    %v706 = vld [vmem:[%s704 + $0x8] sm:$0xff]
    %v707 = vld [vmem:[%s704 + $0x18] sm:$0xff]
    %v708 = vld [vmem:[%s704 + $0x20] sm:$0xff]
    %v709 = vld [vmem:[%s704 + $0x30] sm:$0xff]
    %v710 = vld [vmem:[%s704 + $0x38] sm:$0xff]
    %v711 = vld [vmem:[%s704 + $0x48] sm:$0xff]
    %v712 = vld [vmem:[%s704 + $0x50] sm:$0xff]
    %v713 = vld [vmem:[%s704 + $0x60] sm:$0xff]
    %v714 = vld [vmem:[%s704 + $0x68] sm:$0xff]
    %v715 = vld [vmem:[%s704 + $0x78] sm:$0xff]
    %v716 = vld [vmem:[%s704 + $0x80] sm:$0xff]
    %v717 = vld [vmem:[%s704 + $0x90] sm:$0xff]
    %v718 = vld [vmem:[%s704 + $0x98] sm:$0xff]
    %v719 = vld [vmem:[%s704 + $0xa8] sm:$0xff]
    %v720 = vld [vmem:[%s704 + $0xb0] sm:$0xff]
    %v721 = vld [vmem:[%s704 + $0xc0] sm:$0xff]
    %v722 = vld [vmem:[%s704 + $0xc8] sm:$0xff]
    %v723 = vld [vmem:[%s704 + $0xd8] sm:$0xff]
    %v724 = vld [vmem:[%s704 + $0xe0] sm:$0xff]
    %v725 = vld [vmem:[%s704 + $0xf0] sm:$0xff]
    %v726 = vld [vmem:[%s704 + $0xf8] sm:$0xff]
    %v727 = vld [vmem:[%s704 + $0x108] sm:$0xff]
    %v728 = vld [vmem:[%s704 + $0x110] sm:$0xff]
    %v729 = vld [vmem:[%s704 + $0x120] sm:$0xff]
    %v730 = vld [vmem:[%s704 + $0x128] sm:$0xff]
    %v731 = vld [vmem:[%s704 + $0x138] sm:$0xff]
    %v732 = vld [vmem:[%s704 + $0x140] sm:$0xff]
    %v733 = vld [vmem:[%s704 + $0x150] sm:$0xff]
    %v734 = vld [vmem:[%s704 + $0x158] sm:$0xff]
    %v735 = vld [vmem:[%s704 + $0x168] sm:$0xff]
    %v736 = vld [vmem:[%s704 + $0x170] sm:$0xff]
    %v737 = vpack.c.bf16 %v673, %v672
    %v738 = vpack.c.bf16 %v675, %v674
    %v739 = vpack.c.bf16 %v677, %v676
    %v740 = vpack.c.bf16 %v679, %v678
    %v741 = vpack.c.bf16 %v681, %v680
    %v742 = vpack.c.bf16 %v683, %v682
    %v743 = vpack.c.bf16 %v685, %v684
    %v744 = vpack.c.bf16 %v687, %v686
    %v745 = vpack.c.bf16 %v689, %v688
    %v746 = vpack.c.bf16 %v691, %v690
    %v747 = vpack.c.bf16 %v693, %v692
    %v748 = vpack.c.bf16 %v695, %v694
    %v749 = vpack.c.bf16 %v697, %v696
    %v750 = vpack.c.bf16 %v699, %v698
    %v751 = vpack.c.bf16 %v701, %v700
    %v752 = vpack.c.bf16 %v703, %v702
    %769 = vrot.lane.b32.xlu0 %v737, 12
    %v770 = vpop.permute.xlu0 %769
    %771 = vrot.lane.b32.xlu0 %v738, 12
    %v772 = vpop.permute.xlu0 %771
    %773 = vrot.lane.b32.xlu0 %v739, 12
    %v774 = vpop.permute.xlu0 %773
    %775 = vrot.lane.b32.xlu0 %v740, 12
    %v776 = vpop.permute.xlu0 %775
    %777 = vrot.lane.b32.xlu0 %v741, 12
    %v778 = vpop.permute.xlu0 %777
    %779 = vrot.lane.b32.xlu0 %v742, 12
    %v780 = vpop.permute.xlu0 %779
    %781 = vrot.lane.b32.xlu0 %v743, 12
    %v782 = vpop.permute.xlu0 %781
    %783 = vrot.lane.b32.xlu0 %v744, 12
    %v784 = vpop.permute.xlu0 %783
    %785 = vrot.lane.b32.xlu0 %v745, 12
    %v786 = vpop.permute.xlu0 %785
    %787 = vrot.lane.b32.xlu0 %v746, 12
    %v788 = vpop.permute.xlu0 %787
    %789 = vrot.lane.b32.xlu0 %v747, 12
    %v790 = vpop.permute.xlu0 %789
    %791 = vrot.lane.b32.xlu0 %v748, 12
    %v792 = vpop.permute.xlu0 %791
    %793 = vrot.lane.b32.xlu0 %v749, 12
    %v794 = vpop.permute.xlu0 %793
    %795 = vrot.lane.b32.xlu0 %v750, 12
    %v796 = vpop.permute.xlu0 %795
    %797 = vrot.lane.b32.xlu0 %v751, 12
    %v798 = vpop.permute.xlu0 %797
    %799 = vrot.lane.b32.xlu0 %v752, 12
    %v800 = vpop.permute.xlu0 %799
    %vm817 = vcmask 130144
    %818 = vst.msk [vmem:[#allocation2] sm:$0xff] %vm817, %v770
    %819 = vst.msk [vmem:[#allocation2 + $0x8] sm:$0xff] %vm817, %v772
    %820 = vst.msk [vmem:[#allocation2 + $0x10] sm:$0xff] %vm817, %v774
    %821 = vst.msk [vmem:[#allocation2 + $0x18] sm:$0xff] %vm817, %v776
    %822 = vst.msk [vmem:[#allocation2 + $0x20] sm:$0xff] %vm817, %v778
    %823 = vst.msk [vmem:[#allocation2 + $0x28] sm:$0xff] %vm817, %v780
    %824 = vst.msk [vmem:[#allocation2 + $0x30] sm:$0xff] %vm817, %v782
    %825 = vst.msk [vmem:[#allocation2 + $0x38] sm:$0xff] %vm817, %v784
    %826 = vst.msk [vmem:[#allocation2 + $0x40] sm:$0xff] %vm817, %v786
    %827 = vst.msk [vmem:[#allocation2 + $0x48] sm:$0xff] %vm817, %v788
    %828 = vst.msk [vmem:[#allocation2 + $0x50] sm:$0xff] %vm817, %v790
    %829 = vst.msk [vmem:[#allocation2 + $0x58] sm:$0xff] %vm817, %v792
    %830 = vst.msk [vmem:[#allocation2 + $0x60] sm:$0xff] %vm817, %v794
    %831 = vst.msk [vmem:[#allocation2 + $0x68] sm:$0xff] %vm817, %v796
    %832 = vst.msk [vmem:[#allocation2 + $0x70] sm:$0xff] %vm817, %v798
    %833 = vst.msk [vmem:[#allocation2 + $0x78] sm:$0xff] %vm817, %v800
    %v834 = vpack.c.bf16 %v706, %v705
    %v835 = vpack.c.bf16 %v708, %v707
    %v836 = vpack.c.bf16 %v710, %v709
    %v837 = vpack.c.bf16 %v712, %v711
    %v838 = vpack.c.bf16 %v714, %v713
    %v839 = vpack.c.bf16 %v716, %v715
    %v840 = vpack.c.bf16 %v718, %v717
    %v841 = vpack.c.bf16 %v720, %v719
    %v842 = vpack.c.bf16 %v722, %v721
    %v843 = vpack.c.bf16 %v724, %v723
    %v844 = vpack.c.bf16 %v726, %v725
    %v845 = vpack.c.bf16 %v728, %v727
    %v846 = vpack.c.bf16 %v730, %v729
    %v847 = vpack.c.bf16 %v732, %v731
    %v848 = vpack.c.bf16 %v734, %v733
    %v849 = vpack.c.bf16 %v736, %v735
    %866 = vrot.lane.b32.xlu0 %v834, 12
    %v867 = vpop.permute.xlu0 %866
    %868 = vrot.lane.b32.xlu0 %v835, 12
    %v869 = vpop.permute.xlu0 %868
    %870 = vrot.lane.b32.xlu0 %v836, 12
    %v871 = vpop.permute.xlu0 %870
    %872 = vrot.lane.b32.xlu0 %v837, 12
    %v873 = vpop.permute.xlu0 %872
    %874 = vrot.lane.b32.xlu0 %v838, 12
    %v875 = vpop.permute.xlu0 %874
    %876 = vrot.lane.b32.xlu0 %v839, 12
    %v877 = vpop.permute.xlu0 %876
    %878 = vrot.lane.b32.xlu0 %v840, 12
    %v879 = vpop.permute.xlu0 %878
    %880 = vrot.lane.b32.xlu0 %v841, 12
    %v881 = vpop.permute.xlu0 %880
    %882 = vrot.lane.b32.xlu0 %v842, 12
    %v883 = vpop.permute.xlu0 %882
    %884 = vrot.lane.b32.xlu0 %v843, 12
    %v885 = vpop.permute.xlu0 %884
    %886 = vrot.lane.b32.xlu0 %v844, 12
    %v887 = vpop.permute.xlu0 %886
    %888 = vrot.lane.b32.xlu0 %v845, 12
    %v889 = vpop.permute.xlu0 %888
    %890 = vrot.lane.b32.xlu0 %v846, 12
    %v891 = vpop.permute.xlu0 %890
    %892 = vrot.lane.b32.xlu0 %v847, 12
    %v893 = vpop.permute.xlu0 %892
    %894 = vrot.lane.b32.xlu0 %v848, 12
    %v895 = vpop.permute.xlu0 %894
    %896 = vrot.lane.b32.xlu0 %v849, 12
    %v897 = vpop.permute.xlu0 %896
    %914 = vst.msk [vmem:[#allocation3] sm:$0xff] %vm817, %v867
    %915 = vst.msk [vmem:[#allocation3 + $0x8] sm:$0xff] %vm817, %v869
    %916 = vst.msk [vmem:[#allocation3 + $0x10] sm:$0xff] %vm817, %v871
    %917 = vst.msk [vmem:[#allocation3 + $0x18] sm:$0xff] %vm817, %v873
    %918 = vst.msk [vmem:[#allocation3 + $0x20] sm:$0xff] %vm817, %v875
    %919 = vst.msk [vmem:[#allocation3 + $0x28] sm:$0xff] %vm817, %v877
    %920 = vst.msk [vmem:[#allocation3 + $0x30] sm:$0xff] %vm817, %v879
    %921 = vst.msk [vmem:[#allocation3 + $0x38] sm:$0xff] %vm817, %v881
    %922 = vst.msk [vmem:[#allocation3 + $0x40] sm:$0xff] %vm817, %v883
    %923 = vst.msk [vmem:[#allocation3 + $0x48] sm:$0xff] %vm817, %v885
    %924 = vst.msk [vmem:[#allocation3 + $0x50] sm:$0xff] %vm817, %v887
    %925 = vst.msk [vmem:[#allocation3 + $0x58] sm:$0xff] %vm817, %v889
    %926 = vst.msk [vmem:[#allocation3 + $0x60] sm:$0xff] %vm817, %v891
    %927 = vst.msk [vmem:[#allocation3 + $0x68] sm:$0xff] %vm817, %v893
    %928 = vst.msk [vmem:[#allocation3 + $0x70] sm:$0xff] %vm817, %v895
    %929 = vst.msk [vmem:[#allocation3 + $0x78] sm:$0xff] %vm817, %v897
    %v930 = vld [vmem:[%s671 + $0x1] sm:$0xff]
    %v931 = vld [vmem:[%s671 + $0x9] sm:$0xff]
    %v932 = vld [vmem:[%s671 + $0x19] sm:$0xff]
    %v933 = vld [vmem:[%s671 + $0x21] sm:$0xff]
    %v934 = vld [vmem:[%s671 + $0x31] sm:$0xff]
    %v935 = vld [vmem:[%s671 + $0x39] sm:$0xff]
    %v936 = vld [vmem:[%s671 + $0x49] sm:$0xff]
    %v937 = vld [vmem:[%s671 + $0x51] sm:$0xff]
    %v938 = vld [vmem:[%s671 + $0x61] sm:$0xff]
    %v939 = vld [vmem:[%s671 + $0x69] sm:$0xff]
    %v940 = vld [vmem:[%s671 + $0x79] sm:$0xff]
    %v941 = vld [vmem:[%s671 + $0x81] sm:$0xff]
    %v942 = vld [vmem:[%s671 + $0x91] sm:$0xff]
    %v943 = vld [vmem:[%s671 + $0x99] sm:$0xff]
    %v944 = vld [vmem:[%s671 + $0xa9] sm:$0xff]
    %v945 = vld [vmem:[%s671 + $0xb1] sm:$0xff]
    %v946 = vld [vmem:[%s671 + $0xc1] sm:$0xff]
    %v947 = vld [vmem:[%s671 + $0xc9] sm:$0xff]
    %v948 = vld [vmem:[%s671 + $0xd9] sm:$0xff]
    %v949 = vld [vmem:[%s671 + $0xe1] sm:$0xff]
    %v950 = vld [vmem:[%s671 + $0xf1] sm:$0xff]
    %v951 = vld [vmem:[%s671 + $0xf9] sm:$0xff]
    %v952 = vld [vmem:[%s671 + $0x109] sm:$0xff]
    %v953 = vld [vmem:[%s671 + $0x111] sm:$0xff]
    %v954 = vld [vmem:[%s671 + $0x121] sm:$0xff]
    %v955 = vld [vmem:[%s671 + $0x129] sm:$0xff]
    %v956 = vld [vmem:[%s671 + $0x139] sm:$0xff]
    %v957 = vld [vmem:[%s671 + $0x141] sm:$0xff]
    %v958 = vld [vmem:[%s671 + $0x151] sm:$0xff]
    %v959 = vld [vmem:[%s671 + $0x159] sm:$0xff]
    %v960 = vld [vmem:[%s671 + $0x169] sm:$0xff]
    %v961 = vld [vmem:[%s671 + $0x171] sm:$0xff]
    %v962 = vld [vmem:[%s704 + $0x1] sm:$0xff]
    %v963 = vld [vmem:[%s704 + $0x9] sm:$0xff]
    %v964 = vld [vmem:[%s704 + $0x19] sm:$0xff]
    %v965 = vld [vmem:[%s704 + $0x21] sm:$0xff]
    %v966 = vld [vmem:[%s704 + $0x31] sm:$0xff]
    %v967 = vld [vmem:[%s704 + $0x39] sm:$0xff]
    %v968 = vld [vmem:[%s704 + $0x49] sm:$0xff]
    %v969 = vld [vmem:[%s704 + $0x51] sm:$0xff]
    %v970 = vld [vmem:[%s704 + $0x61] sm:$0xff]
    %v971 = vld [vmem:[%s704 + $0x69] sm:$0xff]
    %v972 = vld [vmem:[%s704 + $0x79] sm:$0xff]
    %v973 = vld [vmem:[%s704 + $0x81] sm:$0xff]
    %v974 = vld [vmem:[%s704 + $0x91] sm:$0xff]
    %v975 = vld [vmem:[%s704 + $0x99] sm:$0xff]
    %v976 = vld [vmem:[%s704 + $0xa9] sm:$0xff]
    %v977 = vld [vmem:[%s704 + $0xb1] sm:$0xff]
    %v978 = vld [vmem:[%s704 + $0xc1] sm:$0xff]
    %v979 = vld [vmem:[%s704 + $0xc9] sm:$0xff]
    %v980 = vld [vmem:[%s704 + $0xd9] sm:$0xff]
    %v981 = vld [vmem:[%s704 + $0xe1] sm:$0xff]
    %v982 = vld [vmem:[%s704 + $0xf1] sm:$0xff]
    %v983 = vld [vmem:[%s704 + $0xf9] sm:$0xff]
    %v984 = vld [vmem:[%s704 + $0x109] sm:$0xff]
    %v985 = vld [vmem:[%s704 + $0x111] sm:$0xff]
    %v986 = vld [vmem:[%s704 + $0x121] sm:$0xff]
    %v987 = vld [vmem:[%s704 + $0x129] sm:$0xff]
    %v988 = vld [vmem:[%s704 + $0x139] sm:$0xff]
    %v989 = vld [vmem:[%s704 + $0x141] sm:$0xff]
    %v990 = vld [vmem:[%s704 + $0x151] sm:$0xff]
    %v991 = vld [vmem:[%s704 + $0x159] sm:$0xff]
    %v992 = vld [vmem:[%s704 + $0x169] sm:$0xff]
    %v993 = vld [vmem:[%s704 + $0x171] sm:$0xff]
    %v994 = vpack.c.bf16 %v931, %v930
    %v995 = vpack.c.bf16 %v933, %v932
    %v996 = vpack.c.bf16 %v935, %v934
    %v997 = vpack.c.bf16 %v937, %v936
    %v998 = vpack.c.bf16 %v939, %v938
    %v999 = vpack.c.bf16 %v941, %v940
    %v1000 = vpack.c.bf16 %v943, %v942
    %v1001 = vpack.c.bf16 %v945, %v944
    %v1002 = vpack.c.bf16 %v947, %v946
    %v1003 = vpack.c.bf16 %v949, %v948
    %v1004 = vpack.c.bf16 %v951, %v950
    %v1005 = vpack.c.bf16 %v953, %v952
    %v1006 = vpack.c.bf16 %v955, %v954
    %v1007 = vpack.c.bf16 %v957, %v956
    %v1008 = vpack.c.bf16 %v959, %v958
    %v1009 = vpack.c.bf16 %v961, %v960
    %1026 = vrot.lane.b32.xlu0 %v994, 16
    %v1027 = vpop.permute.xlu0 %1026
    %1028 = vrot.lane.b32.xlu0 %v995, 16
    %v1029 = vpop.permute.xlu0 %1028
    %1030 = vrot.lane.b32.xlu0 %v996, 16
    %v1031 = vpop.permute.xlu0 %1030
    %1032 = vrot.lane.b32.xlu0 %v997, 16
    %v1033 = vpop.permute.xlu0 %1032
    %1034 = vrot.lane.b32.xlu0 %v998, 16
    %v1035 = vpop.permute.xlu0 %1034
    %1036 = vrot.lane.b32.xlu0 %v999, 16
    %v1037 = vpop.permute.xlu0 %1036
    %1038 = vrot.lane.b32.xlu0 %v1000, 16
    %v1039 = vpop.permute.xlu0 %1038
    %1040 = vrot.lane.b32.xlu0 %v1001, 16
    %v1041 = vpop.permute.xlu0 %1040
    %1042 = vrot.lane.b32.xlu0 %v1002, 16
    %v1043 = vpop.permute.xlu0 %1042
    %1044 = vrot.lane.b32.xlu0 %v1003, 16
    %v1045 = vpop.permute.xlu0 %1044
    %1046 = vrot.lane.b32.xlu0 %v1004, 16
    %v1047 = vpop.permute.xlu0 %1046
    %1048 = vrot.lane.b32.xlu0 %v1005, 16
    %v1049 = vpop.permute.xlu0 %1048
    %1050 = vrot.lane.b32.xlu0 %v1006, 16
    %v1051 = vpop.permute.xlu0 %1050
    %1052 = vrot.lane.b32.xlu0 %v1007, 16
    %v1053 = vpop.permute.xlu0 %1052
    %1054 = vrot.lane.b32.xlu0 %v1008, 16
    %v1055 = vpop.permute.xlu0 %1054
    %1056 = vrot.lane.b32.xlu0 %v1009, 16
    %v1057 = vpop.permute.xlu0 %1056
    %vm1074 = vcmask 162944
    %1075 = vst.msk [vmem:[#allocation2] sm:$0xff] %vm1074, %v1027
    %1076 = vst.msk [vmem:[#allocation2 + $0x8] sm:$0xff] %vm1074, %v1029
    %1077 = vst.msk [vmem:[#allocation2 + $0x10] sm:$0xff] %vm1074, %v1031
    %1078 = vst.msk [vmem:[#allocation2 + $0x18] sm:$0xff] %vm1074, %v1033
    %1079 = vst.msk [vmem:[#allocation2 + $0x20] sm:$0xff] %vm1074, %v1035
    %1080 = vst.msk [vmem:[#allocation2 + $0x28] sm:$0xff] %vm1074, %v1037
    %1081 = vst.msk [vmem:[#allocation2 + $0x30] sm:$0xff] %vm1074, %v1039
    %1082 = vst.msk [vmem:[#allocation2 + $0x38] sm:$0xff] %vm1074, %v1041
    %1083 = vst.msk [vmem:[#allocation2 + $0x40] sm:$0xff] %vm1074, %v1043
    %1084 = vst.msk [vmem:[#allocation2 + $0x48] sm:$0xff] %vm1074, %v1045
    %1085 = vst.msk [vmem:[#allocation2 + $0x50] sm:$0xff] %vm1074, %v1047
    %1086 = vst.msk [vmem:[#allocation2 + $0x58] sm:$0xff] %vm1074, %v1049
    %1087 = vst.msk [vmem:[#allocation2 + $0x60] sm:$0xff] %vm1074, %v1051
    %1088 = vst.msk [vmem:[#allocation2 + $0x68] sm:$0xff] %vm1074, %v1053
    %1089 = vst.msk [vmem:[#allocation2 + $0x70] sm:$0xff] %vm1074, %v1055
    %1090 = vst.msk [vmem:[#allocation2 + $0x78] sm:$0xff] %vm1074, %v1057
    %v1091 = vpack.c.bf16 %v963, %v962
    %v1092 = vpack.c.bf16 %v965, %v964
    %v1093 = vpack.c.bf16 %v967, %v966
    %v1094 = vpack.c.bf16 %v969, %v968
    %v1095 = vpack.c.bf16 %v971, %v970
    %v1096 = vpack.c.bf16 %v973, %v972
    %v1097 = vpack.c.bf16 %v975, %v974
    %v1098 = vpack.c.bf16 %v977, %v976
    %v1099 = vpack.c.bf16 %v979, %v978
    %v1100 = vpack.c.bf16 %v981, %v980
    %v1101 = vpack.c.bf16 %v983, %v982
    %v1102 = vpack.c.bf16 %v985, %v984
    %v1103 = vpack.c.bf16 %v987, %v986
    %v1104 = vpack.c.bf16 %v989, %v988
    %v1105 = vpack.c.bf16 %v991, %v990
    %v1106 = vpack.c.bf16 %v993, %v992
    %1123 = vrot.lane.b32.xlu0 %v1091, 16
    %v1124 = vpop.permute.xlu0 %1123
    %1125 = vrot.lane.b32.xlu0 %v1092, 16
    %v1126 = vpop.permute.xlu0 %1125
    %1127 = vrot.lane.b32.xlu0 %v1093, 16
    %v1128 = vpop.permute.xlu0 %1127
    %1129 = vrot.lane.b32.xlu0 %v1094, 16
    %v1130 = vpop.permute.xlu0 %1129
    %1131 = vrot.lane.b32.xlu0 %v1095, 16
    %v1132 = vpop.permute.xlu0 %1131
    %1133 = vrot.lane.b32.xlu0 %v1096, 16
    %v1134 = vpop.permute.xlu0 %1133
    %1135 = vrot.lane.b32.xlu0 %v1097, 16
    %v1136 = vpop.permute.xlu0 %1135
    %1137 = vrot.lane.b32.xlu0 %v1098, 16
    %v1138 = vpop.permute.xlu0 %1137
    %1139 = vrot.lane.b32.xlu0 %v1099, 16
    %v1140 = vpop.permute.xlu0 %1139
    %1141 = vrot.lane.b32.xlu0 %v1100, 16
    %v1142 = vpop.permute.xlu0 %1141
    %1143 = vrot.lane.b32.xlu0 %v1101, 16
    %v1144 = vpop.permute.xlu0 %1143
    %1145 = vrot.lane.b32.xlu0 %v1102, 16
    %v1146 = vpop.permute.xlu0 %1145
    %1147 = vrot.lane.b32.xlu0 %v1103, 16
    %v1148 = vpop.permute.xlu0 %1147
    %1149 = vrot.lane.b32.xlu0 %v1104, 16
    %v1150 = vpop.permute.xlu0 %1149
    %1151 = vrot.lane.b32.xlu0 %v1105, 16
    %v1152 = vpop.permute.xlu0 %1151
    %1153 = vrot.lane.b32.xlu0 %v1106, 16
    %v1154 = vpop.permute.xlu0 %1153
    %1171 = vst.msk [vmem:[#allocation3] sm:$0xff] %vm1074, %v1124
    %1172 = vst.msk [vmem:[#allocation3 + $0x8] sm:$0xff] %vm1074, %v1126
    %1173 = vst.msk [vmem:[#allocation3 + $0x10] sm:$0xff] %vm1074, %v1128
    %1174 = vst.msk [vmem:[#allocation3 + $0x18] sm:$0xff] %vm1074, %v1130
    %1175 = vst.msk [vmem:[#allocation3 + $0x20] sm:$0xff] %vm1074, %v1132
    %1176 = vst.msk [vmem:[#allocation3 + $0x28] sm:$0xff] %vm1074, %v1134
    %1177 = vst.msk [vmem:[#allocation3 + $0x30] sm:$0xff] %vm1074, %v1136
    %1178 = vst.msk [vmem:[#allocation3 + $0x38] sm:$0xff] %vm1074, %v1138
    %1179 = vst.msk [vmem:[#allocation3 + $0x40] sm:$0xff] %vm1074, %v1140
    %1180 = vst.msk [vmem:[#allocation3 + $0x48] sm:$0xff] %vm1074, %v1142
    %1181 = vst.msk [vmem:[#allocation3 + $0x50] sm:$0xff] %vm1074, %v1144
    %1182 = vst.msk [vmem:[#allocation3 + $0x58] sm:$0xff] %vm1074, %v1146
    %1183 = vst.msk [vmem:[#allocation3 + $0x60] sm:$0xff] %vm1074, %v1148
    %1184 = vst.msk [vmem:[#allocation3 + $0x68] sm:$0xff] %vm1074, %v1150
    %1185 = vst.msk [vmem:[#allocation3 + $0x70] sm:$0xff] %vm1074, %v1152
    %1186 = vst.msk [vmem:[#allocation3 + $0x78] sm:$0xff] %vm1074, %v1154
    %v1187 = vld [vmem:[%s671 + $0x2] sm:$0xff]
    %v1188 = vld [vmem:[%s671 + $0xa] sm:$0xff]
    %v1189 = vld [vmem:[%s671 + $0x1a] sm:$0xff]
    %v1190 = vld [vmem:[%s671 + $0x22] sm:$0xff]
    %v1191 = vld [vmem:[%s671 + $0x32] sm:$0xff]
    %v1192 = vld [vmem:[%s671 + $0x3a] sm:$0xff]
    %v1193 = vld [vmem:[%s671 + $0x4a] sm:$0xff]
    %v1194 = vld [vmem:[%s671 + $0x52] sm:$0xff]
    %v1195 = vld [vmem:[%s671 + $0x62] sm:$0xff]
    %v1196 = vld [vmem:[%s671 + $0x6a] sm:$0xff]
    %v1197 = vld [vmem:[%s671 + $0x7a] sm:$0xff]
    %v1198 = vld [vmem:[%s671 + $0x82] sm:$0xff]
    %v1199 = vld [vmem:[%s671 + $0x92] sm:$0xff]
    %v1200 = vld [vmem:[%s671 + $0x9a] sm:$0xff]
    %v1201 = vld [vmem:[%s671 + $0xaa] sm:$0xff]
    %v1202 = vld [vmem:[%s671 + $0xb2] sm:$0xff]
    %v1203 = vld [vmem:[%s671 + $0xc2] sm:$0xff]
    %v1204 = vld [vmem:[%s671 + $0xca] sm:$0xff]
    %v1205 = vld [vmem:[%s671 + $0xda] sm:$0xff]
    %v1206 = vld [vmem:[%s671 + $0xe2] sm:$0xff]
    %v1207 = vld [vmem:[%s671 + $0xf2] sm:$0xff]
    %v1208 = vld [vmem:[%s671 + $0xfa] sm:$0xff]
    %v1209 = vld [vmem:[%s671 + $0x10a] sm:$0xff]
    %v1210 = vld [vmem:[%s671 + $0x112] sm:$0xff]
    %v1211 = vld [vmem:[%s671 + $0x122] sm:$0xff]
    %v1212 = vld [vmem:[%s671 + $0x12a] sm:$0xff]
    %v1213 = vld [vmem:[%s671 + $0x13a] sm:$0xff]
    %v1214 = vld [vmem:[%s671 + $0x142] sm:$0xff]
    %v1215 = vld [vmem:[%s671 + $0x152] sm:$0xff]
    %v1216 = vld [vmem:[%s671 + $0x15a] sm:$0xff]
    %v1217 = vld [vmem:[%s671 + $0x16a] sm:$0xff]
    %v1218 = vld [vmem:[%s671 + $0x172] sm:$0xff]
    %v1219 = vld [vmem:[%s704 + $0x2] sm:$0xff]
    %v1220 = vld [vmem:[%s704 + $0xa] sm:$0xff]
    %v1221 = vld [vmem:[%s704 + $0x1a] sm:$0xff]
    %v1222 = vld [vmem:[%s704 + $0x22] sm:$0xff]
    %v1223 = vld [vmem:[%s704 + $0x32] sm:$0xff]
    %v1224 = vld [vmem:[%s704 + $0x3a] sm:$0xff]
    %v1225 = vld [vmem:[%s704 + $0x4a] sm:$0xff]
    %v1226 = vld [vmem:[%s704 + $0x52] sm:$0xff]
    %v1227 = vld [vmem:[%s704 + $0x62] sm:$0xff]
    %v1228 = vld [vmem:[%s704 + $0x6a] sm:$0xff]
    %v1229 = vld [vmem:[%s704 + $0x7a] sm:$0xff]
    %v1230 = vld [vmem:[%s704 + $0x82] sm:$0xff]
    %v1231 = vld [vmem:[%s704 + $0x92] sm:$0xff]
    %v1232 = vld [vmem:[%s704 + $0x9a] sm:$0xff]
    %v1233 = vld [vmem:[%s704 + $0xaa] sm:$0xff]
    %v1234 = vld [vmem:[%s704 + $0xb2] sm:$0xff]
    %v1235 = vld [vmem:[%s704 + $0xc2] sm:$0xff]
    %v1236 = vld [vmem:[%s704 + $0xca] sm:$0xff]
    %v1237 = vld [vmem:[%s704 + $0xda] sm:$0xff]
    %v1238 = vld [vmem:[%s704 + $0xe2] sm:$0xff]
    %v1239 = vld [vmem:[%s704 + $0xf2] sm:$0xff]
    %v1240 = vld [vmem:[%s704 + $0xfa] sm:$0xff]
    %v1241 = vld [vmem:[%s704 + $0x10a] sm:$0xff]
    %v1242 = vld [vmem:[%s704 + $0x112] sm:$0xff]
    %v1243 = vld [vmem:[%s704 + $0x122] sm:$0xff]
    %v1244 = vld [vmem:[%s704 + $0x12a] sm:$0xff]
    %v1245 = vld [vmem:[%s704 + $0x13a] sm:$0xff]
    %v1246 = vld [vmem:[%s704 + $0x142] sm:$0xff]
    %v1247 = vld [vmem:[%s704 + $0x152] sm:$0xff]
    %v1248 = vld [vmem:[%s704 + $0x15a] sm:$0xff]
    %v1249 = vld [vmem:[%s704 + $0x16a] sm:$0xff]
    %v1250 = vld [vmem:[%s704 + $0x172] sm:$0xff]
    %v1251 = vpack.c.bf16 %v1188, %v1187
    %v1252 = vpack.c.bf16 %v1190, %v1189
    %v1253 = vpack.c.bf16 %v1192, %v1191
    %v1254 = vpack.c.bf16 %v1194, %v1193
    %v1255 = vpack.c.bf16 %v1196, %v1195
    %v1256 = vpack.c.bf16 %v1198, %v1197
    %v1257 = vpack.c.bf16 %v1200, %v1199
    %v1258 = vpack.c.bf16 %v1202, %v1201
    %v1259 = vpack.c.bf16 %v1204, %v1203
    %v1260 = vpack.c.bf16 %v1206, %v1205
    %v1261 = vpack.c.bf16 %v1208, %v1207
    %v1262 = vpack.c.bf16 %v1210, %v1209
    %v1263 = vpack.c.bf16 %v1212, %v1211
    %v1264 = vpack.c.bf16 %v1214, %v1213
    %v1265 = vpack.c.bf16 %v1216, %v1215
    %v1266 = vpack.c.bf16 %v1218, %v1217
    %1283 = vrot.lane.b32.xlu0 %v1251, 20
    %v1284 = vpop.permute.xlu0 %1283
    %1285 = vrot.lane.b32.xlu0 %v1252, 20
    %v1286 = vpop.permute.xlu0 %1285
    %1287 = vrot.lane.b32.xlu0 %v1253, 20
    %v1288 = vpop.permute.xlu0 %1287
    %1289 = vrot.lane.b32.xlu0 %v1254, 20
    %v1290 = vpop.permute.xlu0 %1289
    %1291 = vrot.lane.b32.xlu0 %v1255, 20
    %v1292 = vpop.permute.xlu0 %1291
    %1293 = vrot.lane.b32.xlu0 %v1256, 20
    %v1294 = vpop.permute.xlu0 %1293
    %1295 = vrot.lane.b32.xlu0 %v1257, 20
    %v1296 = vpop.permute.xlu0 %1295
    %1297 = vrot.lane.b32.xlu0 %v1258, 20
    %v1298 = vpop.permute.xlu0 %1297
    %1299 = vrot.lane.b32.xlu0 %v1259, 20
    %v1300 = vpop.permute.xlu0 %1299
    %1301 = vrot.lane.b32.xlu0 %v1260, 20
    %v1302 = vpop.permute.xlu0 %1301
    %1303 = vrot.lane.b32.xlu0 %v1261, 20
    %v1304 = vpop.permute.xlu0 %1303
    %1305 = vrot.lane.b32.xlu0 %v1262, 20
    %v1306 = vpop.permute.xlu0 %1305
    %1307 = vrot.lane.b32.xlu0 %v1263, 20
    %v1308 = vpop.permute.xlu0 %1307
    %1309 = vrot.lane.b32.xlu0 %v1264, 20
    %v1310 = vpop.permute.xlu0 %1309
    %1311 = vrot.lane.b32.xlu0 %v1265, 20
    %v1312 = vpop.permute.xlu0 %1311
    %1313 = vrot.lane.b32.xlu0 %v1266, 20
    %v1314 = vpop.permute.xlu0 %1313
    %vm1331 = vcmask 195744
    %1332 = vst.msk [vmem:[#allocation2] sm:$0xff] %vm1331, %v1284
    %1333 = vst.msk [vmem:[#allocation2 + $0x8] sm:$0xff] %vm1331, %v1286
    %1334 = vst.msk [vmem:[#allocation2 + $0x10] sm:$0xff] %vm1331, %v1288
    %1335 = vst.msk [vmem:[#allocation2 + $0x18] sm:$0xff] %vm1331, %v1290
    %1336 = vst.msk [vmem:[#allocation2 + $0x20] sm:$0xff] %vm1331, %v1292
    %1337 = vst.msk [vmem:[#allocation2 + $0x28] sm:$0xff] %vm1331, %v1294
    %1338 = vst.msk [vmem:[#allocation2 + $0x30] sm:$0xff] %vm1331, %v1296
    %1339 = vst.msk [vmem:[#allocation2 + $0x38] sm:$0xff] %vm1331, %v1298
    %1340 = vst.msk [vmem:[#allocation2 + $0x40] sm:$0xff] %vm1331, %v1300
    %1341 = vst.msk [vmem:[#allocation2 + $0x48] sm:$0xff] %vm1331, %v1302
    %1342 = vst.msk [vmem:[#allocation2 + $0x50] sm:$0xff] %vm1331, %v1304
    %1343 = vst.msk [vmem:[#allocation2 + $0x58] sm:$0xff] %vm1331, %v1306
    %1344 = vst.msk [vmem:[#allocation2 + $0x60] sm:$0xff] %vm1331, %v1308
    %1345 = vst.msk [vmem:[#allocation2 + $0x68] sm:$0xff] %vm1331, %v1310
    %1346 = vst.msk [vmem:[#allocation2 + $0x70] sm:$0xff] %vm1331, %v1312
    %1347 = vst.msk [vmem:[#allocation2 + $0x78] sm:$0xff] %vm1331, %v1314
    %v1348 = vpack.c.bf16 %v1220, %v1219
    %v1349 = vpack.c.bf16 %v1222, %v1221
    %v1350 = vpack.c.bf16 %v1224, %v1223
    %v1351 = vpack.c.bf16 %v1226, %v1225
    %v1352 = vpack.c.bf16 %v1228, %v1227
    %v1353 = vpack.c.bf16 %v1230, %v1229
    %v1354 = vpack.c.bf16 %v1232, %v1231
    %v1355 = vpack.c.bf16 %v1234, %v1233
    %v1356 = vpack.c.bf16 %v1236, %v1235
    %v1357 = vpack.c.bf16 %v1238, %v1237
    %v1358 = vpack.c.bf16 %v1240, %v1239
    %v1359 = vpack.c.bf16 %v1242, %v1241
    %v1360 = vpack.c.bf16 %v1244, %v1243
    %v1361 = vpack.c.bf16 %v1246, %v1245
    %v1362 = vpack.c.bf16 %v1248, %v1247
    %v1363 = vpack.c.bf16 %v1250, %v1249
    %1380 = vrot.lane.b32.xlu0 %v1348, 20
    %v1381 = vpop.permute.xlu0 %1380
    %1382 = vrot.lane.b32.xlu0 %v1349, 20
    %v1383 = vpop.permute.xlu0 %1382
    %1384 = vrot.lane.b32.xlu0 %v1350, 20
    %v1385 = vpop.permute.xlu0 %1384
    %1386 = vrot.lane.b32.xlu0 %v1351, 20
    %v1387 = vpop.permute.xlu0 %1386
    %1388 = vrot.lane.b32.xlu0 %v1352, 20
    %v1389 = vpop.permute.xlu0 %1388
    %1390 = vrot.lane.b32.xlu0 %v1353, 20
    %v1391 = vpop.permute.xlu0 %1390
    %1392 = vrot.lane.b32.xlu0 %v1354, 20
    %v1393 = vpop.permute.xlu0 %1392
    %1394 = vrot.lane.b32.xlu0 %v1355, 20
    %v1395 = vpop.permute.xlu0 %1394
    %1396 = vrot.lane.b32.xlu0 %v1356, 20
    %v1397 = vpop.permute.xlu0 %1396
    %1398 = vrot.lane.b32.xlu0 %v1357, 20
    %v1399 = vpop.permute.xlu0 %1398
    %1400 = vrot.lane.b32.xlu0 %v1358, 20
    %v1401 = vpop.permute.xlu0 %1400
    %1402 = vrot.lane.b32.xlu0 %v1359, 20
    %v1403 = vpop.permute.xlu0 %1402
    %1404 = vrot.lane.b32.xlu0 %v1360, 20
    %v1405 = vpop.permute.xlu0 %1404
    %1406 = vrot.lane.b32.xlu0 %v1361, 20
    %v1407 = vpop.permute.xlu0 %1406
    %1408 = vrot.lane.b32.xlu0 %v1362, 20
    %v1409 = vpop.permute.xlu0 %1408
    %1410 = vrot.lane.b32.xlu0 %v1363, 20
    %v1411 = vpop.permute.xlu0 %1410
    %1428 = vst.msk [vmem:[#allocation3] sm:$0xff] %vm1331, %v1381
    %1429 = vst.msk [vmem:[#allocation3 + $0x8] sm:$0xff] %vm1331, %v1383
    %1430 = vst.msk [vmem:[#allocation3 + $0x10] sm:$0xff] %vm1331, %v1385
    %1431 = vst.msk [vmem:[#allocation3 + $0x18] sm:$0xff] %vm1331, %v1387
    %1432 = vst.msk [vmem:[#allocation3 + $0x20] sm:$0xff] %vm1331, %v1389
    %1433 = vst.msk [vmem:[#allocation3 + $0x28] sm:$0xff] %vm1331, %v1391
    %1434 = vst.msk [vmem:[#allocation3 + $0x30] sm:$0xff] %vm1331, %v1393
    %1435 = vst.msk [vmem:[#allocation3 + $0x38] sm:$0xff] %vm1331, %v1395
    %1436 = vst.msk [vmem:[#allocation3 + $0x40] sm:$0xff] %vm1331, %v1397
    %1437 = vst.msk [vmem:[#allocation3 + $0x48] sm:$0xff] %vm1331, %v1399
    %1438 = vst.msk [vmem:[#allocation3 + $0x50] sm:$0xff] %vm1331, %v1401
    %1439 = vst.msk [vmem:[#allocation3 + $0x58] sm:$0xff] %vm1331, %v1403
    %1440 = vst.msk [vmem:[#allocation3 + $0x60] sm:$0xff] %vm1331, %v1405
    %1441 = vst.msk [vmem:[#allocation3 + $0x68] sm:$0xff] %vm1331, %v1407
    %1442 = vst.msk [vmem:[#allocation3 + $0x70] sm:$0xff] %vm1331, %v1409
    %1443 = vst.msk [vmem:[#allocation3 + $0x78] sm:$0xff] %vm1331, %v1411
    %s1444 = scalar_lea.vmem %s0, 48
    %v1445 = vld [vmem:[%s1444] sm:$0xff]
    %v1446 = vld [vmem:[%s1444 + $0x8] sm:$0xff]
    %v1447 = vld [vmem:[%s1444 + $0x18] sm:$0xff]
    %v1448 = vld [vmem:[%s1444 + $0x20] sm:$0xff]
    %v1449 = vld [vmem:[%s1444 + $0x30] sm:$0xff]
    %v1450 = vld [vmem:[%s1444 + $0x38] sm:$0xff]
    %v1451 = vld [vmem:[%s1444 + $0x48] sm:$0xff]
    %v1452 = vld [vmem:[%s1444 + $0x50] sm:$0xff]
    %v1453 = vld [vmem:[%s1444 + $0x60] sm:$0xff]
    %v1454 = vld [vmem:[%s1444 + $0x68] sm:$0xff]
    %v1455 = vld [vmem:[%s1444 + $0x78] sm:$0xff]
    %v1456 = vld [vmem:[%s1444 + $0x80] sm:$0xff]
    %v1457 = vld [vmem:[%s1444 + $0x90] sm:$0xff]
    %v1458 = vld [vmem:[%s1444 + $0x98] sm:$0xff]
    %v1459 = vld [vmem:[%s1444 + $0xa8] sm:$0xff]
    %v1460 = vld [vmem:[%s1444 + $0xb0] sm:$0xff]
    %v1461 = vld [vmem:[%s1444 + $0xc0] sm:$0xff]
    %v1462 = vld [vmem:[%s1444 + $0xc8] sm:$0xff]
    %v1463 = vld [vmem:[%s1444 + $0xd8] sm:$0xff]
    %v1464 = vld [vmem:[%s1444 + $0xe0] sm:$0xff]
    %v1465 = vld [vmem:[%s1444 + $0xf0] sm:$0xff]
    %v1466 = vld [vmem:[%s1444 + $0xf8] sm:$0xff]
    %v1467 = vld [vmem:[%s1444 + $0x108] sm:$0xff]
    %v1468 = vld [vmem:[%s1444 + $0x110] sm:$0xff]
    %v1469 = vld [vmem:[%s1444 + $0x120] sm:$0xff]
    %v1470 = vld [vmem:[%s1444 + $0x128] sm:$0xff]
    %v1471 = vld [vmem:[%s1444 + $0x138] sm:$0xff]
    %v1472 = vld [vmem:[%s1444 + $0x140] sm:$0xff]
    %v1473 = vld [vmem:[%s1444 + $0x150] sm:$0xff]
    %v1474 = vld [vmem:[%s1444 + $0x158] sm:$0xff]
    %v1475 = vld [vmem:[%s1444 + $0x168] sm:$0xff]
    %v1476 = vld [vmem:[%s1444 + $0x170] sm:$0xff]
    %s1477 = scalar_lea.vmem %s1, 48
    %v1478 = vld [vmem:[%s1477] sm:$0xff]
    %v1479 = vld [vmem:[%s1477 + $0x8] sm:$0xff]
    %v1480 = vld [vmem:[%s1477 + $0x18] sm:$0xff]
    %v1481 = vld [vmem:[%s1477 + $0x20] sm:$0xff]
    %v1482 = vld [vmem:[%s1477 + $0x30] sm:$0xff]
    %v1483 = vld [vmem:[%s1477 + $0x38] sm:$0xff]
    %v1484 = vld [vmem:[%s1477 + $0x48] sm:$0xff]
    %v1485 = vld [vmem:[%s1477 + $0x50] sm:$0xff]
    %v1486 = vld [vmem:[%s1477 + $0x60] sm:$0xff]
    %v1487 = vld [vmem:[%s1477 + $0x68] sm:$0xff]
    %v1488 = vld [vmem:[%s1477 + $0x78] sm:$0xff]
    %v1489 = vld [vmem:[%s1477 + $0x80] sm:$0xff]
    %v1490 = vld [vmem:[%s1477 + $0x90] sm:$0xff]
    %v1491 = vld [vmem:[%s1477 + $0x98] sm:$0xff]
    %v1492 = vld [vmem:[%s1477 + $0xa8] sm:$0xff]
    %v1493 = vld [vmem:[%s1477 + $0xb0] sm:$0xff]
    %v1494 = vld [vmem:[%s1477 + $0xc0] sm:$0xff]
    %v1495 = vld [vmem:[%s1477 + $0xc8] sm:$0xff]
    %v1496 = vld [vmem:[%s1477 + $0xd8] sm:$0xff]
    %v1497 = vld [vmem:[%s1477 + $0xe0] sm:$0xff]
    %v1498 = vld [vmem:[%s1477 + $0xf0] sm:$0xff]
    %v1499 = vld [vmem:[%s1477 + $0xf8] sm:$0xff]
    %v1500 = vld [vmem:[%s1477 + $0x108] sm:$0xff]
    %v1501 = vld [vmem:[%s1477 + $0x110] sm:$0xff]
    %v1502 = vld [vmem:[%s1477 + $0x120] sm:$0xff]
    %v1503 = vld [vmem:[%s1477 + $0x128] sm:$0xff]
    %v1504 = vld [vmem:[%s1477 + $0x138] sm:$0xff]
    %v1505 = vld [vmem:[%s1477 + $0x140] sm:$0xff]
    %v1506 = vld [vmem:[%s1477 + $0x150] sm:$0xff]
    %v1507 = vld [vmem:[%s1477 + $0x158] sm:$0xff]
    %v1508 = vld [vmem:[%s1477 + $0x168] sm:$0xff]
    %v1509 = vld [vmem:[%s1477 + $0x170] sm:$0xff]
    %v1510 = vpack.c.bf16 %v1446, %v1445
    %v1511 = vpack.c.bf16 %v1448, %v1447
    %v1512 = vpack.c.bf16 %v1450, %v1449
    %v1513 = vpack.c.bf16 %v1452, %v1451
    %v1514 = vpack.c.bf16 %v1454, %v1453
    %v1515 = vpack.c.bf16 %v1456, %v1455
    %v1516 = vpack.c.bf16 %v1458, %v1457
    %v1517 = vpack.c.bf16 %v1460, %v1459
    %v1518 = vpack.c.bf16 %v1462, %v1461
    %v1519 = vpack.c.bf16 %v1464, %v1463
    %v1520 = vpack.c.bf16 %v1466, %v1465
    %v1521 = vpack.c.bf16 %v1468, %v1467
    %v1522 = vpack.c.bf16 %v1470, %v1469
    %v1523 = vpack.c.bf16 %v1472, %v1471
    %v1524 = vpack.c.bf16 %v1474, %v1473
    %v1525 = vpack.c.bf16 %v1476, %v1475
    %1542 = vrot.lane.b32.xlu0 %v1510, 24
    %v1543 = vpop.permute.xlu0 %1542
    %1544 = vrot.lane.b32.xlu0 %v1511, 24
    %v1545 = vpop.permute.xlu0 %1544
    %1546 = vrot.lane.b32.xlu0 %v1512, 24
    %v1547 = vpop.permute.xlu0 %1546
    %1548 = vrot.lane.b32.xlu0 %v1513, 24
    %v1549 = vpop.permute.xlu0 %1548
    %1550 = vrot.lane.b32.xlu0 %v1514, 24
    %v1551 = vpop.permute.xlu0 %1550
    %1552 = vrot.lane.b32.xlu0 %v1515, 24
    %v1553 = vpop.permute.xlu0 %1552
    %1554 = vrot.lane.b32.xlu0 %v1516, 24
    %v1555 = vpop.permute.xlu0 %1554
    %1556 = vrot.lane.b32.xlu0 %v1517, 24
    %v1557 = vpop.permute.xlu0 %1556
    %1558 = vrot.lane.b32.xlu0 %v1518, 24
    %v1559 = vpop.permute.xlu0 %1558
    %1560 = vrot.lane.b32.xlu0 %v1519, 24
    %v1561 = vpop.permute.xlu0 %1560
    %1562 = vrot.lane.b32.xlu0 %v1520, 24
    %v1563 = vpop.permute.xlu0 %1562
    %1564 = vrot.lane.b32.xlu0 %v1521, 24
    %v1565 = vpop.permute.xlu0 %1564
    %1566 = vrot.lane.b32.xlu0 %v1522, 24
    %v1567 = vpop.permute.xlu0 %1566
    %1568 = vrot.lane.b32.xlu0 %v1523, 24
    %v1569 = vpop.permute.xlu0 %1568
    %1570 = vrot.lane.b32.xlu0 %v1524, 24
    %v1571 = vpop.permute.xlu0 %1570
    %1572 = vrot.lane.b32.xlu0 %v1525, 24
    %v1573 = vpop.permute.xlu0 %1572
    %vm1590 = vcmask 228544
    %1591 = vst.msk [vmem:[#allocation2] sm:$0xff] %vm1590, %v1543
    %1592 = vst.msk [vmem:[#allocation2 + $0x8] sm:$0xff] %vm1590, %v1545
    %1593 = vst.msk [vmem:[#allocation2 + $0x10] sm:$0xff] %vm1590, %v1547
    %1594 = vst.msk [vmem:[#allocation2 + $0x18] sm:$0xff] %vm1590, %v1549
    %1595 = vst.msk [vmem:[#allocation2 + $0x20] sm:$0xff] %vm1590, %v1551
    %1596 = vst.msk [vmem:[#allocation2 + $0x28] sm:$0xff] %vm1590, %v1553
    %1597 = vst.msk [vmem:[#allocation2 + $0x30] sm:$0xff] %vm1590, %v1555
    %1598 = vst.msk [vmem:[#allocation2 + $0x38] sm:$0xff] %vm1590, %v1557
    %1599 = vst.msk [vmem:[#allocation2 + $0x40] sm:$0xff] %vm1590, %v1559
    %1600 = vst.msk [vmem:[#allocation2 + $0x48] sm:$0xff] %vm1590, %v1561
    %1601 = vst.msk [vmem:[#allocation2 + $0x50] sm:$0xff] %vm1590, %v1563
    %1602 = vst.msk [vmem:[#allocation2 + $0x58] sm:$0xff] %vm1590, %v1565
    %1603 = vst.msk [vmem:[#allocation2 + $0x60] sm:$0xff] %vm1590, %v1567
    %1604 = vst.msk [vmem:[#allocation2 + $0x68] sm:$0xff] %vm1590, %v1569
    %1605 = vst.msk [vmem:[#allocation2 + $0x70] sm:$0xff] %vm1590, %v1571
    %1606 = vst.msk [vmem:[#allocation2 + $0x78] sm:$0xff] %vm1590, %v1573
    %v1607 = vpack.c.bf16 %v1479, %v1478
    %v1608 = vpack.c.bf16 %v1481, %v1480
    %v1609 = vpack.c.bf16 %v1483, %v1482
    %v1610 = vpack.c.bf16 %v1485, %v1484
    %v1611 = vpack.c.bf16 %v1487, %v1486
    %v1612 = vpack.c.bf16 %v1489, %v1488
    %v1613 = vpack.c.bf16 %v1491, %v1490
    %v1614 = vpack.c.bf16 %v1493, %v1492
    %v1615 = vpack.c.bf16 %v1495, %v1494
    %v1616 = vpack.c.bf16 %v1497, %v1496
    %v1617 = vpack.c.bf16 %v1499, %v1498
    %v1618 = vpack.c.bf16 %v1501, %v1500
    %v1619 = vpack.c.bf16 %v1503, %v1502
    %v1620 = vpack.c.bf16 %v1505, %v1504
    %v1621 = vpack.c.bf16 %v1507, %v1506
    %v1622 = vpack.c.bf16 %v1509, %v1508
    %1639 = vrot.lane.b32.xlu0 %v1607, 24
    %v1640 = vpop.permute.xlu0 %1639
    %1641 = vrot.lane.b32.xlu0 %v1608, 24
    %v1642 = vpop.permute.xlu0 %1641
    %1643 = vrot.lane.b32.xlu0 %v1609, 24
    %v1644 = vpop.permute.xlu0 %1643
    %1645 = vrot.lane.b32.xlu0 %v1610, 24
    %v1646 = vpop.permute.xlu0 %1645
    %1647 = vrot.lane.b32.xlu0 %v1611, 24
    %v1648 = vpop.permute.xlu0 %1647
    %1649 = vrot.lane.b32.xlu0 %v1612, 24
    %v1650 = vpop.permute.xlu0 %1649
    %1651 = vrot.lane.b32.xlu0 %v1613, 24
    %v1652 = vpop.permute.xlu0 %1651
    %1653 = vrot.lane.b32.xlu0 %v1614, 24
    %v1654 = vpop.permute.xlu0 %1653
    %1655 = vrot.lane.b32.xlu0 %v1615, 24
    %v1656 = vpop.permute.xlu0 %1655
    %1657 = vrot.lane.b32.xlu0 %v1616, 24
    %v1658 = vpop.permute.xlu0 %1657
    %1659 = vrot.lane.b32.xlu0 %v1617, 24
    %v1660 = vpop.permute.xlu0 %1659
    %1661 = vrot.lane.b32.xlu0 %v1618, 24
    %v1662 = vpop.permute.xlu0 %1661
    %1663 = vrot.lane.b32.xlu0 %v1619, 24
    %v1664 = vpop.permute.xlu0 %1663
    %1665 = vrot.lane.b32.xlu0 %v1620, 24
    %v1666 = vpop.permute.xlu0 %1665
    %1667 = vrot.lane.b32.xlu0 %v1621, 24
    %v1668 = vpop.permute.xlu0 %1667
    %1669 = vrot.lane.b32.xlu0 %v1622, 24
    %v1670 = vpop.permute.xlu0 %1669
    %1687 = vst.msk [vmem:[#allocation3] sm:$0xff] %vm1590, %v1640
    %1688 = vst.msk [vmem:[#allocation3 + $0x8] sm:$0xff] %vm1590, %v1642
    %1689 = vst.msk [vmem:[#allocation3 + $0x10] sm:$0xff] %vm1590, %v1644
    %1690 = vst.msk [vmem:[#allocation3 + $0x18] sm:$0xff] %vm1590, %v1646
    %1691 = vst.msk [vmem:[#allocation3 + $0x20] sm:$0xff] %vm1590, %v1648
    %1692 = vst.msk [vmem:[#allocation3 + $0x28] sm:$0xff] %vm1590, %v1650
    %1693 = vst.msk [vmem:[#allocation3 + $0x30] sm:$0xff] %vm1590, %v1652
    %1694 = vst.msk [vmem:[#allocation3 + $0x38] sm:$0xff] %vm1590, %v1654
    %1695 = vst.msk [vmem:[#allocation3 + $0x40] sm:$0xff] %vm1590, %v1656
    %1696 = vst.msk [vmem:[#allocation3 + $0x48] sm:$0xff] %vm1590, %v1658
    %1697 = vst.msk [vmem:[#allocation3 + $0x50] sm:$0xff] %vm1590, %v1660
    %1698 = vst.msk [vmem:[#allocation3 + $0x58] sm:$0xff] %vm1590, %v1662
    %1699 = vst.msk [vmem:[#allocation3 + $0x60] sm:$0xff] %vm1590, %v1664
    %1700 = vst.msk [vmem:[#allocation3 + $0x68] sm:$0xff] %vm1590, %v1666
    %1701 = vst.msk [vmem:[#allocation3 + $0x70] sm:$0xff] %vm1590, %v1668
    %1702 = vst.msk [vmem:[#allocation3 + $0x78] sm:$0xff] %vm1590, %v1670
    %v1703 = vld [vmem:[%s1444 + $0x1] sm:$0xff]
    %v1704 = vld [vmem:[%s1444 + $0x9] sm:$0xff]
    %v1705 = vld [vmem:[%s1444 + $0x19] sm:$0xff]
    %v1706 = vld [vmem:[%s1444 + $0x21] sm:$0xff]
    %v1707 = vld [vmem:[%s1444 + $0x31] sm:$0xff]
    %v1708 = vld [vmem:[%s1444 + $0x39] sm:$0xff]
    %v1709 = vld [vmem:[%s1444 + $0x49] sm:$0xff]
    %v1710 = vld [vmem:[%s1444 + $0x51] sm:$0xff]
    %v1711 = vld [vmem:[%s1444 + $0x61] sm:$0xff]
    %v1712 = vld [vmem:[%s1444 + $0x69] sm:$0xff]
    %v1713 = vld [vmem:[%s1444 + $0x79] sm:$0xff]
    %v1714 = vld [vmem:[%s1444 + $0x81] sm:$0xff]
    %v1715 = vld [vmem:[%s1444 + $0x91] sm:$0xff]
    %v1716 = vld [vmem:[%s1444 + $0x99] sm:$0xff]
    %v1717 = vld [vmem:[%s1444 + $0xa9] sm:$0xff]
    %v1718 = vld [vmem:[%s1444 + $0xb1] sm:$0xff]
    %v1719 = vld [vmem:[%s1444 + $0xc1] sm:$0xff]
    %v1720 = vld [vmem:[%s1444 + $0xc9] sm:$0xff]
    %v1721 = vld [vmem:[%s1444 + $0xd9] sm:$0xff]
    %v1722 = vld [vmem:[%s1444 + $0xe1] sm:$0xff]
    %v1723 = vld [vmem:[%s1444 + $0xf1] sm:$0xff]
    %v1724 = vld [vmem:[%s1444 + $0xf9] sm:$0xff]
    %v1725 = vld [vmem:[%s1444 + $0x109] sm:$0xff]
    %v1726 = vld [vmem:[%s1444 + $0x111] sm:$0xff]
    %v1727 = vld [vmem:[%s1444 + $0x121] sm:$0xff]
    %v1728 = vld [vmem:[%s1444 + $0x129] sm:$0xff]
    %v1729 = vld [vmem:[%s1444 + $0x139] sm:$0xff]
    %v1730 = vld [vmem:[%s1444 + $0x141] sm:$0xff]
    %v1731 = vld [vmem:[%s1444 + $0x151] sm:$0xff]
    %v1732 = vld [vmem:[%s1444 + $0x159] sm:$0xff]
    %v1733 = vld [vmem:[%s1444 + $0x169] sm:$0xff]
    %v1734 = vld [vmem:[%s1444 + $0x171] sm:$0xff]
    %v1735 = vld [vmem:[%s1477 + $0x1] sm:$0xff]
    %v1736 = vld [vmem:[%s1477 + $0x9] sm:$0xff]
    %v1737 = vld [vmem:[%s1477 + $0x19] sm:$0xff]
    %v1738 = vld [vmem:[%s1477 + $0x21] sm:$0xff]
    %v1739 = vld [vmem:[%s1477 + $0x31] sm:$0xff]
    %v1740 = vld [vmem:[%s1477 + $0x39] sm:$0xff]
    %v1741 = vld [vmem:[%s1477 + $0x49] sm:$0xff]
    %v1742 = vld [vmem:[%s1477 + $0x51] sm:$0xff]
    %v1743 = vld [vmem:[%s1477 + $0x61] sm:$0xff]
    %v1744 = vld [vmem:[%s1477 + $0x69] sm:$0xff]
    %v1745 = vld [vmem:[%s1477 + $0x79] sm:$0xff]
    %v1746 = vld [vmem:[%s1477 + $0x81] sm:$0xff]
    %v1747 = vld [vmem:[%s1477 + $0x91] sm:$0xff]
    %v1748 = vld [vmem:[%s1477 + $0x99] sm:$0xff]
    %v1749 = vld [vmem:[%s1477 + $0xa9] sm:$0xff]
    %v1750 = vld [vmem:[%s1477 + $0xb1] sm:$0xff]
    %v1751 = vld [vmem:[%s1477 + $0xc1] sm:$0xff]
    %v1752 = vld [vmem:[%s1477 + $0xc9] sm:$0xff]
    %v1753 = vld [vmem:[%s1477 + $0xd9] sm:$0xff]
    %v1754 = vld [vmem:[%s1477 + $0xe1] sm:$0xff]
    %v1755 = vld [vmem:[%s1477 + $0xf1] sm:$0xff]
    %v1756 = vld [vmem:[%s1477 + $0xf9] sm:$0xff]
    %v1757 = vld [vmem:[%s1477 + $0x109] sm:$0xff]
    %v1758 = vld [vmem:[%s1477 + $0x111] sm:$0xff]
    %v1759 = vld [vmem:[%s1477 + $0x121] sm:$0xff]
    %v1760 = vld [vmem:[%s1477 + $0x129] sm:$0xff]
    %v1761 = vld [vmem:[%s1477 + $0x139] sm:$0xff]
    %v1762 = vld [vmem:[%s1477 + $0x141] sm:$0xff]
    %v1763 = vld [vmem:[%s1477 + $0x151] sm:$0xff]
    %v1764 = vld [vmem:[%s1477 + $0x159] sm:$0xff]
    %v1765 = vld [vmem:[%s1477 + $0x169] sm:$0xff]
    %v1766 = vld [vmem:[%s1477 + $0x171] sm:$0xff]
    %v1767 = vpack.c.bf16 %v1704, %v1703
    %v1768 = vpack.c.bf16 %v1706, %v1705
    %v1769 = vpack.c.bf16 %v1708, %v1707
    %v1770 = vpack.c.bf16 %v1710, %v1709
    %v1771 = vpack.c.bf16 %v1712, %v1711
    %v1772 = vpack.c.bf16 %v1714, %v1713
    %v1773 = vpack.c.bf16 %v1716, %v1715
    %v1774 = vpack.c.bf16 %v1718, %v1717
    %v1775 = vpack.c.bf16 %v1720, %v1719
    %v1776 = vpack.c.bf16 %v1722, %v1721
    %v1777 = vpack.c.bf16 %v1724, %v1723
    %v1778 = vpack.c.bf16 %v1726, %v1725
    %v1779 = vpack.c.bf16 %v1728, %v1727
    %v1780 = vpack.c.bf16 %v1730, %v1729
    %v1781 = vpack.c.bf16 %v1732, %v1731
    %v1782 = vpack.c.bf16 %v1734, %v1733
    %1799 = vrot.lane.b32.xlu0 %v1767, 28
    %v1800 = vpop.permute.xlu0 %1799
    %1801 = vrot.lane.b32.xlu0 %v1768, 28
    %v1802 = vpop.permute.xlu0 %1801
    %1803 = vrot.lane.b32.xlu0 %v1769, 28
    %v1804 = vpop.permute.xlu0 %1803
    %1805 = vrot.lane.b32.xlu0 %v1770, 28
    %v1806 = vpop.permute.xlu0 %1805
    %1807 = vrot.lane.b32.xlu0 %v1771, 28
    %v1808 = vpop.permute.xlu0 %1807
    %1809 = vrot.lane.b32.xlu0 %v1772, 28
    %v1810 = vpop.permute.xlu0 %1809
    %1811 = vrot.lane.b32.xlu0 %v1773, 28
    %v1812 = vpop.permute.xlu0 %1811
    %1813 = vrot.lane.b32.xlu0 %v1774, 28
    %v1814 = vpop.permute.xlu0 %1813
    %1815 = vrot.lane.b32.xlu0 %v1775, 28
    %v1816 = vpop.permute.xlu0 %1815
    %1817 = vrot.lane.b32.xlu0 %v1776, 28
    %v1818 = vpop.permute.xlu0 %1817
    %1819 = vrot.lane.b32.xlu0 %v1777, 28
    %v1820 = vpop.permute.xlu0 %1819
    %1821 = vrot.lane.b32.xlu0 %v1778, 28
    %v1822 = vpop.permute.xlu0 %1821
    %1823 = vrot.lane.b32.xlu0 %v1779, 28
    %v1824 = vpop.permute.xlu0 %1823
    %1825 = vrot.lane.b32.xlu0 %v1780, 28
    %v1826 = vpop.permute.xlu0 %1825
    %1827 = vrot.lane.b32.xlu0 %v1781, 28
    %v1828 = vpop.permute.xlu0 %1827
    %1829 = vrot.lane.b32.xlu0 %v1782, 28
    %v1830 = vpop.permute.xlu0 %1829
    %vm1847 = vcmask 261344
    %1848 = vst.msk [vmem:[#allocation2] sm:$0xff] %vm1847, %v1800
    %1849 = vst.msk [vmem:[#allocation2 + $0x8] sm:$0xff] %vm1847, %v1802
    %1850 = vst.msk [vmem:[#allocation2 + $0x10] sm:$0xff] %vm1847, %v1804
    %1851 = vst.msk [vmem:[#allocation2 + $0x18] sm:$0xff] %vm1847, %v1806
    %1852 = vst.msk [vmem:[#allocation2 + $0x20] sm:$0xff] %vm1847, %v1808
    %1853 = vst.msk [vmem:[#allocation2 + $0x28] sm:$0xff] %vm1847, %v1810
    %1854 = vst.msk [vmem:[#allocation2 + $0x30] sm:$0xff] %vm1847, %v1812
    %1855 = vst.msk [vmem:[#allocation2 + $0x38] sm:$0xff] %vm1847, %v1814
    %1856 = vst.msk [vmem:[#allocation2 + $0x40] sm:$0xff] %vm1847, %v1816
    %1857 = vst.msk [vmem:[#allocation2 + $0x48] sm:$0xff] %vm1847, %v1818
    %1858 = vst.msk [vmem:[#allocation2 + $0x50] sm:$0xff] %vm1847, %v1820
    %1859 = vst.msk [vmem:[#allocation2 + $0x58] sm:$0xff] %vm1847, %v1822
    %1860 = vst.msk [vmem:[#allocation2 + $0x60] sm:$0xff] %vm1847, %v1824
    %1861 = vst.msk [vmem:[#allocation2 + $0x68] sm:$0xff] %vm1847, %v1826
    %1862 = vst.msk [vmem:[#allocation2 + $0x70] sm:$0xff] %vm1847, %v1828
    %1863 = vst.msk [vmem:[#allocation2 + $0x78] sm:$0xff] %vm1847, %v1830
    %v1864 = vpack.c.bf16 %v1736, %v1735
    %v1865 = vpack.c.bf16 %v1738, %v1737
    %v1866 = vpack.c.bf16 %v1740, %v1739
    %v1867 = vpack.c.bf16 %v1742, %v1741
    %v1868 = vpack.c.bf16 %v1744, %v1743
    %v1869 = vpack.c.bf16 %v1746, %v1745
    %v1870 = vpack.c.bf16 %v1748, %v1747
    %v1871 = vpack.c.bf16 %v1750, %v1749
    %v1872 = vpack.c.bf16 %v1752, %v1751
    %v1873 = vpack.c.bf16 %v1754, %v1753
    %v1874 = vpack.c.bf16 %v1756, %v1755
    %v1875 = vpack.c.bf16 %v1758, %v1757
    %v1876 = vpack.c.bf16 %v1760, %v1759
    %v1877 = vpack.c.bf16 %v1762, %v1761
    %v1878 = vpack.c.bf16 %v1764, %v1763
    %v1879 = vpack.c.bf16 %v1766, %v1765
    %1896 = vrot.lane.b32.xlu0 %v1864, 28
    %v1897 = vpop.permute.xlu0 %1896
    %1898 = vrot.lane.b32.xlu0 %v1865, 28
    %v1899 = vpop.permute.xlu0 %1898
    %1900 = vrot.lane.b32.xlu0 %v1866, 28
    %v1901 = vpop.permute.xlu0 %1900
    %1902 = vrot.lane.b32.xlu0 %v1867, 28
    %v1903 = vpop.permute.xlu0 %1902
    %1904 = vrot.lane.b32.xlu0 %v1868, 28
    %v1905 = vpop.permute.xlu0 %1904
    %1906 = vrot.lane.b32.xlu0 %v1869, 28
    %v1907 = vpop.permute.xlu0 %1906
    %1908 = vrot.lane.b32.xlu0 %v1870, 28
    %v1909 = vpop.permute.xlu0 %1908
    %1910 = vrot.lane.b32.xlu0 %v1871, 28
    %v1911 = vpop.permute.xlu0 %1910
    %1912 = vrot.lane.b32.xlu0 %v1872, 28
    %v1913 = vpop.permute.xlu0 %1912
    %1914 = vrot.lane.b32.xlu0 %v1873, 28
    %v1915 = vpop.permute.xlu0 %1914
    %1916 = vrot.lane.b32.xlu0 %v1874, 28
    %v1917 = vpop.permute.xlu0 %1916
    %1918 = vrot.lane.b32.xlu0 %v1875, 28
    %v1919 = vpop.permute.xlu0 %1918
    %1920 = vrot.lane.b32.xlu0 %v1876, 28
    %v1921 = vpop.permute.xlu0 %1920
    %1922 = vrot.lane.b32.xlu0 %v1877, 28
    %v1923 = vpop.permute.xlu0 %1922
    %1924 = vrot.lane.b32.xlu0 %v1878, 28
    %v1925 = vpop.permute.xlu0 %1924
    %1926 = vrot.lane.b32.xlu0 %v1879, 28
    %v1927 = vpop.permute.xlu0 %1926
    %1944 = vst.msk [vmem:[#allocation3] sm:$0xff] %vm1847, %v1897
    %1945 = vst.msk [vmem:[#allocation3 + $0x8] sm:$0xff] %vm1847, %v1899
    %1946 = vst.msk [vmem:[#allocation3 + $0x10] sm:$0xff] %vm1847, %v1901
    %1947 = vst.msk [vmem:[#allocation3 + $0x18] sm:$0xff] %vm1847, %v1903
    %1948 = vst.msk [vmem:[#allocation3 + $0x20] sm:$0xff] %vm1847, %v1905
    %1949 = vst.msk [vmem:[#allocation3 + $0x28] sm:$0xff] %vm1847, %v1907
    %1950 = vst.msk [vmem:[#allocation3 + $0x30] sm:$0xff] %vm1847, %v1909
    %1951 = vst.msk [vmem:[#allocation3 + $0x38] sm:$0xff] %vm1847, %v1911
    %1952 = vst.msk [vmem:[#allocation3 + $0x40] sm:$0xff] %vm1847, %v1913
    %1953 = vst.msk [vmem:[#allocation3 + $0x48] sm:$0xff] %vm1847, %v1915
    %1954 = vst.msk [vmem:[#allocation3 + $0x50] sm:$0xff] %vm1847, %v1917
    %1955 = vst.msk [vmem:[#allocation3 + $0x58] sm:$0xff] %vm1847, %v1919
    %1956 = vst.msk [vmem:[#allocation3 + $0x60] sm:$0xff] %vm1847, %v1921
    %1957 = vst.msk [vmem:[#allocation3 + $0x68] sm:$0xff] %vm1847, %v1923
    %1958 = vst.msk [vmem:[#allocation3 + $0x70] sm:$0xff] %vm1847, %v1925
    %1959 = vst.msk [vmem:[#allocation3 + $0x78] sm:$0xff] %vm1847, %v1927
    %v1960 = vld [vmem:[%s1444 + $0x2] sm:$0xff]
    %v1961 = vld [vmem:[%s1444 + $0xa] sm:$0xff]
    %v1962 = vld [vmem:[%s1444 + $0x1a] sm:$0xff]
    %v1963 = vld [vmem:[%s1444 + $0x22] sm:$0xff]
    %v1964 = vld [vmem:[%s1444 + $0x32] sm:$0xff]
    %v1965 = vld [vmem:[%s1444 + $0x3a] sm:$0xff]
    %v1966 = vld [vmem:[%s1444 + $0x4a] sm:$0xff]
    %v1967 = vld [vmem:[%s1444 + $0x52] sm:$0xff]
    %v1968 = vld [vmem:[%s1444 + $0x62] sm:$0xff]
    %v1969 = vld [vmem:[%s1444 + $0x6a] sm:$0xff]
    %v1970 = vld [vmem:[%s1444 + $0x7a] sm:$0xff]
    %v1971 = vld [vmem:[%s1444 + $0x82] sm:$0xff]
    %v1972 = vld [vmem:[%s1444 + $0x92] sm:$0xff]
    %v1973 = vld [vmem:[%s1444 + $0x9a] sm:$0xff]
    %v1974 = vld [vmem:[%s1444 + $0xaa] sm:$0xff]
    %v1975 = vld [vmem:[%s1444 + $0xb2] sm:$0xff]
    %v1976 = vld [vmem:[%s1444 + $0xc2] sm:$0xff]
    %v1977 = vld [vmem:[%s1444 + $0xca] sm:$0xff]
    %v1978 = vld [vmem:[%s1444 + $0xda] sm:$0xff]
    %v1979 = vld [vmem:[%s1444 + $0xe2] sm:$0xff]
    %v1980 = vld [vmem:[%s1444 + $0xf2] sm:$0xff]
    %v1981 = vld [vmem:[%s1444 + $0xfa] sm:$0xff]
    %v1982 = vld [vmem:[%s1444 + $0x10a] sm:$0xff]
    %v1983 = vld [vmem:[%s1444 + $0x112] sm:$0xff]
    %v1984 = vld [vmem:[%s1444 + $0x122] sm:$0xff]
    %v1985 = vld [vmem:[%s1444 + $0x12a] sm:$0xff]
    %v1986 = vld [vmem:[%s1444 + $0x13a] sm:$0xff]
    %v1987 = vld [vmem:[%s1444 + $0x142] sm:$0xff]
    %v1988 = vld [vmem:[%s1444 + $0x152] sm:$0xff]
    %v1989 = vld [vmem:[%s1444 + $0x15a] sm:$0xff]
    %v1990 = vld [vmem:[%s1444 + $0x16a] sm:$0xff]
    %v1991 = vld [vmem:[%s1444 + $0x172] sm:$0xff]
    %v1992 = vld [vmem:[%s1477 + $0x2] sm:$0xff]
    %v1993 = vld [vmem:[%s1477 + $0xa] sm:$0xff]
    %v1994 = vld [vmem:[%s1477 + $0x1a] sm:$0xff]
    %v1995 = vld [vmem:[%s1477 + $0x22] sm:$0xff]
    %v1996 = vld [vmem:[%s1477 + $0x32] sm:$0xff]
    %v1997 = vld [vmem:[%s1477 + $0x3a] sm:$0xff]
    %v1998 = vld [vmem:[%s1477 + $0x4a] sm:$0xff]
    %v1999 = vld [vmem:[%s1477 + $0x52] sm:$0xff]
    %v2000 = vld [vmem:[%s1477 + $0x62] sm:$0xff]
    %v2001 = vld [vmem:[%s1477 + $0x6a] sm:$0xff]
    %v2002 = vld [vmem:[%s1477 + $0x7a] sm:$0xff]
    %v2003 = vld [vmem:[%s1477 + $0x82] sm:$0xff]
    %v2004 = vld [vmem:[%s1477 + $0x92] sm:$0xff]
    %v2005 = vld [vmem:[%s1477 + $0x9a] sm:$0xff]
    %v2006 = vld [vmem:[%s1477 + $0xaa] sm:$0xff]
    %v2007 = vld [vmem:[%s1477 + $0xb2] sm:$0xff]
    %v2008 = vld [vmem:[%s1477 + $0xc2] sm:$0xff]
    %v2009 = vld [vmem:[%s1477 + $0xca] sm:$0xff]
    %v2010 = vld [vmem:[%s1477 + $0xda] sm:$0xff]
    %v2011 = vld [vmem:[%s1477 + $0xe2] sm:$0xff]
    %v2012 = vld [vmem:[%s1477 + $0xf2] sm:$0xff]
    %v2013 = vld [vmem:[%s1477 + $0xfa] sm:$0xff]
    %v2014 = vld [vmem:[%s1477 + $0x10a] sm:$0xff]
    %v2015 = vld [vmem:[%s1477 + $0x112] sm:$0xff]
    %v2016 = vld [vmem:[%s1477 + $0x122] sm:$0xff]
    %v2017 = vld [vmem:[%s1477 + $0x12a] sm:$0xff]
    %v2018 = vld [vmem:[%s1477 + $0x13a] sm:$0xff]
    %v2019 = vld [vmem:[%s1477 + $0x142] sm:$0xff]
    %v2020 = vld [vmem:[%s1477 + $0x152] sm:$0xff]
    %v2021 = vld [vmem:[%s1477 + $0x15a] sm:$0xff]
    %v2022 = vld [vmem:[%s1477 + $0x16a] sm:$0xff]
    %v2023 = vld [vmem:[%s1477 + $0x172] sm:$0xff]
    %v2024 = vpack.c.bf16 %v1961, %v1960
    %v2025 = vpack.c.bf16 %v1963, %v1962
    %v2026 = vpack.c.bf16 %v1965, %v1964
    %v2027 = vpack.c.bf16 %v1967, %v1966
    %v2028 = vpack.c.bf16 %v1969, %v1968
    %v2029 = vpack.c.bf16 %v1971, %v1970
    %v2030 = vpack.c.bf16 %v1973, %v1972
    %v2031 = vpack.c.bf16 %v1975, %v1974
    %v2032 = vpack.c.bf16 %v1977, %v1976
    %v2033 = vpack.c.bf16 %v1979, %v1978
    %v2034 = vpack.c.bf16 %v1981, %v1980
    %v2035 = vpack.c.bf16 %v1983, %v1982
    %v2036 = vpack.c.bf16 %v1985, %v1984
    %v2037 = vpack.c.bf16 %v1987, %v1986
    %v2038 = vpack.c.bf16 %v1989, %v1988
    %v2039 = vpack.c.bf16 %v1991, %v1990
    %2056 = vrot.lane.b32.xlu0 %v2024, 32
    %v2057 = vpop.permute.xlu0 %2056
    %2058 = vrot.lane.b32.xlu0 %v2025, 32
    %v2059 = vpop.permute.xlu0 %2058
    %2060 = vrot.lane.b32.xlu0 %v2026, 32
    %v2061 = vpop.permute.xlu0 %2060
    %2062 = vrot.lane.b32.xlu0 %v2027, 32
    %v2063 = vpop.permute.xlu0 %2062
    %2064 = vrot.lane.b32.xlu0 %v2028, 32
    %v2065 = vpop.permute.xlu0 %2064
    %2066 = vrot.lane.b32.xlu0 %v2029, 32
    %v2067 = vpop.permute.xlu0 %2066
    %2068 = vrot.lane.b32.xlu0 %v2030, 32
    %v2069 = vpop.permute.xlu0 %2068
    %2070 = vrot.lane.b32.xlu0 %v2031, 32
    %v2071 = vpop.permute.xlu0 %2070
    %2072 = vrot.lane.b32.xlu0 %v2032, 32
    %v2073 = vpop.permute.xlu0 %2072
    %2074 = vrot.lane.b32.xlu0 %v2033, 32
    %v2075 = vpop.permute.xlu0 %2074
    %2076 = vrot.lane.b32.xlu0 %v2034, 32
    %v2077 = vpop.permute.xlu0 %2076
    %2078 = vrot.lane.b32.xlu0 %v2035, 32
    %v2079 = vpop.permute.xlu0 %2078
    %2080 = vrot.lane.b32.xlu0 %v2036, 32
    %v2081 = vpop.permute.xlu0 %2080
    %2082 = vrot.lane.b32.xlu0 %v2037, 32
    %v2083 = vpop.permute.xlu0 %2082
    %2084 = vrot.lane.b32.xlu0 %v2038, 32
    %v2085 = vpop.permute.xlu0 %2084
    %2086 = vrot.lane.b32.xlu0 %v2039, 32
    %v2087 = vpop.permute.xlu0 %2086
    %vm2104 = vcmask 294144
    %2105 = vst.msk [vmem:[#allocation2] sm:$0xff] %vm2104, %v2057
    %2106 = vst.msk [vmem:[#allocation2 + $0x8] sm:$0xff] %vm2104, %v2059
    %2107 = vst.msk [vmem:[#allocation2 + $0x10] sm:$0xff] %vm2104, %v2061
    %2108 = vst.msk [vmem:[#allocation2 + $0x18] sm:$0xff] %vm2104, %v2063
    %2109 = vst.msk [vmem:[#allocation2 + $0x20] sm:$0xff] %vm2104, %v2065
    %2110 = vst.msk [vmem:[#allocation2 + $0x28] sm:$0xff] %vm2104, %v2067
    %2111 = vst.msk [vmem:[#allocation2 + $0x30] sm:$0xff] %vm2104, %v2069
    %2112 = vst.msk [vmem:[#allocation2 + $0x38] sm:$0xff] %vm2104, %v2071
    %2113 = vst.msk [vmem:[#allocation2 + $0x40] sm:$0xff] %vm2104, %v2073
    %2114 = vst.msk [vmem:[#allocation2 + $0x48] sm:$0xff] %vm2104, %v2075
    %2115 = vst.msk [vmem:[#allocation2 + $0x50] sm:$0xff] %vm2104, %v2077
    %2116 = vst.msk [vmem:[#allocation2 + $0x58] sm:$0xff] %vm2104, %v2079
    %2117 = vst.msk [vmem:[#allocation2 + $0x60] sm:$0xff] %vm2104, %v2081
    %2118 = vst.msk [vmem:[#allocation2 + $0x68] sm:$0xff] %vm2104, %v2083
    %2119 = vst.msk [vmem:[#allocation2 + $0x70] sm:$0xff] %vm2104, %v2085
    %2120 = vst.msk [vmem:[#allocation2 + $0x78] sm:$0xff] %vm2104, %v2087
    %v2121 = vpack.c.bf16 %v1993, %v1992
    %v2122 = vpack.c.bf16 %v1995, %v1994
    %v2123 = vpack.c.bf16 %v1997, %v1996
    %v2124 = vpack.c.bf16 %v1999, %v1998
    %v2125 = vpack.c.bf16 %v2001, %v2000
    %v2126 = vpack.c.bf16 %v2003, %v2002
    %v2127 = vpack.c.bf16 %v2005, %v2004
    %v2128 = vpack.c.bf16 %v2007, %v2006
    %v2129 = vpack.c.bf16 %v2009, %v2008
    %v2130 = vpack.c.bf16 %v2011, %v2010
    %v2131 = vpack.c.bf16 %v2013, %v2012
    %v2132 = vpack.c.bf16 %v2015, %v2014
    %v2133 = vpack.c.bf16 %v2017, %v2016
    %v2134 = vpack.c.bf16 %v2019, %v2018
    %v2135 = vpack.c.bf16 %v2021, %v2020
    %v2136 = vpack.c.bf16 %v2023, %v2022
    %2153 = vrot.lane.b32.xlu0 %v2121, 32
    %v2154 = vpop.permute.xlu0 %2153
    %2155 = vrot.lane.b32.xlu0 %v2122, 32
    %v2156 = vpop.permute.xlu0 %2155
    %2157 = vrot.lane.b32.xlu0 %v2123, 32
    %v2158 = vpop.permute.xlu0 %2157
    %2159 = vrot.lane.b32.xlu0 %v2124, 32
    %v2160 = vpop.permute.xlu0 %2159
    %2161 = vrot.lane.b32.xlu0 %v2125, 32
    %v2162 = vpop.permute.xlu0 %2161
    %2163 = vrot.lane.b32.xlu0 %v2126, 32
    %v2164 = vpop.permute.xlu0 %2163
    %2165 = vrot.lane.b32.xlu0 %v2127, 32
    %v2166 = vpop.permute.xlu0 %2165
    %2167 = vrot.lane.b32.xlu0 %v2128, 32
    %v2168 = vpop.permute.xlu0 %2167
    %2169 = vrot.lane.b32.xlu0 %v2129, 32
    %v2170 = vpop.permute.xlu0 %2169
    %2171 = vrot.lane.b32.xlu0 %v2130, 32
    %v2172 = vpop.permute.xlu0 %2171
    %2173 = vrot.lane.b32.xlu0 %v2131, 32
    %v2174 = vpop.permute.xlu0 %2173
    %2175 = vrot.lane.b32.xlu0 %v2132, 32
    %v2176 = vpop.permute.xlu0 %2175
    %2177 = vrot.lane.b32.xlu0 %v2133, 32
    %v2178 = vpop.permute.xlu0 %2177
    %2179 = vrot.lane.b32.xlu0 %v2134, 32
    %v2180 = vpop.permute.xlu0 %2179
    %2181 = vrot.lane.b32.xlu0 %v2135, 32
    %v2182 = vpop.permute.xlu0 %2181
    %2183 = vrot.lane.b32.xlu0 %v2136, 32
    %v2184 = vpop.permute.xlu0 %2183
    %2201 = vst.msk [vmem:[#allocation3] sm:$0xff] %vm2104, %v2154
    %2202 = vst.msk [vmem:[#allocation3 + $0x8] sm:$0xff] %vm2104, %v2156
    %2203 = vst.msk [vmem:[#allocation3 + $0x10] sm:$0xff] %vm2104, %v2158
    %2204 = vst.msk [vmem:[#allocation3 + $0x18] sm:$0xff] %vm2104, %v2160
    %2205 = vst.msk [vmem:[#allocation3 + $0x20] sm:$0xff] %vm2104, %v2162
    %2206 = vst.msk [vmem:[#allocation3 + $0x28] sm:$0xff] %vm2104, %v2164
    %2207 = vst.msk [vmem:[#allocation3 + $0x30] sm:$0xff] %vm2104, %v2166
    %2208 = vst.msk [vmem:[#allocation3 + $0x38] sm:$0xff] %vm2104, %v2168
    %2209 = vst.msk [vmem:[#allocation3 + $0x40] sm:$0xff] %vm2104, %v2170
    %2210 = vst.msk [vmem:[#allocation3 + $0x48] sm:$0xff] %vm2104, %v2172
    %2211 = vst.msk [vmem:[#allocation3 + $0x50] sm:$0xff] %vm2104, %v2174
    %2212 = vst.msk [vmem:[#allocation3 + $0x58] sm:$0xff] %vm2104, %v2176
    %2213 = vst.msk [vmem:[#allocation3 + $0x60] sm:$0xff] %vm2104, %v2178
    %2214 = vst.msk [vmem:[#allocation3 + $0x68] sm:$0xff] %vm2104, %v2180
    %2215 = vst.msk [vmem:[#allocation3 + $0x70] sm:$0xff] %vm2104, %v2182
    %2216 = vst.msk [vmem:[#allocation3 + $0x78] sm:$0xff] %vm2104, %v2184
    %s2217 = scalar_lea.vmem %s0, 432
    %v2218 = vld [vmem:[%s2217] sm:$0xff]
    %v2219 = vld [vmem:[%s2217 + $0x8] sm:$0xff]
    %v2220 = vld [vmem:[%s2217 + $0x18] sm:$0xff]
    %v2221 = vld [vmem:[%s2217 + $0x20] sm:$0xff]
    %v2222 = vld [vmem:[%s2217 + $0x30] sm:$0xff]
    %v2223 = vld [vmem:[%s2217 + $0x38] sm:$0xff]
    %v2224 = vld [vmem:[%s2217 + $0x48] sm:$0xff]
    %v2225 = vld [vmem:[%s2217 + $0x50] sm:$0xff]
    %v2226 = vld [vmem:[%s2217 + $0x60] sm:$0xff]
    %v2227 = vld [vmem:[%s2217 + $0x68] sm:$0xff]
    %v2228 = vld [vmem:[%s2217 + $0x78] sm:$0xff]
    %v2229 = vld [vmem:[%s2217 + $0x80] sm:$0xff]
    %v2230 = vld [vmem:[%s2217 + $0x90] sm:$0xff]
    %v2231 = vld [vmem:[%s2217 + $0x98] sm:$0xff]
    %v2232 = vld [vmem:[%s2217 + $0xa8] sm:$0xff]
    %v2233 = vld [vmem:[%s2217 + $0xb0] sm:$0xff]
    %v2234 = vld [vmem:[%s2217 + $0xc0] sm:$0xff]
    %v2235 = vld [vmem:[%s2217 + $0xc8] sm:$0xff]
    %v2236 = vld [vmem:[%s2217 + $0xd8] sm:$0xff]
    %v2237 = vld [vmem:[%s2217 + $0xe0] sm:$0xff]
    %v2238 = vld [vmem:[%s2217 + $0xf0] sm:$0xff]
    %v2239 = vld [vmem:[%s2217 + $0xf8] sm:$0xff]
    %v2240 = vld [vmem:[%s2217 + $0x108] sm:$0xff]
    %v2241 = vld [vmem:[%s2217 + $0x110] sm:$0xff]
    %v2242 = vld [vmem:[%s2217 + $0x120] sm:$0xff]
    %v2243 = vld [vmem:[%s2217 + $0x128] sm:$0xff]
    %v2244 = vld [vmem:[%s2217 + $0x138] sm:$0xff]
    %v2245 = vld [vmem:[%s2217 + $0x140] sm:$0xff]
    %v2246 = vld [vmem:[%s2217 + $0x150] sm:$0xff]
    %v2247 = vld [vmem:[%s2217 + $0x158] sm:$0xff]
    %v2248 = vld [vmem:[%s2217 + $0x168] sm:$0xff]
    %v2249 = vld [vmem:[%s2217 + $0x170] sm:$0xff]
    %s2250 = scalar_lea.vmem %s1, 432
    %v2251 = vld [vmem:[%s2250] sm:$0xff]
    %v2252 = vld [vmem:[%s2250 + $0x8] sm:$0xff]
    %v2253 = vld [vmem:[%s2250 + $0x18] sm:$0xff]
    %v2254 = vld [vmem:[%s2250 + $0x20] sm:$0xff]
    %v2255 = vld [vmem:[%s2250 + $0x30] sm:$0xff]
    %v2256 = vld [vmem:[%s2250 + $0x38] sm:$0xff]
    %v2257 = vld [vmem:[%s2250 + $0x48] sm:$0xff]
    %v2258 = vld [vmem:[%s2250 + $0x50] sm:$0xff]
    %v2259 = vld [vmem:[%s2250 + $0x60] sm:$0xff]
    %v2260 = vld [vmem:[%s2250 + $0x68] sm:$0xff]
    %v2261 = vld [vmem:[%s2250 + $0x78] sm:$0xff]
    %v2262 = vld [vmem:[%s2250 + $0x80] sm:$0xff]
    %v2263 = vld [vmem:[%s2250 + $0x90] sm:$0xff]
    %v2264 = vld [vmem:[%s2250 + $0x98] sm:$0xff]
    %v2265 = vld [vmem:[%s2250 + $0xa8] sm:$0xff]
    %v2266 = vld [vmem:[%s2250 + $0xb0] sm:$0xff]
    %v2267 = vld [vmem:[%s2250 + $0xc0] sm:$0xff]
    %v2268 = vld [vmem:[%s2250 + $0xc8] sm:$0xff]
    %v2269 = vld [vmem:[%s2250 + $0xd8] sm:$0xff]
    %v2270 = vld [vmem:[%s2250 + $0xe0] sm:$0xff]
    %v2271 = vld [vmem:[%s2250 + $0xf0] sm:$0xff]
    %v2272 = vld [vmem:[%s2250 + $0xf8] sm:$0xff]
    %v2273 = vld [vmem:[%s2250 + $0x108] sm:$0xff]
    %v2274 = vld [vmem:[%s2250 + $0x110] sm:$0xff]
    %v2275 = vld [vmem:[%s2250 + $0x120] sm:$0xff]
    %v2276 = vld [vmem:[%s2250 + $0x128] sm:$0xff]
    %v2277 = vld [vmem:[%s2250 + $0x138] sm:$0xff]
    %v2278 = vld [vmem:[%s2250 + $0x140] sm:$0xff]
    %v2279 = vld [vmem:[%s2250 + $0x150] sm:$0xff]
    %v2280 = vld [vmem:[%s2250 + $0x158] sm:$0xff]
    %v2281 = vld [vmem:[%s2250 + $0x168] sm:$0xff]
    %v2282 = vld [vmem:[%s2250 + $0x170] sm:$0xff]
    %v2283 = vpack.c.bf16 %v2219, %v2218
    %v2284 = vpack.c.bf16 %v2221, %v2220
    %v2285 = vpack.c.bf16 %v2223, %v2222
    %v2286 = vpack.c.bf16 %v2225, %v2224
    %v2287 = vpack.c.bf16 %v2227, %v2226
    %v2288 = vpack.c.bf16 %v2229, %v2228
    %v2289 = vpack.c.bf16 %v2231, %v2230
    %v2290 = vpack.c.bf16 %v2233, %v2232
    %v2291 = vpack.c.bf16 %v2235, %v2234
    %v2292 = vpack.c.bf16 %v2237, %v2236
    %v2293 = vpack.c.bf16 %v2239, %v2238
    %v2294 = vpack.c.bf16 %v2241, %v2240
    %v2295 = vpack.c.bf16 %v2243, %v2242
    %v2296 = vpack.c.bf16 %v2245, %v2244
    %v2297 = vpack.c.bf16 %v2247, %v2246
    %v2298 = vpack.c.bf16 %v2249, %v2248
    %2299 = vst.msk [vmem:[#allocation2 + $0x80] sm:$0xff] %vm108, %v2283
    %2300 = vst.msk [vmem:[#allocation2 + $0x88] sm:$0xff] %vm108, %v2284
    %2301 = vst.msk [vmem:[#allocation2 + $0x90] sm:$0xff] %vm108, %v2285
    %2302 = vst.msk [vmem:[#allocation2 + $0x98] sm:$0xff] %vm108, %v2286
    %2303 = vst.msk [vmem:[#allocation2 + $0xa0] sm:$0xff] %vm108, %v2287
    %2304 = vst.msk [vmem:[#allocation2 + $0xa8] sm:$0xff] %vm108, %v2288
    %2305 = vst.msk [vmem:[#allocation2 + $0xb0] sm:$0xff] %vm108, %v2289
    %2306 = vst.msk [vmem:[#allocation2 + $0xb8] sm:$0xff] %vm108, %v2290
    %2307 = vst.msk [vmem:[#allocation2 + $0xc0] sm:$0xff] %vm108, %v2291
    %2308 = vst.msk [vmem:[#allocation2 + $0xc8] sm:$0xff] %vm108, %v2292
    %2309 = vst.msk [vmem:[#allocation2 + $0xd0] sm:$0xff] %vm108, %v2293
    %2310 = vst.msk [vmem:[#allocation2 + $0xd8] sm:$0xff] %vm108, %v2294
    %2311 = vst.msk [vmem:[#allocation2 + $0xe0] sm:$0xff] %vm108, %v2295
    %2312 = vst.msk [vmem:[#allocation2 + $0xe8] sm:$0xff] %vm108, %v2296
    %2313 = vst.msk [vmem:[#allocation2 + $0xf0] sm:$0xff] %vm108, %v2297
    %2314 = vst.msk [vmem:[#allocation2 + $0xf8] sm:$0xff] %vm108, %v2298
    %v2315 = vpack.c.bf16 %v2252, %v2251
    %v2316 = vpack.c.bf16 %v2254, %v2253
    %v2317 = vpack.c.bf16 %v2256, %v2255
    %v2318 = vpack.c.bf16 %v2258, %v2257
    %v2319 = vpack.c.bf16 %v2260, %v2259
    %v2320 = vpack.c.bf16 %v2262, %v2261
    %v2321 = vpack.c.bf16 %v2264, %v2263
    %v2322 = vpack.c.bf16 %v2266, %v2265
    %v2323 = vpack.c.bf16 %v2268, %v2267
    %v2324 = vpack.c.bf16 %v2270, %v2269
    %v2325 = vpack.c.bf16 %v2272, %v2271
    %v2326 = vpack.c.bf16 %v2274, %v2273
    %v2327 = vpack.c.bf16 %v2276, %v2275
    %v2328 = vpack.c.bf16 %v2278, %v2277
    %v2329 = vpack.c.bf16 %v2280, %v2279
    %v2330 = vpack.c.bf16 %v2282, %v2281
    %2331 = vst.msk [vmem:[#allocation3 + $0x80] sm:$0xff] %vm108, %v2315
    %2332 = vst.msk [vmem:[#allocation3 + $0x88] sm:$0xff] %vm108, %v2316
    %2333 = vst.msk [vmem:[#allocation3 + $0x90] sm:$0xff] %vm108, %v2317
    %2334 = vst.msk [vmem:[#allocation3 + $0x98] sm:$0xff] %vm108, %v2318
    %2335 = vst.msk [vmem:[#allocation3 + $0xa0] sm:$0xff] %vm108, %v2319
    %2336 = vst.msk [vmem:[#allocation3 + $0xa8] sm:$0xff] %vm108, %v2320
    %2337 = vst.msk [vmem:[#allocation3 + $0xb0] sm:$0xff] %vm108, %v2321
    %2338 = vst.msk [vmem:[#allocation3 + $0xb8] sm:$0xff] %vm108, %v2322
    %2339 = vst.msk [vmem:[#allocation3 + $0xc0] sm:$0xff] %vm108, %v2323
    %2340 = vst.msk [vmem:[#allocation3 + $0xc8] sm:$0xff] %vm108, %v2324
    %2341 = vst.msk [vmem:[#allocation3 + $0xd0] sm:$0xff] %vm108, %v2325
    %2342 = vst.msk [vmem:[#allocation3 + $0xd8] sm:$0xff] %vm108, %v2326
    %2343 = vst.msk [vmem:[#allocation3 + $0xe0] sm:$0xff] %vm108, %v2327
    %2344 = vst.msk [vmem:[#allocation3 + $0xe8] sm:$0xff] %vm108, %v2328
    %2345 = vst.msk [vmem:[#allocation3 + $0xf0] sm:$0xff] %vm108, %v2329
    %2346 = vst.msk [vmem:[#allocation3 + $0xf8] sm:$0xff] %vm108, %v2330
    %v2347 = vld [vmem:[%s2217 + $0x1] sm:$0xff]
    %v2348 = vld [vmem:[%s2217 + $0x9] sm:$0xff]
    %v2349 = vld [vmem:[%s2217 + $0x19] sm:$0xff]
    %v2350 = vld [vmem:[%s2217 + $0x21] sm:$0xff]
    %v2351 = vld [vmem:[%s2217 + $0x31] sm:$0xff]
    %v2352 = vld [vmem:[%s2217 + $0x39] sm:$0xff]
    %v2353 = vld [vmem:[%s2217 + $0x49] sm:$0xff]
    %v2354 = vld [vmem:[%s2217 + $0x51] sm:$0xff]
    %v2355 = vld [vmem:[%s2217 + $0x61] sm:$0xff]
    %v2356 = vld [vmem:[%s2217 + $0x69] sm:$0xff]
    %v2357 = vld [vmem:[%s2217 + $0x79] sm:$0xff]
    %v2358 = vld [vmem:[%s2217 + $0x81] sm:$0xff]
    %v2359 = vld [vmem:[%s2217 + $0x91] sm:$0xff]
    %v2360 = vld [vmem:[%s2217 + $0x99] sm:$0xff]
    %v2361 = vld [vmem:[%s2217 + $0xa9] sm:$0xff]
    %v2362 = vld [vmem:[%s2217 + $0xb1] sm:$0xff]
    %v2363 = vld [vmem:[%s2217 + $0xc1] sm:$0xff]
    %v2364 = vld [vmem:[%s2217 + $0xc9] sm:$0xff]
    %v2365 = vld [vmem:[%s2217 + $0xd9] sm:$0xff]
    %v2366 = vld [vmem:[%s2217 + $0xe1] sm:$0xff]
    %v2367 = vld [vmem:[%s2217 + $0xf1] sm:$0xff]
    %v2368 = vld [vmem:[%s2217 + $0xf9] sm:$0xff]
    %v2369 = vld [vmem:[%s2217 + $0x109] sm:$0xff]
    %v2370 = vld [vmem:[%s2217 + $0x111] sm:$0xff]
    %v2371 = vld [vmem:[%s2217 + $0x121] sm:$0xff]
    %v2372 = vld [vmem:[%s2217 + $0x129] sm:$0xff]
    %v2373 = vld [vmem:[%s2217 + $0x139] sm:$0xff]
    %v2374 = vld [vmem:[%s2217 + $0x141] sm:$0xff]
    %v2375 = vld [vmem:[%s2217 + $0x151] sm:$0xff]
    %v2376 = vld [vmem:[%s2217 + $0x159] sm:$0xff]
    %v2377 = vld [vmem:[%s2217 + $0x169] sm:$0xff]
    %v2378 = vld [vmem:[%s2217 + $0x171] sm:$0xff]
    %v2379 = vld [vmem:[%s2250 + $0x1] sm:$0xff]
    %v2380 = vld [vmem:[%s2250 + $0x9] sm:$0xff]
    %v2381 = vld [vmem:[%s2250 + $0x19] sm:$0xff]
    %v2382 = vld [vmem:[%s2250 + $0x21] sm:$0xff]
    %v2383 = vld [vmem:[%s2250 + $0x31] sm:$0xff]
    %v2384 = vld [vmem:[%s2250 + $0x39] sm:$0xff]
    %v2385 = vld [vmem:[%s2250 + $0x49] sm:$0xff]
    %v2386 = vld [vmem:[%s2250 + $0x51] sm:$0xff]
    %v2387 = vld [vmem:[%s2250 + $0x61] sm:$0xff]
    %v2388 = vld [vmem:[%s2250 + $0x69] sm:$0xff]
    %v2389 = vld [vmem:[%s2250 + $0x79] sm:$0xff]
    %v2390 = vld [vmem:[%s2250 + $0x81] sm:$0xff]
    %v2391 = vld [vmem:[%s2250 + $0x91] sm:$0xff]
    %v2392 = vld [vmem:[%s2250 + $0x99] sm:$0xff]
    %v2393 = vld [vmem:[%s2250 + $0xa9] sm:$0xff]
    %v2394 = vld [vmem:[%s2250 + $0xb1] sm:$0xff]
    %v2395 = vld [vmem:[%s2250 + $0xc1] sm:$0xff]
    %v2396 = vld [vmem:[%s2250 + $0xc9] sm:$0xff]
    %v2397 = vld [vmem:[%s2250 + $0xd9] sm:$0xff]
    %v2398 = vld [vmem:[%s2250 + $0xe1] sm:$0xff]
    %v2399 = vld [vmem:[%s2250 + $0xf1] sm:$0xff]
    %v2400 = vld [vmem:[%s2250 + $0xf9] sm:$0xff]
    %v2401 = vld [vmem:[%s2250 + $0x109] sm:$0xff]
    %v2402 = vld [vmem:[%s2250 + $0x111] sm:$0xff]
    %v2403 = vld [vmem:[%s2250 + $0x121] sm:$0xff]
    %v2404 = vld [vmem:[%s2250 + $0x129] sm:$0xff]
    %v2405 = vld [vmem:[%s2250 + $0x139] sm:$0xff]
    %v2406 = vld [vmem:[%s2250 + $0x141] sm:$0xff]
    %v2407 = vld [vmem:[%s2250 + $0x151] sm:$0xff]
    %v2408 = vld [vmem:[%s2250 + $0x159] sm:$0xff]
    %v2409 = vld [vmem:[%s2250 + $0x169] sm:$0xff]
    %v2410 = vld [vmem:[%s2250 + $0x171] sm:$0xff]
    %v2411 = vpack.c.bf16 %v2348, %v2347
    %v2412 = vpack.c.bf16 %v2350, %v2349
    %v2413 = vpack.c.bf16 %v2352, %v2351
    %v2414 = vpack.c.bf16 %v2354, %v2353
    %v2415 = vpack.c.bf16 %v2356, %v2355
    %v2416 = vpack.c.bf16 %v2358, %v2357
    %v2417 = vpack.c.bf16 %v2360, %v2359
    %v2418 = vpack.c.bf16 %v2362, %v2361
    %v2419 = vpack.c.bf16 %v2364, %v2363
    %v2420 = vpack.c.bf16 %v2366, %v2365
    %v2421 = vpack.c.bf16 %v2368, %v2367
    %v2422 = vpack.c.bf16 %v2370, %v2369
    %v2423 = vpack.c.bf16 %v2372, %v2371
    %v2424 = vpack.c.bf16 %v2374, %v2373
    %v2425 = vpack.c.bf16 %v2376, %v2375
    %v2426 = vpack.c.bf16 %v2378, %v2377
    %2443 = vrot.lane.b32.xlu0 %v2411, 4
    %v2444 = vpop.permute.xlu0 %2443
    %2445 = vrot.lane.b32.xlu0 %v2412, 4
    %v2446 = vpop.permute.xlu0 %2445
    %2447 = vrot.lane.b32.xlu0 %v2413, 4
    %v2448 = vpop.permute.xlu0 %2447
    %2449 = vrot.lane.b32.xlu0 %v2414, 4
    %v2450 = vpop.permute.xlu0 %2449
    %2451 = vrot.lane.b32.xlu0 %v2415, 4
    %v2452 = vpop.permute.xlu0 %2451
    %2453 = vrot.lane.b32.xlu0 %v2416, 4
    %v2454 = vpop.permute.xlu0 %2453
    %2455 = vrot.lane.b32.xlu0 %v2417, 4
    %v2456 = vpop.permute.xlu0 %2455
    %2457 = vrot.lane.b32.xlu0 %v2418, 4
    %v2458 = vpop.permute.xlu0 %2457
    %2459 = vrot.lane.b32.xlu0 %v2419, 4
    %v2460 = vpop.permute.xlu0 %2459
    %2461 = vrot.lane.b32.xlu0 %v2420, 4
    %v2462 = vpop.permute.xlu0 %2461
    %2463 = vrot.lane.b32.xlu0 %v2421, 4
    %v2464 = vpop.permute.xlu0 %2463
    %2465 = vrot.lane.b32.xlu0 %v2422, 4
    %v2466 = vpop.permute.xlu0 %2465
    %2467 = vrot.lane.b32.xlu0 %v2423, 4
    %v2468 = vpop.permute.xlu0 %2467
    %2469 = vrot.lane.b32.xlu0 %v2424, 4
    %v2470 = vpop.permute.xlu0 %2469
    %2471 = vrot.lane.b32.xlu0 %v2425, 4
    %v2472 = vpop.permute.xlu0 %2471
    %2473 = vrot.lane.b32.xlu0 %v2426, 4
    %v2474 = vpop.permute.xlu0 %2473
    %2491 = vst.msk [vmem:[#allocation2 + $0x80] sm:$0xff] %vm301, %v2444
    %2492 = vst.msk [vmem:[#allocation2 + $0x88] sm:$0xff] %vm301, %v2446
    %2493 = vst.msk [vmem:[#allocation2 + $0x90] sm:$0xff] %vm301, %v2448
    %2494 = vst.msk [vmem:[#allocation2 + $0x98] sm:$0xff] %vm301, %v2450
    %2495 = vst.msk [vmem:[#allocation2 + $0xa0] sm:$0xff] %vm301, %v2452
    %2496 = vst.msk [vmem:[#allocation2 + $0xa8] sm:$0xff] %vm301, %v2454
    %2497 = vst.msk [vmem:[#allocation2 + $0xb0] sm:$0xff] %vm301, %v2456
    %2498 = vst.msk [vmem:[#allocation2 + $0xb8] sm:$0xff] %vm301, %v2458
    %2499 = vst.msk [vmem:[#allocation2 + $0xc0] sm:$0xff] %vm301, %v2460
    %2500 = vst.msk [vmem:[#allocation2 + $0xc8] sm:$0xff] %vm301, %v2462
    %2501 = vst.msk [vmem:[#allocation2 + $0xd0] sm:$0xff] %vm301, %v2464
    %2502 = vst.msk [vmem:[#allocation2 + $0xd8] sm:$0xff] %vm301, %v2466
    %2503 = vst.msk [vmem:[#allocation2 + $0xe0] sm:$0xff] %vm301, %v2468
    %2504 = vst.msk [vmem:[#allocation2 + $0xe8] sm:$0xff] %vm301, %v2470
    %2505 = vst.msk [vmem:[#allocation2 + $0xf0] sm:$0xff] %vm301, %v2472
    %2506 = vst.msk [vmem:[#allocation2 + $0xf8] sm:$0xff] %vm301, %v2474
    %v2507 = vpack.c.bf16 %v2380, %v2379
    %v2508 = vpack.c.bf16 %v2382, %v2381
    %v2509 = vpack.c.bf16 %v2384, %v2383
    %v2510 = vpack.c.bf16 %v2386, %v2385
    %v2511 = vpack.c.bf16 %v2388, %v2387
    %v2512 = vpack.c.bf16 %v2390, %v2389
    %v2513 = vpack.c.bf16 %v2392, %v2391
    %v2514 = vpack.c.bf16 %v2394, %v2393
    %v2515 = vpack.c.bf16 %v2396, %v2395
    %v2516 = vpack.c.bf16 %v2398, %v2397
    %v2517 = vpack.c.bf16 %v2400, %v2399
    %v2518 = vpack.c.bf16 %v2402, %v2401
    %v2519 = vpack.c.bf16 %v2404, %v2403
    %v2520 = vpack.c.bf16 %v2406, %v2405
    %v2521 = vpack.c.bf16 %v2408, %v2407
    %v2522 = vpack.c.bf16 %v2410, %v2409
    %2539 = vrot.lane.b32.xlu0 %v2507, 4
    %v2540 = vpop.permute.xlu0 %2539
    %2541 = vrot.lane.b32.xlu0 %v2508, 4
    %v2542 = vpop.permute.xlu0 %2541
    %2543 = vrot.lane.b32.xlu0 %v2509, 4
    %v2544 = vpop.permute.xlu0 %2543
    %2545 = vrot.lane.b32.xlu0 %v2510, 4
    %v2546 = vpop.permute.xlu0 %2545
    %2547 = vrot.lane.b32.xlu0 %v2511, 4
    %v2548 = vpop.permute.xlu0 %2547
    %2549 = vrot.lane.b32.xlu0 %v2512, 4
    %v2550 = vpop.permute.xlu0 %2549
    %2551 = vrot.lane.b32.xlu0 %v2513, 4
    %v2552 = vpop.permute.xlu0 %2551
    %2553 = vrot.lane.b32.xlu0 %v2514, 4
    %v2554 = vpop.permute.xlu0 %2553
    %2555 = vrot.lane.b32.xlu0 %v2515, 4
    %v2556 = vpop.permute.xlu0 %2555
    %2557 = vrot.lane.b32.xlu0 %v2516, 4
    %v2558 = vpop.permute.xlu0 %2557
    %2559 = vrot.lane.b32.xlu0 %v2517, 4
    %v2560 = vpop.permute.xlu0 %2559
    %2561 = vrot.lane.b32.xlu0 %v2518, 4
    %v2562 = vpop.permute.xlu0 %2561
    %2563 = vrot.lane.b32.xlu0 %v2519, 4
    %v2564 = vpop.permute.xlu0 %2563
    %2565 = vrot.lane.b32.xlu0 %v2520, 4
    %v2566 = vpop.permute.xlu0 %2565
    %2567 = vrot.lane.b32.xlu0 %v2521, 4
    %v2568 = vpop.permute.xlu0 %2567
    %2569 = vrot.lane.b32.xlu0 %v2522, 4
    %v2570 = vpop.permute.xlu0 %2569
    %2587 = vst.msk [vmem:[#allocation3 + $0x80] sm:$0xff] %vm301, %v2540
    %2588 = vst.msk [vmem:[#allocation3 + $0x88] sm:$0xff] %vm301, %v2542
    %2589 = vst.msk [vmem:[#allocation3 + $0x90] sm:$0xff] %vm301, %v2544
    %2590 = vst.msk [vmem:[#allocation3 + $0x98] sm:$0xff] %vm301, %v2546
    %2591 = vst.msk [vmem:[#allocation3 + $0xa0] sm:$0xff] %vm301, %v2548
    %2592 = vst.msk [vmem:[#allocation3 + $0xa8] sm:$0xff] %vm301, %v2550
    %2593 = vst.msk [vmem:[#allocation3 + $0xb0] sm:$0xff] %vm301, %v2552
    %2594 = vst.msk [vmem:[#allocation3 + $0xb8] sm:$0xff] %vm301, %v2554
    %2595 = vst.msk [vmem:[#allocation3 + $0xc0] sm:$0xff] %vm301, %v2556
    %2596 = vst.msk [vmem:[#allocation3 + $0xc8] sm:$0xff] %vm301, %v2558
    %2597 = vst.msk [vmem:[#allocation3 + $0xd0] sm:$0xff] %vm301, %v2560
    %2598 = vst.msk [vmem:[#allocation3 + $0xd8] sm:$0xff] %vm301, %v2562
    %2599 = vst.msk [vmem:[#allocation3 + $0xe0] sm:$0xff] %vm301, %v2564
    %2600 = vst.msk [vmem:[#allocation3 + $0xe8] sm:$0xff] %vm301, %v2566
    %2601 = vst.msk [vmem:[#allocation3 + $0xf0] sm:$0xff] %vm301, %v2568
    %2602 = vst.msk [vmem:[#allocation3 + $0xf8] sm:$0xff] %vm301, %v2570
    %v2603 = vld [vmem:[%s2217 + $0x2] sm:$0xff]
    %v2604 = vld [vmem:[%s2217 + $0xa] sm:$0xff]
    %v2605 = vld [vmem:[%s2217 + $0x1a] sm:$0xff]
    %v2606 = vld [vmem:[%s2217 + $0x22] sm:$0xff]
    %v2607 = vld [vmem:[%s2217 + $0x32] sm:$0xff]
    %v2608 = vld [vmem:[%s2217 + $0x3a] sm:$0xff]
    %v2609 = vld [vmem:[%s2217 + $0x4a] sm:$0xff]
    %v2610 = vld [vmem:[%s2217 + $0x52] sm:$0xff]
    %v2611 = vld [vmem:[%s2217 + $0x62] sm:$0xff]
    %v2612 = vld [vmem:[%s2217 + $0x6a] sm:$0xff]
    %v2613 = vld [vmem:[%s2217 + $0x7a] sm:$0xff]
    %v2614 = vld [vmem:[%s2217 + $0x82] sm:$0xff]
    %v2615 = vld [vmem:[%s2217 + $0x92] sm:$0xff]
    %v2616 = vld [vmem:[%s2217 + $0x9a] sm:$0xff]
    %v2617 = vld [vmem:[%s2217 + $0xaa] sm:$0xff]
    %v2618 = vld [vmem:[%s2217 + $0xb2] sm:$0xff]
    %v2619 = vld [vmem:[%s2217 + $0xc2] sm:$0xff]
    %v2620 = vld [vmem:[%s2217 + $0xca] sm:$0xff]
    %v2621 = vld [vmem:[%s2217 + $0xda] sm:$0xff]
    %v2622 = vld [vmem:[%s2217 + $0xe2] sm:$0xff]
    %v2623 = vld [vmem:[%s2217 + $0xf2] sm:$0xff]
    %v2624 = vld [vmem:[%s2217 + $0xfa] sm:$0xff]
    %v2625 = vld [vmem:[%s2217 + $0x10a] sm:$0xff]
    %v2626 = vld [vmem:[%s2217 + $0x112] sm:$0xff]
    %v2627 = vld [vmem:[%s2217 + $0x122] sm:$0xff]
    %v2628 = vld [vmem:[%s2217 + $0x12a] sm:$0xff]
    %v2629 = vld [vmem:[%s2217 + $0x13a] sm:$0xff]
    %v2630 = vld [vmem:[%s2217 + $0x142] sm:$0xff]
    %v2631 = vld [vmem:[%s2217 + $0x152] sm:$0xff]
    %v2632 = vld [vmem:[%s2217 + $0x15a] sm:$0xff]
    %v2633 = vld [vmem:[%s2217 + $0x16a] sm:$0xff]
    %v2634 = vld [vmem:[%s2217 + $0x172] sm:$0xff]
    %v2635 = vld [vmem:[%s2250 + $0x2] sm:$0xff]
    %v2636 = vld [vmem:[%s2250 + $0xa] sm:$0xff]
    %v2637 = vld [vmem:[%s2250 + $0x1a] sm:$0xff]
    %v2638 = vld [vmem:[%s2250 + $0x22] sm:$0xff]
    %v2639 = vld [vmem:[%s2250 + $0x32] sm:$0xff]
    %v2640 = vld [vmem:[%s2250 + $0x3a] sm:$0xff]
    %v2641 = vld [vmem:[%s2250 + $0x4a] sm:$0xff]
    %v2642 = vld [vmem:[%s2250 + $0x52] sm:$0xff]
    %v2643 = vld [vmem:[%s2250 + $0x62] sm:$0xff]
    %v2644 = vld [vmem:[%s2250 + $0x6a] sm:$0xff]
    %v2645 = vld [vmem:[%s2250 + $0x7a] sm:$0xff]
    %v2646 = vld [vmem:[%s2250 + $0x82] sm:$0xff]
    %v2647 = vld [vmem:[%s2250 + $0x92] sm:$0xff]
    %v2648 = vld [vmem:[%s2250 + $0x9a] sm:$0xff]
    %v2649 = vld [vmem:[%s2250 + $0xaa] sm:$0xff]
    %v2650 = vld [vmem:[%s2250 + $0xb2] sm:$0xff]
    %v2651 = vld [vmem:[%s2250 + $0xc2] sm:$0xff]
    %v2652 = vld [vmem:[%s2250 + $0xca] sm:$0xff]
    %v2653 = vld [vmem:[%s2250 + $0xda] sm:$0xff]
    %v2654 = vld [vmem:[%s2250 + $0xe2] sm:$0xff]
    %v2655 = vld [vmem:[%s2250 + $0xf2] sm:$0xff]
    %v2656 = vld [vmem:[%s2250 + $0xfa] sm:$0xff]
    %v2657 = vld [vmem:[%s2250 + $0x10a] sm:$0xff]
    %v2658 = vld [vmem:[%s2250 + $0x112] sm:$0xff]
    %v2659 = vld [vmem:[%s2250 + $0x122] sm:$0xff]
    %v2660 = vld [vmem:[%s2250 + $0x12a] sm:$0xff]
    %v2661 = vld [vmem:[%s2250 + $0x13a] sm:$0xff]
    %v2662 = vld [vmem:[%s2250 + $0x142] sm:$0xff]
    %v2663 = vld [vmem:[%s2250 + $0x152] sm:$0xff]
    %v2664 = vld [vmem:[%s2250 + $0x15a] sm:$0xff]
    %v2665 = vld [vmem:[%s2250 + $0x16a] sm:$0xff]
    %v2666 = vld [vmem:[%s2250 + $0x172] sm:$0xff]
    %v2667 = vpack.c.bf16 %v2604, %v2603
    %v2668 = vpack.c.bf16 %v2606, %v2605
    %v2669 = vpack.c.bf16 %v2608, %v2607
    %v2670 = vpack.c.bf16 %v2610, %v2609
    %v2671 = vpack.c.bf16 %v2612, %v2611
    %v2672 = vpack.c.bf16 %v2614, %v2613
    %v2673 = vpack.c.bf16 %v2616, %v2615
    %v2674 = vpack.c.bf16 %v2618, %v2617
    %v2675 = vpack.c.bf16 %v2620, %v2619
    %v2676 = vpack.c.bf16 %v2622, %v2621
    %v2677 = vpack.c.bf16 %v2624, %v2623
    %v2678 = vpack.c.bf16 %v2626, %v2625
    %v2679 = vpack.c.bf16 %v2628, %v2627
    %v2680 = vpack.c.bf16 %v2630, %v2629
    %v2681 = vpack.c.bf16 %v2632, %v2631
    %v2682 = vpack.c.bf16 %v2634, %v2633
    %2699 = vrot.lane.b32.xlu0 %v2667, 8
    %v2700 = vpop.permute.xlu0 %2699
    %2701 = vrot.lane.b32.xlu0 %v2668, 8
    %v2702 = vpop.permute.xlu0 %2701
    %2703 = vrot.lane.b32.xlu0 %v2669, 8
    %v2704 = vpop.permute.xlu0 %2703
    %2705 = vrot.lane.b32.xlu0 %v2670, 8
    %v2706 = vpop.permute.xlu0 %2705
    %2707 = vrot.lane.b32.xlu0 %v2671, 8
    %v2708 = vpop.permute.xlu0 %2707
    %2709 = vrot.lane.b32.xlu0 %v2672, 8
    %v2710 = vpop.permute.xlu0 %2709
    %2711 = vrot.lane.b32.xlu0 %v2673, 8
    %v2712 = vpop.permute.xlu0 %2711
    %2713 = vrot.lane.b32.xlu0 %v2674, 8
    %v2714 = vpop.permute.xlu0 %2713
    %2715 = vrot.lane.b32.xlu0 %v2675, 8
    %v2716 = vpop.permute.xlu0 %2715
    %2717 = vrot.lane.b32.xlu0 %v2676, 8
    %v2718 = vpop.permute.xlu0 %2717
    %2719 = vrot.lane.b32.xlu0 %v2677, 8
    %v2720 = vpop.permute.xlu0 %2719
    %2721 = vrot.lane.b32.xlu0 %v2678, 8
    %v2722 = vpop.permute.xlu0 %2721
    %2723 = vrot.lane.b32.xlu0 %v2679, 8
    %v2724 = vpop.permute.xlu0 %2723
    %2725 = vrot.lane.b32.xlu0 %v2680, 8
    %v2726 = vpop.permute.xlu0 %2725
    %2727 = vrot.lane.b32.xlu0 %v2681, 8
    %v2728 = vpop.permute.xlu0 %2727
    %2729 = vrot.lane.b32.xlu0 %v2682, 8
    %v2730 = vpop.permute.xlu0 %2729
    %2747 = vst.msk [vmem:[#allocation2 + $0x80] sm:$0xff] %vm558, %v2700
    %2748 = vst.msk [vmem:[#allocation2 + $0x88] sm:$0xff] %vm558, %v2702
    %2749 = vst.msk [vmem:[#allocation2 + $0x90] sm:$0xff] %vm558, %v2704
    %2750 = vst.msk [vmem:[#allocation2 + $0x98] sm:$0xff] %vm558, %v2706
    %2751 = vst.msk [vmem:[#allocation2 + $0xa0] sm:$0xff] %vm558, %v2708
    %2752 = vst.msk [vmem:[#allocation2 + $0xa8] sm:$0xff] %vm558, %v2710
    %2753 = vst.msk [vmem:[#allocation2 + $0xb0] sm:$0xff] %vm558, %v2712
    %2754 = vst.msk [vmem:[#allocation2 + $0xb8] sm:$0xff] %vm558, %v2714
    %2755 = vst.msk [vmem:[#allocation2 + $0xc0] sm:$0xff] %vm558, %v2716
    %2756 = vst.msk [vmem:[#allocation2 + $0xc8] sm:$0xff] %vm558, %v2718
    %2757 = vst.msk [vmem:[#allocation2 + $0xd0] sm:$0xff] %vm558, %v2720
    %2758 = vst.msk [vmem:[#allocation2 + $0xd8] sm:$0xff] %vm558, %v2722
    %2759 = vst.msk [vmem:[#allocation2 + $0xe0] sm:$0xff] %vm558, %v2724
    %2760 = vst.msk [vmem:[#allocation2 + $0xe8] sm:$0xff] %vm558, %v2726
    %2761 = vst.msk [vmem:[#allocation2 + $0xf0] sm:$0xff] %vm558, %v2728
    %2762 = vst.msk [vmem:[#allocation2 + $0xf8] sm:$0xff] %vm558, %v2730
    %v2763 = vpack.c.bf16 %v2636, %v2635
    %v2764 = vpack.c.bf16 %v2638, %v2637
    %v2765 = vpack.c.bf16 %v2640, %v2639
    %v2766 = vpack.c.bf16 %v2642, %v2641
    %v2767 = vpack.c.bf16 %v2644, %v2643
    %v2768 = vpack.c.bf16 %v2646, %v2645
    %v2769 = vpack.c.bf16 %v2648, %v2647
    %v2770 = vpack.c.bf16 %v2650, %v2649
    %v2771 = vpack.c.bf16 %v2652, %v2651
    %v2772 = vpack.c.bf16 %v2654, %v2653
    %v2773 = vpack.c.bf16 %v2656, %v2655
    %v2774 = vpack.c.bf16 %v2658, %v2657
    %v2775 = vpack.c.bf16 %v2660, %v2659
    %v2776 = vpack.c.bf16 %v2662, %v2661
    %v2777 = vpack.c.bf16 %v2664, %v2663
    %v2778 = vpack.c.bf16 %v2666, %v2665
    %2795 = vrot.lane.b32.xlu0 %v2763, 8
    %v2796 = vpop.permute.xlu0 %2795
    %2797 = vrot.lane.b32.xlu0 %v2764, 8
    %v2798 = vpop.permute.xlu0 %2797
    %2799 = vrot.lane.b32.xlu0 %v2765, 8
    %v2800 = vpop.permute.xlu0 %2799
    %2801 = vrot.lane.b32.xlu0 %v2766, 8
    %v2802 = vpop.permute.xlu0 %2801
    %2803 = vrot.lane.b32.xlu0 %v2767, 8
    %v2804 = vpop.permute.xlu0 %2803
    %2805 = vrot.lane.b32.xlu0 %v2768, 8
    %v2806 = vpop.permute.xlu0 %2805
    %2807 = vrot.lane.b32.xlu0 %v2769, 8
    %v2808 = vpop.permute.xlu0 %2807
    %2809 = vrot.lane.b32.xlu0 %v2770, 8
    %v2810 = vpop.permute.xlu0 %2809
    %2811 = vrot.lane.b32.xlu0 %v2771, 8
    %v2812 = vpop.permute.xlu0 %2811
    %2813 = vrot.lane.b32.xlu0 %v2772, 8
    %v2814 = vpop.permute.xlu0 %2813
    %2815 = vrot.lane.b32.xlu0 %v2773, 8
    %v2816 = vpop.permute.xlu0 %2815
    %2817 = vrot.lane.b32.xlu0 %v2774, 8
    %v2818 = vpop.permute.xlu0 %2817
    %2819 = vrot.lane.b32.xlu0 %v2775, 8
    %v2820 = vpop.permute.xlu0 %2819
    %2821 = vrot.lane.b32.xlu0 %v2776, 8
    %v2822 = vpop.permute.xlu0 %2821
    %2823 = vrot.lane.b32.xlu0 %v2777, 8
    %v2824 = vpop.permute.xlu0 %2823
    %2825 = vrot.lane.b32.xlu0 %v2778, 8
    %v2826 = vpop.permute.xlu0 %2825
    %2843 = vst.msk [vmem:[#allocation3 + $0x80] sm:$0xff] %vm558, %v2796
    %2844 = vst.msk [vmem:[#allocation3 + $0x88] sm:$0xff] %vm558, %v2798
    %2845 = vst.msk [vmem:[#allocation3 + $0x90] sm:$0xff] %vm558, %v2800
    %2846 = vst.msk [vmem:[#allocation3 + $0x98] sm:$0xff] %vm558, %v2802
    %2847 = vst.msk [vmem:[#allocation3 + $0xa0] sm:$0xff] %vm558, %v2804
    %2848 = vst.msk [vmem:[#allocation3 + $0xa8] sm:$0xff] %vm558, %v2806
    %2849 = vst.msk [vmem:[#allocation3 + $0xb0] sm:$0xff] %vm558, %v2808
    %2850 = vst.msk [vmem:[#allocation3 + $0xb8] sm:$0xff] %vm558, %v2810
    %2851 = vst.msk [vmem:[#allocation3 + $0xc0] sm:$0xff] %vm558, %v2812
    %2852 = vst.msk [vmem:[#allocation3 + $0xc8] sm:$0xff] %vm558, %v2814
    %2853 = vst.msk [vmem:[#allocation3 + $0xd0] sm:$0xff] %vm558, %v2816
    %2854 = vst.msk [vmem:[#allocation3 + $0xd8] sm:$0xff] %vm558, %v2818
    %2855 = vst.msk [vmem:[#allocation3 + $0xe0] sm:$0xff] %vm558, %v2820
    %2856 = vst.msk [vmem:[#allocation3 + $0xe8] sm:$0xff] %vm558, %v2822
    %2857 = vst.msk [vmem:[#allocation3 + $0xf0] sm:$0xff] %vm558, %v2824
    %2858 = vst.msk [vmem:[#allocation3 + $0xf8] sm:$0xff] %vm558, %v2826
    %s2859 = scalar_lea.vmem %s0, 456
    %v2860 = vld [vmem:[%s2859] sm:$0xff]
    %v2861 = vld [vmem:[%s2859 + $0x8] sm:$0xff]
    %v2862 = vld [vmem:[%s2859 + $0x18] sm:$0xff]
    %v2863 = vld [vmem:[%s2859 + $0x20] sm:$0xff]
    %v2864 = vld [vmem:[%s2859 + $0x30] sm:$0xff]
    %v2865 = vld [vmem:[%s2859 + $0x38] sm:$0xff]
    %v2866 = vld [vmem:[%s2859 + $0x48] sm:$0xff]
    %v2867 = vld [vmem:[%s2859 + $0x50] sm:$0xff]
    %v2868 = vld [vmem:[%s2859 + $0x60] sm:$0xff]
    %v2869 = vld [vmem:[%s2859 + $0x68] sm:$0xff]
    %v2870 = vld [vmem:[%s2859 + $0x78] sm:$0xff]
    %v2871 = vld [vmem:[%s2859 + $0x80] sm:$0xff]
    %v2872 = vld [vmem:[%s2859 + $0x90] sm:$0xff]
    %v2873 = vld [vmem:[%s2859 + $0x98] sm:$0xff]
    %v2874 = vld [vmem:[%s2859 + $0xa8] sm:$0xff]
    %v2875 = vld [vmem:[%s2859 + $0xb0] sm:$0xff]
    %v2876 = vld [vmem:[%s2859 + $0xc0] sm:$0xff]
    %v2877 = vld [vmem:[%s2859 + $0xc8] sm:$0xff]
    %v2878 = vld [vmem:[%s2859 + $0xd8] sm:$0xff]
    %v2879 = vld [vmem:[%s2859 + $0xe0] sm:$0xff]
    %v2880 = vld [vmem:[%s2859 + $0xf0] sm:$0xff]
    %v2881 = vld [vmem:[%s2859 + $0xf8] sm:$0xff]
    %v2882 = vld [vmem:[%s2859 + $0x108] sm:$0xff]
    %v2883 = vld [vmem:[%s2859 + $0x110] sm:$0xff]
    %v2884 = vld [vmem:[%s2859 + $0x120] sm:$0xff]
    %v2885 = vld [vmem:[%s2859 + $0x128] sm:$0xff]
    %v2886 = vld [vmem:[%s2859 + $0x138] sm:$0xff]
    %v2887 = vld [vmem:[%s2859 + $0x140] sm:$0xff]
    %v2888 = vld [vmem:[%s2859 + $0x150] sm:$0xff]
    %v2889 = vld [vmem:[%s2859 + $0x158] sm:$0xff]
    %v2890 = vld [vmem:[%s2859 + $0x168] sm:$0xff]
    %v2891 = vld [vmem:[%s2859 + $0x170] sm:$0xff]
    %s2892 = scalar_lea.vmem %s1, 456
    %v2893 = vld [vmem:[%s2892] sm:$0xff]
    %v2894 = vld [vmem:[%s2892 + $0x8] sm:$0xff]
    %v2895 = vld [vmem:[%s2892 + $0x18] sm:$0xff]
    %v2896 = vld [vmem:[%s2892 + $0x20] sm:$0xff]
    %v2897 = vld [vmem:[%s2892 + $0x30] sm:$0xff]
    %v2898 = vld [vmem:[%s2892 + $0x38] sm:$0xff]
    %v2899 = vld [vmem:[%s2892 + $0x48] sm:$0xff]
    %v2900 = vld [vmem:[%s2892 + $0x50] sm:$0xff]
    %v2901 = vld [vmem:[%s2892 + $0x60] sm:$0xff]
    %v2902 = vld [vmem:[%s2892 + $0x68] sm:$0xff]
    %v2903 = vld [vmem:[%s2892 + $0x78] sm:$0xff]
    %v2904 = vld [vmem:[%s2892 + $0x80] sm:$0xff]
    %v2905 = vld [vmem:[%s2892 + $0x90] sm:$0xff]
    %v2906 = vld [vmem:[%s2892 + $0x98] sm:$0xff]
    %v2907 = vld [vmem:[%s2892 + $0xa8] sm:$0xff]
    %v2908 = vld [vmem:[%s2892 + $0xb0] sm:$0xff]
    %v2909 = vld [vmem:[%s2892 + $0xc0] sm:$0xff]
    %v2910 = vld [vmem:[%s2892 + $0xc8] sm:$0xff]
    %v2911 = vld [vmem:[%s2892 + $0xd8] sm:$0xff]
    %v2912 = vld [vmem:[%s2892 + $0xe0] sm:$0xff]
    %v2913 = vld [vmem:[%s2892 + $0xf0] sm:$0xff]
    %v2914 = vld [vmem:[%s2892 + $0xf8] sm:$0xff]
    %v2915 = vld [vmem:[%s2892 + $0x108] sm:$0xff]
    %v2916 = vld [vmem:[%s2892 + $0x110] sm:$0xff]
    %v2917 = vld [vmem:[%s2892 + $0x120] sm:$0xff]
    %v2918 = vld [vmem:[%s2892 + $0x128] sm:$0xff]
    %v2919 = vld [vmem:[%s2892 + $0x138] sm:$0xff]
    %v2920 = vld [vmem:[%s2892 + $0x140] sm:$0xff]
    %v2921 = vld [vmem:[%s2892 + $0x150] sm:$0xff]
    %v2922 = vld [vmem:[%s2892 + $0x158] sm:$0xff]
    %v2923 = vld [vmem:[%s2892 + $0x168] sm:$0xff]
    %v2924 = vld [vmem:[%s2892 + $0x170] sm:$0xff]
    %v2925 = vpack.c.bf16 %v2861, %v2860
    %v2926 = vpack.c.bf16 %v2863, %v2862
    %v2927 = vpack.c.bf16 %v2865, %v2864
    %v2928 = vpack.c.bf16 %v2867, %v2866
    %v2929 = vpack.c.bf16 %v2869, %v2868
    %v2930 = vpack.c.bf16 %v2871, %v2870
    %v2931 = vpack.c.bf16 %v2873, %v2872
    %v2932 = vpack.c.bf16 %v2875, %v2874
    %v2933 = vpack.c.bf16 %v2877, %v2876
    %v2934 = vpack.c.bf16 %v2879, %v2878
    %v2935 = vpack.c.bf16 %v2881, %v2880
    %v2936 = vpack.c.bf16 %v2883, %v2882
    %v2937 = vpack.c.bf16 %v2885, %v2884
    %v2938 = vpack.c.bf16 %v2887, %v2886
    %v2939 = vpack.c.bf16 %v2889, %v2888
    %v2940 = vpack.c.bf16 %v2891, %v2890
    %2957 = vrot.lane.b32.xlu0 %v2925, 12
    %v2958 = vpop.permute.xlu0 %2957
    %2959 = vrot.lane.b32.xlu0 %v2926, 12
    %v2960 = vpop.permute.xlu0 %2959
    %2961 = vrot.lane.b32.xlu0 %v2927, 12
    %v2962 = vpop.permute.xlu0 %2961
    %2963 = vrot.lane.b32.xlu0 %v2928, 12
    %v2964 = vpop.permute.xlu0 %2963
    %2965 = vrot.lane.b32.xlu0 %v2929, 12
    %v2966 = vpop.permute.xlu0 %2965
    %2967 = vrot.lane.b32.xlu0 %v2930, 12
    %v2968 = vpop.permute.xlu0 %2967
    %2969 = vrot.lane.b32.xlu0 %v2931, 12
    %v2970 = vpop.permute.xlu0 %2969
    %2971 = vrot.lane.b32.xlu0 %v2932, 12
    %v2972 = vpop.permute.xlu0 %2971
    %2973 = vrot.lane.b32.xlu0 %v2933, 12
    %v2974 = vpop.permute.xlu0 %2973
    %2975 = vrot.lane.b32.xlu0 %v2934, 12
    %v2976 = vpop.permute.xlu0 %2975
    %2977 = vrot.lane.b32.xlu0 %v2935, 12
    %v2978 = vpop.permute.xlu0 %2977
    %2979 = vrot.lane.b32.xlu0 %v2936, 12
    %v2980 = vpop.permute.xlu0 %2979
    %2981 = vrot.lane.b32.xlu0 %v2937, 12
    %v2982 = vpop.permute.xlu0 %2981
    %2983 = vrot.lane.b32.xlu0 %v2938, 12
    %v2984 = vpop.permute.xlu0 %2983
    %2985 = vrot.lane.b32.xlu0 %v2939, 12
    %v2986 = vpop.permute.xlu0 %2985
    %2987 = vrot.lane.b32.xlu0 %v2940, 12
    %v2988 = vpop.permute.xlu0 %2987
    %3005 = vst.msk [vmem:[#allocation2 + $0x80] sm:$0xff] %vm817, %v2958
    %3006 = vst.msk [vmem:[#allocation2 + $0x88] sm:$0xff] %vm817, %v2960
    %3007 = vst.msk [vmem:[#allocation2 + $0x90] sm:$0xff] %vm817, %v2962
    %3008 = vst.msk [vmem:[#allocation2 + $0x98] sm:$0xff] %vm817, %v2964
    %3009 = vst.msk [vmem:[#allocation2 + $0xa0] sm:$0xff] %vm817, %v2966
    %3010 = vst.msk [vmem:[#allocation2 + $0xa8] sm:$0xff] %vm817, %v2968
    %3011 = vst.msk [vmem:[#allocation2 + $0xb0] sm:$0xff] %vm817, %v2970
    %3012 = vst.msk [vmem:[#allocation2 + $0xb8] sm:$0xff] %vm817, %v2972
    %3013 = vst.msk [vmem:[#allocation2 + $0xc0] sm:$0xff] %vm817, %v2974
    %3014 = vst.msk [vmem:[#allocation2 + $0xc8] sm:$0xff] %vm817, %v2976
    %3015 = vst.msk [vmem:[#allocation2 + $0xd0] sm:$0xff] %vm817, %v2978
    %3016 = vst.msk [vmem:[#allocation2 + $0xd8] sm:$0xff] %vm817, %v2980
    %3017 = vst.msk [vmem:[#allocation2 + $0xe0] sm:$0xff] %vm817, %v2982
    %3018 = vst.msk [vmem:[#allocation2 + $0xe8] sm:$0xff] %vm817, %v2984
    %3019 = vst.msk [vmem:[#allocation2 + $0xf0] sm:$0xff] %vm817, %v2986
    %3020 = vst.msk [vmem:[#allocation2 + $0xf8] sm:$0xff] %vm817, %v2988
    %v3021 = vpack.c.bf16 %v2894, %v2893
    %v3022 = vpack.c.bf16 %v2896, %v2895
    %v3023 = vpack.c.bf16 %v2898, %v2897
    %v3024 = vpack.c.bf16 %v2900, %v2899
    %v3025 = vpack.c.bf16 %v2902, %v2901
    %v3026 = vpack.c.bf16 %v2904, %v2903
    %v3027 = vpack.c.bf16 %v2906, %v2905
    %v3028 = vpack.c.bf16 %v2908, %v2907
    %v3029 = vpack.c.bf16 %v2910, %v2909
    %v3030 = vpack.c.bf16 %v2912, %v2911
    %v3031 = vpack.c.bf16 %v2914, %v2913
    %v3032 = vpack.c.bf16 %v2916, %v2915
    %v3033 = vpack.c.bf16 %v2918, %v2917
    %v3034 = vpack.c.bf16 %v2920, %v2919
    %v3035 = vpack.c.bf16 %v2922, %v2921
    %v3036 = vpack.c.bf16 %v2924, %v2923
    %3053 = vrot.lane.b32.xlu0 %v3021, 12
    %v3054 = vpop.permute.xlu0 %3053
    %3055 = vrot.lane.b32.xlu0 %v3022, 12
    %v3056 = vpop.permute.xlu0 %3055
    %3057 = vrot.lane.b32.xlu0 %v3023, 12
    %v3058 = vpop.permute.xlu0 %3057
    %3059 = vrot.lane.b32.xlu0 %v3024, 12
    %v3060 = vpop.permute.xlu0 %3059
    %3061 = vrot.lane.b32.xlu0 %v3025, 12
    %v3062 = vpop.permute.xlu0 %3061
    %3063 = vrot.lane.b32.xlu0 %v3026, 12
    %v3064 = vpop.permute.xlu0 %3063
    %3065 = vrot.lane.b32.xlu0 %v3027, 12
    %v3066 = vpop.permute.xlu0 %3065
    %3067 = vrot.lane.b32.xlu0 %v3028, 12
    %v3068 = vpop.permute.xlu0 %3067
    %3069 = vrot.lane.b32.xlu0 %v3029, 12
    %v3070 = vpop.permute.xlu0 %3069
    %3071 = vrot.lane.b32.xlu0 %v3030, 12
    %v3072 = vpop.permute.xlu0 %3071
    %3073 = vrot.lane.b32.xlu0 %v3031, 12
    %v3074 = vpop.permute.xlu0 %3073
    %3075 = vrot.lane.b32.xlu0 %v3032, 12
    %v3076 = vpop.permute.xlu0 %3075
    %3077 = vrot.lane.b32.xlu0 %v3033, 12
    %v3078 = vpop.permute.xlu0 %3077
    %3079 = vrot.lane.b32.xlu0 %v3034, 12
    %v3080 = vpop.permute.xlu0 %3079
    %3081 = vrot.lane.b32.xlu0 %v3035, 12
    %v3082 = vpop.permute.xlu0 %3081
    %3083 = vrot.lane.b32.xlu0 %v3036, 12
    %v3084 = vpop.permute.xlu0 %3083
    %3101 = vst.msk [vmem:[#allocation3 + $0x80] sm:$0xff] %vm817, %v3054
    %3102 = vst.msk [vmem:[#allocation3 + $0x88] sm:$0xff] %vm817, %v3056
    %3103 = vst.msk [vmem:[#allocation3 + $0x90] sm:$0xff] %vm817, %v3058
    %3104 = vst.msk [vmem:[#allocation3 + $0x98] sm:$0xff] %vm817, %v3060
    %3105 = vst.msk [vmem:[#allocation3 + $0xa0] sm:$0xff] %vm817, %v3062
    %3106 = vst.msk [vmem:[#allocation3 + $0xa8] sm:$0xff] %vm817, %v3064
    %3107 = vst.msk [vmem:[#allocation3 + $0xb0] sm:$0xff] %vm817, %v3066
    %3108 = vst.msk [vmem:[#allocation3 + $0xb8] sm:$0xff] %vm817, %v3068
    %3109 = vst.msk [vmem:[#allocation3 + $0xc0] sm:$0xff] %vm817, %v3070
    %3110 = vst.msk [vmem:[#allocation3 + $0xc8] sm:$0xff] %vm817, %v3072
    %3111 = vst.msk [vmem:[#allocation3 + $0xd0] sm:$0xff] %vm817, %v3074
    %3112 = vst.msk [vmem:[#allocation3 + $0xd8] sm:$0xff] %vm817, %v3076
    %3113 = vst.msk [vmem:[#allocation3 + $0xe0] sm:$0xff] %vm817, %v3078
    %3114 = vst.msk [vmem:[#allocation3 + $0xe8] sm:$0xff] %vm817, %v3080
    %3115 = vst.msk [vmem:[#allocation3 + $0xf0] sm:$0xff] %vm817, %v3082
    %3116 = vst.msk [vmem:[#allocation3 + $0xf8] sm:$0xff] %vm817, %v3084
    %v3117 = vld [vmem:[%s2859 + $0x1] sm:$0xff]
    %v3118 = vld [vmem:[%s2859 + $0x9] sm:$0xff]
    %v3119 = vld [vmem:[%s2859 + $0x19] sm:$0xff]
    %v3120 = vld [vmem:[%s2859 + $0x21] sm:$0xff]
    %v3121 = vld [vmem:[%s2859 + $0x31] sm:$0xff]
    %v3122 = vld [vmem:[%s2859 + $0x39] sm:$0xff]
    %v3123 = vld [vmem:[%s2859 + $0x49] sm:$0xff]
    %v3124 = vld [vmem:[%s2859 + $0x51] sm:$0xff]
    %v3125 = vld [vmem:[%s2859 + $0x61] sm:$0xff]
    %v3126 = vld [vmem:[%s2859 + $0x69] sm:$0xff]
    %v3127 = vld [vmem:[%s2859 + $0x79] sm:$0xff]
    %v3128 = vld [vmem:[%s2859 + $0x81] sm:$0xff]
    %v3129 = vld [vmem:[%s2859 + $0x91] sm:$0xff]
    %v3130 = vld [vmem:[%s2859 + $0x99] sm:$0xff]
    %v3131 = vld [vmem:[%s2859 + $0xa9] sm:$0xff]
    %v3132 = vld [vmem:[%s2859 + $0xb1] sm:$0xff]
    %v3133 = vld [vmem:[%s2859 + $0xc1] sm:$0xff]
    %v3134 = vld [vmem:[%s2859 + $0xc9] sm:$0xff]
    %v3135 = vld [vmem:[%s2859 + $0xd9] sm:$0xff]
    %v3136 = vld [vmem:[%s2859 + $0xe1] sm:$0xff]
    %v3137 = vld [vmem:[%s2859 + $0xf1] sm:$0xff]
    %v3138 = vld [vmem:[%s2859 + $0xf9] sm:$0xff]
    %v3139 = vld [vmem:[%s2859 + $0x109] sm:$0xff]
    %v3140 = vld [vmem:[%s2859 + $0x111] sm:$0xff]
    %v3141 = vld [vmem:[%s2859 + $0x121] sm:$0xff]
    %v3142 = vld [vmem:[%s2859 + $0x129] sm:$0xff]
    %v3143 = vld [vmem:[%s2859 + $0x139] sm:$0xff]
    %v3144 = vld [vmem:[%s2859 + $0x141] sm:$0xff]
    %v3145 = vld [vmem:[%s2859 + $0x151] sm:$0xff]
    %v3146 = vld [vmem:[%s2859 + $0x159] sm:$0xff]
    %v3147 = vld [vmem:[%s2859 + $0x169] sm:$0xff]
    %v3148 = vld [vmem:[%s2859 + $0x171] sm:$0xff]
    %v3149 = vld [vmem:[%s2892 + $0x1] sm:$0xff]
    %v3150 = vld [vmem:[%s2892 + $0x9] sm:$0xff]
    %v3151 = vld [vmem:[%s2892 + $0x19] sm:$0xff]
    %v3152 = vld [vmem:[%s2892 + $0x21] sm:$0xff]
    %v3153 = vld [vmem:[%s2892 + $0x31] sm:$0xff]
    %v3154 = vld [vmem:[%s2892 + $0x39] sm:$0xff]
    %v3155 = vld [vmem:[%s2892 + $0x49] sm:$0xff]
    %v3156 = vld [vmem:[%s2892 + $0x51] sm:$0xff]
    %v3157 = vld [vmem:[%s2892 + $0x61] sm:$0xff]
    %v3158 = vld [vmem:[%s2892 + $0x69] sm:$0xff]
    %v3159 = vld [vmem:[%s2892 + $0x79] sm:$0xff]
    %v3160 = vld [vmem:[%s2892 + $0x81] sm:$0xff]
    %v3161 = vld [vmem:[%s2892 + $0x91] sm:$0xff]
    %v3162 = vld [vmem:[%s2892 + $0x99] sm:$0xff]
    %v3163 = vld [vmem:[%s2892 + $0xa9] sm:$0xff]
    %v3164 = vld [vmem:[%s2892 + $0xb1] sm:$0xff]
    %v3165 = vld [vmem:[%s2892 + $0xc1] sm:$0xff]
    %v3166 = vld [vmem:[%s2892 + $0xc9] sm:$0xff]
    %v3167 = vld [vmem:[%s2892 + $0xd9] sm:$0xff]
    %v3168 = vld [vmem:[%s2892 + $0xe1] sm:$0xff]
    %v3169 = vld [vmem:[%s2892 + $0xf1] sm:$0xff]
    %v3170 = vld [vmem:[%s2892 + $0xf9] sm:$0xff]
    %v3171 = vld [vmem:[%s2892 + $0x109] sm:$0xff]
    %v3172 = vld [vmem:[%s2892 + $0x111] sm:$0xff]
    %v3173 = vld [vmem:[%s2892 + $0x121] sm:$0xff]
    %v3174 = vld [vmem:[%s2892 + $0x129] sm:$0xff]
    %v3175 = vld [vmem:[%s2892 + $0x139] sm:$0xff]
    %v3176 = vld [vmem:[%s2892 + $0x141] sm:$0xff]
    %v3177 = vld [vmem:[%s2892 + $0x151] sm:$0xff]
    %v3178 = vld [vmem:[%s2892 + $0x159] sm:$0xff]
    %v3179 = vld [vmem:[%s2892 + $0x169] sm:$0xff]
    %v3180 = vld [vmem:[%s2892 + $0x171] sm:$0xff]
    %v3181 = vpack.c.bf16 %v3118, %v3117
    %v3182 = vpack.c.bf16 %v3120, %v3119
    %v3183 = vpack.c.bf16 %v3122, %v3121
    %v3184 = vpack.c.bf16 %v3124, %v3123
    %v3185 = vpack.c.bf16 %v3126, %v3125
    %v3186 = vpack.c.bf16 %v3128, %v3127
    %v3187 = vpack.c.bf16 %v3130, %v3129
    %v3188 = vpack.c.bf16 %v3132, %v3131
    %v3189 = vpack.c.bf16 %v3134, %v3133
    %v3190 = vpack.c.bf16 %v3136, %v3135
    %v3191 = vpack.c.bf16 %v3138, %v3137
    %v3192 = vpack.c.bf16 %v3140, %v3139
    %v3193 = vpack.c.bf16 %v3142, %v3141
    %v3194 = vpack.c.bf16 %v3144, %v3143
    %v3195 = vpack.c.bf16 %v3146, %v3145
    %v3196 = vpack.c.bf16 %v3148, %v3147
    %3213 = vrot.lane.b32.xlu0 %v3181, 16
    %v3214 = vpop.permute.xlu0 %3213
    %3215 = vrot.lane.b32.xlu0 %v3182, 16
    %v3216 = vpop.permute.xlu0 %3215
    %3217 = vrot.lane.b32.xlu0 %v3183, 16
    %v3218 = vpop.permute.xlu0 %3217
    %3219 = vrot.lane.b32.xlu0 %v3184, 16
    %v3220 = vpop.permute.xlu0 %3219
    %3221 = vrot.lane.b32.xlu0 %v3185, 16
    %v3222 = vpop.permute.xlu0 %3221
    %3223 = vrot.lane.b32.xlu0 %v3186, 16
    %v3224 = vpop.permute.xlu0 %3223
    %3225 = vrot.lane.b32.xlu0 %v3187, 16
    %v3226 = vpop.permute.xlu0 %3225
    %3227 = vrot.lane.b32.xlu0 %v3188, 16
    %v3228 = vpop.permute.xlu0 %3227
    %3229 = vrot.lane.b32.xlu0 %v3189, 16
    %v3230 = vpop.permute.xlu0 %3229
    %3231 = vrot.lane.b32.xlu0 %v3190, 16
    %v3232 = vpop.permute.xlu0 %3231
    %3233 = vrot.lane.b32.xlu0 %v3191, 16
    %v3234 = vpop.permute.xlu0 %3233
    %3235 = vrot.lane.b32.xlu0 %v3192, 16
    %v3236 = vpop.permute.xlu0 %3235
    %3237 = vrot.lane.b32.xlu0 %v3193, 16
    %v3238 = vpop.permute.xlu0 %3237
    %3239 = vrot.lane.b32.xlu0 %v3194, 16
    %v3240 = vpop.permute.xlu0 %3239
    %3241 = vrot.lane.b32.xlu0 %v3195, 16
    %v3242 = vpop.permute.xlu0 %3241
    %3243 = vrot.lane.b32.xlu0 %v3196, 16
    %v3244 = vpop.permute.xlu0 %3243
    %3261 = vst.msk [vmem:[#allocation2 + $0x80] sm:$0xff] %vm1074, %v3214
    %3262 = vst.msk [vmem:[#allocation2 + $0x88] sm:$0xff] %vm1074, %v3216
    %3263 = vst.msk [vmem:[#allocation2 + $0x90] sm:$0xff] %vm1074, %v3218
    %3264 = vst.msk [vmem:[#allocation2 + $0x98] sm:$0xff] %vm1074, %v3220
    %3265 = vst.msk [vmem:[#allocation2 + $0xa0] sm:$0xff] %vm1074, %v3222
    %3266 = vst.msk [vmem:[#allocation2 + $0xa8] sm:$0xff] %vm1074, %v3224
    %3267 = vst.msk [vmem:[#allocation2 + $0xb0] sm:$0xff] %vm1074, %v3226
    %3268 = vst.msk [vmem:[#allocation2 + $0xb8] sm:$0xff] %vm1074, %v3228
    %3269 = vst.msk [vmem:[#allocation2 + $0xc0] sm:$0xff] %vm1074, %v3230
    %3270 = vst.msk [vmem:[#allocation2 + $0xc8] sm:$0xff] %vm1074, %v3232
    %3271 = vst.msk [vmem:[#allocation2 + $0xd0] sm:$0xff] %vm1074, %v3234
    %3272 = vst.msk [vmem:[#allocation2 + $0xd8] sm:$0xff] %vm1074, %v3236
    %3273 = vst.msk [vmem:[#allocation2 + $0xe0] sm:$0xff] %vm1074, %v3238
    %3274 = vst.msk [vmem:[#allocation2 + $0xe8] sm:$0xff] %vm1074, %v3240
    %3275 = vst.msk [vmem:[#allocation2 + $0xf0] sm:$0xff] %vm1074, %v3242
    %3276 = vst.msk [vmem:[#allocation2 + $0xf8] sm:$0xff] %vm1074, %v3244
    %v3277 = vpack.c.bf16 %v3150, %v3149
    %v3278 = vpack.c.bf16 %v3152, %v3151
    %v3279 = vpack.c.bf16 %v3154, %v3153
    %v3280 = vpack.c.bf16 %v3156, %v3155
    %v3281 = vpack.c.bf16 %v3158, %v3157
    %v3282 = vpack.c.bf16 %v3160, %v3159
    %v3283 = vpack.c.bf16 %v3162, %v3161
    %v3284 = vpack.c.bf16 %v3164, %v3163
    %v3285 = vpack.c.bf16 %v3166, %v3165
    %v3286 = vpack.c.bf16 %v3168, %v3167
    %v3287 = vpack.c.bf16 %v3170, %v3169
    %v3288 = vpack.c.bf16 %v3172, %v3171
    %v3289 = vpack.c.bf16 %v3174, %v3173
    %v3290 = vpack.c.bf16 %v3176, %v3175
    %v3291 = vpack.c.bf16 %v3178, %v3177
    %v3292 = vpack.c.bf16 %v3180, %v3179
    %3309 = vrot.lane.b32.xlu0 %v3277, 16
    %v3310 = vpop.permute.xlu0 %3309
    %3311 = vrot.lane.b32.xlu0 %v3278, 16
    %v3312 = vpop.permute.xlu0 %3311
    %3313 = vrot.lane.b32.xlu0 %v3279, 16
    %v3314 = vpop.permute.xlu0 %3313
    %3315 = vrot.lane.b32.xlu0 %v3280, 16
    %v3316 = vpop.permute.xlu0 %3315
    %3317 = vrot.lane.b32.xlu0 %v3281, 16
    %v3318 = vpop.permute.xlu0 %3317
    %3319 = vrot.lane.b32.xlu0 %v3282, 16
    %v3320 = vpop.permute.xlu0 %3319
    %3321 = vrot.lane.b32.xlu0 %v3283, 16
    %v3322 = vpop.permute.xlu0 %3321
    %3323 = vrot.lane.b32.xlu0 %v3284, 16
    %v3324 = vpop.permute.xlu0 %3323
    %3325 = vrot.lane.b32.xlu0 %v3285, 16
    %v3326 = vpop.permute.xlu0 %3325
    %3327 = vrot.lane.b32.xlu0 %v3286, 16
    %v3328 = vpop.permute.xlu0 %3327
    %3329 = vrot.lane.b32.xlu0 %v3287, 16
    %v3330 = vpop.permute.xlu0 %3329
    %3331 = vrot.lane.b32.xlu0 %v3288, 16
    %v3332 = vpop.permute.xlu0 %3331
    %3333 = vrot.lane.b32.xlu0 %v3289, 16
    %v3334 = vpop.permute.xlu0 %3333
    %3335 = vrot.lane.b32.xlu0 %v3290, 16
    %v3336 = vpop.permute.xlu0 %3335
    %3337 = vrot.lane.b32.xlu0 %v3291, 16
    %v3338 = vpop.permute.xlu0 %3337
    %3339 = vrot.lane.b32.xlu0 %v3292, 16
    %v3340 = vpop.permute.xlu0 %3339
    %3357 = vst.msk [vmem:[#allocation3 + $0x80] sm:$0xff] %vm1074, %v3310
    %3358 = vst.msk [vmem:[#allocation3 + $0x88] sm:$0xff] %vm1074, %v3312
    %3359 = vst.msk [vmem:[#allocation3 + $0x90] sm:$0xff] %vm1074, %v3314
    %3360 = vst.msk [vmem:[#allocation3 + $0x98] sm:$0xff] %vm1074, %v3316
    %3361 = vst.msk [vmem:[#allocation3 + $0xa0] sm:$0xff] %vm1074, %v3318
    %3362 = vst.msk [vmem:[#allocation3 + $0xa8] sm:$0xff] %vm1074, %v3320
    %3363 = vst.msk [vmem:[#allocation3 + $0xb0] sm:$0xff] %vm1074, %v3322
    %3364 = vst.msk [vmem:[#allocation3 + $0xb8] sm:$0xff] %vm1074, %v3324
    %3365 = vst.msk [vmem:[#allocation3 + $0xc0] sm:$0xff] %vm1074, %v3326
    %3366 = vst.msk [vmem:[#allocation3 + $0xc8] sm:$0xff] %vm1074, %v3328
    %3367 = vst.msk [vmem:[#allocation3 + $0xd0] sm:$0xff] %vm1074, %v3330
    %3368 = vst.msk [vmem:[#allocation3 + $0xd8] sm:$0xff] %vm1074, %v3332
    %3369 = vst.msk [vmem:[#allocation3 + $0xe0] sm:$0xff] %vm1074, %v3334
    %3370 = vst.msk [vmem:[#allocation3 + $0xe8] sm:$0xff] %vm1074, %v3336
    %3371 = vst.msk [vmem:[#allocation3 + $0xf0] sm:$0xff] %vm1074, %v3338
    %3372 = vst.msk [vmem:[#allocation3 + $0xf8] sm:$0xff] %vm1074, %v3340
    %v3373 = vld [vmem:[%s2859 + $0x2] sm:$0xff]
    %v3374 = vld [vmem:[%s2859 + $0xa] sm:$0xff]
    %v3375 = vld [vmem:[%s2859 + $0x1a] sm:$0xff]
    %v3376 = vld [vmem:[%s2859 + $0x22] sm:$0xff]
    %v3377 = vld [vmem:[%s2859 + $0x32] sm:$0xff]
    %v3378 = vld [vmem:[%s2859 + $0x3a] sm:$0xff]
    %v3379 = vld [vmem:[%s2859 + $0x4a] sm:$0xff]
    %v3380 = vld [vmem:[%s2859 + $0x52] sm:$0xff]
    %v3381 = vld [vmem:[%s2859 + $0x62] sm:$0xff]
    %v3382 = vld [vmem:[%s2859 + $0x6a] sm:$0xff]
    %v3383 = vld [vmem:[%s2859 + $0x7a] sm:$0xff]
    %v3384 = vld [vmem:[%s2859 + $0x82] sm:$0xff]
    %v3385 = vld [vmem:[%s2859 + $0x92] sm:$0xff]
    %v3386 = vld [vmem:[%s2859 + $0x9a] sm:$0xff]
    %v3387 = vld [vmem:[%s2859 + $0xaa] sm:$0xff]
    %v3388 = vld [vmem:[%s2859 + $0xb2] sm:$0xff]
    %v3389 = vld [vmem:[%s2859 + $0xc2] sm:$0xff]
    %v3390 = vld [vmem:[%s2859 + $0xca] sm:$0xff]
    %v3391 = vld [vmem:[%s2859 + $0xda] sm:$0xff]
    %v3392 = vld [vmem:[%s2859 + $0xe2] sm:$0xff]
    %v3393 = vld [vmem:[%s2859 + $0xf2] sm:$0xff]
    %v3394 = vld [vmem:[%s2859 + $0xfa] sm:$0xff]
    %v3395 = vld [vmem:[%s2859 + $0x10a] sm:$0xff]
    %v3396 = vld [vmem:[%s2859 + $0x112] sm:$0xff]
    %v3397 = vld [vmem:[%s2859 + $0x122] sm:$0xff]
    %v3398 = vld [vmem:[%s2859 + $0x12a] sm:$0xff]
    %v3399 = vld [vmem:[%s2859 + $0x13a] sm:$0xff]
    %v3400 = vld [vmem:[%s2859 + $0x142] sm:$0xff]
    %v3401 = vld [vmem:[%s2859 + $0x152] sm:$0xff]
    %v3402 = vld [vmem:[%s2859 + $0x15a] sm:$0xff]
    %v3403 = vld [vmem:[%s2859 + $0x16a] sm:$0xff]
    %v3404 = vld [vmem:[%s2859 + $0x172] sm:$0xff]
    %v3405 = vld [vmem:[%s2892 + $0x2] sm:$0xff]
    %v3406 = vld [vmem:[%s2892 + $0xa] sm:$0xff]
    %v3407 = vld [vmem:[%s2892 + $0x1a] sm:$0xff]
    %v3408 = vld [vmem:[%s2892 + $0x22] sm:$0xff]
    %v3409 = vld [vmem:[%s2892 + $0x32] sm:$0xff]
    %v3410 = vld [vmem:[%s2892 + $0x3a] sm:$0xff]
    %v3411 = vld [vmem:[%s2892 + $0x4a] sm:$0xff]
    %v3412 = vld [vmem:[%s2892 + $0x52] sm:$0xff]
    %v3413 = vld [vmem:[%s2892 + $0x62] sm:$0xff]
    %v3414 = vld [vmem:[%s2892 + $0x6a] sm:$0xff]
    %v3415 = vld [vmem:[%s2892 + $0x7a] sm:$0xff]
    %v3416 = vld [vmem:[%s2892 + $0x82] sm:$0xff]
    %v3417 = vld [vmem:[%s2892 + $0x92] sm:$0xff]
    %v3418 = vld [vmem:[%s2892 + $0x9a] sm:$0xff]
    %v3419 = vld [vmem:[%s2892 + $0xaa] sm:$0xff]
    %v3420 = vld [vmem:[%s2892 + $0xb2] sm:$0xff]
    %v3421 = vld [vmem:[%s2892 + $0xc2] sm:$0xff]
    %v3422 = vld [vmem:[%s2892 + $0xca] sm:$0xff]
    %v3423 = vld [vmem:[%s2892 + $0xda] sm:$0xff]
    %v3424 = vld [vmem:[%s2892 + $0xe2] sm:$0xff]
    %v3425 = vld [vmem:[%s2892 + $0xf2] sm:$0xff]
    %v3426 = vld [vmem:[%s2892 + $0xfa] sm:$0xff]
    %v3427 = vld [vmem:[%s2892 + $0x10a] sm:$0xff]
    %v3428 = vld [vmem:[%s2892 + $0x112] sm:$0xff]
    %v3429 = vld [vmem:[%s2892 + $0x122] sm:$0xff]
    %v3430 = vld [vmem:[%s2892 + $0x12a] sm:$0xff]
    %v3431 = vld [vmem:[%s2892 + $0x13a] sm:$0xff]
    %v3432 = vld [vmem:[%s2892 + $0x142] sm:$0xff]
    %v3433 = vld [vmem:[%s2892 + $0x152] sm:$0xff]
    %v3434 = vld [vmem:[%s2892 + $0x15a] sm:$0xff]
    %v3435 = vld [vmem:[%s2892 + $0x16a] sm:$0xff]
    %v3436 = vld [vmem:[%s2892 + $0x172] sm:$0xff]
    %v3437 = vpack.c.bf16 %v3374, %v3373
    %v3438 = vpack.c.bf16 %v3376, %v3375
    %v3439 = vpack.c.bf16 %v3378, %v3377
    %v3440 = vpack.c.bf16 %v3380, %v3379
    %v3441 = vpack.c.bf16 %v3382, %v3381
    %v3442 = vpack.c.bf16 %v3384, %v3383
    %v3443 = vpack.c.bf16 %v3386, %v3385
    %v3444 = vpack.c.bf16 %v3388, %v3387
    %v3445 = vpack.c.bf16 %v3390, %v3389
    %v3446 = vpack.c.bf16 %v3392, %v3391
    %v3447 = vpack.c.bf16 %v3394, %v3393
    %v3448 = vpack.c.bf16 %v3396, %v3395
    %v3449 = vpack.c.bf16 %v3398, %v3397
    %v3450 = vpack.c.bf16 %v3400, %v3399
    %v3451 = vpack.c.bf16 %v3402, %v3401
    %v3452 = vpack.c.bf16 %v3404, %v3403
    %3469 = vrot.lane.b32.xlu0 %v3437, 20
    %v3470 = vpop.permute.xlu0 %3469
    %3471 = vrot.lane.b32.xlu0 %v3438, 20
    %v3472 = vpop.permute.xlu0 %3471
    %3473 = vrot.lane.b32.xlu0 %v3439, 20
    %v3474 = vpop.permute.xlu0 %3473
    %3475 = vrot.lane.b32.xlu0 %v3440, 20
    %v3476 = vpop.permute.xlu0 %3475
    %3477 = vrot.lane.b32.xlu0 %v3441, 20
    %v3478 = vpop.permute.xlu0 %3477
    %3479 = vrot.lane.b32.xlu0 %v3442, 20
    %v3480 = vpop.permute.xlu0 %3479
    %3481 = vrot.lane.b32.xlu0 %v3443, 20
    %v3482 = vpop.permute.xlu0 %3481
    %3483 = vrot.lane.b32.xlu0 %v3444, 20
    %v3484 = vpop.permute.xlu0 %3483
    %3485 = vrot.lane.b32.xlu0 %v3445, 20
    %v3486 = vpop.permute.xlu0 %3485
    %3487 = vrot.lane.b32.xlu0 %v3446, 20
    %v3488 = vpop.permute.xlu0 %3487
    %3489 = vrot.lane.b32.xlu0 %v3447, 20
    %v3490 = vpop.permute.xlu0 %3489
    %3491 = vrot.lane.b32.xlu0 %v3448, 20
    %v3492 = vpop.permute.xlu0 %3491
    %3493 = vrot.lane.b32.xlu0 %v3449, 20
    %v3494 = vpop.permute.xlu0 %3493
    %3495 = vrot.lane.b32.xlu0 %v3450, 20
    %v3496 = vpop.permute.xlu0 %3495
    %3497 = vrot.lane.b32.xlu0 %v3451, 20
    %v3498 = vpop.permute.xlu0 %3497
    %3499 = vrot.lane.b32.xlu0 %v3452, 20
    %v3500 = vpop.permute.xlu0 %3499
    %3517 = vst.msk [vmem:[#allocation2 + $0x80] sm:$0xff] %vm1331, %v3470
    %3518 = vst.msk [vmem:[#allocation2 + $0x88] sm:$0xff] %vm1331, %v3472
    %3519 = vst.msk [vmem:[#allocation2 + $0x90] sm:$0xff] %vm1331, %v3474
    %3520 = vst.msk [vmem:[#allocation2 + $0x98] sm:$0xff] %vm1331, %v3476
    %3521 = vst.msk [vmem:[#allocation2 + $0xa0] sm:$0xff] %vm1331, %v3478
    %3522 = vst.msk [vmem:[#allocation2 + $0xa8] sm:$0xff] %vm1331, %v3480
    %3523 = vst.msk [vmem:[#allocation2 + $0xb0] sm:$0xff] %vm1331, %v3482
    %3524 = vst.msk [vmem:[#allocation2 + $0xb8] sm:$0xff] %vm1331, %v3484
    %3525 = vst.msk [vmem:[#allocation2 + $0xc0] sm:$0xff] %vm1331, %v3486
    %3526 = vst.msk [vmem:[#allocation2 + $0xc8] sm:$0xff] %vm1331, %v3488
    %3527 = vst.msk [vmem:[#allocation2 + $0xd0] sm:$0xff] %vm1331, %v3490
    %3528 = vst.msk [vmem:[#allocation2 + $0xd8] sm:$0xff] %vm1331, %v3492
    %3529 = vst.msk [vmem:[#allocation2 + $0xe0] sm:$0xff] %vm1331, %v3494
    %3530 = vst.msk [vmem:[#allocation2 + $0xe8] sm:$0xff] %vm1331, %v3496
    %3531 = vst.msk [vmem:[#allocation2 + $0xf0] sm:$0xff] %vm1331, %v3498
    %3532 = vst.msk [vmem:[#allocation2 + $0xf8] sm:$0xff] %vm1331, %v3500
    %v3533 = vpack.c.bf16 %v3406, %v3405
    %v3534 = vpack.c.bf16 %v3408, %v3407
    %v3535 = vpack.c.bf16 %v3410, %v3409
    %v3536 = vpack.c.bf16 %v3412, %v3411
    %v3537 = vpack.c.bf16 %v3414, %v3413
    %v3538 = vpack.c.bf16 %v3416, %v3415
    %v3539 = vpack.c.bf16 %v3418, %v3417
    %v3540 = vpack.c.bf16 %v3420, %v3419
    %v3541 = vpack.c.bf16 %v3422, %v3421
    %v3542 = vpack.c.bf16 %v3424, %v3423
    %v3543 = vpack.c.bf16 %v3426, %v3425
    %v3544 = vpack.c.bf16 %v3428, %v3427
    %v3545 = vpack.c.bf16 %v3430, %v3429
    %v3546 = vpack.c.bf16 %v3432, %v3431
    %v3547 = vpack.c.bf16 %v3434, %v3433
    %v3548 = vpack.c.bf16 %v3436, %v3435
    %3565 = vrot.lane.b32.xlu0 %v3533, 20
    %v3566 = vpop.permute.xlu0 %3565
    %3567 = vrot.lane.b32.xlu0 %v3534, 20
    %v3568 = vpop.permute.xlu0 %3567
    %3569 = vrot.lane.b32.xlu0 %v3535, 20
    %v3570 = vpop.permute.xlu0 %3569
    %3571 = vrot.lane.b32.xlu0 %v3536, 20
    %v3572 = vpop.permute.xlu0 %3571
    %3573 = vrot.lane.b32.xlu0 %v3537, 20
    %v3574 = vpop.permute.xlu0 %3573
    %3575 = vrot.lane.b32.xlu0 %v3538, 20
    %v3576 = vpop.permute.xlu0 %3575
    %3577 = vrot.lane.b32.xlu0 %v3539, 20
    %v3578 = vpop.permute.xlu0 %3577
    %3579 = vrot.lane.b32.xlu0 %v3540, 20
    %v3580 = vpop.permute.xlu0 %3579
    %3581 = vrot.lane.b32.xlu0 %v3541, 20
    %v3582 = vpop.permute.xlu0 %3581
    %3583 = vrot.lane.b32.xlu0 %v3542, 20
    %v3584 = vpop.permute.xlu0 %3583
    %3585 = vrot.lane.b32.xlu0 %v3543, 20
    %v3586 = vpop.permute.xlu0 %3585
    %3587 = vrot.lane.b32.xlu0 %v3544, 20
    %v3588 = vpop.permute.xlu0 %3587
    %3589 = vrot.lane.b32.xlu0 %v3545, 20
    %v3590 = vpop.permute.xlu0 %3589
    %3591 = vrot.lane.b32.xlu0 %v3546, 20
    %v3592 = vpop.permute.xlu0 %3591
    %3593 = vrot.lane.b32.xlu0 %v3547, 20
    %v3594 = vpop.permute.xlu0 %3593
    %3595 = vrot.lane.b32.xlu0 %v3548, 20
    %v3596 = vpop.permute.xlu0 %3595
    %3613 = vst.msk [vmem:[#allocation3 + $0x80] sm:$0xff] %vm1331, %v3566
    %3614 = vst.msk [vmem:[#allocation3 + $0x88] sm:$0xff] %vm1331, %v3568
    %3615 = vst.msk [vmem:[#allocation3 + $0x90] sm:$0xff] %vm1331, %v3570
    %3616 = vst.msk [vmem:[#allocation3 + $0x98] sm:$0xff] %vm1331, %v3572
    %3617 = vst.msk [vmem:[#allocation3 + $0xa0] sm:$0xff] %vm1331, %v3574
    %3618 = vst.msk [vmem:[#allocation3 + $0xa8] sm:$0xff] %vm1331, %v3576
    %3619 = vst.msk [vmem:[#allocation3 + $0xb0] sm:$0xff] %vm1331, %v3578
    %3620 = vst.msk [vmem:[#allocation3 + $0xb8] sm:$0xff] %vm1331, %v3580
    %3621 = vst.msk [vmem:[#allocation3 + $0xc0] sm:$0xff] %vm1331, %v3582
    %3622 = vst.msk [vmem:[#allocation3 + $0xc8] sm:$0xff] %vm1331, %v3584
    %3623 = vst.msk [vmem:[#allocation3 + $0xd0] sm:$0xff] %vm1331, %v3586
    %3624 = vst.msk [vmem:[#allocation3 + $0xd8] sm:$0xff] %vm1331, %v3588
    %3625 = vst.msk [vmem:[#allocation3 + $0xe0] sm:$0xff] %vm1331, %v3590
    %3626 = vst.msk [vmem:[#allocation3 + $0xe8] sm:$0xff] %vm1331, %v3592
    %3627 = vst.msk [vmem:[#allocation3 + $0xf0] sm:$0xff] %vm1331, %v3594
    %3628 = vst.msk [vmem:[#allocation3 + $0xf8] sm:$0xff] %vm1331, %v3596
    %s3629 = scalar_lea.vmem %s0, 480
    %v3630 = vld [vmem:[%s3629] sm:$0xff]
    %v3631 = vld [vmem:[%s3629 + $0x8] sm:$0xff]
    %v3632 = vld [vmem:[%s3629 + $0x18] sm:$0xff]
    %v3633 = vld [vmem:[%s3629 + $0x20] sm:$0xff]
    %v3634 = vld [vmem:[%s3629 + $0x30] sm:$0xff]
    %v3635 = vld [vmem:[%s3629 + $0x38] sm:$0xff]
    %v3636 = vld [vmem:[%s3629 + $0x48] sm:$0xff]
    %v3637 = vld [vmem:[%s3629 + $0x50] sm:$0xff]
    %v3638 = vld [vmem:[%s3629 + $0x60] sm:$0xff]
    %v3639 = vld [vmem:[%s3629 + $0x68] sm:$0xff]
    %v3640 = vld [vmem:[%s3629 + $0x78] sm:$0xff]
    %v3641 = vld [vmem:[%s3629 + $0x80] sm:$0xff]
    %v3642 = vld [vmem:[%s3629 + $0x90] sm:$0xff]
    %v3643 = vld [vmem:[%s3629 + $0x98] sm:$0xff]
    %v3644 = vld [vmem:[%s3629 + $0xa8] sm:$0xff]
    %v3645 = vld [vmem:[%s3629 + $0xb0] sm:$0xff]
    %v3646 = vld [vmem:[%s3629 + $0xc0] sm:$0xff]
    %v3647 = vld [vmem:[%s3629 + $0xc8] sm:$0xff]
    %v3648 = vld [vmem:[%s3629 + $0xd8] sm:$0xff]
    %v3649 = vld [vmem:[%s3629 + $0xe0] sm:$0xff]
    %v3650 = vld [vmem:[%s3629 + $0xf0] sm:$0xff]
    %v3651 = vld [vmem:[%s3629 + $0xf8] sm:$0xff]
    %v3652 = vld [vmem:[%s3629 + $0x108] sm:$0xff]
    %v3653 = vld [vmem:[%s3629 + $0x110] sm:$0xff]
    %v3654 = vld [vmem:[%s3629 + $0x120] sm:$0xff]
    %v3655 = vld [vmem:[%s3629 + $0x128] sm:$0xff]
    %v3656 = vld [vmem:[%s3629 + $0x138] sm:$0xff]
    %v3657 = vld [vmem:[%s3629 + $0x140] sm:$0xff]
    %v3658 = vld [vmem:[%s3629 + $0x150] sm:$0xff]
    %v3659 = vld [vmem:[%s3629 + $0x158] sm:$0xff]
    %v3660 = vld [vmem:[%s3629 + $0x168] sm:$0xff]
    %v3661 = vld [vmem:[%s3629 + $0x170] sm:$0xff]
    %s3662 = scalar_lea.vmem %s1, 480
    %v3663 = vld [vmem:[%s3662] sm:$0xff]
    %v3664 = vld [vmem:[%s3662 + $0x8] sm:$0xff]
    %v3665 = vld [vmem:[%s3662 + $0x18] sm:$0xff]
    %v3666 = vld [vmem:[%s3662 + $0x20] sm:$0xff]
    %v3667 = vld [vmem:[%s3662 + $0x30] sm:$0xff]
    %v3668 = vld [vmem:[%s3662 + $0x38] sm:$0xff]
    %v3669 = vld [vmem:[%s3662 + $0x48] sm:$0xff]
    %v3670 = vld [vmem:[%s3662 + $0x50] sm:$0xff]
    %v3671 = vld [vmem:[%s3662 + $0x60] sm:$0xff]
    %v3672 = vld [vmem:[%s3662 + $0x68] sm:$0xff]
    %v3673 = vld [vmem:[%s3662 + $0x78] sm:$0xff]
    %v3674 = vld [vmem:[%s3662 + $0x80] sm:$0xff]
    %v3675 = vld [vmem:[%s3662 + $0x90] sm:$0xff]
    %v3676 = vld [vmem:[%s3662 + $0x98] sm:$0xff]
    %v3677 = vld [vmem:[%s3662 + $0xa8] sm:$0xff]
    %v3678 = vld [vmem:[%s3662 + $0xb0] sm:$0xff]
    %v3679 = vld [vmem:[%s3662 + $0xc0] sm:$0xff]
    %v3680 = vld [vmem:[%s3662 + $0xc8] sm:$0xff]
    %v3681 = vld [vmem:[%s3662 + $0xd8] sm:$0xff]
    %v3682 = vld [vmem:[%s3662 + $0xe0] sm:$0xff]
    %v3683 = vld [vmem:[%s3662 + $0xf0] sm:$0xff]
    %v3684 = vld [vmem:[%s3662 + $0xf8] sm:$0xff]
    %v3685 = vld [vmem:[%s3662 + $0x108] sm:$0xff]
    %v3686 = vld [vmem:[%s3662 + $0x110] sm:$0xff]
    %v3687 = vld [vmem:[%s3662 + $0x120] sm:$0xff]
    %v3688 = vld [vmem:[%s3662 + $0x128] sm:$0xff]
    %v3689 = vld [vmem:[%s3662 + $0x138] sm:$0xff]
    %v3690 = vld [vmem:[%s3662 + $0x140] sm:$0xff]
    %v3691 = vld [vmem:[%s3662 + $0x150] sm:$0xff]
    %v3692 = vld [vmem:[%s3662 + $0x158] sm:$0xff]
    %v3693 = vld [vmem:[%s3662 + $0x168] sm:$0xff]
    %v3694 = vld [vmem:[%s3662 + $0x170] sm:$0xff]
    %v3695 = vpack.c.bf16 %v3631, %v3630
    %v3696 = vpack.c.bf16 %v3633, %v3632
    %v3697 = vpack.c.bf16 %v3635, %v3634
    %v3698 = vpack.c.bf16 %v3637, %v3636
    %v3699 = vpack.c.bf16 %v3639, %v3638
    %v3700 = vpack.c.bf16 %v3641, %v3640
    %v3701 = vpack.c.bf16 %v3643, %v3642
    %v3702 = vpack.c.bf16 %v3645, %v3644
    %v3703 = vpack.c.bf16 %v3647, %v3646
    %v3704 = vpack.c.bf16 %v3649, %v3648
    %v3705 = vpack.c.bf16 %v3651, %v3650
    %v3706 = vpack.c.bf16 %v3653, %v3652
    %v3707 = vpack.c.bf16 %v3655, %v3654
    %v3708 = vpack.c.bf16 %v3657, %v3656
    %v3709 = vpack.c.bf16 %v3659, %v3658
    %v3710 = vpack.c.bf16 %v3661, %v3660
    %3727 = vrot.lane.b32.xlu0 %v3695, 24
    %v3728 = vpop.permute.xlu0 %3727
    %3729 = vrot.lane.b32.xlu0 %v3696, 24
    %v3730 = vpop.permute.xlu0 %3729
    %3731 = vrot.lane.b32.xlu0 %v3697, 24
    %v3732 = vpop.permute.xlu0 %3731
    %3733 = vrot.lane.b32.xlu0 %v3698, 24
    %v3734 = vpop.permute.xlu0 %3733
    %3735 = vrot.lane.b32.xlu0 %v3699, 24
    %v3736 = vpop.permute.xlu0 %3735
    %3737 = vrot.lane.b32.xlu0 %v3700, 24
    %v3738 = vpop.permute.xlu0 %3737
    %3739 = vrot.lane.b32.xlu0 %v3701, 24
    %v3740 = vpop.permute.xlu0 %3739
    %3741 = vrot.lane.b32.xlu0 %v3702, 24
    %v3742 = vpop.permute.xlu0 %3741
    %3743 = vrot.lane.b32.xlu0 %v3703, 24
    %v3744 = vpop.permute.xlu0 %3743
    %3745 = vrot.lane.b32.xlu0 %v3704, 24
    %v3746 = vpop.permute.xlu0 %3745
    %3747 = vrot.lane.b32.xlu0 %v3705, 24
    %v3748 = vpop.permute.xlu0 %3747
    %3749 = vrot.lane.b32.xlu0 %v3706, 24
    %v3750 = vpop.permute.xlu0 %3749
    %3751 = vrot.lane.b32.xlu0 %v3707, 24
    %v3752 = vpop.permute.xlu0 %3751
    %3753 = vrot.lane.b32.xlu0 %v3708, 24
    %v3754 = vpop.permute.xlu0 %3753
    %3755 = vrot.lane.b32.xlu0 %v3709, 24
    %v3756 = vpop.permute.xlu0 %3755
    %3757 = vrot.lane.b32.xlu0 %v3710, 24
    %v3758 = vpop.permute.xlu0 %3757
    %3775 = vst.msk [vmem:[#allocation2 + $0x80] sm:$0xff] %vm1590, %v3728
    %3776 = vst.msk [vmem:[#allocation2 + $0x88] sm:$0xff] %vm1590, %v3730
    %3777 = vst.msk [vmem:[#allocation2 + $0x90] sm:$0xff] %vm1590, %v3732
    %3778 = vst.msk [vmem:[#allocation2 + $0x98] sm:$0xff] %vm1590, %v3734
    %3779 = vst.msk [vmem:[#allocation2 + $0xa0] sm:$0xff] %vm1590, %v3736
    %3780 = vst.msk [vmem:[#allocation2 + $0xa8] sm:$0xff] %vm1590, %v3738
    %3781 = vst.msk [vmem:[#allocation2 + $0xb0] sm:$0xff] %vm1590, %v3740
    %3782 = vst.msk [vmem:[#allocation2 + $0xb8] sm:$0xff] %vm1590, %v3742
    %3783 = vst.msk [vmem:[#allocation2 + $0xc0] sm:$0xff] %vm1590, %v3744
    %3784 = vst.msk [vmem:[#allocation2 + $0xc8] sm:$0xff] %vm1590, %v3746
    %3785 = vst.msk [vmem:[#allocation2 + $0xd0] sm:$0xff] %vm1590, %v3748
    %3786 = vst.msk [vmem:[#allocation2 + $0xd8] sm:$0xff] %vm1590, %v3750
    %3787 = vst.msk [vmem:[#allocation2 + $0xe0] sm:$0xff] %vm1590, %v3752
    %3788 = vst.msk [vmem:[#allocation2 + $0xe8] sm:$0xff] %vm1590, %v3754
    %3789 = vst.msk [vmem:[#allocation2 + $0xf0] sm:$0xff] %vm1590, %v3756
    %3790 = vst.msk [vmem:[#allocation2 + $0xf8] sm:$0xff] %vm1590, %v3758
    %v3791 = vpack.c.bf16 %v3664, %v3663
    %v3792 = vpack.c.bf16 %v3666, %v3665
    %v3793 = vpack.c.bf16 %v3668, %v3667
    %v3794 = vpack.c.bf16 %v3670, %v3669
    %v3795 = vpack.c.bf16 %v3672, %v3671
    %v3796 = vpack.c.bf16 %v3674, %v3673
    %v3797 = vpack.c.bf16 %v3676, %v3675
    %v3798 = vpack.c.bf16 %v3678, %v3677
    %v3799 = vpack.c.bf16 %v3680, %v3679
    %v3800 = vpack.c.bf16 %v3682, %v3681
    %v3801 = vpack.c.bf16 %v3684, %v3683
    %v3802 = vpack.c.bf16 %v3686, %v3685
    %v3803 = vpack.c.bf16 %v3688, %v3687
    %v3804 = vpack.c.bf16 %v3690, %v3689
    %v3805 = vpack.c.bf16 %v3692, %v3691
    %v3806 = vpack.c.bf16 %v3694, %v3693
    %3823 = vrot.lane.b32.xlu0 %v3791, 24
    %v3824 = vpop.permute.xlu0 %3823
    %3825 = vrot.lane.b32.xlu0 %v3792, 24
    %v3826 = vpop.permute.xlu0 %3825
    %3827 = vrot.lane.b32.xlu0 %v3793, 24
    %v3828 = vpop.permute.xlu0 %3827
    %3829 = vrot.lane.b32.xlu0 %v3794, 24
    %v3830 = vpop.permute.xlu0 %3829
    %3831 = vrot.lane.b32.xlu0 %v3795, 24
    %v3832 = vpop.permute.xlu0 %3831
    %3833 = vrot.lane.b32.xlu0 %v3796, 24
    %v3834 = vpop.permute.xlu0 %3833
    %3835 = vrot.lane.b32.xlu0 %v3797, 24
    %v3836 = vpop.permute.xlu0 %3835
    %3837 = vrot.lane.b32.xlu0 %v3798, 24
    %v3838 = vpop.permute.xlu0 %3837
    %3839 = vrot.lane.b32.xlu0 %v3799, 24
    %v3840 = vpop.permute.xlu0 %3839
    %3841 = vrot.lane.b32.xlu0 %v3800, 24
    %v3842 = vpop.permute.xlu0 %3841
    %3843 = vrot.lane.b32.xlu0 %v3801, 24
    %v3844 = vpop.permute.xlu0 %3843
    %3845 = vrot.lane.b32.xlu0 %v3802, 24
    %v3846 = vpop.permute.xlu0 %3845
    %3847 = vrot.lane.b32.xlu0 %v3803, 24
    %v3848 = vpop.permute.xlu0 %3847
    %3849 = vrot.lane.b32.xlu0 %v3804, 24
    %v3850 = vpop.permute.xlu0 %3849
    %3851 = vrot.lane.b32.xlu0 %v3805, 24
    %v3852 = vpop.permute.xlu0 %3851
    %3853 = vrot.lane.b32.xlu0 %v3806, 24
    %v3854 = vpop.permute.xlu0 %3853
    %3871 = vst.msk [vmem:[#allocation3 + $0x80] sm:$0xff] %vm1590, %v3824
    %3872 = vst.msk [vmem:[#allocation3 + $0x88] sm:$0xff] %vm1590, %v3826
    %3873 = vst.msk [vmem:[#allocation3 + $0x90] sm:$0xff] %vm1590, %v3828
    %3874 = vst.msk [vmem:[#allocation3 + $0x98] sm:$0xff] %vm1590, %v3830
    %3875 = vst.msk [vmem:[#allocation3 + $0xa0] sm:$0xff] %vm1590, %v3832
    %3876 = vst.msk [vmem:[#allocation3 + $0xa8] sm:$0xff] %vm1590, %v3834
    %3877 = vst.msk [vmem:[#allocation3 + $0xb0] sm:$0xff] %vm1590, %v3836
    %3878 = vst.msk [vmem:[#allocation3 + $0xb8] sm:$0xff] %vm1590, %v3838
    %3879 = vst.msk [vmem:[#allocation3 + $0xc0] sm:$0xff] %vm1590, %v3840
    %3880 = vst.msk [vmem:[#allocation3 + $0xc8] sm:$0xff] %vm1590, %v3842
    %3881 = vst.msk [vmem:[#allocation3 + $0xd0] sm:$0xff] %vm1590, %v3844
    %3882 = vst.msk [vmem:[#allocation3 + $0xd8] sm:$0xff] %vm1590, %v3846
    %3883 = vst.msk [vmem:[#allocation3 + $0xe0] sm:$0xff] %vm1590, %v3848
    %3884 = vst.msk [vmem:[#allocation3 + $0xe8] sm:$0xff] %vm1590, %v3850
    %3885 = vst.msk [vmem:[#allocation3 + $0xf0] sm:$0xff] %vm1590, %v3852
    %3886 = vst.msk [vmem:[#allocation3 + $0xf8] sm:$0xff] %vm1590, %v3854
    %v3887 = vld [vmem:[%s3629 + $0x1] sm:$0xff]
    %v3888 = vld [vmem:[%s3629 + $0x9] sm:$0xff]
    %v3889 = vld [vmem:[%s3629 + $0x19] sm:$0xff]
    %v3890 = vld [vmem:[%s3629 + $0x21] sm:$0xff]
    %v3891 = vld [vmem:[%s3629 + $0x31] sm:$0xff]
    %v3892 = vld [vmem:[%s3629 + $0x39] sm:$0xff]
    %v3893 = vld [vmem:[%s3629 + $0x49] sm:$0xff]
    %v3894 = vld [vmem:[%s3629 + $0x51] sm:$0xff]
    %v3895 = vld [vmem:[%s3629 + $0x61] sm:$0xff]
    %v3896 = vld [vmem:[%s3629 + $0x69] sm:$0xff]
    %v3897 = vld [vmem:[%s3629 + $0x79] sm:$0xff]
    %v3898 = vld [vmem:[%s3629 + $0x81] sm:$0xff]
    %v3899 = vld [vmem:[%s3629 + $0x91] sm:$0xff]
    %v3900 = vld [vmem:[%s3629 + $0x99] sm:$0xff]
    %v3901 = vld [vmem:[%s3629 + $0xa9] sm:$0xff]
    %v3902 = vld [vmem:[%s3629 + $0xb1] sm:$0xff]
    %v3903 = vld [vmem:[%s3629 + $0xc1] sm:$0xff]
    %v3904 = vld [vmem:[%s3629 + $0xc9] sm:$0xff]
    %v3905 = vld [vmem:[%s3629 + $0xd9] sm:$0xff]
    %v3906 = vld [vmem:[%s3629 + $0xe1] sm:$0xff]
    %v3907 = vld [vmem:[%s3629 + $0xf1] sm:$0xff]
    %v3908 = vld [vmem:[%s3629 + $0xf9] sm:$0xff]
    %v3909 = vld [vmem:[%s3629 + $0x109] sm:$0xff]
    %v3910 = vld [vmem:[%s3629 + $0x111] sm:$0xff]
    %v3911 = vld [vmem:[%s3629 + $0x121] sm:$0xff]
    %v3912 = vld [vmem:[%s3629 + $0x129] sm:$0xff]
    %v3913 = vld [vmem:[%s3629 + $0x139] sm:$0xff]
    %v3914 = vld [vmem:[%s3629 + $0x141] sm:$0xff]
    %v3915 = vld [vmem:[%s3629 + $0x151] sm:$0xff]
    %v3916 = vld [vmem:[%s3629 + $0x159] sm:$0xff]
    %v3917 = vld [vmem:[%s3629 + $0x169] sm:$0xff]
    %v3918 = vld [vmem:[%s3629 + $0x171] sm:$0xff]
    %v3919 = vld [vmem:[%s3662 + $0x1] sm:$0xff]
    %v3920 = vld [vmem:[%s3662 + $0x9] sm:$0xff]
    %v3921 = vld [vmem:[%s3662 + $0x19] sm:$0xff]
    %v3922 = vld [vmem:[%s3662 + $0x21] sm:$0xff]
    %v3923 = vld [vmem:[%s3662 + $0x31] sm:$0xff]
    %v3924 = vld [vmem:[%s3662 + $0x39] sm:$0xff]
    %v3925 = vld [vmem:[%s3662 + $0x49] sm:$0xff]
    %v3926 = vld [vmem:[%s3662 + $0x51] sm:$0xff]
    %v3927 = vld [vmem:[%s3662 + $0x61] sm:$0xff]
    %v3928 = vld [vmem:[%s3662 + $0x69] sm:$0xff]
    %v3929 = vld [vmem:[%s3662 + $0x79] sm:$0xff]
    %v3930 = vld [vmem:[%s3662 + $0x81] sm:$0xff]
    %v3931 = vld [vmem:[%s3662 + $0x91] sm:$0xff]
    %v3932 = vld [vmem:[%s3662 + $0x99] sm:$0xff]
    %v3933 = vld [vmem:[%s3662 + $0xa9] sm:$0xff]
    %v3934 = vld [vmem:[%s3662 + $0xb1] sm:$0xff]
    %v3935 = vld [vmem:[%s3662 + $0xc1] sm:$0xff]
    %v3936 = vld [vmem:[%s3662 + $0xc9] sm:$0xff]
    %v3937 = vld [vmem:[%s3662 + $0xd9] sm:$0xff]
    %v3938 = vld [vmem:[%s3662 + $0xe1] sm:$0xff]
    %v3939 = vld [vmem:[%s3662 + $0xf1] sm:$0xff]
    %v3940 = vld [vmem:[%s3662 + $0xf9] sm:$0xff]
    %v3941 = vld [vmem:[%s3662 + $0x109] sm:$0xff]
    %v3942 = vld [vmem:[%s3662 + $0x111] sm:$0xff]
    %v3943 = vld [vmem:[%s3662 + $0x121] sm:$0xff]
    %v3944 = vld [vmem:[%s3662 + $0x129] sm:$0xff]
    %v3945 = vld [vmem:[%s3662 + $0x139] sm:$0xff]
    %v3946 = vld [vmem:[%s3662 + $0x141] sm:$0xff]
    %v3947 = vld [vmem:[%s3662 + $0x151] sm:$0xff]
    %v3948 = vld [vmem:[%s3662 + $0x159] sm:$0xff]
    %v3949 = vld [vmem:[%s3662 + $0x169] sm:$0xff]
    %v3950 = vld [vmem:[%s3662 + $0x171] sm:$0xff]
    %v3951 = vpack.c.bf16 %v3888, %v3887
    %v3952 = vpack.c.bf16 %v3890, %v3889
    %v3953 = vpack.c.bf16 %v3892, %v3891
    %v3954 = vpack.c.bf16 %v3894, %v3893
    %v3955 = vpack.c.bf16 %v3896, %v3895
    %v3956 = vpack.c.bf16 %v3898, %v3897
    %v3957 = vpack.c.bf16 %v3900, %v3899
    %v3958 = vpack.c.bf16 %v3902, %v3901
    %v3959 = vpack.c.bf16 %v3904, %v3903
    %v3960 = vpack.c.bf16 %v3906, %v3905
    %v3961 = vpack.c.bf16 %v3908, %v3907
    %v3962 = vpack.c.bf16 %v3910, %v3909
    %v3963 = vpack.c.bf16 %v3912, %v3911
    %v3964 = vpack.c.bf16 %v3914, %v3913
    %v3965 = vpack.c.bf16 %v3916, %v3915
    %v3966 = vpack.c.bf16 %v3918, %v3917
    %3983 = vrot.lane.b32.xlu0 %v3951, 28
    %v3984 = vpop.permute.xlu0 %3983
    %3985 = vrot.lane.b32.xlu0 %v3952, 28
    %v3986 = vpop.permute.xlu0 %3985
    %3987 = vrot.lane.b32.xlu0 %v3953, 28
    %v3988 = vpop.permute.xlu0 %3987
    %3989 = vrot.lane.b32.xlu0 %v3954, 28
    %v3990 = vpop.permute.xlu0 %3989
    %3991 = vrot.lane.b32.xlu0 %v3955, 28
    %v3992 = vpop.permute.xlu0 %3991
    %3993 = vrot.lane.b32.xlu0 %v3956, 28
    %v3994 = vpop.permute.xlu0 %3993
    %3995 = vrot.lane.b32.xlu0 %v3957, 28
    %v3996 = vpop.permute.xlu0 %3995
    %3997 = vrot.lane.b32.xlu0 %v3958, 28
    %v3998 = vpop.permute.xlu0 %3997
    %3999 = vrot.lane.b32.xlu0 %v3959, 28
    %v4000 = vpop.permute.xlu0 %3999
    %4001 = vrot.lane.b32.xlu0 %v3960, 28
    %v4002 = vpop.permute.xlu0 %4001
    %4003 = vrot.lane.b32.xlu0 %v3961, 28
    %v4004 = vpop.permute.xlu0 %4003
    %4005 = vrot.lane.b32.xlu0 %v3962, 28
    %v4006 = vpop.permute.xlu0 %4005
    %4007 = vrot.lane.b32.xlu0 %v3963, 28
    %v4008 = vpop.permute.xlu0 %4007
    %4009 = vrot.lane.b32.xlu0 %v3964, 28
    %v4010 = vpop.permute.xlu0 %4009
    %4011 = vrot.lane.b32.xlu0 %v3965, 28
    %v4012 = vpop.permute.xlu0 %4011
    %4013 = vrot.lane.b32.xlu0 %v3966, 28
    %v4014 = vpop.permute.xlu0 %4013
    %4031 = vst.msk [vmem:[#allocation2 + $0x80] sm:$0xff] %vm1847, %v3984
    %4032 = vst.msk [vmem:[#allocation2 + $0x88] sm:$0xff] %vm1847, %v3986
    %4033 = vst.msk [vmem:[#allocation2 + $0x90] sm:$0xff] %vm1847, %v3988
    %4034 = vst.msk [vmem:[#allocation2 + $0x98] sm:$0xff] %vm1847, %v3990
    %4035 = vst.msk [vmem:[#allocation2 + $0xa0] sm:$0xff] %vm1847, %v3992
    %4036 = vst.msk [vmem:[#allocation2 + $0xa8] sm:$0xff] %vm1847, %v3994
    %4037 = vst.msk [vmem:[#allocation2 + $0xb0] sm:$0xff] %vm1847, %v3996
    %4038 = vst.msk [vmem:[#allocation2 + $0xb8] sm:$0xff] %vm1847, %v3998
    %4039 = vst.msk [vmem:[#allocation2 + $0xc0] sm:$0xff] %vm1847, %v4000
    %4040 = vst.msk [vmem:[#allocation2 + $0xc8] sm:$0xff] %vm1847, %v4002
    %4041 = vst.msk [vmem:[#allocation2 + $0xd0] sm:$0xff] %vm1847, %v4004
    %4042 = vst.msk [vmem:[#allocation2 + $0xd8] sm:$0xff] %vm1847, %v4006
    %4043 = vst.msk [vmem:[#allocation2 + $0xe0] sm:$0xff] %vm1847, %v4008
    %4044 = vst.msk [vmem:[#allocation2 + $0xe8] sm:$0xff] %vm1847, %v4010
    %4045 = vst.msk [vmem:[#allocation2 + $0xf0] sm:$0xff] %vm1847, %v4012
    %4046 = vst.msk [vmem:[#allocation2 + $0xf8] sm:$0xff] %vm1847, %v4014
    %v4047 = vpack.c.bf16 %v3920, %v3919
    %v4048 = vpack.c.bf16 %v3922, %v3921
    %v4049 = vpack.c.bf16 %v3924, %v3923
    %v4050 = vpack.c.bf16 %v3926, %v3925
    %v4051 = vpack.c.bf16 %v3928, %v3927
    %v4052 = vpack.c.bf16 %v3930, %v3929
    %v4053 = vpack.c.bf16 %v3932, %v3931
    %v4054 = vpack.c.bf16 %v3934, %v3933
    %v4055 = vpack.c.bf16 %v3936, %v3935
    %v4056 = vpack.c.bf16 %v3938, %v3937
    %v4057 = vpack.c.bf16 %v3940, %v3939
    %v4058 = vpack.c.bf16 %v3942, %v3941
    %v4059 = vpack.c.bf16 %v3944, %v3943
    %v4060 = vpack.c.bf16 %v3946, %v3945
    %v4061 = vpack.c.bf16 %v3948, %v3947
    %v4062 = vpack.c.bf16 %v3950, %v3949
    %4079 = vrot.lane.b32.xlu0 %v4047, 28
    %v4080 = vpop.permute.xlu0 %4079
    %4081 = vrot.lane.b32.xlu0 %v4048, 28
    %v4082 = vpop.permute.xlu0 %4081
    %4083 = vrot.lane.b32.xlu0 %v4049, 28
    %v4084 = vpop.permute.xlu0 %4083
    %4085 = vrot.lane.b32.xlu0 %v4050, 28
    %v4086 = vpop.permute.xlu0 %4085
    %4087 = vrot.lane.b32.xlu0 %v4051, 28
    %v4088 = vpop.permute.xlu0 %4087
    %4089 = vrot.lane.b32.xlu0 %v4052, 28
    %v4090 = vpop.permute.xlu0 %4089
    %4091 = vrot.lane.b32.xlu0 %v4053, 28
    %v4092 = vpop.permute.xlu0 %4091
    %4093 = vrot.lane.b32.xlu0 %v4054, 28
    %v4094 = vpop.permute.xlu0 %4093
    %4095 = vrot.lane.b32.xlu0 %v4055, 28
    %v4096 = vpop.permute.xlu0 %4095
    %4097 = vrot.lane.b32.xlu0 %v4056, 28
    %v4098 = vpop.permute.xlu0 %4097
    %4099 = vrot.lane.b32.xlu0 %v4057, 28
    %v4100 = vpop.permute.xlu0 %4099
    %4101 = vrot.lane.b32.xlu0 %v4058, 28
    %v4102 = vpop.permute.xlu0 %4101
    %4103 = vrot.lane.b32.xlu0 %v4059, 28
    %v4104 = vpop.permute.xlu0 %4103
    %4105 = vrot.lane.b32.xlu0 %v4060, 28
    %v4106 = vpop.permute.xlu0 %4105
    %4107 = vrot.lane.b32.xlu0 %v4061, 28
    %v4108 = vpop.permute.xlu0 %4107
    %4109 = vrot.lane.b32.xlu0 %v4062, 28
    %v4110 = vpop.permute.xlu0 %4109
    %4127 = vst.msk [vmem:[#allocation3 + $0x80] sm:$0xff] %vm1847, %v4080
    %4128 = vst.msk [vmem:[#allocation3 + $0x88] sm:$0xff] %vm1847, %v4082
    %4129 = vst.msk [vmem:[#allocation3 + $0x90] sm:$0xff] %vm1847, %v4084
    %4130 = vst.msk [vmem:[#allocation3 + $0x98] sm:$0xff] %vm1847, %v4086
    %4131 = vst.msk [vmem:[#allocation3 + $0xa0] sm:$0xff] %vm1847, %v4088
    %4132 = vst.msk [vmem:[#allocation3 + $0xa8] sm:$0xff] %vm1847, %v4090
    %4133 = vst.msk [vmem:[#allocation3 + $0xb0] sm:$0xff] %vm1847, %v4092
    %4134 = vst.msk [vmem:[#allocation3 + $0xb8] sm:$0xff] %vm1847, %v4094
    %4135 = vst.msk [vmem:[#allocation3 + $0xc0] sm:$0xff] %vm1847, %v4096
    %4136 = vst.msk [vmem:[#allocation3 + $0xc8] sm:$0xff] %vm1847, %v4098
    %4137 = vst.msk [vmem:[#allocation3 + $0xd0] sm:$0xff] %vm1847, %v4100
    %4138 = vst.msk [vmem:[#allocation3 + $0xd8] sm:$0xff] %vm1847, %v4102
    %4139 = vst.msk [vmem:[#allocation3 + $0xe0] sm:$0xff] %vm1847, %v4104
    %4140 = vst.msk [vmem:[#allocation3 + $0xe8] sm:$0xff] %vm1847, %v4106
    %4141 = vst.msk [vmem:[#allocation3 + $0xf0] sm:$0xff] %vm1847, %v4108
    %4142 = vst.msk [vmem:[#allocation3 + $0xf8] sm:$0xff] %vm1847, %v4110
    %v4143 = vld [vmem:[%s3629 + $0x2] sm:$0xff]
    %v4144 = vld [vmem:[%s3629 + $0xa] sm:$0xff]
    %v4145 = vld [vmem:[%s3629 + $0x1a] sm:$0xff]
    %v4146 = vld [vmem:[%s3629 + $0x22] sm:$0xff]
    %v4147 = vld [vmem:[%s3629 + $0x32] sm:$0xff]
    %v4148 = vld [vmem:[%s3629 + $0x3a] sm:$0xff]
    %v4149 = vld [vmem:[%s3629 + $0x4a] sm:$0xff]
    %v4150 = vld [vmem:[%s3629 + $0x52] sm:$0xff]
    %v4151 = vld [vmem:[%s3629 + $0x62] sm:$0xff]
    %v4152 = vld [vmem:[%s3629 + $0x6a] sm:$0xff]
    %v4153 = vld [vmem:[%s3629 + $0x7a] sm:$0xff]
    %v4154 = vld [vmem:[%s3629 + $0x82] sm:$0xff]
    %v4155 = vld [vmem:[%s3629 + $0x92] sm:$0xff]
    %v4156 = vld [vmem:[%s3629 + $0x9a] sm:$0xff]
    %v4157 = vld [vmem:[%s3629 + $0xaa] sm:$0xff]
    %v4158 = vld [vmem:[%s3629 + $0xb2] sm:$0xff]
    %v4159 = vld [vmem:[%s3629 + $0xc2] sm:$0xff]
    %v4160 = vld [vmem:[%s3629 + $0xca] sm:$0xff]
    %v4161 = vld [vmem:[%s3629 + $0xda] sm:$0xff]
    %v4162 = vld [vmem:[%s3629 + $0xe2] sm:$0xff]
    %v4163 = vld [vmem:[%s3629 + $0xf2] sm:$0xff]
    %v4164 = vld [vmem:[%s3629 + $0xfa] sm:$0xff]
    %v4165 = vld [vmem:[%s3629 + $0x10a] sm:$0xff]
    %v4166 = vld [vmem:[%s3629 + $0x112] sm:$0xff]
    %v4167 = vld [vmem:[%s3629 + $0x122] sm:$0xff]
    %v4168 = vld [vmem:[%s3629 + $0x12a] sm:$0xff]
    %v4169 = vld [vmem:[%s3629 + $0x13a] sm:$0xff]
    %v4170 = vld [vmem:[%s3629 + $0x142] sm:$0xff]
    %v4171 = vld [vmem:[%s3629 + $0x152] sm:$0xff]
    %v4172 = vld [vmem:[%s3629 + $0x15a] sm:$0xff]
    %v4173 = vld [vmem:[%s3629 + $0x16a] sm:$0xff]
    %v4174 = vld [vmem:[%s3629 + $0x172] sm:$0xff]
    %v4175 = vld [vmem:[%s3662 + $0x2] sm:$0xff]
    %v4176 = vld [vmem:[%s3662 + $0xa] sm:$0xff]
    %v4177 = vld [vmem:[%s3662 + $0x1a] sm:$0xff]
    %v4178 = vld [vmem:[%s3662 + $0x22] sm:$0xff]
    %v4179 = vld [vmem:[%s3662 + $0x32] sm:$0xff]
    %v4180 = vld [vmem:[%s3662 + $0x3a] sm:$0xff]
    %v4181 = vld [vmem:[%s3662 + $0x4a] sm:$0xff]
    %v4182 = vld [vmem:[%s3662 + $0x52] sm:$0xff]
    %v4183 = vld [vmem:[%s3662 + $0x62] sm:$0xff]
    %v4184 = vld [vmem:[%s3662 + $0x6a] sm:$0xff]
    %v4185 = vld [vmem:[%s3662 + $0x7a] sm:$0xff]
    %v4186 = vld [vmem:[%s3662 + $0x82] sm:$0xff]
    %v4187 = vld [vmem:[%s3662 + $0x92] sm:$0xff]
    %v4188 = vld [vmem:[%s3662 + $0x9a] sm:$0xff]
    %v4189 = vld [vmem:[%s3662 + $0xaa] sm:$0xff]
    %v4190 = vld [vmem:[%s3662 + $0xb2] sm:$0xff]
    %v4191 = vld [vmem:[%s3662 + $0xc2] sm:$0xff]
    %v4192 = vld [vmem:[%s3662 + $0xca] sm:$0xff]
    %v4193 = vld [vmem:[%s3662 + $0xda] sm:$0xff]
    %v4194 = vld [vmem:[%s3662 + $0xe2] sm:$0xff]
    %v4195 = vld [vmem:[%s3662 + $0xf2] sm:$0xff]
    %v4196 = vld [vmem:[%s3662 + $0xfa] sm:$0xff]
    %v4197 = vld [vmem:[%s3662 + $0x10a] sm:$0xff]
    %v4198 = vld [vmem:[%s3662 + $0x112] sm:$0xff]
    %v4199 = vld [vmem:[%s3662 + $0x122] sm:$0xff]
    %v4200 = vld [vmem:[%s3662 + $0x12a] sm:$0xff]
    %v4201 = vld [vmem:[%s3662 + $0x13a] sm:$0xff]
    %v4202 = vld [vmem:[%s3662 + $0x142] sm:$0xff]
    %v4203 = vld [vmem:[%s3662 + $0x152] sm:$0xff]
    %v4204 = vld [vmem:[%s3662 + $0x15a] sm:$0xff]
    %v4205 = vld [vmem:[%s3662 + $0x16a] sm:$0xff]
    %v4206 = vld [vmem:[%s3662 + $0x172] sm:$0xff]
    %v4207 = vpack.c.bf16 %v4144, %v4143
    %v4208 = vpack.c.bf16 %v4146, %v4145
    %v4209 = vpack.c.bf16 %v4148, %v4147
    %v4210 = vpack.c.bf16 %v4150, %v4149
    %v4211 = vpack.c.bf16 %v4152, %v4151
    %v4212 = vpack.c.bf16 %v4154, %v4153
    %v4213 = vpack.c.bf16 %v4156, %v4155
    %v4214 = vpack.c.bf16 %v4158, %v4157
    %v4215 = vpack.c.bf16 %v4160, %v4159
    %v4216 = vpack.c.bf16 %v4162, %v4161
    %v4217 = vpack.c.bf16 %v4164, %v4163
    %v4218 = vpack.c.bf16 %v4166, %v4165
    %v4219 = vpack.c.bf16 %v4168, %v4167
    %v4220 = vpack.c.bf16 %v4170, %v4169
    %v4221 = vpack.c.bf16 %v4172, %v4171
    %v4222 = vpack.c.bf16 %v4174, %v4173
    %4239 = vrot.lane.b32.xlu0 %v4207, 32
    %v4240 = vpop.permute.xlu0 %4239
    %4241 = vrot.lane.b32.xlu0 %v4208, 32
    %v4242 = vpop.permute.xlu0 %4241
    %4243 = vrot.lane.b32.xlu0 %v4209, 32
    %v4244 = vpop.permute.xlu0 %4243
    %4245 = vrot.lane.b32.xlu0 %v4210, 32
    %v4246 = vpop.permute.xlu0 %4245
    %4247 = vrot.lane.b32.xlu0 %v4211, 32
    %v4248 = vpop.permute.xlu0 %4247
    %4249 = vrot.lane.b32.xlu0 %v4212, 32
    %v4250 = vpop.permute.xlu0 %4249
    %4251 = vrot.lane.b32.xlu0 %v4213, 32
    %v4252 = vpop.permute.xlu0 %4251
    %4253 = vrot.lane.b32.xlu0 %v4214, 32
    %v4254 = vpop.permute.xlu0 %4253
    %4255 = vrot.lane.b32.xlu0 %v4215, 32
    %v4256 = vpop.permute.xlu0 %4255
    %4257 = vrot.lane.b32.xlu0 %v4216, 32
    %v4258 = vpop.permute.xlu0 %4257
    %4259 = vrot.lane.b32.xlu0 %v4217, 32
    %v4260 = vpop.permute.xlu0 %4259
    %4261 = vrot.lane.b32.xlu0 %v4218, 32
    %v4262 = vpop.permute.xlu0 %4261
    %4263 = vrot.lane.b32.xlu0 %v4219, 32
    %v4264 = vpop.permute.xlu0 %4263
    %4265 = vrot.lane.b32.xlu0 %v4220, 32
    %v4266 = vpop.permute.xlu0 %4265
    %4267 = vrot.lane.b32.xlu0 %v4221, 32
    %v4268 = vpop.permute.xlu0 %4267
    %4269 = vrot.lane.b32.xlu0 %v4222, 32
    %v4270 = vpop.permute.xlu0 %4269
    %4287 = vst.msk [vmem:[#allocation2 + $0x80] sm:$0xff] %vm2104, %v4240
    %4288 = vst.msk [vmem:[#allocation2 + $0x88] sm:$0xff] %vm2104, %v4242
    %4289 = vst.msk [vmem:[#allocation2 + $0x90] sm:$0xff] %vm2104, %v4244
    %4290 = vst.msk [vmem:[#allocation2 + $0x98] sm:$0xff] %vm2104, %v4246
    %4291 = vst.msk [vmem:[#allocation2 + $0xa0] sm:$0xff] %vm2104, %v4248
    %4292 = vst.msk [vmem:[#allocation2 + $0xa8] sm:$0xff] %vm2104, %v4250
    %4293 = vst.msk [vmem:[#allocation2 + $0xb0] sm:$0xff] %vm2104, %v4252
    %4294 = vst.msk [vmem:[#allocation2 + $0xb8] sm:$0xff] %vm2104, %v4254
    %4295 = vst.msk [vmem:[#allocation2 + $0xc0] sm:$0xff] %vm2104, %v4256
    %4296 = vst.msk [vmem:[#allocation2 + $0xc8] sm:$0xff] %vm2104, %v4258
    %4297 = vst.msk [vmem:[#allocation2 + $0xd0] sm:$0xff] %vm2104, %v4260
    %4298 = vst.msk [vmem:[#allocation2 + $0xd8] sm:$0xff] %vm2104, %v4262
    %4299 = vst.msk [vmem:[#allocation2 + $0xe0] sm:$0xff] %vm2104, %v4264
    %4300 = vst.msk [vmem:[#allocation2 + $0xe8] sm:$0xff] %vm2104, %v4266
    %4301 = vst.msk [vmem:[#allocation2 + $0xf0] sm:$0xff] %vm2104, %v4268
    %4302 = vst.msk [vmem:[#allocation2 + $0xf8] sm:$0xff] %vm2104, %v4270
    %v4303 = vpack.c.bf16 %v4176, %v4175
    %v4304 = vpack.c.bf16 %v4178, %v4177
    %v4305 = vpack.c.bf16 %v4180, %v4179
    %v4306 = vpack.c.bf16 %v4182, %v4181
    %v4307 = vpack.c.bf16 %v4184, %v4183
    %v4308 = vpack.c.bf16 %v4186, %v4185
    %v4309 = vpack.c.bf16 %v4188, %v4187
    %v4310 = vpack.c.bf16 %v4190, %v4189
    %v4311 = vpack.c.bf16 %v4192, %v4191
    %v4312 = vpack.c.bf16 %v4194, %v4193
    %v4313 = vpack.c.bf16 %v4196, %v4195
    %v4314 = vpack.c.bf16 %v4198, %v4197
    %v4315 = vpack.c.bf16 %v4200, %v4199
    %v4316 = vpack.c.bf16 %v4202, %v4201
    %v4317 = vpack.c.bf16 %v4204, %v4203
    %v4318 = vpack.c.bf16 %v4206, %v4205
    %4335 = vrot.lane.b32.xlu0 %v4303, 32
    %v4336 = vpop.permute.xlu0 %4335
    %4337 = vrot.lane.b32.xlu0 %v4304, 32
    %v4338 = vpop.permute.xlu0 %4337
    %4339 = vrot.lane.b32.xlu0 %v4305, 32
    %v4340 = vpop.permute.xlu0 %4339
    %4341 = vrot.lane.b32.xlu0 %v4306, 32
    %v4342 = vpop.permute.xlu0 %4341
    %4343 = vrot.lane.b32.xlu0 %v4307, 32
    %v4344 = vpop.permute.xlu0 %4343
    %4345 = vrot.lane.b32.xlu0 %v4308, 32
    %v4346 = vpop.permute.xlu0 %4345
    %4347 = vrot.lane.b32.xlu0 %v4309, 32
    %v4348 = vpop.permute.xlu0 %4347
    %4349 = vrot.lane.b32.xlu0 %v4310, 32
    %v4350 = vpop.permute.xlu0 %4349
    %4351 = vrot.lane.b32.xlu0 %v4311, 32
    %v4352 = vpop.permute.xlu0 %4351
    %4353 = vrot.lane.b32.xlu0 %v4312, 32
    %v4354 = vpop.permute.xlu0 %4353
    %4355 = vrot.lane.b32.xlu0 %v4313, 32
    %v4356 = vpop.permute.xlu0 %4355
    %4357 = vrot.lane.b32.xlu0 %v4314, 32
    %v4358 = vpop.permute.xlu0 %4357
    %4359 = vrot.lane.b32.xlu0 %v4315, 32
    %v4360 = vpop.permute.xlu0 %4359
    %4361 = vrot.lane.b32.xlu0 %v4316, 32
    %v4362 = vpop.permute.xlu0 %4361
    %4363 = vrot.lane.b32.xlu0 %v4317, 32
    %v4364 = vpop.permute.xlu0 %4363
    %4365 = vrot.lane.b32.xlu0 %v4318, 32
    %v4366 = vpop.permute.xlu0 %4365
    %4383 = vst.msk [vmem:[#allocation3 + $0x80] sm:$0xff] %vm2104, %v4336
    %4384 = vst.msk [vmem:[#allocation3 + $0x88] sm:$0xff] %vm2104, %v4338
    %4385 = vst.msk [vmem:[#allocation3 + $0x90] sm:$0xff] %vm2104, %v4340
    %4386 = vst.msk [vmem:[#allocation3 + $0x98] sm:$0xff] %vm2104, %v4342
    %4387 = vst.msk [vmem:[#allocation3 + $0xa0] sm:$0xff] %vm2104, %v4344
    %4388 = vst.msk [vmem:[#allocation3 + $0xa8] sm:$0xff] %vm2104, %v4346
    %4389 = vst.msk [vmem:[#allocation3 + $0xb0] sm:$0xff] %vm2104, %v4348
    %4390 = vst.msk [vmem:[#allocation3 + $0xb8] sm:$0xff] %vm2104, %v4350
    %4391 = vst.msk [vmem:[#allocation3 + $0xc0] sm:$0xff] %vm2104, %v4352
    %4392 = vst.msk [vmem:[#allocation3 + $0xc8] sm:$0xff] %vm2104, %v4354
    %4393 = vst.msk [vmem:[#allocation3 + $0xd0] sm:$0xff] %vm2104, %v4356
    %4394 = vst.msk [vmem:[#allocation3 + $0xd8] sm:$0xff] %vm2104, %v4358
    %4395 = vst.msk [vmem:[#allocation3 + $0xe0] sm:$0xff] %vm2104, %v4360
    %4396 = vst.msk [vmem:[#allocation3 + $0xe8] sm:$0xff] %vm2104, %v4362
    %4397 = vst.msk [vmem:[#allocation3 + $0xf0] sm:$0xff] %vm2104, %v4364
    %4398 = vst.msk [vmem:[#allocation3 + $0xf8] sm:$0xff] %vm2104, %v4366
    %v4399 = vld [vmem:[#allocation2] sm:$0xff]
    %v4400 = vld [vmem:[#allocation2 + $0x8] sm:$0xff]
    %v4401 = vld [vmem:[#allocation2 + $0x10] sm:$0xff]
    %v4402 = vld [vmem:[#allocation2 + $0x18] sm:$0xff]
    %v4403 = vld [vmem:[#allocation2 + $0x20] sm:$0xff]
    %v4404 = vld [vmem:[#allocation2 + $0x28] sm:$0xff]
    %v4405 = vld [vmem:[#allocation2 + $0x30] sm:$0xff]
    %v4406 = vld [vmem:[#allocation2 + $0x38] sm:$0xff]
    %v4407 = vld [vmem:[#allocation2 + $0x40] sm:$0xff]
    %v4408 = vld [vmem:[#allocation2 + $0x48] sm:$0xff]
    %v4409 = vld [vmem:[#allocation2 + $0x50] sm:$0xff]
    %v4410 = vld [vmem:[#allocation2 + $0x58] sm:$0xff]
    %v4411 = vld [vmem:[#allocation2 + $0x60] sm:$0xff]
    %v4412 = vld [vmem:[#allocation2 + $0x68] sm:$0xff]
    %v4413 = vld [vmem:[#allocation2 + $0x70] sm:$0xff]
    %v4414 = vld [vmem:[#allocation2 + $0x78] sm:$0xff]
    %v4415 = vld [vmem:[#allocation2 + $0x80] sm:$0xff]
    %v4416 = vld [vmem:[#allocation2 + $0x88] sm:$0xff]
    %v4417 = vld [vmem:[#allocation2 + $0x90] sm:$0xff]
    %v4418 = vld [vmem:[#allocation2 + $0x98] sm:$0xff]
    %v4419 = vld [vmem:[#allocation2 + $0xa0] sm:$0xff]
    %v4420 = vld [vmem:[#allocation2 + $0xa8] sm:$0xff]
    %v4421 = vld [vmem:[#allocation2 + $0xb0] sm:$0xff]
    %v4422 = vld [vmem:[#allocation2 + $0xb8] sm:$0xff]
    %v4423 = vld [vmem:[#allocation2 + $0xc0] sm:$0xff]
    %v4424 = vld [vmem:[#allocation2 + $0xc8] sm:$0xff]
    %v4425 = vld [vmem:[#allocation2 + $0xd0] sm:$0xff]
    %v4426 = vld [vmem:[#allocation2 + $0xd8] sm:$0xff]
    %v4427 = vld [vmem:[#allocation2 + $0xe0] sm:$0xff]
    %v4428 = vld [vmem:[#allocation2 + $0xe8] sm:$0xff]
    %v4429 = vld [vmem:[#allocation2 + $0xf0] sm:$0xff]
    %v4430 = vld [vmem:[#allocation2 + $0xf8] sm:$0xff]
    %v4431 = vld [vmem:[%s2] sm:$0xf]
    %v4432 = vld [vmem:[%s2 + $0x4] sm:$0xf]
    %v4433 = vld [vmem:[%s2 + $0x8] sm:$0xf]
    %v4434 = vld [vmem:[%s2 + $0xc] sm:$0xf]
    %v4435 = vld [vmem:[%s2 + $0x10] sm:$0x3]
    %v4441 = vunpack.c.l.b16 %v4431
    %v4442 = vunpack.c.l.b16 %v4432
    %v4443 = vunpack.c.l.b16 %v4433
    %v4444 = vunpack.c.l.b16 %v4434
    %v4445 = vunpack.c.l.b16 %v4435
    %v4446 = vpack.c.b16 %v4442, %v4441
    %v4447 = vpack.c.b16 %v4444, %v4443
    %v4448 = vpack.c.b16 %v4445, %v4445
    %vm4451 = vcmask 293888
    %v4453 = vsel %vm4451, %v4399, 0
    %v4456 = vsel %vm4451, %v4400, 0
    %v4459 = vsel %vm4451, %v4401, 0
    %v4462 = vsel %vm4451, %v4402, 0
    %v4465 = vsel %vm4451, %v4403, 0
    %v4468 = vsel %vm4451, %v4404, 0
    %v4471 = vsel %vm4451, %v4405, 0
    %v4474 = vsel %vm4451, %v4406, 0
    %v4477 = vsel %vm4451, %v4407, 0
    %v4480 = vsel %vm4451, %v4408, 0
    %v4483 = vsel %vm4451, %v4409, 0
    %v4486 = vsel %vm4451, %v4410, 0
    %v4489 = vsel %vm4451, %v4411, 0
    %v4492 = vsel %vm4451, %v4412, 0
    %v4495 = vsel %vm4451, %v4413, 0
    %v4498 = vsel %vm4451, %v4414, 0
    %v4501 = vsel %vm4451, %v4415, 0
    %v4504 = vsel %vm4451, %v4416, 0
    %v4507 = vsel %vm4451, %v4417, 0
    %v4510 = vsel %vm4451, %v4418, 0
    %v4513 = vsel %vm4451, %v4419, 0
    %v4516 = vsel %vm4451, %v4420, 0
    %v4519 = vsel %vm4451, %v4421, 0
    %v4522 = vsel %vm4451, %v4422, 0
    %v4525 = vsel %vm4451, %v4423, 0
    %v4528 = vsel %vm4451, %v4424, 0
    %v4531 = vsel %vm4451, %v4425, 0
    %v4534 = vsel %vm4451, %v4426, 0
    %v4537 = vsel %vm4451, %v4427, 0
    %v4540 = vsel %vm4451, %v4428, 0
    %v4543 = vsel %vm4451, %v4429, 0
    %v4546 = vsel %vm4451, %v4430, 0
    %vm4548 = vcmask 1041408
    %v4550 = vsel %vm4548, %v4448, 0
    %4552 = vmatprep.subr.bf16.mxu0 0
    %4553 = vmatpush1.bf16.msra.mxu0 %v4446
    %4554 = vmatprep.subr.bf16.mxu0 0
    %4555 = vmatpush1.bf16.msra.mxu0 %v4447
    %4556 = vmatprep.subr.bf16.mxu0 0
    %4557 = vmatpush1.bf16.msra.mxu0 %v4550
    %4558 = vmatprep.subr.bf16.mxu0 0
    %4559 = vmatpush1.bf16.msra.mxu0 0
    %4560 = vmatprep.subr.bf16.mxu0 0
    %4561 = vmatpush1.bf16.msra.mxu0 0
    %4562 = vmatprep.subr.bf16.mxu0 0
    %4563 = vmatpush1.bf16.msra.mxu0 0
    %4564 = vmatprep.subr.bf16.mxu0 0
    %4565 = vmatpush1.bf16.msra.mxu0 0
    %4566 = vmatprep.subr.bf16.mxu0 0
    %4567 = vmatpush1.bf16.msra.mxu0 0
    %4568 = vmatprep.subr.bf16.mxu0 0
    %4569 = vmatpush1.bf16.msra.mxu0 0
    %4570 = vmatprep.subr.bf16.mxu0 0
    %4571 = vmatpush1.bf16.msra.mxu0 0
    %4572 = vmatprep.subr.bf16.mxu0 0
    %4573 = vmatpush1.bf16.msra.mxu0 0
    %4574 = vmatprep.subr.bf16.mxu0 0
    %4575 = vmatpush1.bf16.msra.mxu0 0
    %4576 = vmatprep.subr.bf16.mxu0 0
    %4577 = vmatpush1.bf16.msra.mxu0 0
    %4578 = vmatprep.subr.bf16.mxu0 0
    %4579 = vmatpush1.bf16.msra.mxu0 0
    %4580 = vmatprep.subr.bf16.mxu0 0
    %4581 = vmatpush1.bf16.msra.mxu0 0
    %4582 = vmatprep.subr.bf16.mxu0 0
    %4583 = vmatpush1.bf16.msra.mxu0 0
    %4584 = vmatprep.mubr.bf16.mxu0 0
    %4585 = vmatmul.mubr.bf16.gmra.mrb[0].mxu0 %v4453
    %v4586 = vpop.f32.mrb[0].mxu0
    %v4587 = vadd.f32 0.0, %v4586
    %v4588 = vpop.f32.mrb[0].mxu0
    %v4589 = vpop.f32.mrb[0].mxu0
    %v4590 = vadd.f32 0.0, %v4589
    %v4591 = vpop.f32.mrb[0].mxu0
    %4592 = vmatprep.mubr.bf16.mxu0 0
    %4593 = vmatmul.mubr.bf16.gmra.mrb[0].mxu0 %v4456
    %v4594 = vpop.f32.mrb[0].mxu0
    %v4595 = vadd.f32 0.0, %v4594
    %v4596 = vpop.f32.mrb[0].mxu0
    %v4597 = vpop.f32.mrb[0].mxu0
    %v4598 = vadd.f32 0.0, %v4597
    %v4599 = vpop.f32.mrb[0].mxu0
    %4600 = vmatprep.mubr.bf16.mxu0 0
    %4601 = vmatmul.mubr.bf16.gmra.mrb[0].mxu0 %v4459
    %v4602 = vpop.f32.mrb[0].mxu0
    %v4603 = vadd.f32 0.0, %v4602
    %v4604 = vpop.f32.mrb[0].mxu0
    %v4605 = vpop.f32.mrb[0].mxu0
    %v4606 = vadd.f32 0.0, %v4605
    %v4607 = vpop.f32.mrb[0].mxu0
    %4608 = vmatprep.mubr.bf16.mxu0 0
    %4609 = vmatmul.mubr.bf16.gmra.mrb[0].mxu0 %v4462
    %v4610 = vpop.f32.mrb[0].mxu0
    %v4611 = vadd.f32 0.0, %v4610
    %v4612 = vpop.f32.mrb[0].mxu0
    %v4613 = vpop.f32.mrb[0].mxu0
    %v4614 = vadd.f32 0.0, %v4613
    %v4615 = vpop.f32.mrb[0].mxu0
    %4616 = vmatprep.mubr.bf16.mxu0 0
    %4617 = vmatmul.mubr.bf16.gmra.mrb[0].mxu0 %v4465
    %v4618 = vpop.f32.mrb[0].mxu0
    %v4619 = vadd.f32 0.0, %v4618
    %v4620 = vpop.f32.mrb[0].mxu0
    %v4621 = vpop.f32.mrb[0].mxu0
    %v4622 = vadd.f32 0.0, %v4621
    %v4623 = vpop.f32.mrb[0].mxu0
    %4624 = vmatprep.mubr.bf16.mxu0 0
    %4625 = vmatmul.mubr.bf16.gmra.mrb[0].mxu0 %v4468
    %v4626 = vpop.f32.mrb[0].mxu0
    %v4627 = vadd.f32 0.0, %v4626
    %v4628 = vpop.f32.mrb[0].mxu0
    %v4629 = vpop.f32.mrb[0].mxu0
    %v4630 = vadd.f32 0.0, %v4629
    %v4631 = vpop.f32.mrb[0].mxu0
    %4632 = vmatprep.mubr.bf16.mxu0 0
    %4633 = vmatmul.mubr.bf16.gmra.mrb[0].mxu0 %v4471
    %v4634 = vpop.f32.mrb[0].mxu0
    %v4635 = vadd.f32 0.0, %v4634
    %v4636 = vpop.f32.mrb[0].mxu0
    %v4637 = vpop.f32.mrb[0].mxu0
    %v4638 = vadd.f32 0.0, %v4637
    %v4639 = vpop.f32.mrb[0].mxu0
    %4640 = vmatprep.mubr.bf16.mxu0 0
    %4641 = vmatmul.mubr.bf16.gmra.mrb[0].mxu0 %v4474
    %v4642 = vpop.f32.mrb[0].mxu0
    %v4643 = vadd.f32 0.0, %v4642
    %v4644 = vpop.f32.mrb[0].mxu0
    %v4645 = vpop.f32.mrb[0].mxu0
    %v4646 = vadd.f32 0.0, %v4645
    %v4647 = vpop.f32.mrb[0].mxu0
    %4648 = vmatprep.mubr.bf16.mxu0 0
    %4649 = vmatmul.mubr.bf16.gmra.mrb[0].mxu0 %v4477
    %v4650 = vpop.f32.mrb[0].mxu0
    %v4651 = vadd.f32 0.0, %v4650
    %v4652 = vpop.f32.mrb[0].mxu0
    %v4653 = vpop.f32.mrb[0].mxu0
    %v4654 = vadd.f32 0.0, %v4653
    %v4655 = vpop.f32.mrb[0].mxu0
    %4656 = vmatprep.mubr.bf16.mxu0 0
    %4657 = vmatmul.mubr.bf16.gmra.mrb[0].mxu0 %v4480
    %v4658 = vpop.f32.mrb[0].mxu0
    %v4659 = vadd.f32 0.0, %v4658
    %v4660 = vpop.f32.mrb[0].mxu0
    %v4661 = vpop.f32.mrb[0].mxu0
    %v4662 = vadd.f32 0.0, %v4661
    %v4663 = vpop.f32.mrb[0].mxu0
    %4664 = vmatprep.mubr.bf16.mxu0 0
    %4665 = vmatmul.mubr.bf16.gmra.mrb[0].mxu0 %v4483
    %v4666 = vpop.f32.mrb[0].mxu0
    %v4667 = vadd.f32 0.0, %v4666
    %v4668 = vpop.f32.mrb[0].mxu0
    %v4669 = vpop.f32.mrb[0].mxu0
    %v4670 = vadd.f32 0.0, %v4669
    %v4671 = vpop.f32.mrb[0].mxu0
    %4672 = vmatprep.mubr.bf16.mxu0 0
    %4673 = vmatmul.mubr.bf16.gmra.mrb[0].mxu0 %v4486
    %v4674 = vpop.f32.mrb[0].mxu0
    %v4675 = vadd.f32 0.0, %v4674
    %v4676 = vpop.f32.mrb[0].mxu0
    %v4677 = vpop.f32.mrb[0].mxu0
    %v4678 = vadd.f32 0.0, %v4677
    %v4679 = vpop.f32.mrb[0].mxu0
    %4680 = vmatprep.mubr.bf16.mxu0 0
    %4681 = vmatmul.mubr.bf16.gmra.mrb[0].mxu0 %v4489
    %v4682 = vpop.f32.mrb[0].mxu0
    %v4683 = vadd.f32 0.0, %v4682
    %v4684 = vpop.f32.mrb[0].mxu0
    %v4685 = vpop.f32.mrb[0].mxu0
    %v4686 = vadd.f32 0.0, %v4685
    %v4687 = vpop.f32.mrb[0].mxu0
    %4688 = vmatprep.mubr.bf16.mxu0 0
    %4689 = vmatmul.mubr.bf16.gmra.mrb[0].mxu0 %v4492
    %v4690 = vpop.f32.mrb[0].mxu0
    %v4691 = vadd.f32 0.0, %v4690
    %v4692 = vpop.f32.mrb[0].mxu0
    %v4693 = vpop.f32.mrb[0].mxu0
    %v4694 = vadd.f32 0.0, %v4693
    %v4695 = vpop.f32.mrb[0].mxu0
    %4696 = vmatprep.mubr.bf16.mxu0 0
    %4697 = vmatmul.mubr.bf16.gmra.mrb[0].mxu0 %v4495
    %v4698 = vpop.f32.mrb[0].mxu0
    %v4699 = vadd.f32 0.0, %v4698
    %v4700 = vpop.f32.mrb[0].mxu0
    %v4701 = vpop.f32.mrb[0].mxu0
    %v4702 = vadd.f32 0.0, %v4701
    %v4703 = vpop.f32.mrb[0].mxu0
    %4704 = vmatprep.mubr.bf16.mxu0 0
    %4705 = vmatmul.mubr.bf16.gmra.mrb[0].mxu0 %v4498
    %v4706 = vpop.f32.mrb[0].mxu0
    %v4707 = vadd.f32 0.0, %v4706
    %v4708 = vpop.f32.mrb[0].mxu0
    %v4709 = vpop.f32.mrb[0].mxu0
    %v4710 = vadd.f32 0.0, %v4709
    %v4711 = vpop.f32.mrb[0].mxu0
    %4712 = vmatprep.mubr.bf16.mxu0 0
    %4713 = vmatmul.mubr.bf16.gmra.mrb[0].mxu0 %v4501
    %v4714 = vpop.f32.mrb[0].mxu0
    %v4715 = vadd.f32 0.0, %v4714
    %v4716 = vpop.f32.mrb[0].mxu0
    %v4717 = vpop.f32.mrb[0].mxu0
    %v4718 = vadd.f32 0.0, %v4717
    %v4719 = vpop.f32.mrb[0].mxu0
    %4720 = vmatprep.mubr.bf16.mxu0 0
    %4721 = vmatmul.mubr.bf16.gmra.mrb[0].mxu0 %v4504
    %v4722 = vpop.f32.mrb[0].mxu0
    %v4723 = vadd.f32 0.0, %v4722
    %v4724 = vpop.f32.mrb[0].mxu0
    %v4725 = vpop.f32.mrb[0].mxu0
    %v4726 = vadd.f32 0.0, %v4725
    %v4727 = vpop.f32.mrb[0].mxu0
    %4728 = vmatprep.mubr.bf16.mxu0 0
    %4729 = vmatmul.mubr.bf16.gmra.mrb[0].mxu0 %v4507
    %v4730 = vpop.f32.mrb[0].mxu0
    %v4731 = vadd.f32 0.0, %v4730
    %v4732 = vpop.f32.mrb[0].mxu0
    %v4733 = vpop.f32.mrb[0].mxu0
    %v4734 = vadd.f32 0.0, %v4733
    %v4735 = vpop.f32.mrb[0].mxu0
    %4736 = vmatprep.mubr.bf16.mxu0 0
    %4737 = vmatmul.mubr.bf16.gmra.mrb[0].mxu0 %v4510
    %v4738 = vpop.f32.mrb[0].mxu0
    %v4739 = vadd.f32 0.0, %v4738
    %v4740 = vpop.f32.mrb[0].mxu0
    %v4741 = vpop.f32.mrb[0].mxu0
    %v4742 = vadd.f32 0.0, %v4741
    %v4743 = vpop.f32.mrb[0].mxu0
    %4744 = vmatprep.mubr.bf16.mxu0 0
    %4745 = vmatmul.mubr.bf16.gmra.mrb[0].mxu0 %v4513
    %v4746 = vpop.f32.mrb[0].mxu0
    %v4747 = vadd.f32 0.0, %v4746
    %v4748 = vpop.f32.mrb[0].mxu0
    %v4749 = vpop.f32.mrb[0].mxu0
    %v4750 = vadd.f32 0.0, %v4749
    %v4751 = vpop.f32.mrb[0].mxu0
    %4752 = vmatprep.mubr.bf16.mxu0 0
    %4753 = vmatmul.mubr.bf16.gmra.mrb[0].mxu0 %v4516
    %v4754 = vpop.f32.mrb[0].mxu0
    %v4755 = vadd.f32 0.0, %v4754
    %v4756 = vpop.f32.mrb[0].mxu0
    %v4757 = vpop.f32.mrb[0].mxu0
    %v4758 = vadd.f32 0.0, %v4757
    %v4759 = vpop.f32.mrb[0].mxu0
    %4760 = vmatprep.mubr.bf16.mxu0 0
    %4761 = vmatmul.mubr.bf16.gmra.mrb[0].mxu0 %v4519
    %v4762 = vpop.f32.mrb[0].mxu0
    %v4763 = vadd.f32 0.0, %v4762
    %v4764 = vpop.f32.mrb[0].mxu0
    %v4765 = vpop.f32.mrb[0].mxu0
    %v4766 = vadd.f32 0.0, %v4765
    %v4767 = vpop.f32.mrb[0].mxu0
    %4768 = vmatprep.mubr.bf16.mxu0 0
    %4769 = vmatmul.mubr.bf16.gmra.mrb[0].mxu0 %v4522
    %v4770 = vpop.f32.mrb[0].mxu0
    %v4771 = vadd.f32 0.0, %v4770
    %v4772 = vpop.f32.mrb[0].mxu0
    %v4773 = vpop.f32.mrb[0].mxu0
    %v4774 = vadd.f32 0.0, %v4773
    %v4775 = vpop.f32.mrb[0].mxu0
    %4776 = vmatprep.mubr.bf16.mxu0 0
    %4777 = vmatmul.mubr.bf16.gmra.mrb[0].mxu0 %v4525
    %v4778 = vpop.f32.mrb[0].mxu0
    %v4779 = vadd.f32 0.0, %v4778
    %v4780 = vpop.f32.mrb[0].mxu0
    %v4781 = vpop.f32.mrb[0].mxu0
    %v4782 = vadd.f32 0.0, %v4781
    %v4783 = vpop.f32.mrb[0].mxu0
    %4784 = vmatprep.mubr.bf16.mxu0 0
    %4785 = vmatmul.mubr.bf16.gmra.mrb[0].mxu0 %v4528
    %v4786 = vpop.f32.mrb[0].mxu0
    %v4787 = vadd.f32 0.0, %v4786
    %v4788 = vpop.f32.mrb[0].mxu0
    %v4789 = vpop.f32.mrb[0].mxu0
    %v4790 = vadd.f32 0.0, %v4789
    %v4791 = vpop.f32.mrb[0].mxu0
    %4792 = vmatprep.mubr.bf16.mxu0 0
    %4793 = vmatmul.mubr.bf16.gmra.mrb[0].mxu0 %v4531
    %v4794 = vpop.f32.mrb[0].mxu0
    %v4795 = vadd.f32 0.0, %v4794
    %v4796 = vpop.f32.mrb[0].mxu0
    %v4797 = vpop.f32.mrb[0].mxu0
    %v4798 = vadd.f32 0.0, %v4797
    %v4799 = vpop.f32.mrb[0].mxu0
    %4800 = vmatprep.mubr.bf16.mxu0 0
    %4801 = vmatmul.mubr.bf16.gmra.mrb[0].mxu0 %v4534
    %v4802 = vpop.f32.mrb[0].mxu0
    %v4803 = vadd.f32 0.0, %v4802
    %v4804 = vpop.f32.mrb[0].mxu0
    %v4805 = vpop.f32.mrb[0].mxu0
    %v4806 = vadd.f32 0.0, %v4805
    %v4807 = vpop.f32.mrb[0].mxu0
    %4808 = vmatprep.mubr.bf16.mxu0 0
    %4809 = vmatmul.mubr.bf16.gmra.mrb[0].mxu0 %v4537
    %v4810 = vpop.f32.mrb[0].mxu0
    %v4811 = vadd.f32 0.0, %v4810
    %v4812 = vpop.f32.mrb[0].mxu0
    %v4813 = vpop.f32.mrb[0].mxu0
    %v4814 = vadd.f32 0.0, %v4813
    %v4815 = vpop.f32.mrb[0].mxu0
    %4816 = vmatprep.mubr.bf16.mxu0 0
    %4817 = vmatmul.mubr.bf16.gmra.mrb[0].mxu0 %v4540
    %v4818 = vpop.f32.mrb[0].mxu0
    %v4819 = vadd.f32 0.0, %v4818
    %v4820 = vpop.f32.mrb[0].mxu0
    %v4821 = vpop.f32.mrb[0].mxu0
    %v4822 = vadd.f32 0.0, %v4821
    %v4823 = vpop.f32.mrb[0].mxu0
    %4824 = vmatprep.mubr.bf16.mxu0 0
    %4825 = vmatmul.mubr.bf16.gmra.mrb[0].mxu0 %v4543
    %v4826 = vpop.f32.mrb[0].mxu0
    %v4827 = vadd.f32 0.0, %v4826
    %v4828 = vpop.f32.mrb[0].mxu0
    %v4829 = vpop.f32.mrb[0].mxu0
    %v4830 = vadd.f32 0.0, %v4829
    %v4831 = vpop.f32.mrb[0].mxu0
    %4832 = vmatprep.mubr.bf16.mxu0 0
    %4833 = vmatmul.mubr.bf16.gmra.mrb[0].mxu0 %v4546
    %v4834 = vpop.f32.mrb[0].mxu0
    %v4835 = vadd.f32 0.0, %v4834
    %v4836 = vpop.f32.mrb[0].mxu0
    %v4837 = vpop.f32.mrb[0].mxu0
    %v4838 = vadd.f32 0.0, %v4837
    %v4839 = vpop.f32.mrb[0].mxu0
    %4840 = vdwg.mxu0
    %v4841 = vld [vmem:[#allocation3] sm:$0xff]
    %v4842 = vld [vmem:[#allocation3 + $0x8] sm:$0xff]
    %v4843 = vld [vmem:[#allocation3 + $0x10] sm:$0xff]
    %v4844 = vld [vmem:[#allocation3 + $0x18] sm:$0xff]
    %v4845 = vld [vmem:[#allocation3 + $0x20] sm:$0xff]
    %v4846 = vld [vmem:[#allocation3 + $0x28] sm:$0xff]
    %v4847 = vld [vmem:[#allocation3 + $0x30] sm:$0xff]
    %v4848 = vld [vmem:[#allocation3 + $0x38] sm:$0xff]
    %v4849 = vld [vmem:[#allocation3 + $0x40] sm:$0xff]
    %v4850 = vld [vmem:[#allocation3 + $0x48] sm:$0xff]
    %v4851 = vld [vmem:[#allocation3 + $0x50] sm:$0xff]
    %v4852 = vld [vmem:[#allocation3 + $0x58] sm:$0xff]
    %v4853 = vld [vmem:[#allocation3 + $0x60] sm:$0xff]
    %v4854 = vld [vmem:[#allocation3 + $0x68] sm:$0xff]
    %v4855 = vld [vmem:[#allocation3 + $0x70] sm:$0xff]
    %v4856 = vld [vmem:[#allocation3 + $0x78] sm:$0xff]
    %v4857 = vld [vmem:[#allocation3 + $0x80] sm:$0xff]
    %v4858 = vld [vmem:[#allocation3 + $0x88] sm:$0xff]
    %v4859 = vld [vmem:[#allocation3 + $0x90] sm:$0xff]
    %v4860 = vld [vmem:[#allocation3 + $0x98] sm:$0xff]
    %v4861 = vld [vmem:[#allocation3 + $0xa0] sm:$0xff]
    %v4862 = vld [vmem:[#allocation3 + $0xa8] sm:$0xff]
    %v4863 = vld [vmem:[#allocation3 + $0xb0] sm:$0xff]
    %v4864 = vld [vmem:[#allocation3 + $0xb8] sm:$0xff]
    %v4865 = vld [vmem:[#allocation3 + $0xc0] sm:$0xff]
    %v4866 = vld [vmem:[#allocation3 + $0xc8] sm:$0xff]
    %v4867 = vld [vmem:[#allocation3 + $0xd0] sm:$0xff]
    %v4868 = vld [vmem:[#allocation3 + $0xd8] sm:$0xff]
    %v4869 = vld [vmem:[#allocation3 + $0xe0] sm:$0xff]
    %v4870 = vld [vmem:[#allocation3 + $0xe8] sm:$0xff]
    %v4871 = vld [vmem:[#allocation3 + $0xf0] sm:$0xff]
    %v4872 = vld [vmem:[#allocation3 + $0xf8] sm:$0xff]
    %v4873 = vld [vmem:[%s3] sm:$0xf]
    %v4874 = vld [vmem:[%s3 + $0x4] sm:$0xf]
    %v4875 = vld [vmem:[%s3 + $0x8] sm:$0xf]
    %v4876 = vld [vmem:[%s3 + $0xc] sm:$0xf]
    %v4877 = vld [vmem:[%s3 + $0x10] sm:$0x3]
    %v4883 = vunpack.c.l.b16 %v4873
    %v4884 = vunpack.c.l.b16 %v4874
    %v4885 = vunpack.c.l.b16 %v4875
    %v4886 = vunpack.c.l.b16 %v4876
    %v4887 = vunpack.c.l.b16 %v4877
    %v4888 = vpack.c.b16 %v4884, %v4883
    %v4889 = vpack.c.b16 %v4886, %v4885
    %v4890 = vpack.c.b16 %v4887, %v4887
    %v4894 = vsel %vm4451, %v4841, 0
    %v4897 = vsel %vm4451, %v4842, 0
    %v4900 = vsel %vm4451, %v4843, 0
    %v4903 = vsel %vm4451, %v4844, 0
    %v4906 = vsel %vm4451, %v4845, 0
    %v4909 = vsel %vm4451, %v4846, 0
    %v4912 = vsel %vm4451, %v4847, 0
    %v4915 = vsel %vm4451, %v4848, 0
    %v4918 = vsel %vm4451, %v4849, 0
    %v4921 = vsel %vm4451, %v4850, 0
    %v4924 = vsel %vm4451, %v4851, 0
    %v4927 = vsel %vm4451, %v4852, 0
    %v4930 = vsel %vm4451, %v4853, 0
    %v4933 = vsel %vm4451, %v4854, 0
    %v4936 = vsel %vm4451, %v4855, 0
    %v4939 = vsel %vm4451, %v4856, 0
    %v4942 = vsel %vm4451, %v4857, 0
    %v4945 = vsel %vm4451, %v4858, 0
    %v4948 = vsel %vm4451, %v4859, 0
    %v4951 = vsel %vm4451, %v4860, 0
    %v4954 = vsel %vm4451, %v4861, 0
    %v4957 = vsel %vm4451, %v4862, 0
    %v4960 = vsel %vm4451, %v4863, 0
    %v4963 = vsel %vm4451, %v4864, 0
    %v4966 = vsel %vm4451, %v4865, 0
    %v4969 = vsel %vm4451, %v4866, 0
    %v4972 = vsel %vm4451, %v4867, 0
    %v4975 = vsel %vm4451, %v4868, 0
    %v4978 = vsel %vm4451, %v4869, 0
    %v4981 = vsel %vm4451, %v4870, 0
    %v4984 = vsel %vm4451, %v4871, 0
    %v4987 = vsel %vm4451, %v4872, 0
    %v4990 = vsel %vm4548, %v4890, 0
    %4992 = vmatprep.subr.bf16.mxu0 0
    %4993 = vmatpush1.bf16.msra.mxu0 %v4888
    %4994 = vmatprep.subr.bf16.mxu0 0
    %4995 = vmatpush1.bf16.msra.mxu0 %v4889
    %4996 = vmatprep.subr.bf16.mxu0 0
    %4997 = vmatpush1.bf16.msra.mxu0 %v4990
    %4998 = vmatprep.subr.bf16.mxu0 0
    %4999 = vmatpush1.bf16.msra.mxu0 0
    %5000 = vmatprep.subr.bf16.mxu0 0
    %5001 = vmatpush1.bf16.msra.mxu0 0
    %5002 = vmatprep.subr.bf16.mxu0 0
    %5003 = vmatpush1.bf16.msra.mxu0 0
    %5004 = vmatprep.subr.bf16.mxu0 0
    %5005 = vmatpush1.bf16.msra.mxu0 0
    %5006 = vmatprep.subr.bf16.mxu0 0
    %5007 = vmatpush1.bf16.msra.mxu0 0
    %5008 = vmatprep.subr.bf16.mxu0 0
    %5009 = vmatpush1.bf16.msra.mxu0 0
    %5010 = vmatprep.subr.bf16.mxu0 0
    %5011 = vmatpush1.bf16.msra.mxu0 0
    %5012 = vmatprep.subr.bf16.mxu0 0
    %5013 = vmatpush1.bf16.msra.mxu0 0
    %5014 = vmatprep.subr.bf16.mxu0 0
    %5015 = vmatpush1.bf16.msra.mxu0 0
    %5016 = vmatprep.subr.bf16.mxu0 0
    %5017 = vmatpush1.bf16.msra.mxu0 0
    %5018 = vmatprep.subr.bf16.mxu0 0
    %5019 = vmatpush1.bf16.msra.mxu0 0
    %5020 = vmatprep.subr.bf16.mxu0 0
    %5021 = vmatpush1.bf16.msra.mxu0 0
    %5022 = vmatprep.subr.bf16.mxu0 0
    %5023 = vmatpush1.bf16.msra.mxu0 0
    %5024 = vmatprep.mubr.bf16.mxu0 0
    %5025 = vmatmul.mubr.bf16.gmra.mrb[0].mxu0 %v4894
    %v5026 = vpop.f32.mrb[0].mxu0
    %v5027 = vadd.f32 0.0, %v5026
    %v5028 = vpop.f32.mrb[0].mxu0
    %v5029 = vpop.f32.mrb[0].mxu0
    %v5030 = vadd.f32 0.0, %v5029
    %v5031 = vpop.f32.mrb[0].mxu0
    %5032 = vmatprep.mubr.bf16.mxu0 0
    %5033 = vmatmul.mubr.bf16.gmra.mrb[0].mxu0 %v4897
    %v5034 = vpop.f32.mrb[0].mxu0
    %v5035 = vadd.f32 0.0, %v5034
    %v5036 = vpop.f32.mrb[0].mxu0
    %v5037 = vpop.f32.mrb[0].mxu0
    %v5038 = vadd.f32 0.0, %v5037
    %v5039 = vpop.f32.mrb[0].mxu0
    %5040 = vmatprep.mubr.bf16.mxu0 0
    %5041 = vmatmul.mubr.bf16.gmra.mrb[0].mxu0 %v4900
    %v5042 = vpop.f32.mrb[0].mxu0
    %v5043 = vadd.f32 0.0, %v5042
    %v5044 = vpop.f32.mrb[0].mxu0
    %v5045 = vpop.f32.mrb[0].mxu0
    %v5046 = vadd.f32 0.0, %v5045
    %v5047 = vpop.f32.mrb[0].mxu0
    %5048 = vmatprep.mubr.bf16.mxu0 0
    %5049 = vmatmul.mubr.bf16.gmra.mrb[0].mxu0 %v4903
    %v5050 = vpop.f32.mrb[0].mxu0
    %v5051 = vadd.f32 0.0, %v5050
    %v5052 = vpop.f32.mrb[0].mxu0
    %v5053 = vpop.f32.mrb[0].mxu0
    %v5054 = vadd.f32 0.0, %v5053
    %v5055 = vpop.f32.mrb[0].mxu0
    %5056 = vmatprep.mubr.bf16.mxu0 0
    %5057 = vmatmul.mubr.bf16.gmra.mrb[0].mxu0 %v4906
    %v5058 = vpop.f32.mrb[0].mxu0
    %v5059 = vadd.f32 0.0, %v5058
    %v5060 = vpop.f32.mrb[0].mxu0
    %v5061 = vpop.f32.mrb[0].mxu0
    %v5062 = vadd.f32 0.0, %v5061
    %v5063 = vpop.f32.mrb[0].mxu0
    %5064 = vmatprep.mubr.bf16.mxu0 0
    %5065 = vmatmul.mubr.bf16.gmra.mrb[0].mxu0 %v4909
    %v5066 = vpop.f32.mrb[0].mxu0
    %v5067 = vadd.f32 0.0, %v5066
    %v5068 = vpop.f32.mrb[0].mxu0
    %v5069 = vpop.f32.mrb[0].mxu0
    %v5070 = vadd.f32 0.0, %v5069
    %v5071 = vpop.f32.mrb[0].mxu0
    %5072 = vmatprep.mubr.bf16.mxu0 0
    %5073 = vmatmul.mubr.bf16.gmra.mrb[0].mxu0 %v4912
    %v5074 = vpop.f32.mrb[0].mxu0
    %v5075 = vadd.f32 0.0, %v5074
    %v5076 = vpop.f32.mrb[0].mxu0
    %v5077 = vpop.f32.mrb[0].mxu0
    %v5078 = vadd.f32 0.0, %v5077
    %v5079 = vpop.f32.mrb[0].mxu0
    %5080 = vmatprep.mubr.bf16.mxu0 0
    %5081 = vmatmul.mubr.bf16.gmra.mrb[0].mxu0 %v4915
    %v5082 = vpop.f32.mrb[0].mxu0
    %v5083 = vadd.f32 0.0, %v5082
    %v5084 = vpop.f32.mrb[0].mxu0
    %v5085 = vpop.f32.mrb[0].mxu0
    %v5086 = vadd.f32 0.0, %v5085
    %v5087 = vpop.f32.mrb[0].mxu0
    %5088 = vmatprep.mubr.bf16.mxu0 0
    %5089 = vmatmul.mubr.bf16.gmra.mrb[0].mxu0 %v4918
    %v5090 = vpop.f32.mrb[0].mxu0
    %v5091 = vadd.f32 0.0, %v5090
    %v5092 = vpop.f32.mrb[0].mxu0
    %v5093 = vpop.f32.mrb[0].mxu0
    %v5094 = vadd.f32 0.0, %v5093
    %v5095 = vpop.f32.mrb[0].mxu0
    %5096 = vmatprep.mubr.bf16.mxu0 0
    %5097 = vmatmul.mubr.bf16.gmra.mrb[0].mxu0 %v4921
    %v5098 = vpop.f32.mrb[0].mxu0
    %v5099 = vadd.f32 0.0, %v5098
    %v5100 = vpop.f32.mrb[0].mxu0
    %v5101 = vpop.f32.mrb[0].mxu0
    %v5102 = vadd.f32 0.0, %v5101
    %v5103 = vpop.f32.mrb[0].mxu0
    %5104 = vmatprep.mubr.bf16.mxu0 0
    %5105 = vmatmul.mubr.bf16.gmra.mrb[0].mxu0 %v4924
    %v5106 = vpop.f32.mrb[0].mxu0
    %v5107 = vadd.f32 0.0, %v5106
    %v5108 = vpop.f32.mrb[0].mxu0
    %v5109 = vpop.f32.mrb[0].mxu0
    %v5110 = vadd.f32 0.0, %v5109
    %v5111 = vpop.f32.mrb[0].mxu0
    %5112 = vmatprep.mubr.bf16.mxu0 0
    %5113 = vmatmul.mubr.bf16.gmra.mrb[0].mxu0 %v4927
    %v5114 = vpop.f32.mrb[0].mxu0
    %v5115 = vadd.f32 0.0, %v5114
    %v5116 = vpop.f32.mrb[0].mxu0
    %v5117 = vpop.f32.mrb[0].mxu0
    %v5118 = vadd.f32 0.0, %v5117
    %v5119 = vpop.f32.mrb[0].mxu0
    %5120 = vmatprep.mubr.bf16.mxu0 0
    %5121 = vmatmul.mubr.bf16.gmra.mrb[0].mxu0 %v4930
    %v5122 = vpop.f32.mrb[0].mxu0
    %v5123 = vadd.f32 0.0, %v5122
    %v5124 = vpop.f32.mrb[0].mxu0
    %v5125 = vpop.f32.mrb[0].mxu0
    %v5126 = vadd.f32 0.0, %v5125
    %v5127 = vpop.f32.mrb[0].mxu0
    %5128 = vmatprep.mubr.bf16.mxu0 0
    %5129 = vmatmul.mubr.bf16.gmra.mrb[0].mxu0 %v4933
    %v5130 = vpop.f32.mrb[0].mxu0
    %v5131 = vadd.f32 0.0, %v5130
    %v5132 = vpop.f32.mrb[0].mxu0
    %v5133 = vpop.f32.mrb[0].mxu0
    %v5134 = vadd.f32 0.0, %v5133
    %v5135 = vpop.f32.mrb[0].mxu0
    %5136 = vmatprep.mubr.bf16.mxu0 0
    %5137 = vmatmul.mubr.bf16.gmra.mrb[0].mxu0 %v4936
    %v5138 = vpop.f32.mrb[0].mxu0
    %v5139 = vadd.f32 0.0, %v5138
    %v5140 = vpop.f32.mrb[0].mxu0
    %v5141 = vpop.f32.mrb[0].mxu0
    %v5142 = vadd.f32 0.0, %v5141
    %v5143 = vpop.f32.mrb[0].mxu0
    %5144 = vmatprep.mubr.bf16.mxu0 0
    %5145 = vmatmul.mubr.bf16.gmra.mrb[0].mxu0 %v4939
    %v5146 = vpop.f32.mrb[0].mxu0
    %v5147 = vadd.f32 0.0, %v5146
    %v5148 = vpop.f32.mrb[0].mxu0
    %v5149 = vpop.f32.mrb[0].mxu0
    %v5150 = vadd.f32 0.0, %v5149
    %v5151 = vpop.f32.mrb[0].mxu0
    %5152 = vmatprep.mubr.bf16.mxu0 0
    %5153 = vmatmul.mubr.bf16.gmra.mrb[0].mxu0 %v4942
    %v5154 = vpop.f32.mrb[0].mxu0
    %v5155 = vadd.f32 0.0, %v5154
    %v5156 = vpop.f32.mrb[0].mxu0
    %v5157 = vpop.f32.mrb[0].mxu0
    %v5158 = vadd.f32 0.0, %v5157
    %v5159 = vpop.f32.mrb[0].mxu0
    %5160 = vmatprep.mubr.bf16.mxu0 0
    %5161 = vmatmul.mubr.bf16.gmra.mrb[0].mxu0 %v4945
    %v5162 = vpop.f32.mrb[0].mxu0
    %v5163 = vadd.f32 0.0, %v5162
    %v5164 = vpop.f32.mrb[0].mxu0
    %v5165 = vpop.f32.mrb[0].mxu0
    %v5166 = vadd.f32 0.0, %v5165
    %v5167 = vpop.f32.mrb[0].mxu0
    %5168 = vmatprep.mubr.bf16.mxu0 0
    %5169 = vmatmul.mubr.bf16.gmra.mrb[0].mxu0 %v4948
    %v5170 = vpop.f32.mrb[0].mxu0
    %v5171 = vadd.f32 0.0, %v5170
    %v5172 = vpop.f32.mrb[0].mxu0
    %v5173 = vpop.f32.mrb[0].mxu0
    %v5174 = vadd.f32 0.0, %v5173
    %v5175 = vpop.f32.mrb[0].mxu0
    %5176 = vmatprep.mubr.bf16.mxu0 0
    %5177 = vmatmul.mubr.bf16.gmra.mrb[0].mxu0 %v4951
    %v5178 = vpop.f32.mrb[0].mxu0
    %v5179 = vadd.f32 0.0, %v5178
    %v5180 = vpop.f32.mrb[0].mxu0
    %v5181 = vpop.f32.mrb[0].mxu0
    %v5182 = vadd.f32 0.0, %v5181
    %v5183 = vpop.f32.mrb[0].mxu0
    %5184 = vmatprep.mubr.bf16.mxu0 0
    %5185 = vmatmul.mubr.bf16.gmra.mrb[0].mxu0 %v4954
    %v5186 = vpop.f32.mrb[0].mxu0
    %v5187 = vadd.f32 0.0, %v5186
    %v5188 = vpop.f32.mrb[0].mxu0
    %v5189 = vpop.f32.mrb[0].mxu0
    %v5190 = vadd.f32 0.0, %v5189
    %v5191 = vpop.f32.mrb[0].mxu0
    %5192 = vmatprep.mubr.bf16.mxu0 0
    %5193 = vmatmul.mubr.bf16.gmra.mrb[0].mxu0 %v4957
    %v5194 = vpop.f32.mrb[0].mxu0
    %v5195 = vadd.f32 0.0, %v5194
    %v5196 = vpop.f32.mrb[0].mxu0
    %v5197 = vpop.f32.mrb[0].mxu0
    %v5198 = vadd.f32 0.0, %v5197
    %v5199 = vpop.f32.mrb[0].mxu0
    %5200 = vmatprep.mubr.bf16.mxu0 0
    %5201 = vmatmul.mubr.bf16.gmra.mrb[0].mxu0 %v4960
    %v5202 = vpop.f32.mrb[0].mxu0
    %v5203 = vadd.f32 0.0, %v5202
    %v5204 = vpop.f32.mrb[0].mxu0
    %v5205 = vpop.f32.mrb[0].mxu0
    %v5206 = vadd.f32 0.0, %v5205
    %v5207 = vpop.f32.mrb[0].mxu0
    %5208 = vmatprep.mubr.bf16.mxu0 0
    %5209 = vmatmul.mubr.bf16.gmra.mrb[0].mxu0 %v4963
    %v5210 = vpop.f32.mrb[0].mxu0
    %v5211 = vadd.f32 0.0, %v5210
    %v5212 = vpop.f32.mrb[0].mxu0
    %v5213 = vpop.f32.mrb[0].mxu0
    %v5214 = vadd.f32 0.0, %v5213
    %v5215 = vpop.f32.mrb[0].mxu0
    %5216 = vmatprep.mubr.bf16.mxu0 0
    %5217 = vmatmul.mubr.bf16.gmra.mrb[0].mxu0 %v4966
    %v5218 = vpop.f32.mrb[0].mxu0
    %v5219 = vadd.f32 0.0, %v5218
    %v5220 = vpop.f32.mrb[0].mxu0
    %v5221 = vpop.f32.mrb[0].mxu0
    %v5222 = vadd.f32 0.0, %v5221
    %v5223 = vpop.f32.mrb[0].mxu0
    %5224 = vmatprep.mubr.bf16.mxu0 0
    %5225 = vmatmul.mubr.bf16.gmra.mrb[0].mxu0 %v4969
    %v5226 = vpop.f32.mrb[0].mxu0
    %v5227 = vadd.f32 0.0, %v5226
    %v5228 = vpop.f32.mrb[0].mxu0
    %v5229 = vpop.f32.mrb[0].mxu0
    %v5230 = vadd.f32 0.0, %v5229
    %v5231 = vpop.f32.mrb[0].mxu0
    %5232 = vmatprep.mubr.bf16.mxu0 0
    %5233 = vmatmul.mubr.bf16.gmra.mrb[0].mxu0 %v4972
    %v5234 = vpop.f32.mrb[0].mxu0
    %v5235 = vadd.f32 0.0, %v5234
    %v5236 = vpop.f32.mrb[0].mxu0
    %v5237 = vpop.f32.mrb[0].mxu0
    %v5238 = vadd.f32 0.0, %v5237
    %v5239 = vpop.f32.mrb[0].mxu0
    %5240 = vmatprep.mubr.bf16.mxu0 0
    %5241 = vmatmul.mubr.bf16.gmra.mrb[0].mxu0 %v4975
    %v5242 = vpop.f32.mrb[0].mxu0
    %v5243 = vadd.f32 0.0, %v5242
    %v5244 = vpop.f32.mrb[0].mxu0
    %v5245 = vpop.f32.mrb[0].mxu0
    %v5246 = vadd.f32 0.0, %v5245
    %v5247 = vpop.f32.mrb[0].mxu0
    %5248 = vmatprep.mubr.bf16.mxu0 0
    %5249 = vmatmul.mubr.bf16.gmra.mrb[0].mxu0 %v4978
    %v5250 = vpop.f32.mrb[0].mxu0
    %v5251 = vadd.f32 0.0, %v5250
    %v5252 = vpop.f32.mrb[0].mxu0
    %v5253 = vpop.f32.mrb[0].mxu0
    %v5254 = vadd.f32 0.0, %v5253
    %v5255 = vpop.f32.mrb[0].mxu0
    %5256 = vmatprep.mubr.bf16.mxu0 0
    %5257 = vmatmul.mubr.bf16.gmra.mrb[0].mxu0 %v4981
    %v5258 = vpop.f32.mrb[0].mxu0
    %v5259 = vadd.f32 0.0, %v5258
    %v5260 = vpop.f32.mrb[0].mxu0
    %v5261 = vpop.f32.mrb[0].mxu0
    %v5262 = vadd.f32 0.0, %v5261
    %v5263 = vpop.f32.mrb[0].mxu0
    %5264 = vmatprep.mubr.bf16.mxu0 0
    %5265 = vmatmul.mubr.bf16.gmra.mrb[0].mxu0 %v4984
    %v5266 = vpop.f32.mrb[0].mxu0
    %v5267 = vadd.f32 0.0, %v5266
    %v5268 = vpop.f32.mrb[0].mxu0
    %v5269 = vpop.f32.mrb[0].mxu0
    %v5270 = vadd.f32 0.0, %v5269
    %v5271 = vpop.f32.mrb[0].mxu0
    %5272 = vmatprep.mubr.bf16.mxu0 0
    %5273 = vmatmul.mubr.bf16.gmra.mrb[0].mxu0 %v4987
    %v5274 = vpop.f32.mrb[0].mxu0
    %v5275 = vadd.f32 0.0, %v5274
    %v5276 = vpop.f32.mrb[0].mxu0
    %v5277 = vpop.f32.mrb[0].mxu0
    %v5278 = vadd.f32 0.0, %v5277
    %v5279 = vpop.f32.mrb[0].mxu0
    %5280 = vdwg.mxu0
    %v5281 = vadd.f32 %v4587, %v5027
    %v5282 = vadd.f32 %v4590, %v5030
    %v5283 = vadd.f32 %v4595, %v5035
    %v5284 = vadd.f32 %v4598, %v5038
    %v5285 = vadd.f32 %v4603, %v5043
    %v5286 = vadd.f32 %v4606, %v5046
    %v5287 = vadd.f32 %v4611, %v5051
    %v5288 = vadd.f32 %v4614, %v5054
    %v5289 = vadd.f32 %v4619, %v5059
    %v5290 = vadd.f32 %v4622, %v5062
    %v5291 = vadd.f32 %v4627, %v5067
    %v5292 = vadd.f32 %v4630, %v5070
    %v5293 = vadd.f32 %v4635, %v5075
    %v5294 = vadd.f32 %v4638, %v5078
    %v5295 = vadd.f32 %v4643, %v5083
    %v5296 = vadd.f32 %v4646, %v5086
    %v5297 = vadd.f32 %v4651, %v5091
    %v5298 = vadd.f32 %v4654, %v5094
    %v5299 = vadd.f32 %v4659, %v5099
    %v5300 = vadd.f32 %v4662, %v5102
    %v5301 = vadd.f32 %v4667, %v5107
    %v5302 = vadd.f32 %v4670, %v5110
    %v5303 = vadd.f32 %v4675, %v5115
    %v5304 = vadd.f32 %v4678, %v5118
    %v5305 = vadd.f32 %v4683, %v5123
    %v5306 = vadd.f32 %v4686, %v5126
    %v5307 = vadd.f32 %v4691, %v5131
    %v5308 = vadd.f32 %v4694, %v5134
    %v5309 = vadd.f32 %v4699, %v5139
    %v5310 = vadd.f32 %v4702, %v5142
    %v5311 = vadd.f32 %v4707, %v5147
    %v5312 = vadd.f32 %v4710, %v5150
    %v5313 = vadd.f32 %v4715, %v5155
    %v5314 = vadd.f32 %v4718, %v5158
    %v5315 = vadd.f32 %v4723, %v5163
    %v5316 = vadd.f32 %v4726, %v5166
    %v5317 = vadd.f32 %v4731, %v5171
    %v5318 = vadd.f32 %v4734, %v5174
    %v5319 = vadd.f32 %v4739, %v5179
    %v5320 = vadd.f32 %v4742, %v5182
    %v5321 = vadd.f32 %v4747, %v5187
    %v5322 = vadd.f32 %v4750, %v5190
    %v5323 = vadd.f32 %v4755, %v5195
    %v5324 = vadd.f32 %v4758, %v5198
    %v5325 = vadd.f32 %v4763, %v5203
    %v5326 = vadd.f32 %v4766, %v5206
    %v5327 = vadd.f32 %v4771, %v5211
    %v5328 = vadd.f32 %v4774, %v5214
    %v5329 = vadd.f32 %v4779, %v5219
    %v5330 = vadd.f32 %v4782, %v5222
    %v5331 = vadd.f32 %v4787, %v5227
    %v5332 = vadd.f32 %v4790, %v5230
    %v5333 = vadd.f32 %v4795, %v5235
    %v5334 = vadd.f32 %v4798, %v5238
    %v5335 = vadd.f32 %v4803, %v5243
    %v5336 = vadd.f32 %v4806, %v5246
    %v5337 = vadd.f32 %v4811, %v5251
    %v5338 = vadd.f32 %v4814, %v5254
    %v5339 = vadd.f32 %v4819, %v5259
    %v5340 = vadd.f32 %v4822, %v5262
    %v5341 = vadd.f32 %v4827, %v5267
    %v5342 = vadd.f32 %v4830, %v5270
    %v5343 = vadd.f32 %v4835, %v5275
    %v5344 = vadd.f32 %v4838, %v5278
    %v5345 = vld [vmem:[%s5] sm:$0x1]
    %v5347 = vlaneseq
    %v5348 = vshrl.u32 %v5347, 7
    %v5349 = vsub.s32 0, %v5348
    %v5350 = vrot.slane %v5345, %v5349
    %v5352 = vadd.f32 %v5281, %v5350
    %v5353 = vadd.f32 %v5282, %v5350
    %v5354 = vadd.f32 %v5283, %v5350
    %v5355 = vadd.f32 %v5284, %v5350
    %v5356 = vadd.f32 %v5285, %v5350
    %v5357 = vadd.f32 %v5286, %v5350
    %v5358 = vadd.f32 %v5287, %v5350
    %v5359 = vadd.f32 %v5288, %v5350
    %v5360 = vadd.f32 %v5289, %v5350
    %v5361 = vadd.f32 %v5290, %v5350
    %v5362 = vadd.f32 %v5291, %v5350
    %v5363 = vadd.f32 %v5292, %v5350
    %v5364 = vadd.f32 %v5293, %v5350
    %v5365 = vadd.f32 %v5294, %v5350
    %v5366 = vadd.f32 %v5295, %v5350
    %v5367 = vadd.f32 %v5296, %v5350
    %v5368 = vadd.f32 %v5297, %v5350
    %v5369 = vadd.f32 %v5298, %v5350
    %v5370 = vadd.f32 %v5299, %v5350
    %v5371 = vadd.f32 %v5300, %v5350
    %v5372 = vadd.f32 %v5301, %v5350
    %v5373 = vadd.f32 %v5302, %v5350
    %v5374 = vadd.f32 %v5303, %v5350
    %v5375 = vadd.f32 %v5304, %v5350
    %v5376 = vadd.f32 %v5305, %v5350
    %v5377 = vadd.f32 %v5306, %v5350
    %v5378 = vadd.f32 %v5307, %v5350
    %v5379 = vadd.f32 %v5308, %v5350
    %v5380 = vadd.f32 %v5309, %v5350
    %v5381 = vadd.f32 %v5310, %v5350
    %v5382 = vadd.f32 %v5311, %v5350
    %v5383 = vadd.f32 %v5312, %v5350
    %v5384 = vadd.f32 %v5313, %v5350
    %v5385 = vadd.f32 %v5314, %v5350
    %v5386 = vadd.f32 %v5315, %v5350
    %v5387 = vadd.f32 %v5316, %v5350
    %v5388 = vadd.f32 %v5317, %v5350
    %v5389 = vadd.f32 %v5318, %v5350
    %v5390 = vadd.f32 %v5319, %v5350
    %v5391 = vadd.f32 %v5320, %v5350
    %v5392 = vadd.f32 %v5321, %v5350
    %v5393 = vadd.f32 %v5322, %v5350
    %v5394 = vadd.f32 %v5323, %v5350
    %v5395 = vadd.f32 %v5324, %v5350
    %v5396 = vadd.f32 %v5325, %v5350
    %v5397 = vadd.f32 %v5326, %v5350
    %v5398 = vadd.f32 %v5327, %v5350
    %v5399 = vadd.f32 %v5328, %v5350
    %v5400 = vadd.f32 %v5329, %v5350
    %v5401 = vadd.f32 %v5330, %v5350
    %v5402 = vadd.f32 %v5331, %v5350
    %v5403 = vadd.f32 %v5332, %v5350
    %v5404 = vadd.f32 %v5333, %v5350
    %v5405 = vadd.f32 %v5334, %v5350
    %v5406 = vadd.f32 %v5335, %v5350
    %v5407 = vadd.f32 %v5336, %v5350
    %v5408 = vadd.f32 %v5337, %v5350
    %v5409 = vadd.f32 %v5338, %v5350
    %v5410 = vadd.f32 %v5339, %v5350
    %v5411 = vadd.f32 %v5340, %v5350
    %v5412 = vadd.f32 %v5341, %v5350
    %v5413 = vadd.f32 %v5342, %v5350
    %v5414 = vadd.f32 %v5343, %v5350
    %v5415 = vadd.f32 %v5344, %v5350
    %v5416 = vxor.u32 %v5352, 2147483648
    %v5417 = vxor.u32 %v5353, 2147483648
    %v5418 = vxor.u32 %v5354, 2147483648
    %v5419 = vxor.u32 %v5355, 2147483648
    %v5420 = vxor.u32 %v5356, 2147483648
    %v5421 = vxor.u32 %v5357, 2147483648
    %v5422 = vxor.u32 %v5358, 2147483648
    %v5423 = vxor.u32 %v5359, 2147483648
    %v5424 = vxor.u32 %v5360, 2147483648
    %v5425 = vxor.u32 %v5361, 2147483648
    %v5426 = vxor.u32 %v5362, 2147483648
    %v5427 = vxor.u32 %v5363, 2147483648
    %v5428 = vxor.u32 %v5364, 2147483648
    %v5429 = vxor.u32 %v5365, 2147483648
    %v5430 = vxor.u32 %v5366, 2147483648
    %v5431 = vxor.u32 %v5367, 2147483648
    %v5432 = vxor.u32 %v5368, 2147483648
    %v5433 = vxor.u32 %v5369, 2147483648
    %v5434 = vxor.u32 %v5370, 2147483648
    %v5435 = vxor.u32 %v5371, 2147483648
    %v5436 = vxor.u32 %v5372, 2147483648
    %v5437 = vxor.u32 %v5373, 2147483648
    %v5438 = vxor.u32 %v5374, 2147483648
    %v5439 = vxor.u32 %v5375, 2147483648
    %v5440 = vxor.u32 %v5376, 2147483648
    %v5441 = vxor.u32 %v5377, 2147483648
    %v5442 = vxor.u32 %v5378, 2147483648
    %v5443 = vxor.u32 %v5379, 2147483648
    %v5444 = vxor.u32 %v5380, 2147483648
    %v5445 = vxor.u32 %v5381, 2147483648
    %v5446 = vxor.u32 %v5382, 2147483648
    %v5447 = vxor.u32 %v5383, 2147483648
    %v5448 = vxor.u32 %v5384, 2147483648
    %v5449 = vxor.u32 %v5385, 2147483648
    %v5450 = vxor.u32 %v5386, 2147483648
    %v5451 = vxor.u32 %v5387, 2147483648
    %v5452 = vxor.u32 %v5388, 2147483648
    %v5453 = vxor.u32 %v5389, 2147483648
    %v5454 = vxor.u32 %v5390, 2147483648
    %v5455 = vxor.u32 %v5391, 2147483648
    %v5456 = vxor.u32 %v5392, 2147483648
    %v5457 = vxor.u32 %v5393, 2147483648
    %v5458 = vxor.u32 %v5394, 2147483648
    %v5459 = vxor.u32 %v5395, 2147483648
    %v5460 = vxor.u32 %v5396, 2147483648
    %v5461 = vxor.u32 %v5397, 2147483648
    %v5462 = vxor.u32 %v5398, 2147483648
    %v5463 = vxor.u32 %v5399, 2147483648
    %v5464 = vxor.u32 %v5400, 2147483648
    %v5465 = vxor.u32 %v5401, 2147483648
    %v5466 = vxor.u32 %v5402, 2147483648
    %v5467 = vxor.u32 %v5403, 2147483648
    %v5468 = vxor.u32 %v5404, 2147483648
    %v5469 = vxor.u32 %v5405, 2147483648
    %v5470 = vxor.u32 %v5406, 2147483648
    %v5471 = vxor.u32 %v5407, 2147483648
    %v5472 = vxor.u32 %v5408, 2147483648
    %v5473 = vxor.u32 %v5409, 2147483648
    %v5474 = vxor.u32 %v5410, 2147483648
    %v5475 = vxor.u32 %v5411, 2147483648
    %v5476 = vxor.u32 %v5412, 2147483648
    %v5477 = vxor.u32 %v5413, 2147483648
    %v5478 = vxor.u32 %v5414, 2147483648
    %v5479 = vxor.u32 %v5415, 2147483648
    %v5480 = vmul.f32 %v5416, 1.442695
    %v5481 = vpow.pop %v5480
    %v5482 = vmul.f32 %v5417, 1.442695
    %v5483 = vpow.pop %v5482
    %v5484 = vmul.f32 %v5418, 1.442695
    %v5485 = vpow.pop %v5484
    %v5486 = vmul.f32 %v5419, 1.442695
    %v5487 = vpow.pop %v5486
    %v5488 = vmul.f32 %v5420, 1.442695
    %v5489 = vpow.pop %v5488
    %v5490 = vmul.f32 %v5421, 1.442695
    %v5491 = vpow.pop %v5490
    %v5492 = vmul.f32 %v5422, 1.442695
    %v5493 = vpow.pop %v5492
    %v5494 = vmul.f32 %v5423, 1.442695
    %v5495 = vpow.pop %v5494
    %v5496 = vmul.f32 %v5424, 1.442695
    %v5497 = vpow.pop %v5496
    %v5498 = vmul.f32 %v5425, 1.442695
    %v5499 = vpow.pop %v5498
    %v5500 = vmul.f32 %v5426, 1.442695
    %v5501 = vpow.pop %v5500
    %v5502 = vmul.f32 %v5427, 1.442695
    %v5503 = vpow.pop %v5502
    %v5504 = vmul.f32 %v5428, 1.442695
    %v5505 = vpow.pop %v5504
    %v5506 = vmul.f32 %v5429, 1.442695
    %v5507 = vpow.pop %v5506
    %v5508 = vmul.f32 %v5430, 1.442695
    %v5509 = vpow.pop %v5508
    %v5510 = vmul.f32 %v5431, 1.442695
    %v5511 = vpow.pop %v5510
    %v5512 = vmul.f32 %v5432, 1.442695
    %v5513 = vpow.pop %v5512
    %v5514 = vmul.f32 %v5433, 1.442695
    %v5515 = vpow.pop %v5514
    %v5516 = vmul.f32 %v5434, 1.442695
    %v5517 = vpow.pop %v5516
    %v5518 = vmul.f32 %v5435, 1.442695
    %v5519 = vpow.pop %v5518
    %v5520 = vmul.f32 %v5436, 1.442695
    %v5521 = vpow.pop %v5520
    %v5522 = vmul.f32 %v5437, 1.442695
    %v5523 = vpow.pop %v5522
    %v5524 = vmul.f32 %v5438, 1.442695
    %v5525 = vpow.pop %v5524
    %v5526 = vmul.f32 %v5439, 1.442695
    %v5527 = vpow.pop %v5526
    %v5528 = vmul.f32 %v5440, 1.442695
    %v5529 = vpow.pop %v5528
    %v5530 = vmul.f32 %v5441, 1.442695
    %v5531 = vpow.pop %v5530
    %v5532 = vmul.f32 %v5442, 1.442695
    %v5533 = vpow.pop %v5532
    %v5534 = vmul.f32 %v5443, 1.442695
    %v5535 = vpow.pop %v5534
    %v5536 = vmul.f32 %v5444, 1.442695
    %v5537 = vpow.pop %v5536
    %v5538 = vmul.f32 %v5445, 1.442695
    %v5539 = vpow.pop %v5538
    %v5540 = vmul.f32 %v5446, 1.442695
    %v5541 = vpow.pop %v5540
    %v5542 = vmul.f32 %v5447, 1.442695
    %v5543 = vpow.pop %v5542
    %v5544 = vmul.f32 %v5448, 1.442695
    %v5545 = vpow.pop %v5544
    %v5546 = vmul.f32 %v5449, 1.442695
    %v5547 = vpow.pop %v5546
    %v5548 = vmul.f32 %v5450, 1.442695
    %v5549 = vpow.pop %v5548
    %v5550 = vmul.f32 %v5451, 1.442695
    %v5551 = vpow.pop %v5550
    %v5552 = vmul.f32 %v5452, 1.442695
    %v5553 = vpow.pop %v5552
    %v5554 = vmul.f32 %v5453, 1.442695
    %v5555 = vpow.pop %v5554
    %v5556 = vmul.f32 %v5454, 1.442695
    %v5557 = vpow.pop %v5556
    %v5558 = vmul.f32 %v5455, 1.442695
    %v5559 = vpow.pop %v5558
    %v5560 = vmul.f32 %v5456, 1.442695
    %v5561 = vpow.pop %v5560
    %v5562 = vmul.f32 %v5457, 1.442695
    %v5563 = vpow.pop %v5562
    %v5564 = vmul.f32 %v5458, 1.442695
    %v5565 = vpow.pop %v5564
    %v5566 = vmul.f32 %v5459, 1.442695
    %v5567 = vpow.pop %v5566
    %v5568 = vmul.f32 %v5460, 1.442695
    %v5569 = vpow.pop %v5568
    %v5570 = vmul.f32 %v5461, 1.442695
    %v5571 = vpow.pop %v5570
    %v5572 = vmul.f32 %v5462, 1.442695
    %v5573 = vpow.pop %v5572
    %v5574 = vmul.f32 %v5463, 1.442695
    %v5575 = vpow.pop %v5574
    %v5576 = vmul.f32 %v5464, 1.442695
    %v5577 = vpow.pop %v5576
    %v5578 = vmul.f32 %v5465, 1.442695
    %v5579 = vpow.pop %v5578
    %v5580 = vmul.f32 %v5466, 1.442695
    %v5581 = vpow.pop %v5580
    %v5582 = vmul.f32 %v5467, 1.442695
    %v5583 = vpow.pop %v5582
    %v5584 = vmul.f32 %v5468, 1.442695
    %v5585 = vpow.pop %v5584
    %v5586 = vmul.f32 %v5469, 1.442695
    %v5587 = vpow.pop %v5586
    %v5588 = vmul.f32 %v5470, 1.442695
    %v5589 = vpow.pop %v5588
    %v5590 = vmul.f32 %v5471, 1.442695
    %v5591 = vpow.pop %v5590
    %v5592 = vmul.f32 %v5472, 1.442695
    %v5593 = vpow.pop %v5592
    %v5594 = vmul.f32 %v5473, 1.442695
    %v5595 = vpow.pop %v5594
    %v5596 = vmul.f32 %v5474, 1.442695
    %v5597 = vpow.pop %v5596
    %v5598 = vmul.f32 %v5475, 1.442695
    %v5599 = vpow.pop %v5598
    %v5600 = vmul.f32 %v5476, 1.442695
    %v5601 = vpow.pop %v5600
    %v5602 = vmul.f32 %v5477, 1.442695
    %v5603 = vpow.pop %v5602
    %v5604 = vmul.f32 %v5478, 1.442695
    %v5605 = vpow.pop %v5604
    %v5606 = vmul.f32 %v5479, 1.442695
    %v5607 = vpow.pop %v5606
    %v5608 = vadd.f32 %v5481, 1.0
    %v5609 = vadd.f32 %v5483, 1.0
    %v5610 = vadd.f32 %v5485, 1.0
    %v5611 = vadd.f32 %v5487, 1.0
    %v5612 = vadd.f32 %v5489, 1.0
    %v5613 = vadd.f32 %v5491, 1.0
    %v5614 = vadd.f32 %v5493, 1.0
    %v5615 = vadd.f32 %v5495, 1.0
    %v5616 = vadd.f32 %v5497, 1.0
    %v5617 = vadd.f32 %v5499, 1.0
    %v5618 = vadd.f32 %v5501, 1.0
    %v5619 = vadd.f32 %v5503, 1.0
    %v5620 = vadd.f32 %v5505, 1.0
    %v5621 = vadd.f32 %v5507, 1.0
    %v5622 = vadd.f32 %v5509, 1.0
    %v5623 = vadd.f32 %v5511, 1.0
    %v5624 = vadd.f32 %v5513, 1.0
    %v5625 = vadd.f32 %v5515, 1.0
    %v5626 = vadd.f32 %v5517, 1.0
    %v5627 = vadd.f32 %v5519, 1.0
    %v5628 = vadd.f32 %v5521, 1.0
    %v5629 = vadd.f32 %v5523, 1.0
    %v5630 = vadd.f32 %v5525, 1.0
    %v5631 = vadd.f32 %v5527, 1.0
    %v5632 = vadd.f32 %v5529, 1.0
    %v5633 = vadd.f32 %v5531, 1.0
    %v5634 = vadd.f32 %v5533, 1.0
    %v5635 = vadd.f32 %v5535, 1.0
    %v5636 = vadd.f32 %v5537, 1.0
    %v5637 = vadd.f32 %v5539, 1.0
    %v5638 = vadd.f32 %v5541, 1.0
    %v5639 = vadd.f32 %v5543, 1.0
    %v5640 = vadd.f32 %v5545, 1.0
    %v5641 = vadd.f32 %v5547, 1.0
    %v5642 = vadd.f32 %v5549, 1.0
    %v5643 = vadd.f32 %v5551, 1.0
    %v5644 = vadd.f32 %v5553, 1.0
    %v5645 = vadd.f32 %v5555, 1.0
    %v5646 = vadd.f32 %v5557, 1.0
    %v5647 = vadd.f32 %v5559, 1.0
    %v5648 = vadd.f32 %v5561, 1.0
    %v5649 = vadd.f32 %v5563, 1.0
    %v5650 = vadd.f32 %v5565, 1.0
    %v5651 = vadd.f32 %v5567, 1.0
    %v5652 = vadd.f32 %v5569, 1.0
    %v5653 = vadd.f32 %v5571, 1.0
    %v5654 = vadd.f32 %v5573, 1.0
    %v5655 = vadd.f32 %v5575, 1.0
    %v5656 = vadd.f32 %v5577, 1.0
    %v5657 = vadd.f32 %v5579, 1.0
    %v5658 = vadd.f32 %v5581, 1.0
    %v5659 = vadd.f32 %v5583, 1.0
    %v5660 = vadd.f32 %v5585, 1.0
    %v5661 = vadd.f32 %v5587, 1.0
    %v5662 = vadd.f32 %v5589, 1.0
    %v5663 = vadd.f32 %v5591, 1.0
    %v5664 = vadd.f32 %v5593, 1.0
    %v5665 = vadd.f32 %v5595, 1.0
    %v5666 = vadd.f32 %v5597, 1.0
    %v5667 = vadd.f32 %v5599, 1.0
    %v5668 = vadd.f32 %v5601, 1.0
    %v5669 = vadd.f32 %v5603, 1.0
    %v5670 = vadd.f32 %v5605, 1.0
    %v5671 = vadd.f32 %v5607, 1.0
    %v5672 = vrcp.pop %v5608
    %v5673 = vmul.f32 1.0, %v5672
    %v5674 = vrcp.pop %v5609
    %v5675 = vmul.f32 1.0, %v5674
    %v5676 = vrcp.pop %v5610
    %v5677 = vmul.f32 1.0, %v5676
    %v5678 = vrcp.pop %v5611
    %v5679 = vmul.f32 1.0, %v5678
    %v5680 = vrcp.pop %v5612
    %v5681 = vmul.f32 1.0, %v5680
    %v5682 = vrcp.pop %v5613
    %v5683 = vmul.f32 1.0, %v5682
    %v5684 = vrcp.pop %v5614
    %v5685 = vmul.f32 1.0, %v5684
    %v5686 = vrcp.pop %v5615
    %v5687 = vmul.f32 1.0, %v5686
    %v5688 = vrcp.pop %v5616
    %v5689 = vmul.f32 1.0, %v5688
    %v5690 = vrcp.pop %v5617
    %v5691 = vmul.f32 1.0, %v5690
    %v5692 = vrcp.pop %v5618
    %v5693 = vmul.f32 1.0, %v5692
    %v5694 = vrcp.pop %v5619
    %v5695 = vmul.f32 1.0, %v5694
    %v5696 = vrcp.pop %v5620
    %v5697 = vmul.f32 1.0, %v5696
    %v5698 = vrcp.pop %v5621
    %v5699 = vmul.f32 1.0, %v5698
    %v5700 = vrcp.pop %v5622
    %v5701 = vmul.f32 1.0, %v5700
    %v5702 = vrcp.pop %v5623
    %v5703 = vmul.f32 1.0, %v5702
    %v5704 = vrcp.pop %v5624
    %v5705 = vmul.f32 1.0, %v5704
    %v5706 = vrcp.pop %v5625
    %v5707 = vmul.f32 1.0, %v5706
    %v5708 = vrcp.pop %v5626
    %v5709 = vmul.f32 1.0, %v5708
    %v5710 = vrcp.pop %v5627
    %v5711 = vmul.f32 1.0, %v5710
    %v5712 = vrcp.pop %v5628
    %v5713 = vmul.f32 1.0, %v5712
    %v5714 = vrcp.pop %v5629
    %v5715 = vmul.f32 1.0, %v5714
    %v5716 = vrcp.pop %v5630
    %v5717 = vmul.f32 1.0, %v5716
    %v5718 = vrcp.pop %v5631
    %v5719 = vmul.f32 1.0, %v5718
    %v5720 = vrcp.pop %v5632
    %v5721 = vmul.f32 1.0, %v5720
    %v5722 = vrcp.pop %v5633
    %v5723 = vmul.f32 1.0, %v5722
    %v5724 = vrcp.pop %v5634
    %v5725 = vmul.f32 1.0, %v5724
    %v5726 = vrcp.pop %v5635
    %v5727 = vmul.f32 1.0, %v5726
    %v5728 = vrcp.pop %v5636
    %v5729 = vmul.f32 1.0, %v5728
    %v5730 = vrcp.pop %v5637
    %v5731 = vmul.f32 1.0, %v5730
    %v5732 = vrcp.pop %v5638
    %v5733 = vmul.f32 1.0, %v5732
    %v5734 = vrcp.pop %v5639
    %v5735 = vmul.f32 1.0, %v5734
    %v5736 = vrcp.pop %v5640
    %v5737 = vmul.f32 1.0, %v5736
    %v5738 = vrcp.pop %v5641
    %v5739 = vmul.f32 1.0, %v5738
    %v5740 = vrcp.pop %v5642
    %v5741 = vmul.f32 1.0, %v5740
    %v5742 = vrcp.pop %v5643
    %v5743 = vmul.f32 1.0, %v5742
    %v5744 = vrcp.pop %v5644
    %v5745 = vmul.f32 1.0, %v5744
    %v5746 = vrcp.pop %v5645
    %v5747 = vmul.f32 1.0, %v5746
    %v5748 = vrcp.pop %v5646
    %v5749 = vmul.f32 1.0, %v5748
    %v5750 = vrcp.pop %v5647
    %v5751 = vmul.f32 1.0, %v5750
    %v5752 = vrcp.pop %v5648
    %v5753 = vmul.f32 1.0, %v5752
    %v5754 = vrcp.pop %v5649
    %v5755 = vmul.f32 1.0, %v5754
    %v5756 = vrcp.pop %v5650
    %v5757 = vmul.f32 1.0, %v5756
    %v5758 = vrcp.pop %v5651
    %v5759 = vmul.f32 1.0, %v5758
    %v5760 = vrcp.pop %v5652
    %v5761 = vmul.f32 1.0, %v5760
    %v5762 = vrcp.pop %v5653
    %v5763 = vmul.f32 1.0, %v5762
    %v5764 = vrcp.pop %v5654
    %v5765 = vmul.f32 1.0, %v5764
    %v5766 = vrcp.pop %v5655
    %v5767 = vmul.f32 1.0, %v5766
    %v5768 = vrcp.pop %v5656
    %v5769 = vmul.f32 1.0, %v5768
    %v5770 = vrcp.pop %v5657
    %v5771 = vmul.f32 1.0, %v5770
    %v5772 = vrcp.pop %v5658
    %v5773 = vmul.f32 1.0, %v5772
    %v5774 = vrcp.pop %v5659
    %v5775 = vmul.f32 1.0, %v5774
    %v5776 = vrcp.pop %v5660
    %v5777 = vmul.f32 1.0, %v5776
    %v5778 = vrcp.pop %v5661
    %v5779 = vmul.f32 1.0, %v5778
    %v5780 = vrcp.pop %v5662
    %v5781 = vmul.f32 1.0, %v5780
    %v5782 = vrcp.pop %v5663
    %v5783 = vmul.f32 1.0, %v5782
    %v5784 = vrcp.pop %v5664
    %v5785 = vmul.f32 1.0, %v5784
    %v5786 = vrcp.pop %v5665
    %v5787 = vmul.f32 1.0, %v5786
    %v5788 = vrcp.pop %v5666
    %v5789 = vmul.f32 1.0, %v5788
    %v5790 = vrcp.pop %v5667
    %v5791 = vmul.f32 1.0, %v5790
    %v5792 = vrcp.pop %v5668
    %v5793 = vmul.f32 1.0, %v5792
    %v5794 = vrcp.pop %v5669
    %v5795 = vmul.f32 1.0, %v5794
    %v5796 = vrcp.pop %v5670
    %v5797 = vmul.f32 1.0, %v5796
    %v5798 = vrcp.pop %v5671
    %v5799 = vmul.f32 1.0, %v5798
    %v5800 = vld [vmem:[%s704 + $0x1] sm:$0xff]
    %v5801 = vld [vmem:[%s704 + $0x9] sm:$0xff]
    %v5802 = vld [vmem:[%s704 + $0x19] sm:$0xff]
    %v5803 = vld [vmem:[%s704 + $0x21] sm:$0xff]
    %v5804 = vld [vmem:[%s704 + $0x31] sm:$0xff]
    %v5805 = vld [vmem:[%s704 + $0x39] sm:$0xff]
    %v5806 = vld [vmem:[%s704 + $0x49] sm:$0xff]
    %v5807 = vld [vmem:[%s704 + $0x51] sm:$0xff]
    %v5808 = vld [vmem:[%s704 + $0x61] sm:$0xff]
    %v5809 = vld [vmem:[%s704 + $0x69] sm:$0xff]
    %v5810 = vld [vmem:[%s704 + $0x79] sm:$0xff]
    %v5811 = vld [vmem:[%s704 + $0x81] sm:$0xff]
    %v5812 = vld [vmem:[%s704 + $0x91] sm:$0xff]
    %v5813 = vld [vmem:[%s704 + $0x99] sm:$0xff]
    %v5814 = vld [vmem:[%s704 + $0xa9] sm:$0xff]
    %v5815 = vld [vmem:[%s704 + $0xb1] sm:$0xff]
    %v5816 = vld [vmem:[%s704 + $0xc1] sm:$0xff]
    %v5817 = vld [vmem:[%s704 + $0xc9] sm:$0xff]
    %v5818 = vld [vmem:[%s704 + $0xd9] sm:$0xff]
    %v5819 = vld [vmem:[%s704 + $0xe1] sm:$0xff]
    %v5820 = vld [vmem:[%s704 + $0xf1] sm:$0xff]
    %v5821 = vld [vmem:[%s704 + $0xf9] sm:$0xff]
    %v5822 = vld [vmem:[%s704 + $0x109] sm:$0xff]
    %v5823 = vld [vmem:[%s704 + $0x111] sm:$0xff]
    %v5824 = vld [vmem:[%s704 + $0x121] sm:$0xff]
    %v5825 = vld [vmem:[%s704 + $0x129] sm:$0xff]
    %v5826 = vld [vmem:[%s704 + $0x139] sm:$0xff]
    %v5827 = vld [vmem:[%s704 + $0x141] sm:$0xff]
    %v5828 = vld [vmem:[%s704 + $0x151] sm:$0xff]
    %v5829 = vld [vmem:[%s704 + $0x159] sm:$0xff]
    %v5830 = vld [vmem:[%s704 + $0x169] sm:$0xff]
    %v5831 = vld [vmem:[%s704 + $0x171] sm:$0xff]
    %v5832 = vld [vmem:[%s2892 + $0x1] sm:$0xff]
    %v5833 = vld [vmem:[%s2892 + $0x9] sm:$0xff]
    %v5834 = vld [vmem:[%s2892 + $0x19] sm:$0xff]
    %v5835 = vld [vmem:[%s2892 + $0x21] sm:$0xff]
    %v5836 = vld [vmem:[%s2892 + $0x31] sm:$0xff]
    %v5837 = vld [vmem:[%s2892 + $0x39] sm:$0xff]
    %v5838 = vld [vmem:[%s2892 + $0x49] sm:$0xff]
    %v5839 = vld [vmem:[%s2892 + $0x51] sm:$0xff]
    %v5840 = vld [vmem:[%s2892 + $0x61] sm:$0xff]
    %v5841 = vld [vmem:[%s2892 + $0x69] sm:$0xff]
    %v5842 = vld [vmem:[%s2892 + $0x79] sm:$0xff]
    %v5843 = vld [vmem:[%s2892 + $0x81] sm:$0xff]
    %v5844 = vld [vmem:[%s2892 + $0x91] sm:$0xff]
    %v5845 = vld [vmem:[%s2892 + $0x99] sm:$0xff]
    %v5846 = vld [vmem:[%s2892 + $0xa9] sm:$0xff]
    %v5847 = vld [vmem:[%s2892 + $0xb1] sm:$0xff]
    %v5848 = vld [vmem:[%s2892 + $0xc1] sm:$0xff]
    %v5849 = vld [vmem:[%s2892 + $0xc9] sm:$0xff]
    %v5850 = vld [vmem:[%s2892 + $0xd9] sm:$0xff]
    %v5851 = vld [vmem:[%s2892 + $0xe1] sm:$0xff]
    %v5852 = vld [vmem:[%s2892 + $0xf1] sm:$0xff]
    %v5853 = vld [vmem:[%s2892 + $0xf9] sm:$0xff]
    %v5854 = vld [vmem:[%s2892 + $0x109] sm:$0xff]
    %v5855 = vld [vmem:[%s2892 + $0x111] sm:$0xff]
    %v5856 = vld [vmem:[%s2892 + $0x121] sm:$0xff]
    %v5857 = vld [vmem:[%s2892 + $0x129] sm:$0xff]
    %v5858 = vld [vmem:[%s2892 + $0x139] sm:$0xff]
    %v5859 = vld [vmem:[%s2892 + $0x141] sm:$0xff]
    %v5860 = vld [vmem:[%s2892 + $0x151] sm:$0xff]
    %v5861 = vld [vmem:[%s2892 + $0x159] sm:$0xff]
    %v5862 = vld [vmem:[%s2892 + $0x169] sm:$0xff]
    %v5863 = vld [vmem:[%s2892 + $0x171] sm:$0xff]
    %5928 = vrot.lane.b32.xlu0 %v5800, 4
    %v5929 = vpop.permute.xlu0 %5928
    %5930 = vrot.lane.b32.xlu0 %v5801, 4
    %v5931 = vpop.permute.xlu0 %5930
    %5932 = vrot.lane.b32.xlu0 %v5802, 4
    %v5933 = vpop.permute.xlu0 %5932
    %5934 = vrot.lane.b32.xlu0 %v5803, 4
    %v5935 = vpop.permute.xlu0 %5934
    %5936 = vrot.lane.b32.xlu0 %v5804, 4
    %v5937 = vpop.permute.xlu0 %5936
    %5938 = vrot.lane.b32.xlu0 %v5805, 4
    %v5939 = vpop.permute.xlu0 %5938
    %5940 = vrot.lane.b32.xlu0 %v5806, 4
    %v5941 = vpop.permute.xlu0 %5940
    %5942 = vrot.lane.b32.xlu0 %v5807, 4
    %v5943 = vpop.permute.xlu0 %5942
    %5944 = vrot.lane.b32.xlu0 %v5808, 4
    %v5945 = vpop.permute.xlu0 %5944
    %5946 = vrot.lane.b32.xlu0 %v5809, 4
    %v5947 = vpop.permute.xlu0 %5946
    %5948 = vrot.lane.b32.xlu0 %v5810, 4
    %v5949 = vpop.permute.xlu0 %5948
    %5950 = vrot.lane.b32.xlu0 %v5811, 4
    %v5951 = vpop.permute.xlu0 %5950
    %5952 = vrot.lane.b32.xlu0 %v5812, 4
    %v5953 = vpop.permute.xlu0 %5952
    %5954 = vrot.lane.b32.xlu0 %v5813, 4
    %v5955 = vpop.permute.xlu0 %5954
    %5956 = vrot.lane.b32.xlu0 %v5814, 4
    %v5957 = vpop.permute.xlu0 %5956
    %5958 = vrot.lane.b32.xlu0 %v5815, 4
    %v5959 = vpop.permute.xlu0 %5958
    %5960 = vrot.lane.b32.xlu0 %v5816, 4
    %v5961 = vpop.permute.xlu0 %5960
    %5962 = vrot.lane.b32.xlu0 %v5817, 4
    %v5963 = vpop.permute.xlu0 %5962
    %5964 = vrot.lane.b32.xlu0 %v5818, 4
    %v5965 = vpop.permute.xlu0 %5964
    %5966 = vrot.lane.b32.xlu0 %v5819, 4
    %v5967 = vpop.permute.xlu0 %5966
    %5968 = vrot.lane.b32.xlu0 %v5820, 4
    %v5969 = vpop.permute.xlu0 %5968
    %5970 = vrot.lane.b32.xlu0 %v5821, 4
    %v5971 = vpop.permute.xlu0 %5970
    %5972 = vrot.lane.b32.xlu0 %v5822, 4
    %v5973 = vpop.permute.xlu0 %5972
    %5974 = vrot.lane.b32.xlu0 %v5823, 4
    %v5975 = vpop.permute.xlu0 %5974
    %5976 = vrot.lane.b32.xlu0 %v5824, 4
    %v5977 = vpop.permute.xlu0 %5976
    %5978 = vrot.lane.b32.xlu0 %v5825, 4
    %v5979 = vpop.permute.xlu0 %5978
    %5980 = vrot.lane.b32.xlu0 %v5826, 4
    %v5981 = vpop.permute.xlu0 %5980
    %5982 = vrot.lane.b32.xlu0 %v5827, 4
    %v5983 = vpop.permute.xlu0 %5982
    %5984 = vrot.lane.b32.xlu0 %v5828, 4
    %v5985 = vpop.permute.xlu0 %5984
    %5986 = vrot.lane.b32.xlu0 %v5829, 4
    %v5987 = vpop.permute.xlu0 %5986
    %5988 = vrot.lane.b32.xlu0 %v5830, 4
    %v5989 = vpop.permute.xlu0 %5988
    %5990 = vrot.lane.b32.xlu0 %v5831, 4
    %v5991 = vpop.permute.xlu0 %5990
    %5992 = vrot.lane.b32.xlu0 %v5832, 4
    %v5993 = vpop.permute.xlu0 %5992
    %5994 = vrot.lane.b32.xlu0 %v5833, 4
    %v5995 = vpop.permute.xlu0 %5994
    %5996 = vrot.lane.b32.xlu0 %v5834, 4
    %v5997 = vpop.permute.xlu0 %5996
    %5998 = vrot.lane.b32.xlu0 %v5835, 4
    %v5999 = vpop.permute.xlu0 %5998
    %6000 = vrot.lane.b32.xlu0 %v5836, 4
    %v6001 = vpop.permute.xlu0 %6000
    %6002 = vrot.lane.b32.xlu0 %v5837, 4
    %v6003 = vpop.permute.xlu0 %6002
    %6004 = vrot.lane.b32.xlu0 %v5838, 4
    %v6005 = vpop.permute.xlu0 %6004
    %6006 = vrot.lane.b32.xlu0 %v5839, 4
    %v6007 = vpop.permute.xlu0 %6006
    %6008 = vrot.lane.b32.xlu0 %v5840, 4
    %v6009 = vpop.permute.xlu0 %6008
    %6010 = vrot.lane.b32.xlu0 %v5841, 4
    %v6011 = vpop.permute.xlu0 %6010
    %6012 = vrot.lane.b32.xlu0 %v5842, 4
    %v6013 = vpop.permute.xlu0 %6012
    %6014 = vrot.lane.b32.xlu0 %v5843, 4
    %v6015 = vpop.permute.xlu0 %6014
    %6016 = vrot.lane.b32.xlu0 %v5844, 4
    %v6017 = vpop.permute.xlu0 %6016
    %6018 = vrot.lane.b32.xlu0 %v5845, 4
    %v6019 = vpop.permute.xlu0 %6018
    %6020 = vrot.lane.b32.xlu0 %v5846, 4
    %v6021 = vpop.permute.xlu0 %6020
    %6022 = vrot.lane.b32.xlu0 %v5847, 4
    %v6023 = vpop.permute.xlu0 %6022
    %6024 = vrot.lane.b32.xlu0 %v5848, 4
    %v6025 = vpop.permute.xlu0 %6024
    %6026 = vrot.lane.b32.xlu0 %v5849, 4
    %v6027 = vpop.permute.xlu0 %6026
    %6028 = vrot.lane.b32.xlu0 %v5850, 4
    %v6029 = vpop.permute.xlu0 %6028
    %6030 = vrot.lane.b32.xlu0 %v5851, 4
    %v6031 = vpop.permute.xlu0 %6030
    %6032 = vrot.lane.b32.xlu0 %v5852, 4
    %v6033 = vpop.permute.xlu0 %6032
    %6034 = vrot.lane.b32.xlu0 %v5853, 4
    %v6035 = vpop.permute.xlu0 %6034
    %6036 = vrot.lane.b32.xlu0 %v5854, 4
    %v6037 = vpop.permute.xlu0 %6036
    %6038 = vrot.lane.b32.xlu0 %v5855, 4
    %v6039 = vpop.permute.xlu0 %6038
    %6040 = vrot.lane.b32.xlu0 %v5856, 4
    %v6041 = vpop.permute.xlu0 %6040
    %6042 = vrot.lane.b32.xlu0 %v5857, 4
    %v6043 = vpop.permute.xlu0 %6042
    %6044 = vrot.lane.b32.xlu0 %v5858, 4
    %v6045 = vpop.permute.xlu0 %6044
    %6046 = vrot.lane.b32.xlu0 %v5859, 4
    %v6047 = vpop.permute.xlu0 %6046
    %6048 = vrot.lane.b32.xlu0 %v5860, 4
    %v6049 = vpop.permute.xlu0 %6048
    %6050 = vrot.lane.b32.xlu0 %v5861, 4
    %v6051 = vpop.permute.xlu0 %6050
    %6052 = vrot.lane.b32.xlu0 %v5862, 4
    %v6053 = vpop.permute.xlu0 %6052
    %6054 = vrot.lane.b32.xlu0 %v5863, 4
    %v6055 = vpop.permute.xlu0 %6054
    %v6120 = vmul.f32 %v5673, %v5929
    %v6121 = vmul.f32 %v5675, %v5931
    %v6122 = vmul.f32 %v5677, %v5933
    %v6123 = vmul.f32 %v5679, %v5935
    %v6124 = vmul.f32 %v5681, %v5937
    %v6125 = vmul.f32 %v5683, %v5939
    %v6126 = vmul.f32 %v5685, %v5941
    %v6127 = vmul.f32 %v5687, %v5943
    %v6128 = vmul.f32 %v5689, %v5945
    %v6129 = vmul.f32 %v5691, %v5947
    %v6130 = vmul.f32 %v5693, %v5949
    %v6131 = vmul.f32 %v5695, %v5951
    %v6132 = vmul.f32 %v5697, %v5953
    %v6133 = vmul.f32 %v5699, %v5955
    %v6134 = vmul.f32 %v5701, %v5957
    %v6135 = vmul.f32 %v5703, %v5959
    %v6136 = vmul.f32 %v5705, %v5961
    %v6137 = vmul.f32 %v5707, %v5963
    %v6138 = vmul.f32 %v5709, %v5965
    %v6139 = vmul.f32 %v5711, %v5967
    %v6140 = vmul.f32 %v5713, %v5969
    %v6141 = vmul.f32 %v5715, %v5971
    %v6142 = vmul.f32 %v5717, %v5973
    %v6143 = vmul.f32 %v5719, %v5975
    %v6144 = vmul.f32 %v5721, %v5977
    %v6145 = vmul.f32 %v5723, %v5979
    %v6146 = vmul.f32 %v5725, %v5981
    %v6147 = vmul.f32 %v5727, %v5983
    %v6148 = vmul.f32 %v5729, %v5985
    %v6149 = vmul.f32 %v5731, %v5987
    %v6150 = vmul.f32 %v5733, %v5989
    %v6151 = vmul.f32 %v5735, %v5991
    %v6152 = vmul.f32 %v5737, %v5993
    %v6153 = vmul.f32 %v5739, %v5995
    %v6154 = vmul.f32 %v5741, %v5997
    %v6155 = vmul.f32 %v5743, %v5999
    %v6156 = vmul.f32 %v5745, %v6001
    %v6157 = vmul.f32 %v5747, %v6003
    %v6158 = vmul.f32 %v5749, %v6005
    %v6159 = vmul.f32 %v5751, %v6007
    %v6160 = vmul.f32 %v5753, %v6009
    %v6161 = vmul.f32 %v5755, %v6011
    %v6162 = vmul.f32 %v5757, %v6013
    %v6163 = vmul.f32 %v5759, %v6015
    %v6164 = vmul.f32 %v5761, %v6017
    %v6165 = vmul.f32 %v5763, %v6019
    %v6166 = vmul.f32 %v5765, %v6021
    %v6167 = vmul.f32 %v5767, %v6023
    %v6168 = vmul.f32 %v5769, %v6025
    %v6169 = vmul.f32 %v5771, %v6027
    %v6170 = vmul.f32 %v5773, %v6029
    %v6171 = vmul.f32 %v5775, %v6031
    %v6172 = vmul.f32 %v5777, %v6033
    %v6173 = vmul.f32 %v5779, %v6035
    %v6174 = vmul.f32 %v5781, %v6037
    %v6175 = vmul.f32 %v5783, %v6039
    %v6176 = vmul.f32 %v5785, %v6041
    %v6177 = vmul.f32 %v5787, %v6043
    %v6178 = vmul.f32 %v5789, %v6045
    %v6179 = vmul.f32 %v5791, %v6047
    %v6180 = vmul.f32 %v5793, %v6049
    %v6181 = vmul.f32 %v5795, %v6051
    %v6182 = vmul.f32 %v5797, %v6053
    %v6183 = vmul.f32 %v5799, %v6055
    %6184 = vst.msk [vmem:[#allocation4] sm:$0xff] %vm108, 0.0
    %6185 = vst.msk [vmem:[#allocation4 + $0x8] sm:$0xff] %vm108, 0.0
    %vm6186 = vcmask 25600
    %6187 = vst.msk [vmem:[#allocation4 + $0x10] sm:$0x3] %vm6186, 0.0
    %s6188 = scalar_lea.vmem [#allocation4], 408
    %6189 = vst.msk [vmem:[%s6188] sm:$0xff] %vm108, 0.0
    %6190 = vst.msk [vmem:[%s6188 + $0x8] sm:$0xff] %vm108, 0.0
    %6191 = vst.msk [vmem:[%s6188 + $0x10] sm:$0x3] %vm6186, 0.0
    %vm6192 = vcmask 24576
    %6193 = vst.msk [vmem:[#allocation4] sm:$0x1] %vm6192, 0.0
    %6194 = vst.msk [vmem:[#allocation4 + $0x18] sm:$0x1] %vm6192, 0.0
    %6195 = vst.msk [vmem:[#allocation4 + $0x30] sm:$0x1] %vm6192, 0.0
    %6196 = vst.msk [vmem:[#allocation4 + $0x48] sm:$0x1] %vm6192, 0.0
    %6197 = vst.msk [vmem:[#allocation4 + $0x60] sm:$0x1] %vm6192, 0.0
    %6198 = vst.msk [vmem:[#allocation4 + $0x78] sm:$0x1] %vm6192, 0.0
    %6199 = vst.msk [vmem:[#allocation4 + $0x90] sm:$0x1] %vm6192, 0.0
    %6200 = vst.msk [vmem:[#allocation4 + $0xa8] sm:$0x1] %vm6192, 0.0
    %6201 = vst.msk [vmem:[#allocation4 + $0xc0] sm:$0x1] %vm6192, 0.0
    %6202 = vst.msk [vmem:[#allocation4 + $0xd8] sm:$0x1] %vm6192, 0.0
    %6203 = vst.msk [vmem:[#allocation4 + $0xf0] sm:$0x1] %vm6192, 0.0
    %6204 = vst.msk [vmem:[#allocation4 + $0x108] sm:$0x1] %vm6192, 0.0
    %6205 = vst.msk [vmem:[#allocation4 + $0x120] sm:$0x1] %vm6192, 0.0
    %6206 = vst.msk [vmem:[#allocation4 + $0x138] sm:$0x1] %vm6192, 0.0
    %6207 = vst.msk [vmem:[#allocation4 + $0x150] sm:$0x1] %vm6192, 0.0
    %6208 = vst.msk [vmem:[#allocation4 + $0x168] sm:$0x1] %vm6192, 0.0
    %6209 = vst.msk [vmem:[#allocation4 + $0x180] sm:$0x1] %vm6192, 0.0
    %6210 = vst.msk [vmem:[#allocation4 + $0x198] sm:$0x1] %vm6192, 0.0
    %6211 = vst.msk [vmem:[#allocation4 + $0x11] sm:$0x1] %vm6192, 0.0
    %6212 = vst.msk [vmem:[#allocation4 + $0x29] sm:$0x1] %vm6192, 0.0
    %6213 = vst.msk [vmem:[#allocation4 + $0x41] sm:$0x1] %vm6192, 0.0
    %6214 = vst.msk [vmem:[#allocation4 + $0x59] sm:$0x1] %vm6192, 0.0
    %6215 = vst.msk [vmem:[#allocation4 + $0x71] sm:$0x1] %vm6192, 0.0
    %6216 = vst.msk [vmem:[#allocation4 + $0x89] sm:$0x1] %vm6192, 0.0
    %6217 = vst.msk [vmem:[#allocation4 + $0xa1] sm:$0x1] %vm6192, 0.0
    %6218 = vst.msk [vmem:[#allocation4 + $0xb9] sm:$0x1] %vm6192, 0.0
    %6219 = vst.msk [vmem:[#allocation4 + $0xd1] sm:$0x1] %vm6192, 0.0
    %6220 = vst.msk [vmem:[#allocation4 + $0xe9] sm:$0x1] %vm6192, 0.0
    %6221 = vst.msk [vmem:[#allocation4 + $0x101] sm:$0x1] %vm6192, 0.0
    %6222 = vst.msk [vmem:[#allocation4 + $0x119] sm:$0x1] %vm6192, 0.0
    %6223 = vst.msk [vmem:[#allocation4 + $0x131] sm:$0x1] %vm6192, 0.0
    %6224 = vst.msk [vmem:[#allocation4 + $0x149] sm:$0x1] %vm6192, 0.0
    %6225 = vst.msk [vmem:[#allocation4 + $0x161] sm:$0x1] %vm6192, 0.0
    %6226 = vst.msk [vmem:[#allocation4 + $0x179] sm:$0x1] %vm6192, 0.0
    %6227 = vst.msk [vmem:[#allocation4 + $0x191] sm:$0x1] %vm6192, 0.0
    %6228 = vst.msk [vmem:[#allocation4 + $0x1a9] sm:$0x1] %vm6192, 0.0
    %6261 = vrot.lane.b32.xlu0 %v6120, 124
    %v6262 = vpop.permute.xlu0 %6261
    %6263 = vrot.lane.b32.xlu0 %v6121, 124
    %v6264 = vpop.permute.xlu0 %6263
    %6265 = vrot.lane.b32.xlu0 %v6122, 124
    %v6266 = vpop.permute.xlu0 %6265
    %6267 = vrot.lane.b32.xlu0 %v6123, 124
    %v6268 = vpop.permute.xlu0 %6267
    %6269 = vrot.lane.b32.xlu0 %v6124, 124
    %v6270 = vpop.permute.xlu0 %6269
    %6271 = vrot.lane.b32.xlu0 %v6125, 124
    %v6272 = vpop.permute.xlu0 %6271
    %6273 = vrot.lane.b32.xlu0 %v6126, 124
    %v6274 = vpop.permute.xlu0 %6273
    %6275 = vrot.lane.b32.xlu0 %v6127, 124
    %v6276 = vpop.permute.xlu0 %6275
    %6277 = vrot.lane.b32.xlu0 %v6128, 124
    %v6278 = vpop.permute.xlu0 %6277
    %6279 = vrot.lane.b32.xlu0 %v6129, 124
    %v6280 = vpop.permute.xlu0 %6279
    %6281 = vrot.lane.b32.xlu0 %v6130, 124
    %v6282 = vpop.permute.xlu0 %6281
    %6283 = vrot.lane.b32.xlu0 %v6131, 124
    %v6284 = vpop.permute.xlu0 %6283
    %6285 = vrot.lane.b32.xlu0 %v6132, 124
    %v6286 = vpop.permute.xlu0 %6285
    %6287 = vrot.lane.b32.xlu0 %v6133, 124
    %v6288 = vpop.permute.xlu0 %6287
    %6289 = vrot.lane.b32.xlu0 %v6134, 124
    %v6290 = vpop.permute.xlu0 %6289
    %6291 = vrot.lane.b32.xlu0 %v6135, 124
    %v6292 = vpop.permute.xlu0 %6291
    %6293 = vrot.lane.b32.xlu0 %v6136, 124
    %v6294 = vpop.permute.xlu0 %6293
    %6295 = vrot.lane.b32.xlu0 %v6137, 124
    %v6296 = vpop.permute.xlu0 %6295
    %6297 = vrot.lane.b32.xlu0 %v6138, 124
    %v6298 = vpop.permute.xlu0 %6297
    %6299 = vrot.lane.b32.xlu0 %v6139, 124
    %v6300 = vpop.permute.xlu0 %6299
    %6301 = vrot.lane.b32.xlu0 %v6140, 124
    %v6302 = vpop.permute.xlu0 %6301
    %6303 = vrot.lane.b32.xlu0 %v6141, 124
    %v6304 = vpop.permute.xlu0 %6303
    %6305 = vrot.lane.b32.xlu0 %v6142, 124
    %v6306 = vpop.permute.xlu0 %6305
    %6307 = vrot.lane.b32.xlu0 %v6143, 124
    %v6308 = vpop.permute.xlu0 %6307
    %6309 = vrot.lane.b32.xlu0 %v6144, 124
    %v6310 = vpop.permute.xlu0 %6309
    %6311 = vrot.lane.b32.xlu0 %v6145, 124
    %v6312 = vpop.permute.xlu0 %6311
    %6313 = vrot.lane.b32.xlu0 %v6146, 124
    %v6314 = vpop.permute.xlu0 %6313
    %6315 = vrot.lane.b32.xlu0 %v6147, 124
    %v6316 = vpop.permute.xlu0 %6315
    %6317 = vrot.lane.b32.xlu0 %v6148, 124
    %v6318 = vpop.permute.xlu0 %6317
    %6319 = vrot.lane.b32.xlu0 %v6149, 124
    %v6320 = vpop.permute.xlu0 %6319
    %6321 = vrot.lane.b32.xlu0 %v6150, 124
    %v6322 = vpop.permute.xlu0 %6321
    %6323 = vrot.lane.b32.xlu0 %v6151, 124
    %v6324 = vpop.permute.xlu0 %6323
    %s6357 = scalar_lea.vmem [#allocation4], 24
    %6358 = vst.msk [vmem:[%s6357 + $0x1] sm:$0xff] %vm108, %v6262
    %6359 = vst.msk [vmem:[%s6357 + $0x9] sm:$0xff] %vm108, %v6264
    %6360 = vst.msk [vmem:[%s6357 + $0x19] sm:$0xff] %vm108, %v6266
    %6361 = vst.msk [vmem:[%s6357 + $0x21] sm:$0xff] %vm108, %v6268
    %6362 = vst.msk [vmem:[%s6357 + $0x31] sm:$0xff] %vm108, %v6270
    %6363 = vst.msk [vmem:[%s6357 + $0x39] sm:$0xff] %vm108, %v6272
    %6364 = vst.msk [vmem:[%s6357 + $0x49] sm:$0xff] %vm108, %v6274
    %6365 = vst.msk [vmem:[%s6357 + $0x51] sm:$0xff] %vm108, %v6276
    %6366 = vst.msk [vmem:[%s6357 + $0x61] sm:$0xff] %vm108, %v6278
    %6367 = vst.msk [vmem:[%s6357 + $0x69] sm:$0xff] %vm108, %v6280
    %6368 = vst.msk [vmem:[%s6357 + $0x79] sm:$0xff] %vm108, %v6282
    %6369 = vst.msk [vmem:[%s6357 + $0x81] sm:$0xff] %vm108, %v6284
    %6370 = vst.msk [vmem:[%s6357 + $0x91] sm:$0xff] %vm108, %v6286
    %6371 = vst.msk [vmem:[%s6357 + $0x99] sm:$0xff] %vm108, %v6288
    %6372 = vst.msk [vmem:[%s6357 + $0xa9] sm:$0xff] %vm108, %v6290
    %6373 = vst.msk [vmem:[%s6357 + $0xb1] sm:$0xff] %vm108, %v6292
    %6374 = vst.msk [vmem:[%s6357 + $0xc1] sm:$0xff] %vm108, %v6294
    %6375 = vst.msk [vmem:[%s6357 + $0xc9] sm:$0xff] %vm108, %v6296
    %6376 = vst.msk [vmem:[%s6357 + $0xd9] sm:$0xff] %vm108, %v6298
    %6377 = vst.msk [vmem:[%s6357 + $0xe1] sm:$0xff] %vm108, %v6300
    %6378 = vst.msk [vmem:[%s6357 + $0xf1] sm:$0xff] %vm108, %v6302
    %6379 = vst.msk [vmem:[%s6357 + $0xf9] sm:$0xff] %vm108, %v6304
    %6380 = vst.msk [vmem:[%s6357 + $0x109] sm:$0xff] %vm108, %v6306
    %6381 = vst.msk [vmem:[%s6357 + $0x111] sm:$0xff] %vm108, %v6308
    %6382 = vst.msk [vmem:[%s6357 + $0x121] sm:$0xff] %vm108, %v6310
    %6383 = vst.msk [vmem:[%s6357 + $0x129] sm:$0xff] %vm108, %v6312
    %6384 = vst.msk [vmem:[%s6357 + $0x139] sm:$0xff] %vm108, %v6314
    %6385 = vst.msk [vmem:[%s6357 + $0x141] sm:$0xff] %vm108, %v6316
    %6386 = vst.msk [vmem:[%s6357 + $0x151] sm:$0xff] %vm108, %v6318
    %6387 = vst.msk [vmem:[%s6357 + $0x159] sm:$0xff] %vm108, %v6320
    %6388 = vst.msk [vmem:[%s6357 + $0x169] sm:$0xff] %vm108, %v6322
    %6389 = vst.msk [vmem:[%s6357 + $0x171] sm:$0xff] %vm108, %v6324
    %s6390 = scalar_lea.vmem [#allocation4], 432
    %6391 = vst.msk [vmem:[%s6390] sm:$0xff] %vm108, 0.0
    %6392 = vst.msk [vmem:[%s6390 + $0x8] sm:$0xff] %vm108, 0.0
    %6393 = vst.msk [vmem:[%s6390 + $0x10] sm:$0x3] %vm6186, 0.0
    %s6394 = scalar_lea.vmem [#allocation4], 840
    %6395 = vst.msk [vmem:[%s6394] sm:$0xff] %vm108, 0.0
    %6396 = vst.msk [vmem:[%s6394 + $0x8] sm:$0xff] %vm108, 0.0
    %6397 = vst.msk [vmem:[%s6394 + $0x10] sm:$0x3] %vm6186, 0.0
    %6398 = vst.msk [vmem:[%s6390] sm:$0x1] %vm6192, 0.0
    %6399 = vst.msk [vmem:[%s6390 + $0x18] sm:$0x1] %vm6192, 0.0
    %6400 = vst.msk [vmem:[%s6390 + $0x30] sm:$0x1] %vm6192, 0.0
    %6401 = vst.msk [vmem:[%s6390 + $0x48] sm:$0x1] %vm6192, 0.0
    %6402 = vst.msk [vmem:[%s6390 + $0x60] sm:$0x1] %vm6192, 0.0
    %6403 = vst.msk [vmem:[%s6390 + $0x78] sm:$0x1] %vm6192, 0.0
    %6404 = vst.msk [vmem:[%s6390 + $0x90] sm:$0x1] %vm6192, 0.0
    %6405 = vst.msk [vmem:[%s6390 + $0xa8] sm:$0x1] %vm6192, 0.0
    %6406 = vst.msk [vmem:[%s6390 + $0xc0] sm:$0x1] %vm6192, 0.0
    %6407 = vst.msk [vmem:[%s6390 + $0xd8] sm:$0x1] %vm6192, 0.0
    %6408 = vst.msk [vmem:[%s6390 + $0xf0] sm:$0x1] %vm6192, 0.0
    %6409 = vst.msk [vmem:[%s6390 + $0x108] sm:$0x1] %vm6192, 0.0
    %6410 = vst.msk [vmem:[%s6390 + $0x120] sm:$0x1] %vm6192, 0.0
    %6411 = vst.msk [vmem:[%s6390 + $0x138] sm:$0x1] %vm6192, 0.0
    %6412 = vst.msk [vmem:[%s6390 + $0x150] sm:$0x1] %vm6192, 0.0
    %6413 = vst.msk [vmem:[%s6390 + $0x168] sm:$0x1] %vm6192, 0.0
    %6414 = vst.msk [vmem:[%s6390 + $0x180] sm:$0x1] %vm6192, 0.0
    %6415 = vst.msk [vmem:[%s6390 + $0x198] sm:$0x1] %vm6192, 0.0
    %6416 = vst.msk [vmem:[%s6390 + $0x11] sm:$0x1] %vm6192, 0.0
    %6417 = vst.msk [vmem:[%s6390 + $0x29] sm:$0x1] %vm6192, 0.0
    %6418 = vst.msk [vmem:[%s6390 + $0x41] sm:$0x1] %vm6192, 0.0
    %6419 = vst.msk [vmem:[%s6390 + $0x59] sm:$0x1] %vm6192, 0.0
    %6420 = vst.msk [vmem:[%s6390 + $0x71] sm:$0x1] %vm6192, 0.0
    %6421 = vst.msk [vmem:[%s6390 + $0x89] sm:$0x1] %vm6192, 0.0
    %6422 = vst.msk [vmem:[%s6390 + $0xa1] sm:$0x1] %vm6192, 0.0
    %6423 = vst.msk [vmem:[%s6390 + $0xb9] sm:$0x1] %vm6192, 0.0
    %6424 = vst.msk [vmem:[%s6390 + $0xd1] sm:$0x1] %vm6192, 0.0
    %6425 = vst.msk [vmem:[%s6390 + $0xe9] sm:$0x1] %vm6192, 0.0
    %6426 = vst.msk [vmem:[%s6390 + $0x101] sm:$0x1] %vm6192, 0.0
    %6427 = vst.msk [vmem:[%s6390 + $0x119] sm:$0x1] %vm6192, 0.0
    %6428 = vst.msk [vmem:[%s6390 + $0x131] sm:$0x1] %vm6192, 0.0
    %6429 = vst.msk [vmem:[%s6390 + $0x149] sm:$0x1] %vm6192, 0.0
    %6430 = vst.msk [vmem:[%s6390 + $0x161] sm:$0x1] %vm6192, 0.0
    %6431 = vst.msk [vmem:[%s6390 + $0x179] sm:$0x1] %vm6192, 0.0
    %6432 = vst.msk [vmem:[%s6390 + $0x191] sm:$0x1] %vm6192, 0.0
    %6433 = vst.msk [vmem:[%s6390 + $0x1a9] sm:$0x1] %vm6192, 0.0
    %6466 = vrot.lane.b32.xlu0 %v6152, 124
    %v6467 = vpop.permute.xlu0 %6466
    %6468 = vrot.lane.b32.xlu0 %v6153, 124
    %v6469 = vpop.permute.xlu0 %6468
    %6470 = vrot.lane.b32.xlu0 %v6154, 124
    %v6471 = vpop.permute.xlu0 %6470
    %6472 = vrot.lane.b32.xlu0 %v6155, 124
    %v6473 = vpop.permute.xlu0 %6472
    %6474 = vrot.lane.b32.xlu0 %v6156, 124
    %v6475 = vpop.permute.xlu0 %6474
    %6476 = vrot.lane.b32.xlu0 %v6157, 124
    %v6477 = vpop.permute.xlu0 %6476
    %6478 = vrot.lane.b32.xlu0 %v6158, 124
    %v6479 = vpop.permute.xlu0 %6478
    %6480 = vrot.lane.b32.xlu0 %v6159, 124
    %v6481 = vpop.permute.xlu0 %6480
    %6482 = vrot.lane.b32.xlu0 %v6160, 124
    %v6483 = vpop.permute.xlu0 %6482
    %6484 = vrot.lane.b32.xlu0 %v6161, 124
    %v6485 = vpop.permute.xlu0 %6484
    %6486 = vrot.lane.b32.xlu0 %v6162, 124
    %v6487 = vpop.permute.xlu0 %6486
    %6488 = vrot.lane.b32.xlu0 %v6163, 124
    %v6489 = vpop.permute.xlu0 %6488
    %6490 = vrot.lane.b32.xlu0 %v6164, 124
    %v6491 = vpop.permute.xlu0 %6490
    %6492 = vrot.lane.b32.xlu0 %v6165, 124
    %v6493 = vpop.permute.xlu0 %6492
    %6494 = vrot.lane.b32.xlu0 %v6166, 124
    %v6495 = vpop.permute.xlu0 %6494
    %6496 = vrot.lane.b32.xlu0 %v6167, 124
    %v6497 = vpop.permute.xlu0 %6496
    %6498 = vrot.lane.b32.xlu0 %v6168, 124
    %v6499 = vpop.permute.xlu0 %6498
    %6500 = vrot.lane.b32.xlu0 %v6169, 124
    %v6501 = vpop.permute.xlu0 %6500
    %6502 = vrot.lane.b32.xlu0 %v6170, 124
    %v6503 = vpop.permute.xlu0 %6502
    %6504 = vrot.lane.b32.xlu0 %v6171, 124
    %v6505 = vpop.permute.xlu0 %6504
    %6506 = vrot.lane.b32.xlu0 %v6172, 124
    %v6507 = vpop.permute.xlu0 %6506
    %6508 = vrot.lane.b32.xlu0 %v6173, 124
    %v6509 = vpop.permute.xlu0 %6508
    %6510 = vrot.lane.b32.xlu0 %v6174, 124
    %v6511 = vpop.permute.xlu0 %6510
    %6512 = vrot.lane.b32.xlu0 %v6175, 124
    %v6513 = vpop.permute.xlu0 %6512
    %6514 = vrot.lane.b32.xlu0 %v6176, 124
    %v6515 = vpop.permute.xlu0 %6514
    %6516 = vrot.lane.b32.xlu0 %v6177, 124
    %v6517 = vpop.permute.xlu0 %6516
    %6518 = vrot.lane.b32.xlu0 %v6178, 124
    %v6519 = vpop.permute.xlu0 %6518
    %6520 = vrot.lane.b32.xlu0 %v6179, 124
    %v6521 = vpop.permute.xlu0 %6520
    %6522 = vrot.lane.b32.xlu0 %v6180, 124
    %v6523 = vpop.permute.xlu0 %6522
    %6524 = vrot.lane.b32.xlu0 %v6181, 124
    %v6525 = vpop.permute.xlu0 %6524
    %6526 = vrot.lane.b32.xlu0 %v6182, 124
    %v6527 = vpop.permute.xlu0 %6526
    %6528 = vrot.lane.b32.xlu0 %v6183, 124
    %v6529 = vpop.permute.xlu0 %6528
    %s6562 = scalar_lea.vmem [#allocation4], 456
    %6563 = vst.msk [vmem:[%s6562 + $0x1] sm:$0xff] %vm108, %v6467
    %6564 = vst.msk [vmem:[%s6562 + $0x9] sm:$0xff] %vm108, %v6469
    %6565 = vst.msk [vmem:[%s6562 + $0x19] sm:$0xff] %vm108, %v6471
    %6566 = vst.msk [vmem:[%s6562 + $0x21] sm:$0xff] %vm108, %v6473
    %6567 = vst.msk [vmem:[%s6562 + $0x31] sm:$0xff] %vm108, %v6475
    %6568 = vst.msk [vmem:[%s6562 + $0x39] sm:$0xff] %vm108, %v6477
    %6569 = vst.msk [vmem:[%s6562 + $0x49] sm:$0xff] %vm108, %v6479
    %6570 = vst.msk [vmem:[%s6562 + $0x51] sm:$0xff] %vm108, %v6481
    %6571 = vst.msk [vmem:[%s6562 + $0x61] sm:$0xff] %vm108, %v6483
    %6572 = vst.msk [vmem:[%s6562 + $0x69] sm:$0xff] %vm108, %v6485
    %6573 = vst.msk [vmem:[%s6562 + $0x79] sm:$0xff] %vm108, %v6487
    %6574 = vst.msk [vmem:[%s6562 + $0x81] sm:$0xff] %vm108, %v6489
    %6575 = vst.msk [vmem:[%s6562 + $0x91] sm:$0xff] %vm108, %v6491
    %6576 = vst.msk [vmem:[%s6562 + $0x99] sm:$0xff] %vm108, %v6493
    %6577 = vst.msk [vmem:[%s6562 + $0xa9] sm:$0xff] %vm108, %v6495
    %6578 = vst.msk [vmem:[%s6562 + $0xb1] sm:$0xff] %vm108, %v6497
    %6579 = vst.msk [vmem:[%s6562 + $0xc1] sm:$0xff] %vm108, %v6499
    %6580 = vst.msk [vmem:[%s6562 + $0xc9] sm:$0xff] %vm108, %v6501
    %6581 = vst.msk [vmem:[%s6562 + $0xd9] sm:$0xff] %vm108, %v6503
    %6582 = vst.msk [vmem:[%s6562 + $0xe1] sm:$0xff] %vm108, %v6505
    %6583 = vst.msk [vmem:[%s6562 + $0xf1] sm:$0xff] %vm108, %v6507
    %6584 = vst.msk [vmem:[%s6562 + $0xf9] sm:$0xff] %vm108, %v6509
    %6585 = vst.msk [vmem:[%s6562 + $0x109] sm:$0xff] %vm108, %v6511
    %6586 = vst.msk [vmem:[%s6562 + $0x111] sm:$0xff] %vm108, %v6513
    %6587 = vst.msk [vmem:[%s6562 + $0x121] sm:$0xff] %vm108, %v6515
    %6588 = vst.msk [vmem:[%s6562 + $0x129] sm:$0xff] %vm108, %v6517
    %6589 = vst.msk [vmem:[%s6562 + $0x139] sm:$0xff] %vm108, %v6519
    %6590 = vst.msk [vmem:[%s6562 + $0x141] sm:$0xff] %vm108, %v6521
    %6591 = vst.msk [vmem:[%s6562 + $0x151] sm:$0xff] %vm108, %v6523
    %6592 = vst.msk [vmem:[%s6562 + $0x159] sm:$0xff] %vm108, %v6525
    %6593 = vst.msk [vmem:[%s6562 + $0x169] sm:$0xff] %vm108, %v6527
    %6594 = vst.msk [vmem:[%s6562 + $0x171] sm:$0xff] %vm108, %v6529
    %v6595 = vld [vmem:[#allocation4] sm:$0xff]
    %v6596 = vld [vmem:[#allocation4 + $0x8] sm:$0xff]
    %v6597 = vld [vmem:[#allocation4 + $0x18] sm:$0xff]
    %v6598 = vld [vmem:[#allocation4 + $0x20] sm:$0xff]
    %v6599 = vld [vmem:[#allocation4 + $0x30] sm:$0xff]
    %v6600 = vld [vmem:[#allocation4 + $0x38] sm:$0xff]
    %v6601 = vld [vmem:[#allocation4 + $0x48] sm:$0xff]
    %v6602 = vld [vmem:[#allocation4 + $0x50] sm:$0xff]
    %v6603 = vld [vmem:[#allocation4 + $0x60] sm:$0xff]
    %v6604 = vld [vmem:[#allocation4 + $0x68] sm:$0xff]
    %v6605 = vld [vmem:[#allocation4 + $0x78] sm:$0xff]
    %v6606 = vld [vmem:[#allocation4 + $0x80] sm:$0xff]
    %v6607 = vld [vmem:[#allocation4 + $0x90] sm:$0xff]
    %v6608 = vld [vmem:[#allocation4 + $0x98] sm:$0xff]
    %v6609 = vld [vmem:[#allocation4 + $0xa8] sm:$0xff]
    %v6610 = vld [vmem:[#allocation4 + $0xb0] sm:$0xff]
    %v6611 = vld [vmem:[#allocation4 + $0xc0] sm:$0xff]
    %v6612 = vld [vmem:[#allocation4 + $0xc8] sm:$0xff]
    %v6613 = vld [vmem:[#allocation4 + $0xd8] sm:$0xff]
    %v6614 = vld [vmem:[#allocation4 + $0xe0] sm:$0xff]
    %v6615 = vld [vmem:[#allocation4 + $0xf0] sm:$0xff]
    %v6616 = vld [vmem:[#allocation4 + $0xf8] sm:$0xff]
    %v6617 = vld [vmem:[#allocation4 + $0x108] sm:$0xff]
    %v6618 = vld [vmem:[#allocation4 + $0x110] sm:$0xff]
    %v6619 = vld [vmem:[#allocation4 + $0x120] sm:$0xff]
    %v6620 = vld [vmem:[#allocation4 + $0x128] sm:$0xff]
    %v6621 = vld [vmem:[#allocation4 + $0x138] sm:$0xff]
    %v6622 = vld [vmem:[#allocation4 + $0x140] sm:$0xff]
    %v6623 = vld [vmem:[#allocation4 + $0x150] sm:$0xff]
    %v6624 = vld [vmem:[#allocation4 + $0x158] sm:$0xff]
    %v6625 = vld [vmem:[#allocation4 + $0x168] sm:$0xff]
    %v6626 = vld [vmem:[#allocation4 + $0x170] sm:$0xff]
    %v6627 = vpack.c.bf16 %v6596, %v6595
    %v6628 = vpack.c.bf16 %v6598, %v6597
    %v6629 = vpack.c.bf16 %v6600, %v6599
    %v6630 = vpack.c.bf16 %v6602, %v6601
    %v6631 = vpack.c.bf16 %v6604, %v6603
    %v6632 = vpack.c.bf16 %v6606, %v6605
    %v6633 = vpack.c.bf16 %v6608, %v6607
    %v6634 = vpack.c.bf16 %v6610, %v6609
    %v6635 = vpack.c.bf16 %v6612, %v6611
    %v6636 = vpack.c.bf16 %v6614, %v6613
    %v6637 = vpack.c.bf16 %v6616, %v6615
    %v6638 = vpack.c.bf16 %v6618, %v6617
    %v6639 = vpack.c.bf16 %v6620, %v6619
    %v6640 = vpack.c.bf16 %v6622, %v6621
    %v6641 = vpack.c.bf16 %v6624, %v6623
    %v6642 = vpack.c.bf16 %v6626, %v6625
    %6643 = vst.msk [vmem:[#allocation3] sm:$0xff] %vm108, %v6627
    %6644 = vst.msk [vmem:[#allocation3 + $0x8] sm:$0xff] %vm108, %v6628
    %6645 = vst.msk [vmem:[#allocation3 + $0x10] sm:$0xff] %vm108, %v6629
    %6646 = vst.msk [vmem:[#allocation3 + $0x18] sm:$0xff] %vm108, %v6630
    %6647 = vst.msk [vmem:[#allocation3 + $0x20] sm:$0xff] %vm108, %v6631
    %6648 = vst.msk [vmem:[#allocation3 + $0x28] sm:$0xff] %vm108, %v6632
    %6649 = vst.msk [vmem:[#allocation3 + $0x30] sm:$0xff] %vm108, %v6633
    %6650 = vst.msk [vmem:[#allocation3 + $0x38] sm:$0xff] %vm108, %v6634
    %6651 = vst.msk [vmem:[#allocation3 + $0x40] sm:$0xff] %vm108, %v6635
    %6652 = vst.msk [vmem:[#allocation3 + $0x48] sm:$0xff] %vm108, %v6636
    %6653 = vst.msk [vmem:[#allocation3 + $0x50] sm:$0xff] %vm108, %v6637
    %6654 = vst.msk [vmem:[#allocation3 + $0x58] sm:$0xff] %vm108, %v6638
    %6655 = vst.msk [vmem:[#allocation3 + $0x60] sm:$0xff] %vm108, %v6639
    %6656 = vst.msk [vmem:[#allocation3 + $0x68] sm:$0xff] %vm108, %v6640
    %6657 = vst.msk [vmem:[#allocation3 + $0x70] sm:$0xff] %vm108, %v6641
    %6658 = vst.msk [vmem:[#allocation3 + $0x78] sm:$0xff] %vm108, %v6642
    %v6659 = vld [vmem:[#allocation4 + $0x1] sm:$0xff]
    %v6660 = vld [vmem:[#allocation4 + $0x9] sm:$0xff]
    %v6661 = vld [vmem:[#allocation4 + $0x19] sm:$0xff]
    %v6662 = vld [vmem:[#allocation4 + $0x21] sm:$0xff]
    %v6663 = vld [vmem:[#allocation4 + $0x31] sm:$0xff]
    %v6664 = vld [vmem:[#allocation4 + $0x39] sm:$0xff]
    %v6665 = vld [vmem:[#allocation4 + $0x49] sm:$0xff]
    %v6666 = vld [vmem:[#allocation4 + $0x51] sm:$0xff]
    %v6667 = vld [vmem:[#allocation4 + $0x61] sm:$0xff]
    %v6668 = vld [vmem:[#allocation4 + $0x69] sm:$0xff]
    %v6669 = vld [vmem:[#allocation4 + $0x79] sm:$0xff]
    %v6670 = vld [vmem:[#allocation4 + $0x81] sm:$0xff]
    %v6671 = vld [vmem:[#allocation4 + $0x91] sm:$0xff]
    %v6672 = vld [vmem:[#allocation4 + $0x99] sm:$0xff]
    %v6673 = vld [vmem:[#allocation4 + $0xa9] sm:$0xff]
    %v6674 = vld [vmem:[#allocation4 + $0xb1] sm:$0xff]
    %v6675 = vld [vmem:[#allocation4 + $0xc1] sm:$0xff]
    %v6676 = vld [vmem:[#allocation4 + $0xc9] sm:$0xff]
    %v6677 = vld [vmem:[#allocation4 + $0xd9] sm:$0xff]
    %v6678 = vld [vmem:[#allocation4 + $0xe1] sm:$0xff]
    %v6679 = vld [vmem:[#allocation4 + $0xf1] sm:$0xff]
    %v6680 = vld [vmem:[#allocation4 + $0xf9] sm:$0xff]
    %v6681 = vld [vmem:[#allocation4 + $0x109] sm:$0xff]
    %v6682 = vld [vmem:[#allocation4 + $0x111] sm:$0xff]
    %v6683 = vld [vmem:[#allocation4 + $0x121] sm:$0xff]
    %v6684 = vld [vmem:[#allocation4 + $0x129] sm:$0xff]
    %v6685 = vld [vmem:[#allocation4 + $0x139] sm:$0xff]
    %v6686 = vld [vmem:[#allocation4 + $0x141] sm:$0xff]
    %v6687 = vld [vmem:[#allocation4 + $0x151] sm:$0xff]
    %v6688 = vld [vmem:[#allocation4 + $0x159] sm:$0xff]
    %v6689 = vld [vmem:[#allocation4 + $0x169] sm:$0xff]
    %v6690 = vld [vmem:[#allocation4 + $0x171] sm:$0xff]
    %v6691 = vpack.c.bf16 %v6660, %v6659
    %v6692 = vpack.c.bf16 %v6662, %v6661
    %v6693 = vpack.c.bf16 %v6664, %v6663
    %v6694 = vpack.c.bf16 %v6666, %v6665
    %v6695 = vpack.c.bf16 %v6668, %v6667
    %v6696 = vpack.c.bf16 %v6670, %v6669
    %v6697 = vpack.c.bf16 %v6672, %v6671
    %v6698 = vpack.c.bf16 %v6674, %v6673
    %v6699 = vpack.c.bf16 %v6676, %v6675
    %v6700 = vpack.c.bf16 %v6678, %v6677
    %v6701 = vpack.c.bf16 %v6680, %v6679
    %v6702 = vpack.c.bf16 %v6682, %v6681
    %v6703 = vpack.c.bf16 %v6684, %v6683
    %v6704 = vpack.c.bf16 %v6686, %v6685
    %v6705 = vpack.c.bf16 %v6688, %v6687
    %v6706 = vpack.c.bf16 %v6690, %v6689
    %6723 = vrot.lane.b32.xlu0 %v6691, 4
    %v6724 = vpop.permute.xlu0 %6723
    %6725 = vrot.lane.b32.xlu0 %v6692, 4
    %v6726 = vpop.permute.xlu0 %6725
    %6727 = vrot.lane.b32.xlu0 %v6693, 4
    %v6728 = vpop.permute.xlu0 %6727
    %6729 = vrot.lane.b32.xlu0 %v6694, 4
    %v6730 = vpop.permute.xlu0 %6729
    %6731 = vrot.lane.b32.xlu0 %v6695, 4
    %v6732 = vpop.permute.xlu0 %6731
    %6733 = vrot.lane.b32.xlu0 %v6696, 4
    %v6734 = vpop.permute.xlu0 %6733
    %6735 = vrot.lane.b32.xlu0 %v6697, 4
    %v6736 = vpop.permute.xlu0 %6735
    %6737 = vrot.lane.b32.xlu0 %v6698, 4
    %v6738 = vpop.permute.xlu0 %6737
    %6739 = vrot.lane.b32.xlu0 %v6699, 4
    %v6740 = vpop.permute.xlu0 %6739
    %6741 = vrot.lane.b32.xlu0 %v6700, 4
    %v6742 = vpop.permute.xlu0 %6741
    %6743 = vrot.lane.b32.xlu0 %v6701, 4
    %v6744 = vpop.permute.xlu0 %6743
    %6745 = vrot.lane.b32.xlu0 %v6702, 4
    %v6746 = vpop.permute.xlu0 %6745
    %6747 = vrot.lane.b32.xlu0 %v6703, 4
    %v6748 = vpop.permute.xlu0 %6747
    %6749 = vrot.lane.b32.xlu0 %v6704, 4
    %v6750 = vpop.permute.xlu0 %6749
    %6751 = vrot.lane.b32.xlu0 %v6705, 4
    %v6752 = vpop.permute.xlu0 %6751
    %6753 = vrot.lane.b32.xlu0 %v6706, 4
    %v6754 = vpop.permute.xlu0 %6753
    %6771 = vst.msk [vmem:[#allocation3] sm:$0xff] %vm301, %v6724
    %6772 = vst.msk [vmem:[#allocation3 + $0x8] sm:$0xff] %vm301, %v6726
    %6773 = vst.msk [vmem:[#allocation3 + $0x10] sm:$0xff] %vm301, %v6728
    %6774 = vst.msk [vmem:[#allocation3 + $0x18] sm:$0xff] %vm301, %v6730
    %6775 = vst.msk [vmem:[#allocation3 + $0x20] sm:$0xff] %vm301, %v6732
    %6776 = vst.msk [vmem:[#allocation3 + $0x28] sm:$0xff] %vm301, %v6734
    %6777 = vst.msk [vmem:[#allocation3 + $0x30] sm:$0xff] %vm301, %v6736
    %6778 = vst.msk [vmem:[#allocation3 + $0x38] sm:$0xff] %vm301, %v6738
    %6779 = vst.msk [vmem:[#allocation3 + $0x40] sm:$0xff] %vm301, %v6740
    %6780 = vst.msk [vmem:[#allocation3 + $0x48] sm:$0xff] %vm301, %v6742
    %6781 = vst.msk [vmem:[#allocation3 + $0x50] sm:$0xff] %vm301, %v6744
    %6782 = vst.msk [vmem:[#allocation3 + $0x58] sm:$0xff] %vm301, %v6746
    %6783 = vst.msk [vmem:[#allocation3 + $0x60] sm:$0xff] %vm301, %v6748
    %6784 = vst.msk [vmem:[#allocation3 + $0x68] sm:$0xff] %vm301, %v6750
    %6785 = vst.msk [vmem:[#allocation3 + $0x70] sm:$0xff] %vm301, %v6752
    %6786 = vst.msk [vmem:[#allocation3 + $0x78] sm:$0xff] %vm301, %v6754
    %v6787 = vld [vmem:[#allocation4 + $0x2] sm:$0xff]
    %v6788 = vld [vmem:[#allocation4 + $0xa] sm:$0xff]
    %v6789 = vld [vmem:[#allocation4 + $0x1a] sm:$0xff]
    %v6790 = vld [vmem:[#allocation4 + $0x22] sm:$0xff]
    %v6791 = vld [vmem:[#allocation4 + $0x32] sm:$0xff]
    %v6792 = vld [vmem:[#allocation4 + $0x3a] sm:$0xff]
    %v6793 = vld [vmem:[#allocation4 + $0x4a] sm:$0xff]
    %v6794 = vld [vmem:[#allocation4 + $0x52] sm:$0xff]
    %v6795 = vld [vmem:[#allocation4 + $0x62] sm:$0xff]
    %v6796 = vld [vmem:[#allocation4 + $0x6a] sm:$0xff]
    %v6797 = vld [vmem:[#allocation4 + $0x7a] sm:$0xff]
    %v6798 = vld [vmem:[#allocation4 + $0x82] sm:$0xff]
    %v6799 = vld [vmem:[#allocation4 + $0x92] sm:$0xff]
    %v6800 = vld [vmem:[#allocation4 + $0x9a] sm:$0xff]
    %v6801 = vld [vmem:[#allocation4 + $0xaa] sm:$0xff]
    %v6802 = vld [vmem:[#allocation4 + $0xb2] sm:$0xff]
    %v6803 = vld [vmem:[#allocation4 + $0xc2] sm:$0xff]
    %v6804 = vld [vmem:[#allocation4 + $0xca] sm:$0xff]
    %v6805 = vld [vmem:[#allocation4 + $0xda] sm:$0xff]
    %v6806 = vld [vmem:[#allocation4 + $0xe2] sm:$0xff]
    %v6807 = vld [vmem:[#allocation4 + $0xf2] sm:$0xff]
    %v6808 = vld [vmem:[#allocation4 + $0xfa] sm:$0xff]
    %v6809 = vld [vmem:[#allocation4 + $0x10a] sm:$0xff]
    %v6810 = vld [vmem:[#allocation4 + $0x112] sm:$0xff]
    %v6811 = vld [vmem:[#allocation4 + $0x122] sm:$0xff]
    %v6812 = vld [vmem:[#allocation4 + $0x12a] sm:$0xff]
    %v6813 = vld [vmem:[#allocation4 + $0x13a] sm:$0xff]
    %v6814 = vld [vmem:[#allocation4 + $0x142] sm:$0xff]
    %v6815 = vld [vmem:[#allocation4 + $0x152] sm:$0xff]
    %v6816 = vld [vmem:[#allocation4 + $0x15a] sm:$0xff]
    %v6817 = vld [vmem:[#allocation4 + $0x16a] sm:$0xff]
    %v6818 = vld [vmem:[#allocation4 + $0x172] sm:$0xff]
    %v6819 = vpack.c.bf16 %v6788, %v6787
    %v6820 = vpack.c.bf16 %v6790, %v6789
    %v6821 = vpack.c.bf16 %v6792, %v6791
    %v6822 = vpack.c.bf16 %v6794, %v6793
    %v6823 = vpack.c.bf16 %v6796, %v6795
    %v6824 = vpack.c.bf16 %v6798, %v6797
    %v6825 = vpack.c.bf16 %v6800, %v6799
    %v6826 = vpack.c.bf16 %v6802, %v6801
    %v6827 = vpack.c.bf16 %v6804, %v6803
    %v6828 = vpack.c.bf16 %v6806, %v6805
    %v6829 = vpack.c.bf16 %v6808, %v6807
    %v6830 = vpack.c.bf16 %v6810, %v6809
    %v6831 = vpack.c.bf16 %v6812, %v6811
    %v6832 = vpack.c.bf16 %v6814, %v6813
    %v6833 = vpack.c.bf16 %v6816, %v6815
    %v6834 = vpack.c.bf16 %v6818, %v6817
    %6851 = vrot.lane.b32.xlu0 %v6819, 8
    %v6852 = vpop.permute.xlu0 %6851
    %6853 = vrot.lane.b32.xlu0 %v6820, 8
    %v6854 = vpop.permute.xlu0 %6853
    %6855 = vrot.lane.b32.xlu0 %v6821, 8
    %v6856 = vpop.permute.xlu0 %6855
    %6857 = vrot.lane.b32.xlu0 %v6822, 8
    %v6858 = vpop.permute.xlu0 %6857
    %6859 = vrot.lane.b32.xlu0 %v6823, 8
    %v6860 = vpop.permute.xlu0 %6859
    %6861 = vrot.lane.b32.xlu0 %v6824, 8
    %v6862 = vpop.permute.xlu0 %6861
    %6863 = vrot.lane.b32.xlu0 %v6825, 8
    %v6864 = vpop.permute.xlu0 %6863
    %6865 = vrot.lane.b32.xlu0 %v6826, 8
    %v6866 = vpop.permute.xlu0 %6865
    %6867 = vrot.lane.b32.xlu0 %v6827, 8
    %v6868 = vpop.permute.xlu0 %6867
    %6869 = vrot.lane.b32.xlu0 %v6828, 8
    %v6870 = vpop.permute.xlu0 %6869
    %6871 = vrot.lane.b32.xlu0 %v6829, 8
    %v6872 = vpop.permute.xlu0 %6871
    %6873 = vrot.lane.b32.xlu0 %v6830, 8
    %v6874 = vpop.permute.xlu0 %6873
    %6875 = vrot.lane.b32.xlu0 %v6831, 8
    %v6876 = vpop.permute.xlu0 %6875
    %6877 = vrot.lane.b32.xlu0 %v6832, 8
    %v6878 = vpop.permute.xlu0 %6877
    %6879 = vrot.lane.b32.xlu0 %v6833, 8
    %v6880 = vpop.permute.xlu0 %6879
    %6881 = vrot.lane.b32.xlu0 %v6834, 8
    %v6882 = vpop.permute.xlu0 %6881
    %6899 = vst.msk [vmem:[#allocation3] sm:$0xff] %vm558, %v6852
    %6900 = vst.msk [vmem:[#allocation3 + $0x8] sm:$0xff] %vm558, %v6854
    %6901 = vst.msk [vmem:[#allocation3 + $0x10] sm:$0xff] %vm558, %v6856
    %6902 = vst.msk [vmem:[#allocation3 + $0x18] sm:$0xff] %vm558, %v6858
    %6903 = vst.msk [vmem:[#allocation3 + $0x20] sm:$0xff] %vm558, %v6860
    %6904 = vst.msk [vmem:[#allocation3 + $0x28] sm:$0xff] %vm558, %v6862
    %6905 = vst.msk [vmem:[#allocation3 + $0x30] sm:$0xff] %vm558, %v6864
    %6906 = vst.msk [vmem:[#allocation3 + $0x38] sm:$0xff] %vm558, %v6866
    %6907 = vst.msk [vmem:[#allocation3 + $0x40] sm:$0xff] %vm558, %v6868
    %6908 = vst.msk [vmem:[#allocation3 + $0x48] sm:$0xff] %vm558, %v6870
    %6909 = vst.msk [vmem:[#allocation3 + $0x50] sm:$0xff] %vm558, %v6872
    %6910 = vst.msk [vmem:[#allocation3 + $0x58] sm:$0xff] %vm558, %v6874
    %6911 = vst.msk [vmem:[#allocation3 + $0x60] sm:$0xff] %vm558, %v6876
    %6912 = vst.msk [vmem:[#allocation3 + $0x68] sm:$0xff] %vm558, %v6878
    %6913 = vst.msk [vmem:[#allocation3 + $0x70] sm:$0xff] %vm558, %v6880
    %6914 = vst.msk [vmem:[#allocation3 + $0x78] sm:$0xff] %vm558, %v6882
    %v6915 = vld [vmem:[%s6357] sm:$0xff]
    %v6916 = vld [vmem:[%s6357 + $0x8] sm:$0xff]
    %v6917 = vld [vmem:[%s6357 + $0x18] sm:$0xff]
    %v6918 = vld [vmem:[%s6357 + $0x20] sm:$0xff]
    %v6919 = vld [vmem:[%s6357 + $0x30] sm:$0xff]
    %v6920 = vld [vmem:[%s6357 + $0x38] sm:$0xff]
    %v6921 = vld [vmem:[%s6357 + $0x48] sm:$0xff]
    %v6922 = vld [vmem:[%s6357 + $0x50] sm:$0xff]
    %v6923 = vld [vmem:[%s6357 + $0x60] sm:$0xff]
    %v6924 = vld [vmem:[%s6357 + $0x68] sm:$0xff]
    %v6925 = vld [vmem:[%s6357 + $0x78] sm:$0xff]
    %v6926 = vld [vmem:[%s6357 + $0x80] sm:$0xff]
    %v6927 = vld [vmem:[%s6357 + $0x90] sm:$0xff]
    %v6928 = vld [vmem:[%s6357 + $0x98] sm:$0xff]
    %v6929 = vld [vmem:[%s6357 + $0xa8] sm:$0xff]
    %v6930 = vld [vmem:[%s6357 + $0xb0] sm:$0xff]
    %v6931 = vld [vmem:[%s6357 + $0xc0] sm:$0xff]
    %v6932 = vld [vmem:[%s6357 + $0xc8] sm:$0xff]
    %v6933 = vld [vmem:[%s6357 + $0xd8] sm:$0xff]
    %v6934 = vld [vmem:[%s6357 + $0xe0] sm:$0xff]
    %v6935 = vld [vmem:[%s6357 + $0xf0] sm:$0xff]
    %v6936 = vld [vmem:[%s6357 + $0xf8] sm:$0xff]
    %v6937 = vld [vmem:[%s6357 + $0x108] sm:$0xff]
    %v6938 = vld [vmem:[%s6357 + $0x110] sm:$0xff]
    %v6939 = vld [vmem:[%s6357 + $0x120] sm:$0xff]
    %v6940 = vld [vmem:[%s6357 + $0x128] sm:$0xff]
    %v6941 = vld [vmem:[%s6357 + $0x138] sm:$0xff]
    %v6942 = vld [vmem:[%s6357 + $0x140] sm:$0xff]
    %v6943 = vld [vmem:[%s6357 + $0x150] sm:$0xff]
    %v6944 = vld [vmem:[%s6357 + $0x158] sm:$0xff]
    %v6945 = vld [vmem:[%s6357 + $0x168] sm:$0xff]
    %v6946 = vld [vmem:[%s6357 + $0x170] sm:$0xff]
    %v6947 = vpack.c.bf16 %v6916, %v6915
    %v6948 = vpack.c.bf16 %v6918, %v6917
    %v6949 = vpack.c.bf16 %v6920, %v6919
    %v6950 = vpack.c.bf16 %v6922, %v6921
    %v6951 = vpack.c.bf16 %v6924, %v6923
    %v6952 = vpack.c.bf16 %v6926, %v6925
    %v6953 = vpack.c.bf16 %v6928, %v6927
    %v6954 = vpack.c.bf16 %v6930, %v6929
    %v6955 = vpack.c.bf16 %v6932, %v6931
    %v6956 = vpack.c.bf16 %v6934, %v6933
    %v6957 = vpack.c.bf16 %v6936, %v6935
    %v6958 = vpack.c.bf16 %v6938, %v6937
    %v6959 = vpack.c.bf16 %v6940, %v6939
    %v6960 = vpack.c.bf16 %v6942, %v6941
    %v6961 = vpack.c.bf16 %v6944, %v6943
    %v6962 = vpack.c.bf16 %v6946, %v6945
    %6979 = vrot.lane.b32.xlu0 %v6947, 12
    %v6980 = vpop.permute.xlu0 %6979
    %6981 = vrot.lane.b32.xlu0 %v6948, 12
    %v6982 = vpop.permute.xlu0 %6981
    %6983 = vrot.lane.b32.xlu0 %v6949, 12
    %v6984 = vpop.permute.xlu0 %6983
    %6985 = vrot.lane.b32.xlu0 %v6950, 12
    %v6986 = vpop.permute.xlu0 %6985
    %6987 = vrot.lane.b32.xlu0 %v6951, 12
    %v6988 = vpop.permute.xlu0 %6987
    %6989 = vrot.lane.b32.xlu0 %v6952, 12
    %v6990 = vpop.permute.xlu0 %6989
    %6991 = vrot.lane.b32.xlu0 %v6953, 12
    %v6992 = vpop.permute.xlu0 %6991
    %6993 = vrot.lane.b32.xlu0 %v6954, 12
    %v6994 = vpop.permute.xlu0 %6993
    %6995 = vrot.lane.b32.xlu0 %v6955, 12
    %v6996 = vpop.permute.xlu0 %6995
    %6997 = vrot.lane.b32.xlu0 %v6956, 12
    %v6998 = vpop.permute.xlu0 %6997
    %6999 = vrot.lane.b32.xlu0 %v6957, 12
    %v7000 = vpop.permute.xlu0 %6999
    %7001 = vrot.lane.b32.xlu0 %v6958, 12
    %v7002 = vpop.permute.xlu0 %7001
    %7003 = vrot.lane.b32.xlu0 %v6959, 12
    %v7004 = vpop.permute.xlu0 %7003
    %7005 = vrot.lane.b32.xlu0 %v6960, 12
    %v7006 = vpop.permute.xlu0 %7005
    %7007 = vrot.lane.b32.xlu0 %v6961, 12
    %v7008 = vpop.permute.xlu0 %7007
    %7009 = vrot.lane.b32.xlu0 %v6962, 12
    %v7010 = vpop.permute.xlu0 %7009
    %7027 = vst.msk [vmem:[#allocation3] sm:$0xff] %vm817, %v6980
    %7028 = vst.msk [vmem:[#allocation3 + $0x8] sm:$0xff] %vm817, %v6982
    %7029 = vst.msk [vmem:[#allocation3 + $0x10] sm:$0xff] %vm817, %v6984
    %7030 = vst.msk [vmem:[#allocation3 + $0x18] sm:$0xff] %vm817, %v6986
    %7031 = vst.msk [vmem:[#allocation3 + $0x20] sm:$0xff] %vm817, %v6988
    %7032 = vst.msk [vmem:[#allocation3 + $0x28] sm:$0xff] %vm817, %v6990
    %7033 = vst.msk [vmem:[#allocation3 + $0x30] sm:$0xff] %vm817, %v6992
    %7034 = vst.msk [vmem:[#allocation3 + $0x38] sm:$0xff] %vm817, %v6994
    %7035 = vst.msk [vmem:[#allocation3 + $0x40] sm:$0xff] %vm817, %v6996
    %7036 = vst.msk [vmem:[#allocation3 + $0x48] sm:$0xff] %vm817, %v6998
    %7037 = vst.msk [vmem:[#allocation3 + $0x50] sm:$0xff] %vm817, %v7000
    %7038 = vst.msk [vmem:[#allocation3 + $0x58] sm:$0xff] %vm817, %v7002
    %7039 = vst.msk [vmem:[#allocation3 + $0x60] sm:$0xff] %vm817, %v7004
    %7040 = vst.msk [vmem:[#allocation3 + $0x68] sm:$0xff] %vm817, %v7006
    %7041 = vst.msk [vmem:[#allocation3 + $0x70] sm:$0xff] %vm817, %v7008
    %7042 = vst.msk [vmem:[#allocation3 + $0x78] sm:$0xff] %vm817, %v7010
    %v7043 = vld [vmem:[%s6357 + $0x1] sm:$0xff]
    %v7044 = vld [vmem:[%s6357 + $0x9] sm:$0xff]
    %v7045 = vld [vmem:[%s6357 + $0x19] sm:$0xff]
    %v7046 = vld [vmem:[%s6357 + $0x21] sm:$0xff]
    %v7047 = vld [vmem:[%s6357 + $0x31] sm:$0xff]
    %v7048 = vld [vmem:[%s6357 + $0x39] sm:$0xff]
    %v7049 = vld [vmem:[%s6357 + $0x49] sm:$0xff]
    %v7050 = vld [vmem:[%s6357 + $0x51] sm:$0xff]
    %v7051 = vld [vmem:[%s6357 + $0x61] sm:$0xff]
    %v7052 = vld [vmem:[%s6357 + $0x69] sm:$0xff]
    %v7053 = vld [vmem:[%s6357 + $0x79] sm:$0xff]
    %v7054 = vld [vmem:[%s6357 + $0x81] sm:$0xff]
    %v7055 = vld [vmem:[%s6357 + $0x91] sm:$0xff]
    %v7056 = vld [vmem:[%s6357 + $0x99] sm:$0xff]
    %v7057 = vld [vmem:[%s6357 + $0xa9] sm:$0xff]
    %v7058 = vld [vmem:[%s6357 + $0xb1] sm:$0xff]
    %v7059 = vld [vmem:[%s6357 + $0xc1] sm:$0xff]
    %v7060 = vld [vmem:[%s6357 + $0xc9] sm:$0xff]
    %v7061 = vld [vmem:[%s6357 + $0xd9] sm:$0xff]
    %v7062 = vld [vmem:[%s6357 + $0xe1] sm:$0xff]
    %v7063 = vld [vmem:[%s6357 + $0xf1] sm:$0xff]
    %v7064 = vld [vmem:[%s6357 + $0xf9] sm:$0xff]
    %v7065 = vld [vmem:[%s6357 + $0x109] sm:$0xff]
    %v7066 = vld [vmem:[%s6357 + $0x111] sm:$0xff]
    %v7067 = vld [vmem:[%s6357 + $0x121] sm:$0xff]
    %v7068 = vld [vmem:[%s6357 + $0x129] sm:$0xff]
    %v7069 = vld [vmem:[%s6357 + $0x139] sm:$0xff]
    %v7070 = vld [vmem:[%s6357 + $0x141] sm:$0xff]
    %v7071 = vld [vmem:[%s6357 + $0x151] sm:$0xff]
    %v7072 = vld [vmem:[%s6357 + $0x159] sm:$0xff]
    %v7073 = vld [vmem:[%s6357 + $0x169] sm:$0xff]
    %v7074 = vld [vmem:[%s6357 + $0x171] sm:$0xff]
    %v7075 = vpack.c.bf16 %v7044, %v7043
    %v7076 = vpack.c.bf16 %v7046, %v7045
    %v7077 = vpack.c.bf16 %v7048, %v7047
    %v7078 = vpack.c.bf16 %v7050, %v7049
    %v7079 = vpack.c.bf16 %v7052, %v7051
    %v7080 = vpack.c.bf16 %v7054, %v7053
    %v7081 = vpack.c.bf16 %v7056, %v7055
    %v7082 = vpack.c.bf16 %v7058, %v7057
    %v7083 = vpack.c.bf16 %v7060, %v7059
    %v7084 = vpack.c.bf16 %v7062, %v7061
    %v7085 = vpack.c.bf16 %v7064, %v7063
    %v7086 = vpack.c.bf16 %v7066, %v7065
    %v7087 = vpack.c.bf16 %v7068, %v7067
    %v7088 = vpack.c.bf16 %v7070, %v7069
    %v7089 = vpack.c.bf16 %v7072, %v7071
    %v7090 = vpack.c.bf16 %v7074, %v7073
    %7107 = vrot.lane.b32.xlu0 %v7075, 16
    %v7108 = vpop.permute.xlu0 %7107
    %7109 = vrot.lane.b32.xlu0 %v7076, 16
    %v7110 = vpop.permute.xlu0 %7109
    %7111 = vrot.lane.b32.xlu0 %v7077, 16
    %v7112 = vpop.permute.xlu0 %7111
    %7113 = vrot.lane.b32.xlu0 %v7078, 16
    %v7114 = vpop.permute.xlu0 %7113
    %7115 = vrot.lane.b32.xlu0 %v7079, 16
    %v7116 = vpop.permute.xlu0 %7115
    %7117 = vrot.lane.b32.xlu0 %v7080, 16
    %v7118 = vpop.permute.xlu0 %7117
    %7119 = vrot.lane.b32.xlu0 %v7081, 16
    %v7120 = vpop.permute.xlu0 %7119
    %7121 = vrot.lane.b32.xlu0 %v7082, 16
    %v7122 = vpop.permute.xlu0 %7121
    %7123 = vrot.lane.b32.xlu0 %v7083, 16
    %v7124 = vpop.permute.xlu0 %7123
    %7125 = vrot.lane.b32.xlu0 %v7084, 16
    %v7126 = vpop.permute.xlu0 %7125
    %7127 = vrot.lane.b32.xlu0 %v7085, 16
    %v7128 = vpop.permute.xlu0 %7127
    %7129 = vrot.lane.b32.xlu0 %v7086, 16
    %v7130 = vpop.permute.xlu0 %7129
    %7131 = vrot.lane.b32.xlu0 %v7087, 16
    %v7132 = vpop.permute.xlu0 %7131
    %7133 = vrot.lane.b32.xlu0 %v7088, 16
    %v7134 = vpop.permute.xlu0 %7133
    %7135 = vrot.lane.b32.xlu0 %v7089, 16
    %v7136 = vpop.permute.xlu0 %7135
    %7137 = vrot.lane.b32.xlu0 %v7090, 16
    %v7138 = vpop.permute.xlu0 %7137
    %7155 = vst.msk [vmem:[#allocation3] sm:$0xff] %vm1074, %v7108
    %7156 = vst.msk [vmem:[#allocation3 + $0x8] sm:$0xff] %vm1074, %v7110
    %7157 = vst.msk [vmem:[#allocation3 + $0x10] sm:$0xff] %vm1074, %v7112
    %7158 = vst.msk [vmem:[#allocation3 + $0x18] sm:$0xff] %vm1074, %v7114
    %7159 = vst.msk [vmem:[#allocation3 + $0x20] sm:$0xff] %vm1074, %v7116
    %7160 = vst.msk [vmem:[#allocation3 + $0x28] sm:$0xff] %vm1074, %v7118
    %7161 = vst.msk [vmem:[#allocation3 + $0x30] sm:$0xff] %vm1074, %v7120
    %7162 = vst.msk [vmem:[#allocation3 + $0x38] sm:$0xff] %vm1074, %v7122
    %7163 = vst.msk [vmem:[#allocation3 + $0x40] sm:$0xff] %vm1074, %v7124
    %7164 = vst.msk [vmem:[#allocation3 + $0x48] sm:$0xff] %vm1074, %v7126
    %7165 = vst.msk [vmem:[#allocation3 + $0x50] sm:$0xff] %vm1074, %v7128
    %7166 = vst.msk [vmem:[#allocation3 + $0x58] sm:$0xff] %vm1074, %v7130
    %7167 = vst.msk [vmem:[#allocation3 + $0x60] sm:$0xff] %vm1074, %v7132
    %7168 = vst.msk [vmem:[#allocation3 + $0x68] sm:$0xff] %vm1074, %v7134
    %7169 = vst.msk [vmem:[#allocation3 + $0x70] sm:$0xff] %vm1074, %v7136
    %7170 = vst.msk [vmem:[#allocation3 + $0x78] sm:$0xff] %vm1074, %v7138
    %v7171 = vld [vmem:[%s6357 + $0x2] sm:$0xff]
    %v7172 = vld [vmem:[%s6357 + $0xa] sm:$0xff]
    %v7173 = vld [vmem:[%s6357 + $0x1a] sm:$0xff]
    %v7174 = vld [vmem:[%s6357 + $0x22] sm:$0xff]
    %v7175 = vld [vmem:[%s6357 + $0x32] sm:$0xff]
    %v7176 = vld [vmem:[%s6357 + $0x3a] sm:$0xff]
    %v7177 = vld [vmem:[%s6357 + $0x4a] sm:$0xff]
    %v7178 = vld [vmem:[%s6357 + $0x52] sm:$0xff]
    %v7179 = vld [vmem:[%s6357 + $0x62] sm:$0xff]
    %v7180 = vld [vmem:[%s6357 + $0x6a] sm:$0xff]
    %v7181 = vld [vmem:[%s6357 + $0x7a] sm:$0xff]
    %v7182 = vld [vmem:[%s6357 + $0x82] sm:$0xff]
    %v7183 = vld [vmem:[%s6357 + $0x92] sm:$0xff]
    %v7184 = vld [vmem:[%s6357 + $0x9a] sm:$0xff]
    %v7185 = vld [vmem:[%s6357 + $0xaa] sm:$0xff]
    %v7186 = vld [vmem:[%s6357 + $0xb2] sm:$0xff]
    %v7187 = vld [vmem:[%s6357 + $0xc2] sm:$0xff]
    %v7188 = vld [vmem:[%s6357 + $0xca] sm:$0xff]
    %v7189 = vld [vmem:[%s6357 + $0xda] sm:$0xff]
    %v7190 = vld [vmem:[%s6357 + $0xe2] sm:$0xff]
    %v7191 = vld [vmem:[%s6357 + $0xf2] sm:$0xff]
    %v7192 = vld [vmem:[%s6357 + $0xfa] sm:$0xff]
    %v7193 = vld [vmem:[%s6357 + $0x10a] sm:$0xff]
    %v7194 = vld [vmem:[%s6357 + $0x112] sm:$0xff]
    %v7195 = vld [vmem:[%s6357 + $0x122] sm:$0xff]
    %v7196 = vld [vmem:[%s6357 + $0x12a] sm:$0xff]
    %v7197 = vld [vmem:[%s6357 + $0x13a] sm:$0xff]
    %v7198 = vld [vmem:[%s6357 + $0x142] sm:$0xff]
    %v7199 = vld [vmem:[%s6357 + $0x152] sm:$0xff]
    %v7200 = vld [vmem:[%s6357 + $0x15a] sm:$0xff]
    %v7201 = vld [vmem:[%s6357 + $0x16a] sm:$0xff]
    %v7202 = vld [vmem:[%s6357 + $0x172] sm:$0xff]
    %v7203 = vpack.c.bf16 %v7172, %v7171
    %v7204 = vpack.c.bf16 %v7174, %v7173
    %v7205 = vpack.c.bf16 %v7176, %v7175
    %v7206 = vpack.c.bf16 %v7178, %v7177
    %v7207 = vpack.c.bf16 %v7180, %v7179
    %v7208 = vpack.c.bf16 %v7182, %v7181
    %v7209 = vpack.c.bf16 %v7184, %v7183
    %v7210 = vpack.c.bf16 %v7186, %v7185
    %v7211 = vpack.c.bf16 %v7188, %v7187
    %v7212 = vpack.c.bf16 %v7190, %v7189
    %v7213 = vpack.c.bf16 %v7192, %v7191
    %v7214 = vpack.c.bf16 %v7194, %v7193
    %v7215 = vpack.c.bf16 %v7196, %v7195
    %v7216 = vpack.c.bf16 %v7198, %v7197
    %v7217 = vpack.c.bf16 %v7200, %v7199
    %v7218 = vpack.c.bf16 %v7202, %v7201
    %7235 = vrot.lane.b32.xlu0 %v7203, 20
    %v7236 = vpop.permute.xlu0 %7235
    %7237 = vrot.lane.b32.xlu0 %v7204, 20
    %v7238 = vpop.permute.xlu0 %7237
    %7239 = vrot.lane.b32.xlu0 %v7205, 20
    %v7240 = vpop.permute.xlu0 %7239
    %7241 = vrot.lane.b32.xlu0 %v7206, 20
    %v7242 = vpop.permute.xlu0 %7241
    %7243 = vrot.lane.b32.xlu0 %v7207, 20
    %v7244 = vpop.permute.xlu0 %7243
    %7245 = vrot.lane.b32.xlu0 %v7208, 20
    %v7246 = vpop.permute.xlu0 %7245
    %7247 = vrot.lane.b32.xlu0 %v7209, 20
    %v7248 = vpop.permute.xlu0 %7247
    %7249 = vrot.lane.b32.xlu0 %v7210, 20
    %v7250 = vpop.permute.xlu0 %7249
    %7251 = vrot.lane.b32.xlu0 %v7211, 20
    %v7252 = vpop.permute.xlu0 %7251
    %7253 = vrot.lane.b32.xlu0 %v7212, 20
    %v7254 = vpop.permute.xlu0 %7253
    %7255 = vrot.lane.b32.xlu0 %v7213, 20
    %v7256 = vpop.permute.xlu0 %7255
    %7257 = vrot.lane.b32.xlu0 %v7214, 20
    %v7258 = vpop.permute.xlu0 %7257
    %7259 = vrot.lane.b32.xlu0 %v7215, 20
    %v7260 = vpop.permute.xlu0 %7259
    %7261 = vrot.lane.b32.xlu0 %v7216, 20
    %v7262 = vpop.permute.xlu0 %7261
    %7263 = vrot.lane.b32.xlu0 %v7217, 20
    %v7264 = vpop.permute.xlu0 %7263
    %7265 = vrot.lane.b32.xlu0 %v7218, 20
    %v7266 = vpop.permute.xlu0 %7265
    %7283 = vst.msk [vmem:[#allocation3] sm:$0xff] %vm1331, %v7236
    %7284 = vst.msk [vmem:[#allocation3 + $0x8] sm:$0xff] %vm1331, %v7238
    %7285 = vst.msk [vmem:[#allocation3 + $0x10] sm:$0xff] %vm1331, %v7240
    %7286 = vst.msk [vmem:[#allocation3 + $0x18] sm:$0xff] %vm1331, %v7242
    %7287 = vst.msk [vmem:[#allocation3 + $0x20] sm:$0xff] %vm1331, %v7244
    %7288 = vst.msk [vmem:[#allocation3 + $0x28] sm:$0xff] %vm1331, %v7246
    %7289 = vst.msk [vmem:[#allocation3 + $0x30] sm:$0xff] %vm1331, %v7248
    %7290 = vst.msk [vmem:[#allocation3 + $0x38] sm:$0xff] %vm1331, %v7250
    %7291 = vst.msk [vmem:[#allocation3 + $0x40] sm:$0xff] %vm1331, %v7252
    %7292 = vst.msk [vmem:[#allocation3 + $0x48] sm:$0xff] %vm1331, %v7254
    %7293 = vst.msk [vmem:[#allocation3 + $0x50] sm:$0xff] %vm1331, %v7256
    %7294 = vst.msk [vmem:[#allocation3 + $0x58] sm:$0xff] %vm1331, %v7258
    %7295 = vst.msk [vmem:[#allocation3 + $0x60] sm:$0xff] %vm1331, %v7260
    %7296 = vst.msk [vmem:[#allocation3 + $0x68] sm:$0xff] %vm1331, %v7262
    %7297 = vst.msk [vmem:[#allocation3 + $0x70] sm:$0xff] %vm1331, %v7264
    %7298 = vst.msk [vmem:[#allocation3 + $0x78] sm:$0xff] %vm1331, %v7266
    %s7299 = scalar_lea.vmem [#allocation4], 48
    %v7300 = vld [vmem:[%s7299] sm:$0xff]
    %v7301 = vld [vmem:[%s7299 + $0x8] sm:$0xff]
    %v7302 = vld [vmem:[%s7299 + $0x18] sm:$0xff]
    %v7303 = vld [vmem:[%s7299 + $0x20] sm:$0xff]
    %v7304 = vld [vmem:[%s7299 + $0x30] sm:$0xff]
    %v7305 = vld [vmem:[%s7299 + $0x38] sm:$0xff]
    %v7306 = vld [vmem:[%s7299 + $0x48] sm:$0xff]
    %v7307 = vld [vmem:[%s7299 + $0x50] sm:$0xff]
    %v7308 = vld [vmem:[%s7299 + $0x60] sm:$0xff]
    %v7309 = vld [vmem:[%s7299 + $0x68] sm:$0xff]
    %v7310 = vld [vmem:[%s7299 + $0x78] sm:$0xff]
    %v7311 = vld [vmem:[%s7299 + $0x80] sm:$0xff]
    %v7312 = vld [vmem:[%s7299 + $0x90] sm:$0xff]
    %v7313 = vld [vmem:[%s7299 + $0x98] sm:$0xff]
    %v7314 = vld [vmem:[%s7299 + $0xa8] sm:$0xff]
    %v7315 = vld [vmem:[%s7299 + $0xb0] sm:$0xff]
    %v7316 = vld [vmem:[%s7299 + $0xc0] sm:$0xff]
    %v7317 = vld [vmem:[%s7299 + $0xc8] sm:$0xff]
    %v7318 = vld [vmem:[%s7299 + $0xd8] sm:$0xff]
    %v7319 = vld [vmem:[%s7299 + $0xe0] sm:$0xff]
    %v7320 = vld [vmem:[%s7299 + $0xf0] sm:$0xff]
    %v7321 = vld [vmem:[%s7299 + $0xf8] sm:$0xff]
    %v7322 = vld [vmem:[%s7299 + $0x108] sm:$0xff]
    %v7323 = vld [vmem:[%s7299 + $0x110] sm:$0xff]
    %v7324 = vld [vmem:[%s7299 + $0x120] sm:$0xff]
    %v7325 = vld [vmem:[%s7299 + $0x128] sm:$0xff]
    %v7326 = vld [vmem:[%s7299 + $0x138] sm:$0xff]
    %v7327 = vld [vmem:[%s7299 + $0x140] sm:$0xff]
    %v7328 = vld [vmem:[%s7299 + $0x150] sm:$0xff]
    %v7329 = vld [vmem:[%s7299 + $0x158] sm:$0xff]
    %v7330 = vld [vmem:[%s7299 + $0x168] sm:$0xff]
    %v7331 = vld [vmem:[%s7299 + $0x170] sm:$0xff]
    %v7332 = vpack.c.bf16 %v7301, %v7300
    %v7333 = vpack.c.bf16 %v7303, %v7302
    %v7334 = vpack.c.bf16 %v7305, %v7304
    %v7335 = vpack.c.bf16 %v7307, %v7306
    %v7336 = vpack.c.bf16 %v7309, %v7308
    %v7337 = vpack.c.bf16 %v7311, %v7310
    %v7338 = vpack.c.bf16 %v7313, %v7312
    %v7339 = vpack.c.bf16 %v7315, %v7314
    %v7340 = vpack.c.bf16 %v7317, %v7316
    %v7341 = vpack.c.bf16 %v7319, %v7318
    %v7342 = vpack.c.bf16 %v7321, %v7320
    %v7343 = vpack.c.bf16 %v7323, %v7322
    %v7344 = vpack.c.bf16 %v7325, %v7324
    %v7345 = vpack.c.bf16 %v7327, %v7326
    %v7346 = vpack.c.bf16 %v7329, %v7328
    %v7347 = vpack.c.bf16 %v7331, %v7330
    %7364 = vrot.lane.b32.xlu0 %v7332, 24
    %v7365 = vpop.permute.xlu0 %7364
    %7366 = vrot.lane.b32.xlu0 %v7333, 24
    %v7367 = vpop.permute.xlu0 %7366
    %7368 = vrot.lane.b32.xlu0 %v7334, 24
    %v7369 = vpop.permute.xlu0 %7368
    %7370 = vrot.lane.b32.xlu0 %v7335, 24
    %v7371 = vpop.permute.xlu0 %7370
    %7372 = vrot.lane.b32.xlu0 %v7336, 24
    %v7373 = vpop.permute.xlu0 %7372
    %7374 = vrot.lane.b32.xlu0 %v7337, 24
    %v7375 = vpop.permute.xlu0 %7374
    %7376 = vrot.lane.b32.xlu0 %v7338, 24
    %v7377 = vpop.permute.xlu0 %7376
    %7378 = vrot.lane.b32.xlu0 %v7339, 24
    %v7379 = vpop.permute.xlu0 %7378
    %7380 = vrot.lane.b32.xlu0 %v7340, 24
    %v7381 = vpop.permute.xlu0 %7380
    %7382 = vrot.lane.b32.xlu0 %v7341, 24
    %v7383 = vpop.permute.xlu0 %7382
    %7384 = vrot.lane.b32.xlu0 %v7342, 24
    %v7385 = vpop.permute.xlu0 %7384
    %7386 = vrot.lane.b32.xlu0 %v7343, 24
    %v7387 = vpop.permute.xlu0 %7386
    %7388 = vrot.lane.b32.xlu0 %v7344, 24
    %v7389 = vpop.permute.xlu0 %7388
    %7390 = vrot.lane.b32.xlu0 %v7345, 24
    %v7391 = vpop.permute.xlu0 %7390
    %7392 = vrot.lane.b32.xlu0 %v7346, 24
    %v7393 = vpop.permute.xlu0 %7392
    %7394 = vrot.lane.b32.xlu0 %v7347, 24
    %v7395 = vpop.permute.xlu0 %7394
    %7412 = vst.msk [vmem:[#allocation3] sm:$0xff] %vm1590, %v7365
    %7413 = vst.msk [vmem:[#allocation3 + $0x8] sm:$0xff] %vm1590, %v7367
    %7414 = vst.msk [vmem:[#allocation3 + $0x10] sm:$0xff] %vm1590, %v7369
    %7415 = vst.msk [vmem:[#allocation3 + $0x18] sm:$0xff] %vm1590, %v7371
    %7416 = vst.msk [vmem:[#allocation3 + $0x20] sm:$0xff] %vm1590, %v7373
    %7417 = vst.msk [vmem:[#allocation3 + $0x28] sm:$0xff] %vm1590, %v7375
    %7418 = vst.msk [vmem:[#allocation3 + $0x30] sm:$0xff] %vm1590, %v7377
    %7419 = vst.msk [vmem:[#allocation3 + $0x38] sm:$0xff] %vm1590, %v7379
    %7420 = vst.msk [vmem:[#allocation3 + $0x40] sm:$0xff] %vm1590, %v7381
    %7421 = vst.msk [vmem:[#allocation3 + $0x48] sm:$0xff] %vm1590, %v7383
    %7422 = vst.msk [vmem:[#allocation3 + $0x50] sm:$0xff] %vm1590, %v7385
    %7423 = vst.msk [vmem:[#allocation3 + $0x58] sm:$0xff] %vm1590, %v7387
    %7424 = vst.msk [vmem:[#allocation3 + $0x60] sm:$0xff] %vm1590, %v7389
    %7425 = vst.msk [vmem:[#allocation3 + $0x68] sm:$0xff] %vm1590, %v7391
    %7426 = vst.msk [vmem:[#allocation3 + $0x70] sm:$0xff] %vm1590, %v7393
    %7427 = vst.msk [vmem:[#allocation3 + $0x78] sm:$0xff] %vm1590, %v7395
    %v7428 = vld [vmem:[%s7299 + $0x1] sm:$0xff]
    %v7429 = vld [vmem:[%s7299 + $0x9] sm:$0xff]
    %v7430 = vld [vmem:[%s7299 + $0x19] sm:$0xff]
    %v7431 = vld [vmem:[%s7299 + $0x21] sm:$0xff]
    %v7432 = vld [vmem:[%s7299 + $0x31] sm:$0xff]
    %v7433 = vld [vmem:[%s7299 + $0x39] sm:$0xff]
    %v7434 = vld [vmem:[%s7299 + $0x49] sm:$0xff]
    %v7435 = vld [vmem:[%s7299 + $0x51] sm:$0xff]
    %v7436 = vld [vmem:[%s7299 + $0x61] sm:$0xff]
    %v7437 = vld [vmem:[%s7299 + $0x69] sm:$0xff]
    %v7438 = vld [vmem:[%s7299 + $0x79] sm:$0xff]
    %v7439 = vld [vmem:[%s7299 + $0x81] sm:$0xff]
    %v7440 = vld [vmem:[%s7299 + $0x91] sm:$0xff]
    %v7441 = vld [vmem:[%s7299 + $0x99] sm:$0xff]
    %v7442 = vld [vmem:[%s7299 + $0xa9] sm:$0xff]
    %v7443 = vld [vmem:[%s7299 + $0xb1] sm:$0xff]
    %v7444 = vld [vmem:[%s7299 + $0xc1] sm:$0xff]
    %v7445 = vld [vmem:[%s7299 + $0xc9] sm:$0xff]
    %v7446 = vld [vmem:[%s7299 + $0xd9] sm:$0xff]
    %v7447 = vld [vmem:[%s7299 + $0xe1] sm:$0xff]
    %v7448 = vld [vmem:[%s7299 + $0xf1] sm:$0xff]
    %v7449 = vld [vmem:[%s7299 + $0xf9] sm:$0xff]
    %v7450 = vld [vmem:[%s7299 + $0x109] sm:$0xff]
    %v7451 = vld [vmem:[%s7299 + $0x111] sm:$0xff]
    %v7452 = vld [vmem:[%s7299 + $0x121] sm:$0xff]
    %v7453 = vld [vmem:[%s7299 + $0x129] sm:$0xff]
    %v7454 = vld [vmem:[%s7299 + $0x139] sm:$0xff]
    %v7455 = vld [vmem:[%s7299 + $0x141] sm:$0xff]
    %v7456 = vld [vmem:[%s7299 + $0x151] sm:$0xff]
    %v7457 = vld [vmem:[%s7299 + $0x159] sm:$0xff]
    %v7458 = vld [vmem:[%s7299 + $0x169] sm:$0xff]
    %v7459 = vld [vmem:[%s7299 + $0x171] sm:$0xff]
    %v7460 = vpack.c.bf16 %v7429, %v7428
    %v7461 = vpack.c.bf16 %v7431, %v7430
    %v7462 = vpack.c.bf16 %v7433, %v7432
    %v7463 = vpack.c.bf16 %v7435, %v7434
    %v7464 = vpack.c.bf16 %v7437, %v7436
    %v7465 = vpack.c.bf16 %v7439, %v7438
    %v7466 = vpack.c.bf16 %v7441, %v7440
    %v7467 = vpack.c.bf16 %v7443, %v7442
    %v7468 = vpack.c.bf16 %v7445, %v7444
    %v7469 = vpack.c.bf16 %v7447, %v7446
    %v7470 = vpack.c.bf16 %v7449, %v7448
    %v7471 = vpack.c.bf16 %v7451, %v7450
    %v7472 = vpack.c.bf16 %v7453, %v7452
    %v7473 = vpack.c.bf16 %v7455, %v7454
    %v7474 = vpack.c.bf16 %v7457, %v7456
    %v7475 = vpack.c.bf16 %v7459, %v7458
    %7492 = vrot.lane.b32.xlu0 %v7460, 28
    %v7493 = vpop.permute.xlu0 %7492
    %7494 = vrot.lane.b32.xlu0 %v7461, 28
    %v7495 = vpop.permute.xlu0 %7494
    %7496 = vrot.lane.b32.xlu0 %v7462, 28
    %v7497 = vpop.permute.xlu0 %7496
    %7498 = vrot.lane.b32.xlu0 %v7463, 28
    %v7499 = vpop.permute.xlu0 %7498
    %7500 = vrot.lane.b32.xlu0 %v7464, 28
    %v7501 = vpop.permute.xlu0 %7500
    %7502 = vrot.lane.b32.xlu0 %v7465, 28
    %v7503 = vpop.permute.xlu0 %7502
    %7504 = vrot.lane.b32.xlu0 %v7466, 28
    %v7505 = vpop.permute.xlu0 %7504
    %7506 = vrot.lane.b32.xlu0 %v7467, 28
    %v7507 = vpop.permute.xlu0 %7506
    %7508 = vrot.lane.b32.xlu0 %v7468, 28
    %v7509 = vpop.permute.xlu0 %7508
    %7510 = vrot.lane.b32.xlu0 %v7469, 28
    %v7511 = vpop.permute.xlu0 %7510
    %7512 = vrot.lane.b32.xlu0 %v7470, 28
    %v7513 = vpop.permute.xlu0 %7512
    %7514 = vrot.lane.b32.xlu0 %v7471, 28
    %v7515 = vpop.permute.xlu0 %7514
    %7516 = vrot.lane.b32.xlu0 %v7472, 28
    %v7517 = vpop.permute.xlu0 %7516
    %7518 = vrot.lane.b32.xlu0 %v7473, 28
    %v7519 = vpop.permute.xlu0 %7518
    %7520 = vrot.lane.b32.xlu0 %v7474, 28
    %v7521 = vpop.permute.xlu0 %7520
    %7522 = vrot.lane.b32.xlu0 %v7475, 28
    %v7523 = vpop.permute.xlu0 %7522
    %7540 = vst.msk [vmem:[#allocation3] sm:$0xff] %vm1847, %v7493
    %7541 = vst.msk [vmem:[#allocation3 + $0x8] sm:$0xff] %vm1847, %v7495
    %7542 = vst.msk [vmem:[#allocation3 + $0x10] sm:$0xff] %vm1847, %v7497
    %7543 = vst.msk [vmem:[#allocation3 + $0x18] sm:$0xff] %vm1847, %v7499
    %7544 = vst.msk [vmem:[#allocation3 + $0x20] sm:$0xff] %vm1847, %v7501
    %7545 = vst.msk [vmem:[#allocation3 + $0x28] sm:$0xff] %vm1847, %v7503
    %7546 = vst.msk [vmem:[#allocation3 + $0x30] sm:$0xff] %vm1847, %v7505
    %7547 = vst.msk [vmem:[#allocation3 + $0x38] sm:$0xff] %vm1847, %v7507
    %7548 = vst.msk [vmem:[#allocation3 + $0x40] sm:$0xff] %vm1847, %v7509
    %7549 = vst.msk [vmem:[#allocation3 + $0x48] sm:$0xff] %vm1847, %v7511
    %7550 = vst.msk [vmem:[#allocation3 + $0x50] sm:$0xff] %vm1847, %v7513
    %7551 = vst.msk [vmem:[#allocation3 + $0x58] sm:$0xff] %vm1847, %v7515
    %7552 = vst.msk [vmem:[#allocation3 + $0x60] sm:$0xff] %vm1847, %v7517
    %7553 = vst.msk [vmem:[#allocation3 + $0x68] sm:$0xff] %vm1847, %v7519
    %7554 = vst.msk [vmem:[#allocation3 + $0x70] sm:$0xff] %vm1847, %v7521
    %7555 = vst.msk [vmem:[#allocation3 + $0x78] sm:$0xff] %vm1847, %v7523
    %v7556 = vld [vmem:[%s7299 + $0x2] sm:$0xff]
    %v7557 = vld [vmem:[%s7299 + $0xa] sm:$0xff]
    %v7558 = vld [vmem:[%s7299 + $0x1a] sm:$0xff]
    %v7559 = vld [vmem:[%s7299 + $0x22] sm:$0xff]
    %v7560 = vld [vmem:[%s7299 + $0x32] sm:$0xff]
    %v7561 = vld [vmem:[%s7299 + $0x3a] sm:$0xff]
    %v7562 = vld [vmem:[%s7299 + $0x4a] sm:$0xff]
    %v7563 = vld [vmem:[%s7299 + $0x52] sm:$0xff]
    %v7564 = vld [vmem:[%s7299 + $0x62] sm:$0xff]
    %v7565 = vld [vmem:[%s7299 + $0x6a] sm:$0xff]
    %v7566 = vld [vmem:[%s7299 + $0x7a] sm:$0xff]
    %v7567 = vld [vmem:[%s7299 + $0x82] sm:$0xff]
    %v7568 = vld [vmem:[%s7299 + $0x92] sm:$0xff]
    %v7569 = vld [vmem:[%s7299 + $0x9a] sm:$0xff]
    %v7570 = vld [vmem:[%s7299 + $0xaa] sm:$0xff]
    %v7571 = vld [vmem:[%s7299 + $0xb2] sm:$0xff]
    %v7572 = vld [vmem:[%s7299 + $0xc2] sm:$0xff]
    %v7573 = vld [vmem:[%s7299 + $0xca] sm:$0xff]
    %v7574 = vld [vmem:[%s7299 + $0xda] sm:$0xff]
    %v7575 = vld [vmem:[%s7299 + $0xe2] sm:$0xff]
    %v7576 = vld [vmem:[%s7299 + $0xf2] sm:$0xff]
    %v7577 = vld [vmem:[%s7299 + $0xfa] sm:$0xff]
    %v7578 = vld [vmem:[%s7299 + $0x10a] sm:$0xff]
    %v7579 = vld [vmem:[%s7299 + $0x112] sm:$0xff]
    %v7580 = vld [vmem:[%s7299 + $0x122] sm:$0xff]
    %v7581 = vld [vmem:[%s7299 + $0x12a] sm:$0xff]
    %v7582 = vld [vmem:[%s7299 + $0x13a] sm:$0xff]
    %v7583 = vld [vmem:[%s7299 + $0x142] sm:$0xff]
    %v7584 = vld [vmem:[%s7299 + $0x152] sm:$0xff]
    %v7585 = vld [vmem:[%s7299 + $0x15a] sm:$0xff]
    %v7586 = vld [vmem:[%s7299 + $0x16a] sm:$0xff]
    %v7587 = vld [vmem:[%s7299 + $0x172] sm:$0xff]
    %v7588 = vpack.c.bf16 %v7557, %v7556
    %v7589 = vpack.c.bf16 %v7559, %v7558
    %v7590 = vpack.c.bf16 %v7561, %v7560
    %v7591 = vpack.c.bf16 %v7563, %v7562
    %v7592 = vpack.c.bf16 %v7565, %v7564
    %v7593 = vpack.c.bf16 %v7567, %v7566
    %v7594 = vpack.c.bf16 %v7569, %v7568
    %v7595 = vpack.c.bf16 %v7571, %v7570
    %v7596 = vpack.c.bf16 %v7573, %v7572
    %v7597 = vpack.c.bf16 %v7575, %v7574
    %v7598 = vpack.c.bf16 %v7577, %v7576
    %v7599 = vpack.c.bf16 %v7579, %v7578
    %v7600 = vpack.c.bf16 %v7581, %v7580
    %v7601 = vpack.c.bf16 %v7583, %v7582
    %v7602 = vpack.c.bf16 %v7585, %v7584
    %v7603 = vpack.c.bf16 %v7587, %v7586
    %7620 = vrot.lane.b32.xlu0 %v7588, 32
    %v7621 = vpop.permute.xlu0 %7620
    %7622 = vrot.lane.b32.xlu0 %v7589, 32
    %v7623 = vpop.permute.xlu0 %7622
    %7624 = vrot.lane.b32.xlu0 %v7590, 32
    %v7625 = vpop.permute.xlu0 %7624
    %7626 = vrot.lane.b32.xlu0 %v7591, 32
    %v7627 = vpop.permute.xlu0 %7626
    %7628 = vrot.lane.b32.xlu0 %v7592, 32
    %v7629 = vpop.permute.xlu0 %7628
    %7630 = vrot.lane.b32.xlu0 %v7593, 32
    %v7631 = vpop.permute.xlu0 %7630
    %7632 = vrot.lane.b32.xlu0 %v7594, 32
    %v7633 = vpop.permute.xlu0 %7632
    %7634 = vrot.lane.b32.xlu0 %v7595, 32
    %v7635 = vpop.permute.xlu0 %7634
    %7636 = vrot.lane.b32.xlu0 %v7596, 32
    %v7637 = vpop.permute.xlu0 %7636
    %7638 = vrot.lane.b32.xlu0 %v7597, 32
    %v7639 = vpop.permute.xlu0 %7638
    %7640 = vrot.lane.b32.xlu0 %v7598, 32
    %v7641 = vpop.permute.xlu0 %7640
    %7642 = vrot.lane.b32.xlu0 %v7599, 32
    %v7643 = vpop.permute.xlu0 %7642
    %7644 = vrot.lane.b32.xlu0 %v7600, 32
    %v7645 = vpop.permute.xlu0 %7644
    %7646 = vrot.lane.b32.xlu0 %v7601, 32
    %v7647 = vpop.permute.xlu0 %7646
    %7648 = vrot.lane.b32.xlu0 %v7602, 32
    %v7649 = vpop.permute.xlu0 %7648
    %7650 = vrot.lane.b32.xlu0 %v7603, 32
    %v7651 = vpop.permute.xlu0 %7650
    %7668 = vst.msk [vmem:[#allocation3] sm:$0xff] %vm2104, %v7621
    %7669 = vst.msk [vmem:[#allocation3 + $0x8] sm:$0xff] %vm2104, %v7623
    %7670 = vst.msk [vmem:[#allocation3 + $0x10] sm:$0xff] %vm2104, %v7625
    %7671 = vst.msk [vmem:[#allocation3 + $0x18] sm:$0xff] %vm2104, %v7627
    %7672 = vst.msk [vmem:[#allocation3 + $0x20] sm:$0xff] %vm2104, %v7629
    %7673 = vst.msk [vmem:[#allocation3 + $0x28] sm:$0xff] %vm2104, %v7631
    %7674 = vst.msk [vmem:[#allocation3 + $0x30] sm:$0xff] %vm2104, %v7633
    %7675 = vst.msk [vmem:[#allocation3 + $0x38] sm:$0xff] %vm2104, %v7635
    %7676 = vst.msk [vmem:[#allocation3 + $0x40] sm:$0xff] %vm2104, %v7637
    %7677 = vst.msk [vmem:[#allocation3 + $0x48] sm:$0xff] %vm2104, %v7639
    %7678 = vst.msk [vmem:[#allocation3 + $0x50] sm:$0xff] %vm2104, %v7641
    %7679 = vst.msk [vmem:[#allocation3 + $0x58] sm:$0xff] %vm2104, %v7643
    %7680 = vst.msk [vmem:[#allocation3 + $0x60] sm:$0xff] %vm2104, %v7645
    %7681 = vst.msk [vmem:[#allocation3 + $0x68] sm:$0xff] %vm2104, %v7647
    %7682 = vst.msk [vmem:[#allocation3 + $0x70] sm:$0xff] %vm2104, %v7649
    %7683 = vst.msk [vmem:[#allocation3 + $0x78] sm:$0xff] %vm2104, %v7651
    %v7684 = vld [vmem:[%s6390] sm:$0xff]
    %v7685 = vld [vmem:[%s6390 + $0x8] sm:$0xff]
    %v7686 = vld [vmem:[%s6390 + $0x18] sm:$0xff]
    %v7687 = vld [vmem:[%s6390 + $0x20] sm:$0xff]
    %v7688 = vld [vmem:[%s6390 + $0x30] sm:$0xff]
    %v7689 = vld [vmem:[%s6390 + $0x38] sm:$0xff]
    %v7690 = vld [vmem:[%s6390 + $0x48] sm:$0xff]
    %v7691 = vld [vmem:[%s6390 + $0x50] sm:$0xff]
    %v7692 = vld [vmem:[%s6390 + $0x60] sm:$0xff]
    %v7693 = vld [vmem:[%s6390 + $0x68] sm:$0xff]
    %v7694 = vld [vmem:[%s6390 + $0x78] sm:$0xff]
    %v7695 = vld [vmem:[%s6390 + $0x80] sm:$0xff]
    %v7696 = vld [vmem:[%s6390 + $0x90] sm:$0xff]
    %v7697 = vld [vmem:[%s6390 + $0x98] sm:$0xff]
    %v7698 = vld [vmem:[%s6390 + $0xa8] sm:$0xff]
    %v7699 = vld [vmem:[%s6390 + $0xb0] sm:$0xff]
    %v7700 = vld [vmem:[%s6390 + $0xc0] sm:$0xff]
    %v7701 = vld [vmem:[%s6390 + $0xc8] sm:$0xff]
    %v7702 = vld [vmem:[%s6390 + $0xd8] sm:$0xff]
    %v7703 = vld [vmem:[%s6390 + $0xe0] sm:$0xff]
    %v7704 = vld [vmem:[%s6390 + $0xf0] sm:$0xff]
    %v7705 = vld [vmem:[%s6390 + $0xf8] sm:$0xff]
    %v7706 = vld [vmem:[%s6390 + $0x108] sm:$0xff]
    %v7707 = vld [vmem:[%s6390 + $0x110] sm:$0xff]
    %v7708 = vld [vmem:[%s6390 + $0x120] sm:$0xff]
    %v7709 = vld [vmem:[%s6390 + $0x128] sm:$0xff]
    %v7710 = vld [vmem:[%s6390 + $0x138] sm:$0xff]
    %v7711 = vld [vmem:[%s6390 + $0x140] sm:$0xff]
    %v7712 = vld [vmem:[%s6390 + $0x150] sm:$0xff]
    %v7713 = vld [vmem:[%s6390 + $0x158] sm:$0xff]
    %v7714 = vld [vmem:[%s6390 + $0x168] sm:$0xff]
    %v7715 = vld [vmem:[%s6390 + $0x170] sm:$0xff]
    %v7716 = vpack.c.bf16 %v7685, %v7684
    %v7717 = vpack.c.bf16 %v7687, %v7686
    %v7718 = vpack.c.bf16 %v7689, %v7688
    %v7719 = vpack.c.bf16 %v7691, %v7690
    %v7720 = vpack.c.bf16 %v7693, %v7692
    %v7721 = vpack.c.bf16 %v7695, %v7694
    %v7722 = vpack.c.bf16 %v7697, %v7696
    %v7723 = vpack.c.bf16 %v7699, %v7698
    %v7724 = vpack.c.bf16 %v7701, %v7700
    %v7725 = vpack.c.bf16 %v7703, %v7702
    %v7726 = vpack.c.bf16 %v7705, %v7704
    %v7727 = vpack.c.bf16 %v7707, %v7706
    %v7728 = vpack.c.bf16 %v7709, %v7708
    %v7729 = vpack.c.bf16 %v7711, %v7710
    %v7730 = vpack.c.bf16 %v7713, %v7712
    %v7731 = vpack.c.bf16 %v7715, %v7714
    %7732 = vst.msk [vmem:[#allocation3 + $0x80] sm:$0xff] %vm108, %v7716
    %7733 = vst.msk [vmem:[#allocation3 + $0x88] sm:$0xff] %vm108, %v7717
    %7734 = vst.msk [vmem:[#allocation3 + $0x90] sm:$0xff] %vm108, %v7718
    %7735 = vst.msk [vmem:[#allocation3 + $0x98] sm:$0xff] %vm108, %v7719
    %7736 = vst.msk [vmem:[#allocation3 + $0xa0] sm:$0xff] %vm108, %v7720
    %7737 = vst.msk [vmem:[#allocation3 + $0xa8] sm:$0xff] %vm108, %v7721
    %7738 = vst.msk [vmem:[#allocation3 + $0xb0] sm:$0xff] %vm108, %v7722
    %7739 = vst.msk [vmem:[#allocation3 + $0xb8] sm:$0xff] %vm108, %v7723
    %7740 = vst.msk [vmem:[#allocation3 + $0xc0] sm:$0xff] %vm108, %v7724
    %7741 = vst.msk [vmem:[#allocation3 + $0xc8] sm:$0xff] %vm108, %v7725
    %7742 = vst.msk [vmem:[#allocation3 + $0xd0] sm:$0xff] %vm108, %v7726
    %7743 = vst.msk [vmem:[#allocation3 + $0xd8] sm:$0xff] %vm108, %v7727
    %7744 = vst.msk [vmem:[#allocation3 + $0xe0] sm:$0xff] %vm108, %v7728
    %7745 = vst.msk [vmem:[#allocation3 + $0xe8] sm:$0xff] %vm108, %v7729
    %7746 = vst.msk [vmem:[#allocation3 + $0xf0] sm:$0xff] %vm108, %v7730
    %7747 = vst.msk [vmem:[#allocation3 + $0xf8] sm:$0xff] %vm108, %v7731
    %v7748 = vld [vmem:[%s6390 + $0x1] sm:$0xff]
    %v7749 = vld [vmem:[%s6390 + $0x9] sm:$0xff]
    %v7750 = vld [vmem:[%s6390 + $0x19] sm:$0xff]
    %v7751 = vld [vmem:[%s6390 + $0x21] sm:$0xff]
    %v7752 = vld [vmem:[%s6390 + $0x31] sm:$0xff]
    %v7753 = vld [vmem:[%s6390 + $0x39] sm:$0xff]
    %v7754 = vld [vmem:[%s6390 + $0x49] sm:$0xff]
    %v7755 = vld [vmem:[%s6390 + $0x51] sm:$0xff]
    %v7756 = vld [vmem:[%s6390 + $0x61] sm:$0xff]
    %v7757 = vld [vmem:[%s6390 + $0x69] sm:$0xff]
    %v7758 = vld [vmem:[%s6390 + $0x79] sm:$0xff]
    %v7759 = vld [vmem:[%s6390 + $0x81] sm:$0xff]
    %v7760 = vld [vmem:[%s6390 + $0x91] sm:$0xff]
    %v7761 = vld [vmem:[%s6390 + $0x99] sm:$0xff]
    %v7762 = vld [vmem:[%s6390 + $0xa9] sm:$0xff]
    %v7763 = vld [vmem:[%s6390 + $0xb1] sm:$0xff]
    %v7764 = vld [vmem:[%s6390 + $0xc1] sm:$0xff]
    %v7765 = vld [vmem:[%s6390 + $0xc9] sm:$0xff]
    %v7766 = vld [vmem:[%s6390 + $0xd9] sm:$0xff]
    %v7767 = vld [vmem:[%s6390 + $0xe1] sm:$0xff]
    %v7768 = vld [vmem:[%s6390 + $0xf1] sm:$0xff]
    %v7769 = vld [vmem:[%s6390 + $0xf9] sm:$0xff]
    %v7770 = vld [vmem:[%s6390 + $0x109] sm:$0xff]
    %v7771 = vld [vmem:[%s6390 + $0x111] sm:$0xff]
    %v7772 = vld [vmem:[%s6390 + $0x121] sm:$0xff]
    %v7773 = vld [vmem:[%s6390 + $0x129] sm:$0xff]
    %v7774 = vld [vmem:[%s6390 + $0x139] sm:$0xff]
    %v7775 = vld [vmem:[%s6390 + $0x141] sm:$0xff]
    %v7776 = vld [vmem:[%s6390 + $0x151] sm:$0xff]
    %v7777 = vld [vmem:[%s6390 + $0x159] sm:$0xff]
    %v7778 = vld [vmem:[%s6390 + $0x169] sm:$0xff]
    %v7779 = vld [vmem:[%s6390 + $0x171] sm:$0xff]
    %v7780 = vpack.c.bf16 %v7749, %v7748
    %v7781 = vpack.c.bf16 %v7751, %v7750
    %v7782 = vpack.c.bf16 %v7753, %v7752
    %v7783 = vpack.c.bf16 %v7755, %v7754
    %v7784 = vpack.c.bf16 %v7757, %v7756
    %v7785 = vpack.c.bf16 %v7759, %v7758
    %v7786 = vpack.c.bf16 %v7761, %v7760
    %v7787 = vpack.c.bf16 %v7763, %v7762
    %v7788 = vpack.c.bf16 %v7765, %v7764
    %v7789 = vpack.c.bf16 %v7767, %v7766
    %v7790 = vpack.c.bf16 %v7769, %v7768
    %v7791 = vpack.c.bf16 %v7771, %v7770
    %v7792 = vpack.c.bf16 %v7773, %v7772
    %v7793 = vpack.c.bf16 %v7775, %v7774
    %v7794 = vpack.c.bf16 %v7777, %v7776
    %v7795 = vpack.c.bf16 %v7779, %v7778
    %7812 = vrot.lane.b32.xlu0 %v7780, 4
    %v7813 = vpop.permute.xlu0 %7812
    %7814 = vrot.lane.b32.xlu0 %v7781, 4
    %v7815 = vpop.permute.xlu0 %7814
    %7816 = vrot.lane.b32.xlu0 %v7782, 4
    %v7817 = vpop.permute.xlu0 %7816
    %7818 = vrot.lane.b32.xlu0 %v7783, 4
    %v7819 = vpop.permute.xlu0 %7818
    %7820 = vrot.lane.b32.xlu0 %v7784, 4
    %v7821 = vpop.permute.xlu0 %7820
    %7822 = vrot.lane.b32.xlu0 %v7785, 4
    %v7823 = vpop.permute.xlu0 %7822
    %7824 = vrot.lane.b32.xlu0 %v7786, 4
    %v7825 = vpop.permute.xlu0 %7824
    %7826 = vrot.lane.b32.xlu0 %v7787, 4
    %v7827 = vpop.permute.xlu0 %7826
    %7828 = vrot.lane.b32.xlu0 %v7788, 4
    %v7829 = vpop.permute.xlu0 %7828
    %7830 = vrot.lane.b32.xlu0 %v7789, 4
    %v7831 = vpop.permute.xlu0 %7830
    %7832 = vrot.lane.b32.xlu0 %v7790, 4
    %v7833 = vpop.permute.xlu0 %7832
    %7834 = vrot.lane.b32.xlu0 %v7791, 4
    %v7835 = vpop.permute.xlu0 %7834
    %7836 = vrot.lane.b32.xlu0 %v7792, 4
    %v7837 = vpop.permute.xlu0 %7836
    %7838 = vrot.lane.b32.xlu0 %v7793, 4
    %v7839 = vpop.permute.xlu0 %7838
    %7840 = vrot.lane.b32.xlu0 %v7794, 4
    %v7841 = vpop.permute.xlu0 %7840
    %7842 = vrot.lane.b32.xlu0 %v7795, 4
    %v7843 = vpop.permute.xlu0 %7842
    %7860 = vst.msk [vmem:[#allocation3 + $0x80] sm:$0xff] %vm301, %v7813
    %7861 = vst.msk [vmem:[#allocation3 + $0x88] sm:$0xff] %vm301, %v7815
    %7862 = vst.msk [vmem:[#allocation3 + $0x90] sm:$0xff] %vm301, %v7817
    %7863 = vst.msk [vmem:[#allocation3 + $0x98] sm:$0xff] %vm301, %v7819
    %7864 = vst.msk [vmem:[#allocation3 + $0xa0] sm:$0xff] %vm301, %v7821
    %7865 = vst.msk [vmem:[#allocation3 + $0xa8] sm:$0xff] %vm301, %v7823
    %7866 = vst.msk [vmem:[#allocation3 + $0xb0] sm:$0xff] %vm301, %v7825
    %7867 = vst.msk [vmem:[#allocation3 + $0xb8] sm:$0xff] %vm301, %v7827
    %7868 = vst.msk [vmem:[#allocation3 + $0xc0] sm:$0xff] %vm301, %v7829
    %7869 = vst.msk [vmem:[#allocation3 + $0xc8] sm:$0xff] %vm301, %v7831
    %7870 = vst.msk [vmem:[#allocation3 + $0xd0] sm:$0xff] %vm301, %v7833
    %7871 = vst.msk [vmem:[#allocation3 + $0xd8] sm:$0xff] %vm301, %v7835
    %7872 = vst.msk [vmem:[#allocation3 + $0xe0] sm:$0xff] %vm301, %v7837
    %7873 = vst.msk [vmem:[#allocation3 + $0xe8] sm:$0xff] %vm301, %v7839
    %7874 = vst.msk [vmem:[#allocation3 + $0xf0] sm:$0xff] %vm301, %v7841
    %7875 = vst.msk [vmem:[#allocation3 + $0xf8] sm:$0xff] %vm301, %v7843
    %v7876 = vld [vmem:[%s6390 + $0x2] sm:$0xff]
    %v7877 = vld [vmem:[%s6390 + $0xa] sm:$0xff]
    %v7878 = vld [vmem:[%s6390 + $0x1a] sm:$0xff]
    %v7879 = vld [vmem:[%s6390 + $0x22] sm:$0xff]
    %v7880 = vld [vmem:[%s6390 + $0x32] sm:$0xff]
    %v7881 = vld [vmem:[%s6390 + $0x3a] sm:$0xff]
    %v7882 = vld [vmem:[%s6390 + $0x4a] sm:$0xff]
    %v7883 = vld [vmem:[%s6390 + $0x52] sm:$0xff]
    %v7884 = vld [vmem:[%s6390 + $0x62] sm:$0xff]
    %v7885 = vld [vmem:[%s6390 + $0x6a] sm:$0xff]
    %v7886 = vld [vmem:[%s6390 + $0x7a] sm:$0xff]
    %v7887 = vld [vmem:[%s6390 + $0x82] sm:$0xff]
    %v7888 = vld [vmem:[%s6390 + $0x92] sm:$0xff]
    %v7889 = vld [vmem:[%s6390 + $0x9a] sm:$0xff]
    %v7890 = vld [vmem:[%s6390 + $0xaa] sm:$0xff]
    %v7891 = vld [vmem:[%s6390 + $0xb2] sm:$0xff]
    %v7892 = vld [vmem:[%s6390 + $0xc2] sm:$0xff]
    %v7893 = vld [vmem:[%s6390 + $0xca] sm:$0xff]
    %v7894 = vld [vmem:[%s6390 + $0xda] sm:$0xff]
    %v7895 = vld [vmem:[%s6390 + $0xe2] sm:$0xff]
    %v7896 = vld [vmem:[%s6390 + $0xf2] sm:$0xff]
    %v7897 = vld [vmem:[%s6390 + $0xfa] sm:$0xff]
    %v7898 = vld [vmem:[%s6390 + $0x10a] sm:$0xff]
    %v7899 = vld [vmem:[%s6390 + $0x112] sm:$0xff]
    %v7900 = vld [vmem:[%s6390 + $0x122] sm:$0xff]
    %v7901 = vld [vmem:[%s6390 + $0x12a] sm:$0xff]
    %v7902 = vld [vmem:[%s6390 + $0x13a] sm:$0xff]
    %v7903 = vld [vmem:[%s6390 + $0x142] sm:$0xff]
    %v7904 = vld [vmem:[%s6390 + $0x152] sm:$0xff]
    %v7905 = vld [vmem:[%s6390 + $0x15a] sm:$0xff]
    %v7906 = vld [vmem:[%s6390 + $0x16a] sm:$0xff]
    %v7907 = vld [vmem:[%s6390 + $0x172] sm:$0xff]
    %v7908 = vpack.c.bf16 %v7877, %v7876
    %v7909 = vpack.c.bf16 %v7879, %v7878
    %v7910 = vpack.c.bf16 %v7881, %v7880
    %v7911 = vpack.c.bf16 %v7883, %v7882
    %v7912 = vpack.c.bf16 %v7885, %v7884
    %v7913 = vpack.c.bf16 %v7887, %v7886
    %v7914 = vpack.c.bf16 %v7889, %v7888
    %v7915 = vpack.c.bf16 %v7891, %v7890
    %v7916 = vpack.c.bf16 %v7893, %v7892
    %v7917 = vpack.c.bf16 %v7895, %v7894
    %v7918 = vpack.c.bf16 %v7897, %v7896
    %v7919 = vpack.c.bf16 %v7899, %v7898
    %v7920 = vpack.c.bf16 %v7901, %v7900
    %v7921 = vpack.c.bf16 %v7903, %v7902
    %v7922 = vpack.c.bf16 %v7905, %v7904
    %v7923 = vpack.c.bf16 %v7907, %v7906
    %7940 = vrot.lane.b32.xlu0 %v7908, 8
    %v7941 = vpop.permute.xlu0 %7940
    %7942 = vrot.lane.b32.xlu0 %v7909, 8
    %v7943 = vpop.permute.xlu0 %7942
    %7944 = vrot.lane.b32.xlu0 %v7910, 8
    %v7945 = vpop.permute.xlu0 %7944
    %7946 = vrot.lane.b32.xlu0 %v7911, 8
    %v7947 = vpop.permute.xlu0 %7946
    %7948 = vrot.lane.b32.xlu0 %v7912, 8
    %v7949 = vpop.permute.xlu0 %7948
    %7950 = vrot.lane.b32.xlu0 %v7913, 8
    %v7951 = vpop.permute.xlu0 %7950
    %7952 = vrot.lane.b32.xlu0 %v7914, 8
    %v7953 = vpop.permute.xlu0 %7952
    %7954 = vrot.lane.b32.xlu0 %v7915, 8
    %v7955 = vpop.permute.xlu0 %7954
    %7956 = vrot.lane.b32.xlu0 %v7916, 8
    %v7957 = vpop.permute.xlu0 %7956
    %7958 = vrot.lane.b32.xlu0 %v7917, 8
    %v7959 = vpop.permute.xlu0 %7958
    %7960 = vrot.lane.b32.xlu0 %v7918, 8
    %v7961 = vpop.permute.xlu0 %7960
    %7962 = vrot.lane.b32.xlu0 %v7919, 8
    %v7963 = vpop.permute.xlu0 %7962
    %7964 = vrot.lane.b32.xlu0 %v7920, 8
    %v7965 = vpop.permute.xlu0 %7964
    %7966 = vrot.lane.b32.xlu0 %v7921, 8
    %v7967 = vpop.permute.xlu0 %7966
    %7968 = vrot.lane.b32.xlu0 %v7922, 8
    %v7969 = vpop.permute.xlu0 %7968
    %7970 = vrot.lane.b32.xlu0 %v7923, 8
    %v7971 = vpop.permute.xlu0 %7970
    %7988 = vst.msk [vmem:[#allocation3 + $0x80] sm:$0xff] %vm558, %v7941
    %7989 = vst.msk [vmem:[#allocation3 + $0x88] sm:$0xff] %vm558, %v7943
    %7990 = vst.msk [vmem:[#allocation3 + $0x90] sm:$0xff] %vm558, %v7945
    %7991 = vst.msk [vmem:[#allocation3 + $0x98] sm:$0xff] %vm558, %v7947
    %7992 = vst.msk [vmem:[#allocation3 + $0xa0] sm:$0xff] %vm558, %v7949
    %7993 = vst.msk [vmem:[#allocation3 + $0xa8] sm:$0xff] %vm558, %v7951
    %7994 = vst.msk [vmem:[#allocation3 + $0xb0] sm:$0xff] %vm558, %v7953
    %7995 = vst.msk [vmem:[#allocation3 + $0xb8] sm:$0xff] %vm558, %v7955
    %7996 = vst.msk [vmem:[#allocation3 + $0xc0] sm:$0xff] %vm558, %v7957
    %7997 = vst.msk [vmem:[#allocation3 + $0xc8] sm:$0xff] %vm558, %v7959
    %7998 = vst.msk [vmem:[#allocation3 + $0xd0] sm:$0xff] %vm558, %v7961
    %7999 = vst.msk [vmem:[#allocation3 + $0xd8] sm:$0xff] %vm558, %v7963
    %8000 = vst.msk [vmem:[#allocation3 + $0xe0] sm:$0xff] %vm558, %v7965
    %8001 = vst.msk [vmem:[#allocation3 + $0xe8] sm:$0xff] %vm558, %v7967
    %8002 = vst.msk [vmem:[#allocation3 + $0xf0] sm:$0xff] %vm558, %v7969
    %8003 = vst.msk [vmem:[#allocation3 + $0xf8] sm:$0xff] %vm558, %v7971
    %v8004 = vld [vmem:[%s6562] sm:$0xff]
    %v8005 = vld [vmem:[%s6562 + $0x8] sm:$0xff]
    %v8006 = vld [vmem:[%s6562 + $0x18] sm:$0xff]
    %v8007 = vld [vmem:[%s6562 + $0x20] sm:$0xff]
    %v8008 = vld [vmem:[%s6562 + $0x30] sm:$0xff]
    %v8009 = vld [vmem:[%s6562 + $0x38] sm:$0xff]
    %v8010 = vld [vmem:[%s6562 + $0x48] sm:$0xff]
    %v8011 = vld [vmem:[%s6562 + $0x50] sm:$0xff]
    %v8012 = vld [vmem:[%s6562 + $0x60] sm:$0xff]
    %v8013 = vld [vmem:[%s6562 + $0x68] sm:$0xff]
    %v8014 = vld [vmem:[%s6562 + $0x78] sm:$0xff]
    %v8015 = vld [vmem:[%s6562 + $0x80] sm:$0xff]
    %v8016 = vld [vmem:[%s6562 + $0x90] sm:$0xff]
    %v8017 = vld [vmem:[%s6562 + $0x98] sm:$0xff]
    %v8018 = vld [vmem:[%s6562 + $0xa8] sm:$0xff]
    %v8019 = vld [vmem:[%s6562 + $0xb0] sm:$0xff]
    %v8020 = vld [vmem:[%s6562 + $0xc0] sm:$0xff]
    %v8021 = vld [vmem:[%s6562 + $0xc8] sm:$0xff]
    %v8022 = vld [vmem:[%s6562 + $0xd8] sm:$0xff]
    %v8023 = vld [vmem:[%s6562 + $0xe0] sm:$0xff]
    %v8024 = vld [vmem:[%s6562 + $0xf0] sm:$0xff]
    %v8025 = vld [vmem:[%s6562 + $0xf8] sm:$0xff]
    %v8026 = vld [vmem:[%s6562 + $0x108] sm:$0xff]
    %v8027 = vld [vmem:[%s6562 + $0x110] sm:$0xff]
    %v8028 = vld [vmem:[%s6562 + $0x120] sm:$0xff]
    %v8029 = vld [vmem:[%s6562 + $0x128] sm:$0xff]
    %v8030 = vld [vmem:[%s6562 + $0x138] sm:$0xff]
    %v8031 = vld [vmem:[%s6562 + $0x140] sm:$0xff]
    %v8032 = vld [vmem:[%s6562 + $0x150] sm:$0xff]
    %v8033 = vld [vmem:[%s6562 + $0x158] sm:$0xff]
    %v8034 = vld [vmem:[%s6562 + $0x168] sm:$0xff]
    %v8035 = vld [vmem:[%s6562 + $0x170] sm:$0xff]
    %v8036 = vpack.c.bf16 %v8005, %v8004
    %v8037 = vpack.c.bf16 %v8007, %v8006
    %v8038 = vpack.c.bf16 %v8009, %v8008
    %v8039 = vpack.c.bf16 %v8011, %v8010
    %v8040 = vpack.c.bf16 %v8013, %v8012
    %v8041 = vpack.c.bf16 %v8015, %v8014
    %v8042 = vpack.c.bf16 %v8017, %v8016
    %v8043 = vpack.c.bf16 %v8019, %v8018
    %v8044 = vpack.c.bf16 %v8021, %v8020
    %v8045 = vpack.c.bf16 %v8023, %v8022
    %v8046 = vpack.c.bf16 %v8025, %v8024
    %v8047 = vpack.c.bf16 %v8027, %v8026
    %v8048 = vpack.c.bf16 %v8029, %v8028
    %v8049 = vpack.c.bf16 %v8031, %v8030
    %v8050 = vpack.c.bf16 %v8033, %v8032
    %v8051 = vpack.c.bf16 %v8035, %v8034
    %8068 = vrot.lane.b32.xlu0 %v8036, 12
    %v8069 = vpop.permute.xlu0 %8068
    %8070 = vrot.lane.b32.xlu0 %v8037, 12
    %v8071 = vpop.permute.xlu0 %8070
    %8072 = vrot.lane.b32.xlu0 %v8038, 12
    %v8073 = vpop.permute.xlu0 %8072
    %8074 = vrot.lane.b32.xlu0 %v8039, 12
    %v8075 = vpop.permute.xlu0 %8074
    %8076 = vrot.lane.b32.xlu0 %v8040, 12
    %v8077 = vpop.permute.xlu0 %8076
    %8078 = vrot.lane.b32.xlu0 %v8041, 12
    %v8079 = vpop.permute.xlu0 %8078
    %8080 = vrot.lane.b32.xlu0 %v8042, 12
    %v8081 = vpop.permute.xlu0 %8080
    %8082 = vrot.lane.b32.xlu0 %v8043, 12
    %v8083 = vpop.permute.xlu0 %8082
    %8084 = vrot.lane.b32.xlu0 %v8044, 12
    %v8085 = vpop.permute.xlu0 %8084
    %8086 = vrot.lane.b32.xlu0 %v8045, 12
    %v8087 = vpop.permute.xlu0 %8086
    %8088 = vrot.lane.b32.xlu0 %v8046, 12
    %v8089 = vpop.permute.xlu0 %8088
    %8090 = vrot.lane.b32.xlu0 %v8047, 12
    %v8091 = vpop.permute.xlu0 %8090
    %8092 = vrot.lane.b32.xlu0 %v8048, 12
    %v8093 = vpop.permute.xlu0 %8092
    %8094 = vrot.lane.b32.xlu0 %v8049, 12
    %v8095 = vpop.permute.xlu0 %8094
    %8096 = vrot.lane.b32.xlu0 %v8050, 12
    %v8097 = vpop.permute.xlu0 %8096
    %8098 = vrot.lane.b32.xlu0 %v8051, 12
    %v8099 = vpop.permute.xlu0 %8098
    %8116 = vst.msk [vmem:[#allocation3 + $0x80] sm:$0xff] %vm817, %v8069
    %8117 = vst.msk [vmem:[#allocation3 + $0x88] sm:$0xff] %vm817, %v8071
    %8118 = vst.msk [vmem:[#allocation3 + $0x90] sm:$0xff] %vm817, %v8073
    %8119 = vst.msk [vmem:[#allocation3 + $0x98] sm:$0xff] %vm817, %v8075
    %8120 = vst.msk [vmem:[#allocation3 + $0xa0] sm:$0xff] %vm817, %v8077
    %8121 = vst.msk [vmem:[#allocation3 + $0xa8] sm:$0xff] %vm817, %v8079
    %8122 = vst.msk [vmem:[#allocation3 + $0xb0] sm:$0xff] %vm817, %v8081
    %8123 = vst.msk [vmem:[#allocation3 + $0xb8] sm:$0xff] %vm817, %v8083
    %8124 = vst.msk [vmem:[#allocation3 + $0xc0] sm:$0xff] %vm817, %v8085
    %8125 = vst.msk [vmem:[#allocation3 + $0xc8] sm:$0xff] %vm817, %v8087
    %8126 = vst.msk [vmem:[#allocation3 + $0xd0] sm:$0xff] %vm817, %v8089
    %8127 = vst.msk [vmem:[#allocation3 + $0xd8] sm:$0xff] %vm817, %v8091
    %8128 = vst.msk [vmem:[#allocation3 + $0xe0] sm:$0xff] %vm817, %v8093
    %8129 = vst.msk [vmem:[#allocation3 + $0xe8] sm:$0xff] %vm817, %v8095
    %8130 = vst.msk [vmem:[#allocation3 + $0xf0] sm:$0xff] %vm817, %v8097
    %8131 = vst.msk [vmem:[#allocation3 + $0xf8] sm:$0xff] %vm817, %v8099
    %v8132 = vld [vmem:[%s6562 + $0x1] sm:$0xff]
    %v8133 = vld [vmem:[%s6562 + $0x9] sm:$0xff]
    %v8134 = vld [vmem:[%s6562 + $0x19] sm:$0xff]
    %v8135 = vld [vmem:[%s6562 + $0x21] sm:$0xff]
    %v8136 = vld [vmem:[%s6562 + $0x31] sm:$0xff]
    %v8137 = vld [vmem:[%s6562 + $0x39] sm:$0xff]
    %v8138 = vld [vmem:[%s6562 + $0x49] sm:$0xff]
    %v8139 = vld [vmem:[%s6562 + $0x51] sm:$0xff]
    %v8140 = vld [vmem:[%s6562 + $0x61] sm:$0xff]
    %v8141 = vld [vmem:[%s6562 + $0x69] sm:$0xff]
    %v8142 = vld [vmem:[%s6562 + $0x79] sm:$0xff]
    %v8143 = vld [vmem:[%s6562 + $0x81] sm:$0xff]
    %v8144 = vld [vmem:[%s6562 + $0x91] sm:$0xff]
    %v8145 = vld [vmem:[%s6562 + $0x99] sm:$0xff]
    %v8146 = vld [vmem:[%s6562 + $0xa9] sm:$0xff]
    %v8147 = vld [vmem:[%s6562 + $0xb1] sm:$0xff]
    %v8148 = vld [vmem:[%s6562 + $0xc1] sm:$0xff]
    %v8149 = vld [vmem:[%s6562 + $0xc9] sm:$0xff]
    %v8150 = vld [vmem:[%s6562 + $0xd9] sm:$0xff]
    %v8151 = vld [vmem:[%s6562 + $0xe1] sm:$0xff]
    %v8152 = vld [vmem:[%s6562 + $0xf1] sm:$0xff]
    %v8153 = vld [vmem:[%s6562 + $0xf9] sm:$0xff]
    %v8154 = vld [vmem:[%s6562 + $0x109] sm:$0xff]
    %v8155 = vld [vmem:[%s6562 + $0x111] sm:$0xff]
    %v8156 = vld [vmem:[%s6562 + $0x121] sm:$0xff]
    %v8157 = vld [vmem:[%s6562 + $0x129] sm:$0xff]
    %v8158 = vld [vmem:[%s6562 + $0x139] sm:$0xff]
    %v8159 = vld [vmem:[%s6562 + $0x141] sm:$0xff]
    %v8160 = vld [vmem:[%s6562 + $0x151] sm:$0xff]
    %v8161 = vld [vmem:[%s6562 + $0x159] sm:$0xff]
    %v8162 = vld [vmem:[%s6562 + $0x169] sm:$0xff]
    %v8163 = vld [vmem:[%s6562 + $0x171] sm:$0xff]
    %v8164 = vpack.c.bf16 %v8133, %v8132
    %v8165 = vpack.c.bf16 %v8135, %v8134
    %v8166 = vpack.c.bf16 %v8137, %v8136
    %v8167 = vpack.c.bf16 %v8139, %v8138
    %v8168 = vpack.c.bf16 %v8141, %v8140
    %v8169 = vpack.c.bf16 %v8143, %v8142
    %v8170 = vpack.c.bf16 %v8145, %v8144
    %v8171 = vpack.c.bf16 %v8147, %v8146
    %v8172 = vpack.c.bf16 %v8149, %v8148
    %v8173 = vpack.c.bf16 %v8151, %v8150
    %v8174 = vpack.c.bf16 %v8153, %v8152
    %v8175 = vpack.c.bf16 %v8155, %v8154
    %v8176 = vpack.c.bf16 %v8157, %v8156
    %v8177 = vpack.c.bf16 %v8159, %v8158
    %v8178 = vpack.c.bf16 %v8161, %v8160
    %v8179 = vpack.c.bf16 %v8163, %v8162
    %8196 = vrot.lane.b32.xlu0 %v8164, 16
    %v8197 = vpop.permute.xlu0 %8196
    %8198 = vrot.lane.b32.xlu0 %v8165, 16
    %v8199 = vpop.permute.xlu0 %8198
    %8200 = vrot.lane.b32.xlu0 %v8166, 16
    %v8201 = vpop.permute.xlu0 %8200
    %8202 = vrot.lane.b32.xlu0 %v8167, 16
    %v8203 = vpop.permute.xlu0 %8202
    %8204 = vrot.lane.b32.xlu0 %v8168, 16
    %v8205 = vpop.permute.xlu0 %8204
    %8206 = vrot.lane.b32.xlu0 %v8169, 16
    %v8207 = vpop.permute.xlu0 %8206
    %8208 = vrot.lane.b32.xlu0 %v8170, 16
    %v8209 = vpop.permute.xlu0 %8208
    %8210 = vrot.lane.b32.xlu0 %v8171, 16
    %v8211 = vpop.permute.xlu0 %8210
    %8212 = vrot.lane.b32.xlu0 %v8172, 16
    %v8213 = vpop.permute.xlu0 %8212
    %8214 = vrot.lane.b32.xlu0 %v8173, 16
    %v8215 = vpop.permute.xlu0 %8214
    %8216 = vrot.lane.b32.xlu0 %v8174, 16
    %v8217 = vpop.permute.xlu0 %8216
    %8218 = vrot.lane.b32.xlu0 %v8175, 16
    %v8219 = vpop.permute.xlu0 %8218
    %8220 = vrot.lane.b32.xlu0 %v8176, 16
    %v8221 = vpop.permute.xlu0 %8220
    %8222 = vrot.lane.b32.xlu0 %v8177, 16
    %v8223 = vpop.permute.xlu0 %8222
    %8224 = vrot.lane.b32.xlu0 %v8178, 16
    %v8225 = vpop.permute.xlu0 %8224
    %8226 = vrot.lane.b32.xlu0 %v8179, 16
    %v8227 = vpop.permute.xlu0 %8226
    %8244 = vst.msk [vmem:[#allocation3 + $0x80] sm:$0xff] %vm1074, %v8197
    %8245 = vst.msk [vmem:[#allocation3 + $0x88] sm:$0xff] %vm1074, %v8199
    %8246 = vst.msk [vmem:[#allocation3 + $0x90] sm:$0xff] %vm1074, %v8201
    %8247 = vst.msk [vmem:[#allocation3 + $0x98] sm:$0xff] %vm1074, %v8203
    %8248 = vst.msk [vmem:[#allocation3 + $0xa0] sm:$0xff] %vm1074, %v8205
    %8249 = vst.msk [vmem:[#allocation3 + $0xa8] sm:$0xff] %vm1074, %v8207
    %8250 = vst.msk [vmem:[#allocation3 + $0xb0] sm:$0xff] %vm1074, %v8209
    %8251 = vst.msk [vmem:[#allocation3 + $0xb8] sm:$0xff] %vm1074, %v8211
    %8252 = vst.msk [vmem:[#allocation3 + $0xc0] sm:$0xff] %vm1074, %v8213
    %8253 = vst.msk [vmem:[#allocation3 + $0xc8] sm:$0xff] %vm1074, %v8215
    %8254 = vst.msk [vmem:[#allocation3 + $0xd0] sm:$0xff] %vm1074, %v8217
    %8255 = vst.msk [vmem:[#allocation3 + $0xd8] sm:$0xff] %vm1074, %v8219
    %8256 = vst.msk [vmem:[#allocation3 + $0xe0] sm:$0xff] %vm1074, %v8221
    %8257 = vst.msk [vmem:[#allocation3 + $0xe8] sm:$0xff] %vm1074, %v8223
    %8258 = vst.msk [vmem:[#allocation3 + $0xf0] sm:$0xff] %vm1074, %v8225
    %8259 = vst.msk [vmem:[#allocation3 + $0xf8] sm:$0xff] %vm1074, %v8227
    %v8260 = vld [vmem:[%s6562 + $0x2] sm:$0xff]
    %v8261 = vld [vmem:[%s6562 + $0xa] sm:$0xff]
    %v8262 = vld [vmem:[%s6562 + $0x1a] sm:$0xff]
    %v8263 = vld [vmem:[%s6562 + $0x22] sm:$0xff]
    %v8264 = vld [vmem:[%s6562 + $0x32] sm:$0xff]
    %v8265 = vld [vmem:[%s6562 + $0x3a] sm:$0xff]
    %v8266 = vld [vmem:[%s6562 + $0x4a] sm:$0xff]
    %v8267 = vld [vmem:[%s6562 + $0x52] sm:$0xff]
    %v8268 = vld [vmem:[%s6562 + $0x62] sm:$0xff]
    %v8269 = vld [vmem:[%s6562 + $0x6a] sm:$0xff]
    %v8270 = vld [vmem:[%s6562 + $0x7a] sm:$0xff]
    %v8271 = vld [vmem:[%s6562 + $0x82] sm:$0xff]
    %v8272 = vld [vmem:[%s6562 + $0x92] sm:$0xff]
    %v8273 = vld [vmem:[%s6562 + $0x9a] sm:$0xff]
    %v8274 = vld [vmem:[%s6562 + $0xaa] sm:$0xff]
    %v8275 = vld [vmem:[%s6562 + $0xb2] sm:$0xff]
    %v8276 = vld [vmem:[%s6562 + $0xc2] sm:$0xff]
    %v8277 = vld [vmem:[%s6562 + $0xca] sm:$0xff]
    %v8278 = vld [vmem:[%s6562 + $0xda] sm:$0xff]
    %v8279 = vld [vmem:[%s6562 + $0xe2] sm:$0xff]
    %v8280 = vld [vmem:[%s6562 + $0xf2] sm:$0xff]
    %v8281 = vld [vmem:[%s6562 + $0xfa] sm:$0xff]
    %v8282 = vld [vmem:[%s6562 + $0x10a] sm:$0xff]
    %v8283 = vld [vmem:[%s6562 + $0x112] sm:$0xff]
    %v8284 = vld [vmem:[%s6562 + $0x122] sm:$0xff]
    %v8285 = vld [vmem:[%s6562 + $0x12a] sm:$0xff]
    %v8286 = vld [vmem:[%s6562 + $0x13a] sm:$0xff]
    %v8287 = vld [vmem:[%s6562 + $0x142] sm:$0xff]
    %v8288 = vld [vmem:[%s6562 + $0x152] sm:$0xff]
    %v8289 = vld [vmem:[%s6562 + $0x15a] sm:$0xff]
    %v8290 = vld [vmem:[%s6562 + $0x16a] sm:$0xff]
    %v8291 = vld [vmem:[%s6562 + $0x172] sm:$0xff]
    %v8292 = vpack.c.bf16 %v8261, %v8260
    %v8293 = vpack.c.bf16 %v8263, %v8262
    %v8294 = vpack.c.bf16 %v8265, %v8264
    %v8295 = vpack.c.bf16 %v8267, %v8266
    %v8296 = vpack.c.bf16 %v8269, %v8268
    %v8297 = vpack.c.bf16 %v8271, %v8270
    %v8298 = vpack.c.bf16 %v8273, %v8272
    %v8299 = vpack.c.bf16 %v8275, %v8274
    %v8300 = vpack.c.bf16 %v8277, %v8276
    %v8301 = vpack.c.bf16 %v8279, %v8278
    %v8302 = vpack.c.bf16 %v8281, %v8280
    %v8303 = vpack.c.bf16 %v8283, %v8282
    %v8304 = vpack.c.bf16 %v8285, %v8284
    %v8305 = vpack.c.bf16 %v8287, %v8286
    %v8306 = vpack.c.bf16 %v8289, %v8288
    %v8307 = vpack.c.bf16 %v8291, %v8290
    %8324 = vrot.lane.b32.xlu0 %v8292, 20
    %v8325 = vpop.permute.xlu0 %8324
    %8326 = vrot.lane.b32.xlu0 %v8293, 20
    %v8327 = vpop.permute.xlu0 %8326
    %8328 = vrot.lane.b32.xlu0 %v8294, 20
    %v8329 = vpop.permute.xlu0 %8328
    %8330 = vrot.lane.b32.xlu0 %v8295, 20
    %v8331 = vpop.permute.xlu0 %8330
    %8332 = vrot.lane.b32.xlu0 %v8296, 20
    %v8333 = vpop.permute.xlu0 %8332
    %8334 = vrot.lane.b32.xlu0 %v8297, 20
    %v8335 = vpop.permute.xlu0 %8334
    %8336 = vrot.lane.b32.xlu0 %v8298, 20
    %v8337 = vpop.permute.xlu0 %8336
    %8338 = vrot.lane.b32.xlu0 %v8299, 20
    %v8339 = vpop.permute.xlu0 %8338
    %8340 = vrot.lane.b32.xlu0 %v8300, 20
    %v8341 = vpop.permute.xlu0 %8340
    %8342 = vrot.lane.b32.xlu0 %v8301, 20
    %v8343 = vpop.permute.xlu0 %8342
    %8344 = vrot.lane.b32.xlu0 %v8302, 20
    %v8345 = vpop.permute.xlu0 %8344
    %8346 = vrot.lane.b32.xlu0 %v8303, 20
    %v8347 = vpop.permute.xlu0 %8346
    %8348 = vrot.lane.b32.xlu0 %v8304, 20
    %v8349 = vpop.permute.xlu0 %8348
    %8350 = vrot.lane.b32.xlu0 %v8305, 20
    %v8351 = vpop.permute.xlu0 %8350
    %8352 = vrot.lane.b32.xlu0 %v8306, 20
    %v8353 = vpop.permute.xlu0 %8352
    %8354 = vrot.lane.b32.xlu0 %v8307, 20
    %v8355 = vpop.permute.xlu0 %8354
    %8372 = vst.msk [vmem:[#allocation3 + $0x80] sm:$0xff] %vm1331, %v8325
    %8373 = vst.msk [vmem:[#allocation3 + $0x88] sm:$0xff] %vm1331, %v8327
    %8374 = vst.msk [vmem:[#allocation3 + $0x90] sm:$0xff] %vm1331, %v8329
    %8375 = vst.msk [vmem:[#allocation3 + $0x98] sm:$0xff] %vm1331, %v8331
    %8376 = vst.msk [vmem:[#allocation3 + $0xa0] sm:$0xff] %vm1331, %v8333
    %8377 = vst.msk [vmem:[#allocation3 + $0xa8] sm:$0xff] %vm1331, %v8335
    %8378 = vst.msk [vmem:[#allocation3 + $0xb0] sm:$0xff] %vm1331, %v8337
    %8379 = vst.msk [vmem:[#allocation3 + $0xb8] sm:$0xff] %vm1331, %v8339
    %8380 = vst.msk [vmem:[#allocation3 + $0xc0] sm:$0xff] %vm1331, %v8341
    %8381 = vst.msk [vmem:[#allocation3 + $0xc8] sm:$0xff] %vm1331, %v8343
    %8382 = vst.msk [vmem:[#allocation3 + $0xd0] sm:$0xff] %vm1331, %v8345
    %8383 = vst.msk [vmem:[#allocation3 + $0xd8] sm:$0xff] %vm1331, %v8347
    %8384 = vst.msk [vmem:[#allocation3 + $0xe0] sm:$0xff] %vm1331, %v8349
    %8385 = vst.msk [vmem:[#allocation3 + $0xe8] sm:$0xff] %vm1331, %v8351
    %8386 = vst.msk [vmem:[#allocation3 + $0xf0] sm:$0xff] %vm1331, %v8353
    %8387 = vst.msk [vmem:[#allocation3 + $0xf8] sm:$0xff] %vm1331, %v8355
    %s8388 = scalar_lea.vmem [#allocation4], 480
    %v8389 = vld [vmem:[%s8388] sm:$0xff]
    %v8390 = vld [vmem:[%s8388 + $0x8] sm:$0xff]
    %v8391 = vld [vmem:[%s8388 + $0x18] sm:$0xff]
    %v8392 = vld [vmem:[%s8388 + $0x20] sm:$0xff]
    %v8393 = vld [vmem:[%s8388 + $0x30] sm:$0xff]
    %v8394 = vld [vmem:[%s8388 + $0x38] sm:$0xff]
    %v8395 = vld [vmem:[%s8388 + $0x48] sm:$0xff]
    %v8396 = vld [vmem:[%s8388 + $0x50] sm:$0xff]
    %v8397 = vld [vmem:[%s8388 + $0x60] sm:$0xff]
    %v8398 = vld [vmem:[%s8388 + $0x68] sm:$0xff]
    %v8399 = vld [vmem:[%s8388 + $0x78] sm:$0xff]
    %v8400 = vld [vmem:[%s8388 + $0x80] sm:$0xff]
    %v8401 = vld [vmem:[%s8388 + $0x90] sm:$0xff]
    %v8402 = vld [vmem:[%s8388 + $0x98] sm:$0xff]
    %v8403 = vld [vmem:[%s8388 + $0xa8] sm:$0xff]
    %v8404 = vld [vmem:[%s8388 + $0xb0] sm:$0xff]
    %v8405 = vld [vmem:[%s8388 + $0xc0] sm:$0xff]
    %v8406 = vld [vmem:[%s8388 + $0xc8] sm:$0xff]
    %v8407 = vld [vmem:[%s8388 + $0xd8] sm:$0xff]
    %v8408 = vld [vmem:[%s8388 + $0xe0] sm:$0xff]
    %v8409 = vld [vmem:[%s8388 + $0xf0] sm:$0xff]
    %v8410 = vld [vmem:[%s8388 + $0xf8] sm:$0xff]
    %v8411 = vld [vmem:[%s8388 + $0x108] sm:$0xff]
    %v8412 = vld [vmem:[%s8388 + $0x110] sm:$0xff]
    %v8413 = vld [vmem:[%s8388 + $0x120] sm:$0xff]
    %v8414 = vld [vmem:[%s8388 + $0x128] sm:$0xff]
    %v8415 = vld [vmem:[%s8388 + $0x138] sm:$0xff]
    %v8416 = vld [vmem:[%s8388 + $0x140] sm:$0xff]
    %v8417 = vld [vmem:[%s8388 + $0x150] sm:$0xff]
    %v8418 = vld [vmem:[%s8388 + $0x158] sm:$0xff]
    %v8419 = vld [vmem:[%s8388 + $0x168] sm:$0xff]
    %v8420 = vld [vmem:[%s8388 + $0x170] sm:$0xff]
    %v8421 = vpack.c.bf16 %v8390, %v8389
    %v8422 = vpack.c.bf16 %v8392, %v8391
    %v8423 = vpack.c.bf16 %v8394, %v8393
    %v8424 = vpack.c.bf16 %v8396, %v8395
    %v8425 = vpack.c.bf16 %v8398, %v8397
    %v8426 = vpack.c.bf16 %v8400, %v8399
    %v8427 = vpack.c.bf16 %v8402, %v8401
    %v8428 = vpack.c.bf16 %v8404, %v8403
    %v8429 = vpack.c.bf16 %v8406, %v8405
    %v8430 = vpack.c.bf16 %v8408, %v8407
    %v8431 = vpack.c.bf16 %v8410, %v8409
    %v8432 = vpack.c.bf16 %v8412, %v8411
    %v8433 = vpack.c.bf16 %v8414, %v8413
    %v8434 = vpack.c.bf16 %v8416, %v8415
    %v8435 = vpack.c.bf16 %v8418, %v8417
    %v8436 = vpack.c.bf16 %v8420, %v8419
    %8453 = vrot.lane.b32.xlu0 %v8421, 24
    %v8454 = vpop.permute.xlu0 %8453
    %8455 = vrot.lane.b32.xlu0 %v8422, 24
    %v8456 = vpop.permute.xlu0 %8455
    %8457 = vrot.lane.b32.xlu0 %v8423, 24
    %v8458 = vpop.permute.xlu0 %8457
    %8459 = vrot.lane.b32.xlu0 %v8424, 24
    %v8460 = vpop.permute.xlu0 %8459
    %8461 = vrot.lane.b32.xlu0 %v8425, 24
    %v8462 = vpop.permute.xlu0 %8461
    %8463 = vrot.lane.b32.xlu0 %v8426, 24
    %v8464 = vpop.permute.xlu0 %8463
    %8465 = vrot.lane.b32.xlu0 %v8427, 24
    %v8466 = vpop.permute.xlu0 %8465
    %8467 = vrot.lane.b32.xlu0 %v8428, 24
    %v8468 = vpop.permute.xlu0 %8467
    %8469 = vrot.lane.b32.xlu0 %v8429, 24
    %v8470 = vpop.permute.xlu0 %8469
    %8471 = vrot.lane.b32.xlu0 %v8430, 24
    %v8472 = vpop.permute.xlu0 %8471
    %8473 = vrot.lane.b32.xlu0 %v8431, 24
    %v8474 = vpop.permute.xlu0 %8473
    %8475 = vrot.lane.b32.xlu0 %v8432, 24
    %v8476 = vpop.permute.xlu0 %8475
    %8477 = vrot.lane.b32.xlu0 %v8433, 24
    %v8478 = vpop.permute.xlu0 %8477
    %8479 = vrot.lane.b32.xlu0 %v8434, 24
    %v8480 = vpop.permute.xlu0 %8479
    %8481 = vrot.lane.b32.xlu0 %v8435, 24
    %v8482 = vpop.permute.xlu0 %8481
    %8483 = vrot.lane.b32.xlu0 %v8436, 24
    %v8484 = vpop.permute.xlu0 %8483
    %8501 = vst.msk [vmem:[#allocation3 + $0x80] sm:$0xff] %vm1590, %v8454
    %8502 = vst.msk [vmem:[#allocation3 + $0x88] sm:$0xff] %vm1590, %v8456
    %8503 = vst.msk [vmem:[#allocation3 + $0x90] sm:$0xff] %vm1590, %v8458
    %8504 = vst.msk [vmem:[#allocation3 + $0x98] sm:$0xff] %vm1590, %v8460
    %8505 = vst.msk [vmem:[#allocation3 + $0xa0] sm:$0xff] %vm1590, %v8462
    %8506 = vst.msk [vmem:[#allocation3 + $0xa8] sm:$0xff] %vm1590, %v8464
    %8507 = vst.msk [vmem:[#allocation3 + $0xb0] sm:$0xff] %vm1590, %v8466
    %8508 = vst.msk [vmem:[#allocation3 + $0xb8] sm:$0xff] %vm1590, %v8468
    %8509 = vst.msk [vmem:[#allocation3 + $0xc0] sm:$0xff] %vm1590, %v8470
    %8510 = vst.msk [vmem:[#allocation3 + $0xc8] sm:$0xff] %vm1590, %v8472
    %8511 = vst.msk [vmem:[#allocation3 + $0xd0] sm:$0xff] %vm1590, %v8474
    %8512 = vst.msk [vmem:[#allocation3 + $0xd8] sm:$0xff] %vm1590, %v8476
    %8513 = vst.msk [vmem:[#allocation3 + $0xe0] sm:$0xff] %vm1590, %v8478
    %8514 = vst.msk [vmem:[#allocation3 + $0xe8] sm:$0xff] %vm1590, %v8480
    %8515 = vst.msk [vmem:[#allocation3 + $0xf0] sm:$0xff] %vm1590, %v8482
    %8516 = vst.msk [vmem:[#allocation3 + $0xf8] sm:$0xff] %vm1590, %v8484
    %v8517 = vld [vmem:[%s8388 + $0x1] sm:$0xff]
    %v8518 = vld [vmem:[%s8388 + $0x9] sm:$0xff]
    %v8519 = vld [vmem:[%s8388 + $0x19] sm:$0xff]
    %v8520 = vld [vmem:[%s8388 + $0x21] sm:$0xff]
    %v8521 = vld [vmem:[%s8388 + $0x31] sm:$0xff]
    %v8522 = vld [vmem:[%s8388 + $0x39] sm:$0xff]
    %v8523 = vld [vmem:[%s8388 + $0x49] sm:$0xff]
    %v8524 = vld [vmem:[%s8388 + $0x51] sm:$0xff]
    %v8525 = vld [vmem:[%s8388 + $0x61] sm:$0xff]
    %v8526 = vld [vmem:[%s8388 + $0x69] sm:$0xff]
    %v8527 = vld [vmem:[%s8388 + $0x79] sm:$0xff]
    %v8528 = vld [vmem:[%s8388 + $0x81] sm:$0xff]
    %v8529 = vld [vmem:[%s8388 + $0x91] sm:$0xff]
    %v8530 = vld [vmem:[%s8388 + $0x99] sm:$0xff]
    %v8531 = vld [vmem:[%s8388 + $0xa9] sm:$0xff]
    %v8532 = vld [vmem:[%s8388 + $0xb1] sm:$0xff]
    %v8533 = vld [vmem:[%s8388 + $0xc1] sm:$0xff]
    %v8534 = vld [vmem:[%s8388 + $0xc9] sm:$0xff]
    %v8535 = vld [vmem:[%s8388 + $0xd9] sm:$0xff]
    %v8536 = vld [vmem:[%s8388 + $0xe1] sm:$0xff]
    %v8537 = vld [vmem:[%s8388 + $0xf1] sm:$0xff]
    %v8538 = vld [vmem:[%s8388 + $0xf9] sm:$0xff]
    %v8539 = vld [vmem:[%s8388 + $0x109] sm:$0xff]
    %v8540 = vld [vmem:[%s8388 + $0x111] sm:$0xff]
    %v8541 = vld [vmem:[%s8388 + $0x121] sm:$0xff]
    %v8542 = vld [vmem:[%s8388 + $0x129] sm:$0xff]
    %v8543 = vld [vmem:[%s8388 + $0x139] sm:$0xff]
    %v8544 = vld [vmem:[%s8388 + $0x141] sm:$0xff]
    %v8545 = vld [vmem:[%s8388 + $0x151] sm:$0xff]
    %v8546 = vld [vmem:[%s8388 + $0x159] sm:$0xff]
    %v8547 = vld [vmem:[%s8388 + $0x169] sm:$0xff]
    %v8548 = vld [vmem:[%s8388 + $0x171] sm:$0xff]
    %v8549 = vpack.c.bf16 %v8518, %v8517
    %v8550 = vpack.c.bf16 %v8520, %v8519
    %v8551 = vpack.c.bf16 %v8522, %v8521
    %v8552 = vpack.c.bf16 %v8524, %v8523
    %v8553 = vpack.c.bf16 %v8526, %v8525
    %v8554 = vpack.c.bf16 %v8528, %v8527
    %v8555 = vpack.c.bf16 %v8530, %v8529
    %v8556 = vpack.c.bf16 %v8532, %v8531
    %v8557 = vpack.c.bf16 %v8534, %v8533
    %v8558 = vpack.c.bf16 %v8536, %v8535
    %v8559 = vpack.c.bf16 %v8538, %v8537
    %v8560 = vpack.c.bf16 %v8540, %v8539
    %v8561 = vpack.c.bf16 %v8542, %v8541
    %v8562 = vpack.c.bf16 %v8544, %v8543
    %v8563 = vpack.c.bf16 %v8546, %v8545
    %v8564 = vpack.c.bf16 %v8548, %v8547
    %8581 = vrot.lane.b32.xlu0 %v8549, 28
    %v8582 = vpop.permute.xlu0 %8581
    %8583 = vrot.lane.b32.xlu0 %v8550, 28
    %v8584 = vpop.permute.xlu0 %8583
    %8585 = vrot.lane.b32.xlu0 %v8551, 28
    %v8586 = vpop.permute.xlu0 %8585
    %8587 = vrot.lane.b32.xlu0 %v8552, 28
    %v8588 = vpop.permute.xlu0 %8587
    %8589 = vrot.lane.b32.xlu0 %v8553, 28
    %v8590 = vpop.permute.xlu0 %8589
    %8591 = vrot.lane.b32.xlu0 %v8554, 28
    %v8592 = vpop.permute.xlu0 %8591
    %8593 = vrot.lane.b32.xlu0 %v8555, 28
    %v8594 = vpop.permute.xlu0 %8593
    %8595 = vrot.lane.b32.xlu0 %v8556, 28
    %v8596 = vpop.permute.xlu0 %8595
    %8597 = vrot.lane.b32.xlu0 %v8557, 28
    %v8598 = vpop.permute.xlu0 %8597
    %8599 = vrot.lane.b32.xlu0 %v8558, 28
    %v8600 = vpop.permute.xlu0 %8599
    %8601 = vrot.lane.b32.xlu0 %v8559, 28
    %v8602 = vpop.permute.xlu0 %8601
    %8603 = vrot.lane.b32.xlu0 %v8560, 28
    %v8604 = vpop.permute.xlu0 %8603
    %8605 = vrot.lane.b32.xlu0 %v8561, 28
    %v8606 = vpop.permute.xlu0 %8605
    %8607 = vrot.lane.b32.xlu0 %v8562, 28
    %v8608 = vpop.permute.xlu0 %8607
    %8609 = vrot.lane.b32.xlu0 %v8563, 28
    %v8610 = vpop.permute.xlu0 %8609
    %8611 = vrot.lane.b32.xlu0 %v8564, 28
    %v8612 = vpop.permute.xlu0 %8611
    %8629 = vst.msk [vmem:[#allocation3 + $0x80] sm:$0xff] %vm1847, %v8582
    %8630 = vst.msk [vmem:[#allocation3 + $0x88] sm:$0xff] %vm1847, %v8584
    %8631 = vst.msk [vmem:[#allocation3 + $0x90] sm:$0xff] %vm1847, %v8586
    %8632 = vst.msk [vmem:[#allocation3 + $0x98] sm:$0xff] %vm1847, %v8588
    %8633 = vst.msk [vmem:[#allocation3 + $0xa0] sm:$0xff] %vm1847, %v8590
    %8634 = vst.msk [vmem:[#allocation3 + $0xa8] sm:$0xff] %vm1847, %v8592
    %8635 = vst.msk [vmem:[#allocation3 + $0xb0] sm:$0xff] %vm1847, %v8594
    %8636 = vst.msk [vmem:[#allocation3 + $0xb8] sm:$0xff] %vm1847, %v8596
    %8637 = vst.msk [vmem:[#allocation3 + $0xc0] sm:$0xff] %vm1847, %v8598
    %8638 = vst.msk [vmem:[#allocation3 + $0xc8] sm:$0xff] %vm1847, %v8600
    %8639 = vst.msk [vmem:[#allocation3 + $0xd0] sm:$0xff] %vm1847, %v8602
    %8640 = vst.msk [vmem:[#allocation3 + $0xd8] sm:$0xff] %vm1847, %v8604
    %8641 = vst.msk [vmem:[#allocation3 + $0xe0] sm:$0xff] %vm1847, %v8606
    %8642 = vst.msk [vmem:[#allocation3 + $0xe8] sm:$0xff] %vm1847, %v8608
    %8643 = vst.msk [vmem:[#allocation3 + $0xf0] sm:$0xff] %vm1847, %v8610
    %8644 = vst.msk [vmem:[#allocation3 + $0xf8] sm:$0xff] %vm1847, %v8612
    %v8645 = vld [vmem:[%s8388 + $0x2] sm:$0xff]
    %v8646 = vld [vmem:[%s8388 + $0xa] sm:$0xff]
    %v8647 = vld [vmem:[%s8388 + $0x1a] sm:$0xff]
    %v8648 = vld [vmem:[%s8388 + $0x22] sm:$0xff]
    %v8649 = vld [vmem:[%s8388 + $0x32] sm:$0xff]
    %v8650 = vld [vmem:[%s8388 + $0x3a] sm:$0xff]
    %v8651 = vld [vmem:[%s8388 + $0x4a] sm:$0xff]
    %v8652 = vld [vmem:[%s8388 + $0x52] sm:$0xff]
    %v8653 = vld [vmem:[%s8388 + $0x62] sm:$0xff]
    %v8654 = vld [vmem:[%s8388 + $0x6a] sm:$0xff]
    %v8655 = vld [vmem:[%s8388 + $0x7a] sm:$0xff]
    %v8656 = vld [vmem:[%s8388 + $0x82] sm:$0xff]
    %v8657 = vld [vmem:[%s8388 + $0x92] sm:$0xff]
    %v8658 = vld [vmem:[%s8388 + $0x9a] sm:$0xff]
    %v8659 = vld [vmem:[%s8388 + $0xaa] sm:$0xff]
    %v8660 = vld [vmem:[%s8388 + $0xb2] sm:$0xff]
    %v8661 = vld [vmem:[%s8388 + $0xc2] sm:$0xff]
    %v8662 = vld [vmem:[%s8388 + $0xca] sm:$0xff]
    %v8663 = vld [vmem:[%s8388 + $0xda] sm:$0xff]
    %v8664 = vld [vmem:[%s8388 + $0xe2] sm:$0xff]
    %v8665 = vld [vmem:[%s8388 + $0xf2] sm:$0xff]
    %v8666 = vld [vmem:[%s8388 + $0xfa] sm:$0xff]
    %v8667 = vld [vmem:[%s8388 + $0x10a] sm:$0xff]
    %v8668 = vld [vmem:[%s8388 + $0x112] sm:$0xff]
    %v8669 = vld [vmem:[%s8388 + $0x122] sm:$0xff]
    %v8670 = vld [vmem:[%s8388 + $0x12a] sm:$0xff]
    %v8671 = vld [vmem:[%s8388 + $0x13a] sm:$0xff]
    %v8672 = vld [vmem:[%s8388 + $0x142] sm:$0xff]
    %v8673 = vld [vmem:[%s8388 + $0x152] sm:$0xff]
    %v8674 = vld [vmem:[%s8388 + $0x15a] sm:$0xff]
    %v8675 = vld [vmem:[%s8388 + $0x16a] sm:$0xff]
    %v8676 = vld [vmem:[%s8388 + $0x172] sm:$0xff]
    %v8677 = vpack.c.bf16 %v8646, %v8645
    %v8678 = vpack.c.bf16 %v8648, %v8647
    %v8679 = vpack.c.bf16 %v8650, %v8649
    %v8680 = vpack.c.bf16 %v8652, %v8651
    %v8681 = vpack.c.bf16 %v8654, %v8653
    %v8682 = vpack.c.bf16 %v8656, %v8655
    %v8683 = vpack.c.bf16 %v8658, %v8657
    %v8684 = vpack.c.bf16 %v8660, %v8659
    %v8685 = vpack.c.bf16 %v8662, %v8661
    %v8686 = vpack.c.bf16 %v8664, %v8663
    %v8687 = vpack.c.bf16 %v8666, %v8665
    %v8688 = vpack.c.bf16 %v8668, %v8667
    %v8689 = vpack.c.bf16 %v8670, %v8669
    %v8690 = vpack.c.bf16 %v8672, %v8671
    %v8691 = vpack.c.bf16 %v8674, %v8673
    %v8692 = vpack.c.bf16 %v8676, %v8675
    %8709 = vrot.lane.b32.xlu0 %v8677, 32
    %v8710 = vpop.permute.xlu0 %8709
    %8711 = vrot.lane.b32.xlu0 %v8678, 32
    %v8712 = vpop.permute.xlu0 %8711
    %8713 = vrot.lane.b32.xlu0 %v8679, 32
    %v8714 = vpop.permute.xlu0 %8713
    %8715 = vrot.lane.b32.xlu0 %v8680, 32
    %v8716 = vpop.permute.xlu0 %8715
    %8717 = vrot.lane.b32.xlu0 %v8681, 32
    %v8718 = vpop.permute.xlu0 %8717
    %8719 = vrot.lane.b32.xlu0 %v8682, 32
    %v8720 = vpop.permute.xlu0 %8719
    %8721 = vrot.lane.b32.xlu0 %v8683, 32
    %v8722 = vpop.permute.xlu0 %8721
    %8723 = vrot.lane.b32.xlu0 %v8684, 32
    %v8724 = vpop.permute.xlu0 %8723
    %8725 = vrot.lane.b32.xlu0 %v8685, 32
    %v8726 = vpop.permute.xlu0 %8725
    %8727 = vrot.lane.b32.xlu0 %v8686, 32
    %v8728 = vpop.permute.xlu0 %8727
    %8729 = vrot.lane.b32.xlu0 %v8687, 32
    %v8730 = vpop.permute.xlu0 %8729
    %8731 = vrot.lane.b32.xlu0 %v8688, 32
    %v8732 = vpop.permute.xlu0 %8731
    %8733 = vrot.lane.b32.xlu0 %v8689, 32
    %v8734 = vpop.permute.xlu0 %8733
    %8735 = vrot.lane.b32.xlu0 %v8690, 32
    %v8736 = vpop.permute.xlu0 %8735
    %8737 = vrot.lane.b32.xlu0 %v8691, 32
    %v8738 = vpop.permute.xlu0 %8737
    %8739 = vrot.lane.b32.xlu0 %v8692, 32
    %v8740 = vpop.permute.xlu0 %8739
    %8757 = vst.msk [vmem:[#allocation3 + $0x80] sm:$0xff] %vm2104, %v8710
    %8758 = vst.msk [vmem:[#allocation3 + $0x88] sm:$0xff] %vm2104, %v8712
    %8759 = vst.msk [vmem:[#allocation3 + $0x90] sm:$0xff] %vm2104, %v8714
    %8760 = vst.msk [vmem:[#allocation3 + $0x98] sm:$0xff] %vm2104, %v8716
    %8761 = vst.msk [vmem:[#allocation3 + $0xa0] sm:$0xff] %vm2104, %v8718
    %8762 = vst.msk [vmem:[#allocation3 + $0xa8] sm:$0xff] %vm2104, %v8720
    %8763 = vst.msk [vmem:[#allocation3 + $0xb0] sm:$0xff] %vm2104, %v8722
    %8764 = vst.msk [vmem:[#allocation3 + $0xb8] sm:$0xff] %vm2104, %v8724
    %8765 = vst.msk [vmem:[#allocation3 + $0xc0] sm:$0xff] %vm2104, %v8726
    %8766 = vst.msk [vmem:[#allocation3 + $0xc8] sm:$0xff] %vm2104, %v8728
    %8767 = vst.msk [vmem:[#allocation3 + $0xd0] sm:$0xff] %vm2104, %v8730
    %8768 = vst.msk [vmem:[#allocation3 + $0xd8] sm:$0xff] %vm2104, %v8732
    %8769 = vst.msk [vmem:[#allocation3 + $0xe0] sm:$0xff] %vm2104, %v8734
    %8770 = vst.msk [vmem:[#allocation3 + $0xe8] sm:$0xff] %vm2104, %v8736
    %8771 = vst.msk [vmem:[#allocation3 + $0xf0] sm:$0xff] %vm2104, %v8738
    %8772 = vst.msk [vmem:[#allocation3 + $0xf8] sm:$0xff] %vm2104, %v8740
    %v8773 = vld [vmem:[#allocation3] sm:$0xff]
    %v8774 = vld [vmem:[#allocation3 + $0x8] sm:$0xff]
    %v8775 = vld [vmem:[#allocation3 + $0x10] sm:$0xff]
    %v8776 = vld [vmem:[#allocation3 + $0x18] sm:$0xff]
    %v8777 = vld [vmem:[#allocation3 + $0x20] sm:$0xff]
    %v8778 = vld [vmem:[#allocation3 + $0x28] sm:$0xff]
    %v8779 = vld [vmem:[#allocation3 + $0x30] sm:$0xff]
    %v8780 = vld [vmem:[#allocation3 + $0x38] sm:$0xff]
    %v8781 = vld [vmem:[#allocation3 + $0x40] sm:$0xff]
    %v8782 = vld [vmem:[#allocation3 + $0x48] sm:$0xff]
    %v8783 = vld [vmem:[#allocation3 + $0x50] sm:$0xff]
    %v8784 = vld [vmem:[#allocation3 + $0x58] sm:$0xff]
    %v8785 = vld [vmem:[#allocation3 + $0x60] sm:$0xff]
    %v8786 = vld [vmem:[#allocation3 + $0x68] sm:$0xff]
    %v8787 = vld [vmem:[#allocation3 + $0x70] sm:$0xff]
    %v8788 = vld [vmem:[#allocation3 + $0x78] sm:$0xff]
    %v8789 = vld [vmem:[#allocation3 + $0x80] sm:$0xff]
    %v8790 = vld [vmem:[#allocation3 + $0x88] sm:$0xff]
    %v8791 = vld [vmem:[#allocation3 + $0x90] sm:$0xff]
    %v8792 = vld [vmem:[#allocation3 + $0x98] sm:$0xff]
    %v8793 = vld [vmem:[#allocation3 + $0xa0] sm:$0xff]
    %v8794 = vld [vmem:[#allocation3 + $0xa8] sm:$0xff]
    %v8795 = vld [vmem:[#allocation3 + $0xb0] sm:$0xff]
    %v8796 = vld [vmem:[#allocation3 + $0xb8] sm:$0xff]
    %v8797 = vld [vmem:[#allocation3 + $0xc0] sm:$0xff]
    %v8798 = vld [vmem:[#allocation3 + $0xc8] sm:$0xff]
    %v8799 = vld [vmem:[#allocation3 + $0xd0] sm:$0xff]
    %v8800 = vld [vmem:[#allocation3 + $0xd8] sm:$0xff]
    %v8801 = vld [vmem:[#allocation3 + $0xe0] sm:$0xff]
    %v8802 = vld [vmem:[#allocation3 + $0xe8] sm:$0xff]
    %v8803 = vld [vmem:[#allocation3 + $0xf0] sm:$0xff]
    %v8804 = vld [vmem:[#allocation3 + $0xf8] sm:$0xff]
    %v8805 = vld [vmem:[%s4] sm:$0xf]
    %v8806 = vld [vmem:[%s4 + $0x4] sm:$0xf]
    %v8807 = vld [vmem:[%s4 + $0x8] sm:$0xf]
    %v8808 = vld [vmem:[%s4 + $0xc] sm:$0xf]
    %v8809 = vld [vmem:[%s4 + $0x10] sm:$0x3]
    %v8815 = vunpack.c.l.b16 %v8805
    %v8816 = vunpack.c.l.b16 %v8806
    %v8817 = vunpack.c.l.b16 %v8807
    %v8818 = vunpack.c.l.b16 %v8808
    %v8819 = vunpack.c.l.b16 %v8809
    %v8820 = vpack.c.b16 %v8816, %v8815
    %v8821 = vpack.c.b16 %v8818, %v8817
    %v8822 = vpack.c.b16 %v8819, %v8819
    %v8826 = vsel %vm4451, %v8773, 0
    %v8829 = vsel %vm4451, %v8774, 0
    %v8832 = vsel %vm4451, %v8775, 0
    %v8835 = vsel %vm4451, %v8776, 0
    %v8838 = vsel %vm4451, %v8777, 0
    %v8841 = vsel %vm4451, %v8778, 0
    %v8844 = vsel %vm4451, %v8779, 0
    %v8847 = vsel %vm4451, %v8780, 0
    %v8850 = vsel %vm4451, %v8781, 0
    %v8853 = vsel %vm4451, %v8782, 0
    %v8856 = vsel %vm4451, %v8783, 0
    %v8859 = vsel %vm4451, %v8784, 0
    %v8862 = vsel %vm4451, %v8785, 0
    %v8865 = vsel %vm4451, %v8786, 0
    %v8868 = vsel %vm4451, %v8787, 0
    %v8871 = vsel %vm4451, %v8788, 0
    %v8874 = vsel %vm4451, %v8789, 0
    %v8877 = vsel %vm4451, %v8790, 0
    %v8880 = vsel %vm4451, %v8791, 0
    %v8883 = vsel %vm4451, %v8792, 0
    %v8886 = vsel %vm4451, %v8793, 0
    %v8889 = vsel %vm4451, %v8794, 0
    %v8892 = vsel %vm4451, %v8795, 0
    %v8895 = vsel %vm4451, %v8796, 0
    %v8898 = vsel %vm4451, %v8797, 0
    %v8901 = vsel %vm4451, %v8798, 0
    %v8904 = vsel %vm4451, %v8799, 0
    %v8907 = vsel %vm4451, %v8800, 0
    %v8910 = vsel %vm4451, %v8801, 0
    %v8913 = vsel %vm4451, %v8802, 0
    %v8916 = vsel %vm4451, %v8803, 0
    %v8919 = vsel %vm4451, %v8804, 0
    %v8922 = vsel %vm4548, %v8822, 0
    %8924 = vmatprep.subr.bf16.mxu0 0
    %8925 = vmatpush1.bf16.msra.mxu0 %v8820
    %8926 = vmatprep.subr.bf16.mxu0 0
    %8927 = vmatpush1.bf16.msra.mxu0 %v8821
    %8928 = vmatprep.subr.bf16.mxu0 0
    %8929 = vmatpush1.bf16.msra.mxu0 %v8922
    %8930 = vmatprep.subr.bf16.mxu0 0
    %8931 = vmatpush1.bf16.msra.mxu0 0
    %8932 = vmatprep.subr.bf16.mxu0 0
    %8933 = vmatpush1.bf16.msra.mxu0 0
    %8934 = vmatprep.subr.bf16.mxu0 0
    %8935 = vmatpush1.bf16.msra.mxu0 0
    %8936 = vmatprep.subr.bf16.mxu0 0
    %8937 = vmatpush1.bf16.msra.mxu0 0
    %8938 = vmatprep.subr.bf16.mxu0 0
    %8939 = vmatpush1.bf16.msra.mxu0 0
    %8940 = vmatprep.subr.bf16.mxu0 0
    %8941 = vmatpush1.bf16.msra.mxu0 0
    %8942 = vmatprep.subr.bf16.mxu0 0
    %8943 = vmatpush1.bf16.msra.mxu0 0
    %8944 = vmatprep.subr.bf16.mxu0 0
    %8945 = vmatpush1.bf16.msra.mxu0 0
    %8946 = vmatprep.subr.bf16.mxu0 0
    %8947 = vmatpush1.bf16.msra.mxu0 0
    %8948 = vmatprep.subr.bf16.mxu0 0
    %8949 = vmatpush1.bf16.msra.mxu0 0
    %8950 = vmatprep.subr.bf16.mxu0 0
    %8951 = vmatpush1.bf16.msra.mxu0 0
    %8952 = vmatprep.subr.bf16.mxu0 0
    %8953 = vmatpush1.bf16.msra.mxu0 0
    %8954 = vmatprep.subr.bf16.mxu0 0
    %8955 = vmatpush1.bf16.msra.mxu0 0
    %8956 = vmatprep.mubr.bf16.mxu0 0
    %8957 = vmatmul.mubr.bf16.gmra.mrb[0].mxu0 %v8826
    %v8958 = vpop.f32.mrb[0].mxu0
    %v8959 = vadd.f32 0.0, %v8958
    %v8960 = vpop.f32.mrb[0].mxu0
    %v8961 = vpop.f32.mrb[0].mxu0
    %v8962 = vadd.f32 0.0, %v8961
    %v8963 = vpop.f32.mrb[0].mxu0
    %8964 = vmatprep.mubr.bf16.mxu0 0
    %8965 = vmatmul.mubr.bf16.gmra.mrb[0].mxu0 %v8829
    %v8966 = vpop.f32.mrb[0].mxu0
    %v8967 = vadd.f32 0.0, %v8966
    %v8968 = vpop.f32.mrb[0].mxu0
    %v8969 = vpop.f32.mrb[0].mxu0
    %v8970 = vadd.f32 0.0, %v8969
    %v8971 = vpop.f32.mrb[0].mxu0
    %8972 = vmatprep.mubr.bf16.mxu0 0
    %8973 = vmatmul.mubr.bf16.gmra.mrb[0].mxu0 %v8832
    %v8974 = vpop.f32.mrb[0].mxu0
    %v8975 = vadd.f32 0.0, %v8974
    %v8976 = vpop.f32.mrb[0].mxu0
    %v8977 = vpop.f32.mrb[0].mxu0
    %v8978 = vadd.f32 0.0, %v8977
    %v8979 = vpop.f32.mrb[0].mxu0
    %8980 = vmatprep.mubr.bf16.mxu0 0
    %8981 = vmatmul.mubr.bf16.gmra.mrb[0].mxu0 %v8835
    %v8982 = vpop.f32.mrb[0].mxu0
    %v8983 = vadd.f32 0.0, %v8982
    %v8984 = vpop.f32.mrb[0].mxu0
    %v8985 = vpop.f32.mrb[0].mxu0
    %v8986 = vadd.f32 0.0, %v8985
    %v8987 = vpop.f32.mrb[0].mxu0
    %8988 = vmatprep.mubr.bf16.mxu0 0
    %8989 = vmatmul.mubr.bf16.gmra.mrb[0].mxu0 %v8838
    %v8990 = vpop.f32.mrb[0].mxu0
    %v8991 = vadd.f32 0.0, %v8990
    %v8992 = vpop.f32.mrb[0].mxu0
    %v8993 = vpop.f32.mrb[0].mxu0
    %v8994 = vadd.f32 0.0, %v8993
    %v8995 = vpop.f32.mrb[0].mxu0
    %8996 = vmatprep.mubr.bf16.mxu0 0
    %8997 = vmatmul.mubr.bf16.gmra.mrb[0].mxu0 %v8841
    %v8998 = vpop.f32.mrb[0].mxu0
    %v8999 = vadd.f32 0.0, %v8998
    %v9000 = vpop.f32.mrb[0].mxu0
    %v9001 = vpop.f32.mrb[0].mxu0
    %v9002 = vadd.f32 0.0, %v9001
    %v9003 = vpop.f32.mrb[0].mxu0
    %9004 = vmatprep.mubr.bf16.mxu0 0
    %9005 = vmatmul.mubr.bf16.gmra.mrb[0].mxu0 %v8844
    %v9006 = vpop.f32.mrb[0].mxu0
    %v9007 = vadd.f32 0.0, %v9006
    %v9008 = vpop.f32.mrb[0].mxu0
    %v9009 = vpop.f32.mrb[0].mxu0
    %v9010 = vadd.f32 0.0, %v9009
    %v9011 = vpop.f32.mrb[0].mxu0
    %9012 = vmatprep.mubr.bf16.mxu0 0
    %9013 = vmatmul.mubr.bf16.gmra.mrb[0].mxu0 %v8847
    %v9014 = vpop.f32.mrb[0].mxu0
    %v9015 = vadd.f32 0.0, %v9014
    %v9016 = vpop.f32.mrb[0].mxu0
    %v9017 = vpop.f32.mrb[0].mxu0
    %v9018 = vadd.f32 0.0, %v9017
    %v9019 = vpop.f32.mrb[0].mxu0
    %9020 = vmatprep.mubr.bf16.mxu0 0
    %9021 = vmatmul.mubr.bf16.gmra.mrb[0].mxu0 %v8850
    %v9022 = vpop.f32.mrb[0].mxu0
    %v9023 = vadd.f32 0.0, %v9022
    %v9024 = vpop.f32.mrb[0].mxu0
    %v9025 = vpop.f32.mrb[0].mxu0
    %v9026 = vadd.f32 0.0, %v9025
    %v9027 = vpop.f32.mrb[0].mxu0
    %9028 = vmatprep.mubr.bf16.mxu0 0
    %9029 = vmatmul.mubr.bf16.gmra.mrb[0].mxu0 %v8853
    %v9030 = vpop.f32.mrb[0].mxu0
    %v9031 = vadd.f32 0.0, %v9030
    %v9032 = vpop.f32.mrb[0].mxu0
    %v9033 = vpop.f32.mrb[0].mxu0
    %v9034 = vadd.f32 0.0, %v9033
    %v9035 = vpop.f32.mrb[0].mxu0
    %9036 = vmatprep.mubr.bf16.mxu0 0
    %9037 = vmatmul.mubr.bf16.gmra.mrb[0].mxu0 %v8856
    %v9038 = vpop.f32.mrb[0].mxu0
    %v9039 = vadd.f32 0.0, %v9038
    %v9040 = vpop.f32.mrb[0].mxu0
    %v9041 = vpop.f32.mrb[0].mxu0
    %v9042 = vadd.f32 0.0, %v9041
    %v9043 = vpop.f32.mrb[0].mxu0
    %9044 = vmatprep.mubr.bf16.mxu0 0
    %9045 = vmatmul.mubr.bf16.gmra.mrb[0].mxu0 %v8859
    %v9046 = vpop.f32.mrb[0].mxu0
    %v9047 = vadd.f32 0.0, %v9046
    %v9048 = vpop.f32.mrb[0].mxu0
    %v9049 = vpop.f32.mrb[0].mxu0
    %v9050 = vadd.f32 0.0, %v9049
    %v9051 = vpop.f32.mrb[0].mxu0
    %9052 = vmatprep.mubr.bf16.mxu0 0
    %9053 = vmatmul.mubr.bf16.gmra.mrb[0].mxu0 %v8862
    %v9054 = vpop.f32.mrb[0].mxu0
    %v9055 = vadd.f32 0.0, %v9054
    %v9056 = vpop.f32.mrb[0].mxu0
    %v9057 = vpop.f32.mrb[0].mxu0
    %v9058 = vadd.f32 0.0, %v9057
    %v9059 = vpop.f32.mrb[0].mxu0
    %9060 = vmatprep.mubr.bf16.mxu0 0
    %9061 = vmatmul.mubr.bf16.gmra.mrb[0].mxu0 %v8865
    %v9062 = vpop.f32.mrb[0].mxu0
    %v9063 = vadd.f32 0.0, %v9062
    %v9064 = vpop.f32.mrb[0].mxu0
    %v9065 = vpop.f32.mrb[0].mxu0
    %v9066 = vadd.f32 0.0, %v9065
    %v9067 = vpop.f32.mrb[0].mxu0
    %9068 = vmatprep.mubr.bf16.mxu0 0
    %9069 = vmatmul.mubr.bf16.gmra.mrb[0].mxu0 %v8868
    %v9070 = vpop.f32.mrb[0].mxu0
    %v9071 = vadd.f32 0.0, %v9070
    %v9072 = vpop.f32.mrb[0].mxu0
    %v9073 = vpop.f32.mrb[0].mxu0
    %v9074 = vadd.f32 0.0, %v9073
    %v9075 = vpop.f32.mrb[0].mxu0
    %9076 = vmatprep.mubr.bf16.mxu0 0
    %9077 = vmatmul.mubr.bf16.gmra.mrb[0].mxu0 %v8871
    %v9078 = vpop.f32.mrb[0].mxu0
    %v9079 = vadd.f32 0.0, %v9078
    %v9080 = vpop.f32.mrb[0].mxu0
    %v9081 = vpop.f32.mrb[0].mxu0
    %v9082 = vadd.f32 0.0, %v9081
    %v9083 = vpop.f32.mrb[0].mxu0
    %9084 = vmatprep.mubr.bf16.mxu0 0
    %9085 = vmatmul.mubr.bf16.gmra.mrb[0].mxu0 %v8874
    %v9086 = vpop.f32.mrb[0].mxu0
    %v9087 = vadd.f32 0.0, %v9086
    %v9088 = vpop.f32.mrb[0].mxu0
    %v9089 = vpop.f32.mrb[0].mxu0
    %v9090 = vadd.f32 0.0, %v9089
    %v9091 = vpop.f32.mrb[0].mxu0
    %9092 = vmatprep.mubr.bf16.mxu0 0
    %9093 = vmatmul.mubr.bf16.gmra.mrb[0].mxu0 %v8877
    %v9094 = vpop.f32.mrb[0].mxu0
    %v9095 = vadd.f32 0.0, %v9094
    %v9096 = vpop.f32.mrb[0].mxu0
    %v9097 = vpop.f32.mrb[0].mxu0
    %v9098 = vadd.f32 0.0, %v9097
    %v9099 = vpop.f32.mrb[0].mxu0
    %9100 = vmatprep.mubr.bf16.mxu0 0
    %9101 = vmatmul.mubr.bf16.gmra.mrb[0].mxu0 %v8880
    %v9102 = vpop.f32.mrb[0].mxu0
    %v9103 = vadd.f32 0.0, %v9102
    %v9104 = vpop.f32.mrb[0].mxu0
    %v9105 = vpop.f32.mrb[0].mxu0
    %v9106 = vadd.f32 0.0, %v9105
    %v9107 = vpop.f32.mrb[0].mxu0
    %9108 = vmatprep.mubr.bf16.mxu0 0
    %9109 = vmatmul.mubr.bf16.gmra.mrb[0].mxu0 %v8883
    %v9110 = vpop.f32.mrb[0].mxu0
    %v9111 = vadd.f32 0.0, %v9110
    %v9112 = vpop.f32.mrb[0].mxu0
    %v9113 = vpop.f32.mrb[0].mxu0
    %v9114 = vadd.f32 0.0, %v9113
    %v9115 = vpop.f32.mrb[0].mxu0
    %9116 = vmatprep.mubr.bf16.mxu0 0
    %9117 = vmatmul.mubr.bf16.gmra.mrb[0].mxu0 %v8886
    %v9118 = vpop.f32.mrb[0].mxu0
    %v9119 = vadd.f32 0.0, %v9118
    %v9120 = vpop.f32.mrb[0].mxu0
    %v9121 = vpop.f32.mrb[0].mxu0
    %v9122 = vadd.f32 0.0, %v9121
    %v9123 = vpop.f32.mrb[0].mxu0
    %9124 = vmatprep.mubr.bf16.mxu0 0
    %9125 = vmatmul.mubr.bf16.gmra.mrb[0].mxu0 %v8889
    %v9126 = vpop.f32.mrb[0].mxu0
    %v9127 = vadd.f32 0.0, %v9126
    %v9128 = vpop.f32.mrb[0].mxu0
    %v9129 = vpop.f32.mrb[0].mxu0
    %v9130 = vadd.f32 0.0, %v9129
    %v9131 = vpop.f32.mrb[0].mxu0
    %9132 = vmatprep.mubr.bf16.mxu0 0
    %9133 = vmatmul.mubr.bf16.gmra.mrb[0].mxu0 %v8892
    %v9134 = vpop.f32.mrb[0].mxu0
    %v9135 = vadd.f32 0.0, %v9134
    %v9136 = vpop.f32.mrb[0].mxu0
    %v9137 = vpop.f32.mrb[0].mxu0
    %v9138 = vadd.f32 0.0, %v9137
    %v9139 = vpop.f32.mrb[0].mxu0
    %9140 = vmatprep.mubr.bf16.mxu0 0
    %9141 = vmatmul.mubr.bf16.gmra.mrb[0].mxu0 %v8895
    %v9142 = vpop.f32.mrb[0].mxu0
    %v9143 = vadd.f32 0.0, %v9142
    %v9144 = vpop.f32.mrb[0].mxu0
    %v9145 = vpop.f32.mrb[0].mxu0
    %v9146 = vadd.f32 0.0, %v9145
    %v9147 = vpop.f32.mrb[0].mxu0
    %9148 = vmatprep.mubr.bf16.mxu0 0
    %9149 = vmatmul.mubr.bf16.gmra.mrb[0].mxu0 %v8898
    %v9150 = vpop.f32.mrb[0].mxu0
    %v9151 = vadd.f32 0.0, %v9150
    %v9152 = vpop.f32.mrb[0].mxu0
    %v9153 = vpop.f32.mrb[0].mxu0
    %v9154 = vadd.f32 0.0, %v9153
    %v9155 = vpop.f32.mrb[0].mxu0
    %9156 = vmatprep.mubr.bf16.mxu0 0
    %9157 = vmatmul.mubr.bf16.gmra.mrb[0].mxu0 %v8901
    %v9158 = vpop.f32.mrb[0].mxu0
    %v9159 = vadd.f32 0.0, %v9158
    %v9160 = vpop.f32.mrb[0].mxu0
    %v9161 = vpop.f32.mrb[0].mxu0
    %v9162 = vadd.f32 0.0, %v9161
    %v9163 = vpop.f32.mrb[0].mxu0
    %9164 = vmatprep.mubr.bf16.mxu0 0
    %9165 = vmatmul.mubr.bf16.gmra.mrb[0].mxu0 %v8904
    %v9166 = vpop.f32.mrb[0].mxu0
    %v9167 = vadd.f32 0.0, %v9166
    %v9168 = vpop.f32.mrb[0].mxu0
    %v9169 = vpop.f32.mrb[0].mxu0
    %v9170 = vadd.f32 0.0, %v9169
    %v9171 = vpop.f32.mrb[0].mxu0
    %9172 = vmatprep.mubr.bf16.mxu0 0
    %9173 = vmatmul.mubr.bf16.gmra.mrb[0].mxu0 %v8907
    %v9174 = vpop.f32.mrb[0].mxu0
    %v9175 = vadd.f32 0.0, %v9174
    %v9176 = vpop.f32.mrb[0].mxu0
    %v9177 = vpop.f32.mrb[0].mxu0
    %v9178 = vadd.f32 0.0, %v9177
    %v9179 = vpop.f32.mrb[0].mxu0
    %9180 = vmatprep.mubr.bf16.mxu0 0
    %9181 = vmatmul.mubr.bf16.gmra.mrb[0].mxu0 %v8910
    %v9182 = vpop.f32.mrb[0].mxu0
    %v9183 = vadd.f32 0.0, %v9182
    %v9184 = vpop.f32.mrb[0].mxu0
    %v9185 = vpop.f32.mrb[0].mxu0
    %v9186 = vadd.f32 0.0, %v9185
    %v9187 = vpop.f32.mrb[0].mxu0
    %9188 = vmatprep.mubr.bf16.mxu0 0
    %9189 = vmatmul.mubr.bf16.gmra.mrb[0].mxu0 %v8913
    %v9190 = vpop.f32.mrb[0].mxu0
    %v9191 = vadd.f32 0.0, %v9190
    %v9192 = vpop.f32.mrb[0].mxu0
    %v9193 = vpop.f32.mrb[0].mxu0
    %v9194 = vadd.f32 0.0, %v9193
    %v9195 = vpop.f32.mrb[0].mxu0
    %9196 = vmatprep.mubr.bf16.mxu0 0
    %9197 = vmatmul.mubr.bf16.gmra.mrb[0].mxu0 %v8916
    %v9198 = vpop.f32.mrb[0].mxu0
    %v9199 = vadd.f32 0.0, %v9198
    %v9200 = vpop.f32.mrb[0].mxu0
    %v9201 = vpop.f32.mrb[0].mxu0
    %v9202 = vadd.f32 0.0, %v9201
    %v9203 = vpop.f32.mrb[0].mxu0
    %9204 = vmatprep.mubr.bf16.mxu0 0
    %9205 = vmatmul.mubr.bf16.gmra.mrb[0].mxu0 %v8919
    %v9206 = vpop.f32.mrb[0].mxu0
    %v9207 = vadd.f32 0.0, %v9206
    %v9208 = vpop.f32.mrb[0].mxu0
    %v9209 = vpop.f32.mrb[0].mxu0
    %v9210 = vadd.f32 0.0, %v9209
    %v9211 = vpop.f32.mrb[0].mxu0
    %9212 = vdwg.mxu0
    %9277 = vrot.lane.b32.xlu0 %v8959, 8
    %v9278 = vpop.permute.xlu0 %9277
    %9279 = vrot.lane.b32.xlu0 %v8962, 8
    %v9280 = vpop.permute.xlu0 %9279
    %9281 = vrot.lane.b32.xlu0 %v8967, 8
    %v9282 = vpop.permute.xlu0 %9281
    %9283 = vrot.lane.b32.xlu0 %v8970, 8
    %v9284 = vpop.permute.xlu0 %9283
    %9285 = vrot.lane.b32.xlu0 %v8975, 8
    %v9286 = vpop.permute.xlu0 %9285
    %9287 = vrot.lane.b32.xlu0 %v8978, 8
    %v9288 = vpop.permute.xlu0 %9287
    %9289 = vrot.lane.b32.xlu0 %v8983, 8
    %v9290 = vpop.permute.xlu0 %9289
    %9291 = vrot.lane.b32.xlu0 %v8986, 8
    %v9292 = vpop.permute.xlu0 %9291
    %9293 = vrot.lane.b32.xlu0 %v8991, 8
    %v9294 = vpop.permute.xlu0 %9293
    %9295 = vrot.lane.b32.xlu0 %v8994, 8
    %v9296 = vpop.permute.xlu0 %9295
    %9297 = vrot.lane.b32.xlu0 %v8999, 8
    %v9298 = vpop.permute.xlu0 %9297
    %9299 = vrot.lane.b32.xlu0 %v9002, 8
    %v9300 = vpop.permute.xlu0 %9299
    %9301 = vrot.lane.b32.xlu0 %v9007, 8
    %v9302 = vpop.permute.xlu0 %9301
    %9303 = vrot.lane.b32.xlu0 %v9010, 8
    %v9304 = vpop.permute.xlu0 %9303
    %9305 = vrot.lane.b32.xlu0 %v9015, 8
    %v9306 = vpop.permute.xlu0 %9305
    %9307 = vrot.lane.b32.xlu0 %v9018, 8
    %v9308 = vpop.permute.xlu0 %9307
    %9309 = vrot.lane.b32.xlu0 %v9023, 8
    %v9310 = vpop.permute.xlu0 %9309
    %9311 = vrot.lane.b32.xlu0 %v9026, 8
    %v9312 = vpop.permute.xlu0 %9311
    %9313 = vrot.lane.b32.xlu0 %v9031, 8
    %v9314 = vpop.permute.xlu0 %9313
    %9315 = vrot.lane.b32.xlu0 %v9034, 8
    %v9316 = vpop.permute.xlu0 %9315
    %9317 = vrot.lane.b32.xlu0 %v9039, 8
    %v9318 = vpop.permute.xlu0 %9317
    %9319 = vrot.lane.b32.xlu0 %v9042, 8
    %v9320 = vpop.permute.xlu0 %9319
    %9321 = vrot.lane.b32.xlu0 %v9047, 8
    %v9322 = vpop.permute.xlu0 %9321
    %9323 = vrot.lane.b32.xlu0 %v9050, 8
    %v9324 = vpop.permute.xlu0 %9323
    %9325 = vrot.lane.b32.xlu0 %v9055, 8
    %v9326 = vpop.permute.xlu0 %9325
    %9327 = vrot.lane.b32.xlu0 %v9058, 8
    %v9328 = vpop.permute.xlu0 %9327
    %9329 = vrot.lane.b32.xlu0 %v9063, 8
    %v9330 = vpop.permute.xlu0 %9329
    %9331 = vrot.lane.b32.xlu0 %v9066, 8
    %v9332 = vpop.permute.xlu0 %9331
    %9333 = vrot.lane.b32.xlu0 %v9071, 8
    %v9334 = vpop.permute.xlu0 %9333
    %9335 = vrot.lane.b32.xlu0 %v9074, 8
    %v9336 = vpop.permute.xlu0 %9335
    %9337 = vrot.lane.b32.xlu0 %v9079, 8
    %v9338 = vpop.permute.xlu0 %9337
    %9339 = vrot.lane.b32.xlu0 %v9082, 8
    %v9340 = vpop.permute.xlu0 %9339
    %9341 = vrot.lane.b32.xlu0 %v9087, 8
    %v9342 = vpop.permute.xlu0 %9341
    %9343 = vrot.lane.b32.xlu0 %v9090, 8
    %v9344 = vpop.permute.xlu0 %9343
    %9345 = vrot.lane.b32.xlu0 %v9095, 8
    %v9346 = vpop.permute.xlu0 %9345
    %9347 = vrot.lane.b32.xlu0 %v9098, 8
    %v9348 = vpop.permute.xlu0 %9347
    %9349 = vrot.lane.b32.xlu0 %v9103, 8
    %v9350 = vpop.permute.xlu0 %9349
    %9351 = vrot.lane.b32.xlu0 %v9106, 8
    %v9352 = vpop.permute.xlu0 %9351
    %9353 = vrot.lane.b32.xlu0 %v9111, 8
    %v9354 = vpop.permute.xlu0 %9353
    %9355 = vrot.lane.b32.xlu0 %v9114, 8
    %v9356 = vpop.permute.xlu0 %9355
    %9357 = vrot.lane.b32.xlu0 %v9119, 8
    %v9358 = vpop.permute.xlu0 %9357
    %9359 = vrot.lane.b32.xlu0 %v9122, 8
    %v9360 = vpop.permute.xlu0 %9359
    %9361 = vrot.lane.b32.xlu0 %v9127, 8
    %v9362 = vpop.permute.xlu0 %9361
    %9363 = vrot.lane.b32.xlu0 %v9130, 8
    %v9364 = vpop.permute.xlu0 %9363
    %9365 = vrot.lane.b32.xlu0 %v9135, 8
    %v9366 = vpop.permute.xlu0 %9365
    %9367 = vrot.lane.b32.xlu0 %v9138, 8
    %v9368 = vpop.permute.xlu0 %9367
    %9369 = vrot.lane.b32.xlu0 %v9143, 8
    %v9370 = vpop.permute.xlu0 %9369
    %9371 = vrot.lane.b32.xlu0 %v9146, 8
    %v9372 = vpop.permute.xlu0 %9371
    %9373 = vrot.lane.b32.xlu0 %v9151, 8
    %v9374 = vpop.permute.xlu0 %9373
    %9375 = vrot.lane.b32.xlu0 %v9154, 8
    %v9376 = vpop.permute.xlu0 %9375
    %9377 = vrot.lane.b32.xlu0 %v9159, 8
    %v9378 = vpop.permute.xlu0 %9377
    %9379 = vrot.lane.b32.xlu0 %v9162, 8
    %v9380 = vpop.permute.xlu0 %9379
    %9381 = vrot.lane.b32.xlu0 %v9167, 8
    %v9382 = vpop.permute.xlu0 %9381
    %9383 = vrot.lane.b32.xlu0 %v9170, 8
    %v9384 = vpop.permute.xlu0 %9383
    %9385 = vrot.lane.b32.xlu0 %v9175, 8
    %v9386 = vpop.permute.xlu0 %9385
    %9387 = vrot.lane.b32.xlu0 %v9178, 8
    %v9388 = vpop.permute.xlu0 %9387
    %9389 = vrot.lane.b32.xlu0 %v9183, 8
    %v9390 = vpop.permute.xlu0 %9389
    %9391 = vrot.lane.b32.xlu0 %v9186, 8
    %v9392 = vpop.permute.xlu0 %9391
    %9393 = vrot.lane.b32.xlu0 %v9191, 8
    %v9394 = vpop.permute.xlu0 %9393
    %9395 = vrot.lane.b32.xlu0 %v9194, 8
    %v9396 = vpop.permute.xlu0 %9395
    %9397 = vrot.lane.b32.xlu0 %v9199, 8
    %v9398 = vpop.permute.xlu0 %9397
    %9399 = vrot.lane.b32.xlu0 %v9202, 8
    %v9400 = vpop.permute.xlu0 %9399
    %9401 = vrot.lane.b32.xlu0 %v9207, 8
    %v9402 = vpop.permute.xlu0 %9401
    %9403 = vrot.lane.b32.xlu0 %v9210, 8
    %v9404 = vpop.permute.xlu0 %9403
    %v9469 = vadd.f32 %v4587, %v9278
    %v9470 = vadd.f32 %v4590, %v9280
    %v9471 = vadd.f32 %v4595, %v9282
    %v9472 = vadd.f32 %v4598, %v9284
    %v9473 = vadd.f32 %v4603, %v9286
    %v9474 = vadd.f32 %v4606, %v9288
    %v9475 = vadd.f32 %v4611, %v9290
    %v9476 = vadd.f32 %v4614, %v9292
    %v9477 = vadd.f32 %v4619, %v9294
    %v9478 = vadd.f32 %v4622, %v9296
    %v9479 = vadd.f32 %v4627, %v9298
    %v9480 = vadd.f32 %v4630, %v9300
    %v9481 = vadd.f32 %v4635, %v9302
    %v9482 = vadd.f32 %v4638, %v9304
    %v9483 = vadd.f32 %v4643, %v9306
    %v9484 = vadd.f32 %v4646, %v9308
    %v9485 = vadd.f32 %v4651, %v9310
    %v9486 = vadd.f32 %v4654, %v9312
    %v9487 = vadd.f32 %v4659, %v9314
    %v9488 = vadd.f32 %v4662, %v9316
    %v9489 = vadd.f32 %v4667, %v9318
    %v9490 = vadd.f32 %v4670, %v9320
    %v9491 = vadd.f32 %v4675, %v9322
    %v9492 = vadd.f32 %v4678, %v9324
    %v9493 = vadd.f32 %v4683, %v9326
    %v9494 = vadd.f32 %v4686, %v9328
    %v9495 = vadd.f32 %v4691, %v9330
    %v9496 = vadd.f32 %v4694, %v9332
    %v9497 = vadd.f32 %v4699, %v9334
    %v9498 = vadd.f32 %v4702, %v9336
    %v9499 = vadd.f32 %v4707, %v9338
    %v9500 = vadd.f32 %v4710, %v9340
    %v9501 = vadd.f32 %v4715, %v9342
    %v9502 = vadd.f32 %v4718, %v9344
    %v9503 = vadd.f32 %v4723, %v9346
    %v9504 = vadd.f32 %v4726, %v9348
    %v9505 = vadd.f32 %v4731, %v9350
    %v9506 = vadd.f32 %v4734, %v9352
    %v9507 = vadd.f32 %v4739, %v9354
    %v9508 = vadd.f32 %v4742, %v9356
    %v9509 = vadd.f32 %v4747, %v9358
    %v9510 = vadd.f32 %v4750, %v9360
    %v9511 = vadd.f32 %v4755, %v9362
    %v9512 = vadd.f32 %v4758, %v9364
    %v9513 = vadd.f32 %v4763, %v9366
    %v9514 = vadd.f32 %v4766, %v9368
    %v9515 = vadd.f32 %v4771, %v9370
    %v9516 = vadd.f32 %v4774, %v9372
    %v9517 = vadd.f32 %v4779, %v9374
    %v9518 = vadd.f32 %v4782, %v9376
    %v9519 = vadd.f32 %v4787, %v9378
    %v9520 = vadd.f32 %v4790, %v9380
    %v9521 = vadd.f32 %v4795, %v9382
    %v9522 = vadd.f32 %v4798, %v9384
    %v9523 = vadd.f32 %v4803, %v9386
    %v9524 = vadd.f32 %v4806, %v9388
    %v9525 = vadd.f32 %v4811, %v9390
    %v9526 = vadd.f32 %v4814, %v9392
    %v9527 = vadd.f32 %v4819, %v9394
    %v9528 = vadd.f32 %v4822, %v9396
    %v9529 = vadd.f32 %v4827, %v9398
    %v9530 = vadd.f32 %v4830, %v9400
    %v9531 = vadd.f32 %v4835, %v9402
    %v9532 = vadd.f32 %v4838, %v9404
    %v9533 = vld [vmem:[%s6] sm:$0x1]
    %v9535 = vlaneseq
    %v9536 = vshrl.u32 %v9535, 7
    %v9537 = vsub.s32 0, %v9536
    %v9538 = vrot.slane %v9533, %v9537
    %9539 = vrot.lane.b32.xlu0 %v9538, 8
    %v9540 = vpop.permute.xlu0 %9539
    %v9542 = vadd.f32 %v9469, %v9540
    %v9543 = vadd.f32 %v9470, %v9540
    %v9544 = vadd.f32 %v9471, %v9540
    %v9545 = vadd.f32 %v9472, %v9540
    %v9546 = vadd.f32 %v9473, %v9540
    %v9547 = vadd.f32 %v9474, %v9540
    %v9548 = vadd.f32 %v9475, %v9540
    %v9549 = vadd.f32 %v9476, %v9540
    %v9550 = vadd.f32 %v9477, %v9540
    %v9551 = vadd.f32 %v9478, %v9540
    %v9552 = vadd.f32 %v9479, %v9540
    %v9553 = vadd.f32 %v9480, %v9540
    %v9554 = vadd.f32 %v9481, %v9540
    %v9555 = vadd.f32 %v9482, %v9540
    %v9556 = vadd.f32 %v9483, %v9540
    %v9557 = vadd.f32 %v9484, %v9540
    %v9558 = vadd.f32 %v9485, %v9540
    %v9559 = vadd.f32 %v9486, %v9540
    %v9560 = vadd.f32 %v9487, %v9540
    %v9561 = vadd.f32 %v9488, %v9540
    %v9562 = vadd.f32 %v9489, %v9540
    %v9563 = vadd.f32 %v9490, %v9540
    %v9564 = vadd.f32 %v9491, %v9540
    %v9565 = vadd.f32 %v9492, %v9540
    %v9566 = vadd.f32 %v9493, %v9540
    %v9567 = vadd.f32 %v9494, %v9540
    %v9568 = vadd.f32 %v9495, %v9540
    %v9569 = vadd.f32 %v9496, %v9540
    %v9570 = vadd.f32 %v9497, %v9540
    %v9571 = vadd.f32 %v9498, %v9540
    %v9572 = vadd.f32 %v9499, %v9540
    %v9573 = vadd.f32 %v9500, %v9540
    %v9574 = vadd.f32 %v9501, %v9540
    %v9575 = vadd.f32 %v9502, %v9540
    %v9576 = vadd.f32 %v9503, %v9540
    %v9577 = vadd.f32 %v9504, %v9540
    %v9578 = vadd.f32 %v9505, %v9540
    %v9579 = vadd.f32 %v9506, %v9540
    %v9580 = vadd.f32 %v9507, %v9540
    %v9581 = vadd.f32 %v9508, %v9540
    %v9582 = vadd.f32 %v9509, %v9540
    %v9583 = vadd.f32 %v9510, %v9540
    %v9584 = vadd.f32 %v9511, %v9540
    %v9585 = vadd.f32 %v9512, %v9540
    %v9586 = vadd.f32 %v9513, %v9540
    %v9587 = vadd.f32 %v9514, %v9540
    %v9588 = vadd.f32 %v9515, %v9540
    %v9589 = vadd.f32 %v9516, %v9540
    %v9590 = vadd.f32 %v9517, %v9540
    %v9591 = vadd.f32 %v9518, %v9540
    %v9592 = vadd.f32 %v9519, %v9540
    %v9593 = vadd.f32 %v9520, %v9540
    %v9594 = vadd.f32 %v9521, %v9540
    %v9595 = vadd.f32 %v9522, %v9540
    %v9596 = vadd.f32 %v9523, %v9540
    %v9597 = vadd.f32 %v9524, %v9540
    %v9598 = vadd.f32 %v9525, %v9540
    %v9599 = vadd.f32 %v9526, %v9540
    %v9600 = vadd.f32 %v9527, %v9540
    %v9601 = vadd.f32 %v9528, %v9540
    %v9602 = vadd.f32 %v9529, %v9540
    %v9603 = vadd.f32 %v9530, %v9540
    %v9604 = vadd.f32 %v9531, %v9540
    %v9605 = vadd.f32 %v9532, %v9540
    %v9606 = vtanh.pop %v9542
    %v9607 = vtanh.pop %v9543
    %v9608 = vtanh.pop %v9544
    %v9609 = vtanh.pop %v9545
    %v9610 = vtanh.pop %v9546
    %v9611 = vtanh.pop %v9547
    %v9612 = vtanh.pop %v9548
    %v9613 = vtanh.pop %v9549
    %v9614 = vtanh.pop %v9550
    %v9615 = vtanh.pop %v9551
    %v9616 = vtanh.pop %v9552
    %v9617 = vtanh.pop %v9553
    %v9618 = vtanh.pop %v9554
    %v9619 = vtanh.pop %v9555
    %v9620 = vtanh.pop %v9556
    %v9621 = vtanh.pop %v9557
    %v9622 = vtanh.pop %v9558
    %v9623 = vtanh.pop %v9559
    %v9624 = vtanh.pop %v9560
    %v9625 = vtanh.pop %v9561
    %v9626 = vtanh.pop %v9562
    %v9627 = vtanh.pop %v9563
    %v9628 = vtanh.pop %v9564
    %v9629 = vtanh.pop %v9565
    %v9630 = vtanh.pop %v9566
    %v9631 = vtanh.pop %v9567
    %v9632 = vtanh.pop %v9568
    %v9633 = vtanh.pop %v9569
    %v9634 = vtanh.pop %v9570
    %v9635 = vtanh.pop %v9571
    %v9636 = vtanh.pop %v9572
    %v9637 = vtanh.pop %v9573
    %v9638 = vtanh.pop %v9574
    %v9639 = vtanh.pop %v9575
    %v9640 = vtanh.pop %v9576
    %v9641 = vtanh.pop %v9577
    %v9642 = vtanh.pop %v9578
    %v9643 = vtanh.pop %v9579
    %v9644 = vtanh.pop %v9580
    %v9645 = vtanh.pop %v9581
    %v9646 = vtanh.pop %v9582
    %v9647 = vtanh.pop %v9583
    %v9648 = vtanh.pop %v9584
    %v9649 = vtanh.pop %v9585
    %v9650 = vtanh.pop %v9586
    %v9651 = vtanh.pop %v9587
    %v9652 = vtanh.pop %v9588
    %v9653 = vtanh.pop %v9589
    %v9654 = vtanh.pop %v9590
    %v9655 = vtanh.pop %v9591
    %v9656 = vtanh.pop %v9592
    %v9657 = vtanh.pop %v9593
    %v9658 = vtanh.pop %v9594
    %v9659 = vtanh.pop %v9595
    %v9660 = vtanh.pop %v9596
    %v9661 = vtanh.pop %v9597
    %v9662 = vtanh.pop %v9598
    %v9663 = vtanh.pop %v9599
    %v9664 = vtanh.pop %v9600
    %v9665 = vtanh.pop %v9601
    %v9666 = vtanh.pop %v9602
    %v9667 = vtanh.pop %v9603
    %v9668 = vtanh.pop %v9604
    %v9669 = vtanh.pop %v9605
    %v9670 = vsub.f32 1.0, %v5673
    %v9671 = vsub.f32 1.0, %v5675
    %v9672 = vsub.f32 1.0, %v5677
    %v9673 = vsub.f32 1.0, %v5679
    %v9674 = vsub.f32 1.0, %v5681
    %v9675 = vsub.f32 1.0, %v5683
    %v9676 = vsub.f32 1.0, %v5685
    %v9677 = vsub.f32 1.0, %v5687
    %v9678 = vsub.f32 1.0, %v5689
    %v9679 = vsub.f32 1.0, %v5691
    %v9680 = vsub.f32 1.0, %v5693
    %v9681 = vsub.f32 1.0, %v5695
    %v9682 = vsub.f32 1.0, %v5697
    %v9683 = vsub.f32 1.0, %v5699
    %v9684 = vsub.f32 1.0, %v5701
    %v9685 = vsub.f32 1.0, %v5703
    %v9686 = vsub.f32 1.0, %v5705
    %v9687 = vsub.f32 1.0, %v5707
    %v9688 = vsub.f32 1.0, %v5709
    %v9689 = vsub.f32 1.0, %v5711
    %v9690 = vsub.f32 1.0, %v5713
    %v9691 = vsub.f32 1.0, %v5715
    %v9692 = vsub.f32 1.0, %v5717
    %v9693 = vsub.f32 1.0, %v5719
    %v9694 = vsub.f32 1.0, %v5721
    %v9695 = vsub.f32 1.0, %v5723
    %v9696 = vsub.f32 1.0, %v5725
    %v9697 = vsub.f32 1.0, %v5727
    %v9698 = vsub.f32 1.0, %v5729
    %v9699 = vsub.f32 1.0, %v5731
    %v9700 = vsub.f32 1.0, %v5733
    %v9701 = vsub.f32 1.0, %v5735
    %v9702 = vsub.f32 1.0, %v5737
    %v9703 = vsub.f32 1.0, %v5739
    %v9704 = vsub.f32 1.0, %v5741
    %v9705 = vsub.f32 1.0, %v5743
    %v9706 = vsub.f32 1.0, %v5745
    %v9707 = vsub.f32 1.0, %v5747
    %v9708 = vsub.f32 1.0, %v5749
    %v9709 = vsub.f32 1.0, %v5751
    %v9710 = vsub.f32 1.0, %v5753
    %v9711 = vsub.f32 1.0, %v5755
    %v9712 = vsub.f32 1.0, %v5757
    %v9713 = vsub.f32 1.0, %v5759
    %v9714 = vsub.f32 1.0, %v5761
    %v9715 = vsub.f32 1.0, %v5763
    %v9716 = vsub.f32 1.0, %v5765
    %v9717 = vsub.f32 1.0, %v5767
    %v9718 = vsub.f32 1.0, %v5769
    %v9719 = vsub.f32 1.0, %v5771
    %v9720 = vsub.f32 1.0, %v5773
    %v9721 = vsub.f32 1.0, %v5775
    %v9722 = vsub.f32 1.0, %v5777
    %v9723 = vsub.f32 1.0, %v5779
    %v9724 = vsub.f32 1.0, %v5781
    %v9725 = vsub.f32 1.0, %v5783
    %v9726 = vsub.f32 1.0, %v5785
    %v9727 = vsub.f32 1.0, %v5787
    %v9728 = vsub.f32 1.0, %v5789
    %v9729 = vsub.f32 1.0, %v5791
    %v9730 = vsub.f32 1.0, %v5793
    %v9731 = vsub.f32 1.0, %v5795
    %v9732 = vsub.f32 1.0, %v5797
    %v9733 = vsub.f32 1.0, %v5799
    %v9734 = vmul.f32 %v9670, %v5800
    %v9735 = vmul.f32 %v9671, %v5801
    %v9736 = vmul.f32 %v9672, %v5802
    %v9737 = vmul.f32 %v9673, %v5803
    %v9738 = vmul.f32 %v9674, %v5804
    %v9739 = vmul.f32 %v9675, %v5805
    %v9740 = vmul.f32 %v9676, %v5806
    %v9741 = vmul.f32 %v9677, %v5807
    %v9742 = vmul.f32 %v9678, %v5808
    %v9743 = vmul.f32 %v9679, %v5809
    %v9744 = vmul.f32 %v9680, %v5810
    %v9745 = vmul.f32 %v9681, %v5811
    %v9746 = vmul.f32 %v9682, %v5812
    %v9747 = vmul.f32 %v9683, %v5813
    %v9748 = vmul.f32 %v9684, %v5814
    %v9749 = vmul.f32 %v9685, %v5815
    %v9750 = vmul.f32 %v9686, %v5816
    %v9751 = vmul.f32 %v9687, %v5817
    %v9752 = vmul.f32 %v9688, %v5818
    %v9753 = vmul.f32 %v9689, %v5819
    %v9754 = vmul.f32 %v9690, %v5820
    %v9755 = vmul.f32 %v9691, %v5821
    %v9756 = vmul.f32 %v9692, %v5822
    %v9757 = vmul.f32 %v9693, %v5823
    %v9758 = vmul.f32 %v9694, %v5824
    %v9759 = vmul.f32 %v9695, %v5825
    %v9760 = vmul.f32 %v9696, %v5826
    %v9761 = vmul.f32 %v9697, %v5827
    %v9762 = vmul.f32 %v9698, %v5828
    %v9763 = vmul.f32 %v9699, %v5829
    %v9764 = vmul.f32 %v9700, %v5830
    %v9765 = vmul.f32 %v9701, %v5831
    %v9766 = vmul.f32 %v9702, %v5832
    %v9767 = vmul.f32 %v9703, %v5833
    %v9768 = vmul.f32 %v9704, %v5834
    %v9769 = vmul.f32 %v9705, %v5835
    %v9770 = vmul.f32 %v9706, %v5836
    %v9771 = vmul.f32 %v9707, %v5837
    %v9772 = vmul.f32 %v9708, %v5838
    %v9773 = vmul.f32 %v9709, %v5839
    %v9774 = vmul.f32 %v9710, %v5840
    %v9775 = vmul.f32 %v9711, %v5841
    %v9776 = vmul.f32 %v9712, %v5842
    %v9777 = vmul.f32 %v9713, %v5843
    %v9778 = vmul.f32 %v9714, %v5844
    %v9779 = vmul.f32 %v9715, %v5845
    %v9780 = vmul.f32 %v9716, %v5846
    %v9781 = vmul.f32 %v9717, %v5847
    %v9782 = vmul.f32 %v9718, %v5848
    %v9783 = vmul.f32 %v9719, %v5849
    %v9784 = vmul.f32 %v9720, %v5850
    %v9785 = vmul.f32 %v9721, %v5851
    %v9786 = vmul.f32 %v9722, %v5852
    %v9787 = vmul.f32 %v9723, %v5853
    %v9788 = vmul.f32 %v9724, %v5854
    %v9789 = vmul.f32 %v9725, %v5855
    %v9790 = vmul.f32 %v9726, %v5856
    %v9791 = vmul.f32 %v9727, %v5857
    %v9792 = vmul.f32 %v9728, %v5858
    %v9793 = vmul.f32 %v9729, %v5859
    %v9794 = vmul.f32 %v9730, %v5860
    %v9795 = vmul.f32 %v9731, %v5861
    %v9796 = vmul.f32 %v9732, %v5862
    %v9797 = vmul.f32 %v9733, %v5863
    %9862 = vrot.lane.b32.xlu0 %v9606, 120
    %v9863 = vpop.permute.xlu0 %9862
    %9864 = vrot.lane.b32.xlu0 %v9607, 120
    %v9865 = vpop.permute.xlu0 %9864
    %9866 = vrot.lane.b32.xlu0 %v9608, 120
    %v9867 = vpop.permute.xlu0 %9866
    %9868 = vrot.lane.b32.xlu0 %v9609, 120
    %v9869 = vpop.permute.xlu0 %9868
    %9870 = vrot.lane.b32.xlu0 %v9610, 120
    %v9871 = vpop.permute.xlu0 %9870
    %9872 = vrot.lane.b32.xlu0 %v9611, 120
    %v9873 = vpop.permute.xlu0 %9872
    %9874 = vrot.lane.b32.xlu0 %v9612, 120
    %v9875 = vpop.permute.xlu0 %9874
    %9876 = vrot.lane.b32.xlu0 %v9613, 120
    %v9877 = vpop.permute.xlu0 %9876
    %9878 = vrot.lane.b32.xlu0 %v9614, 120
    %v9879 = vpop.permute.xlu0 %9878
    %9880 = vrot.lane.b32.xlu0 %v9615, 120
    %v9881 = vpop.permute.xlu0 %9880
    %9882 = vrot.lane.b32.xlu0 %v9616, 120
    %v9883 = vpop.permute.xlu0 %9882
    %9884 = vrot.lane.b32.xlu0 %v9617, 120
    %v9885 = vpop.permute.xlu0 %9884
    %9886 = vrot.lane.b32.xlu0 %v9618, 120
    %v9887 = vpop.permute.xlu0 %9886
    %9888 = vrot.lane.b32.xlu0 %v9619, 120
    %v9889 = vpop.permute.xlu0 %9888
    %9890 = vrot.lane.b32.xlu0 %v9620, 120
    %v9891 = vpop.permute.xlu0 %9890
    %9892 = vrot.lane.b32.xlu0 %v9621, 120
    %v9893 = vpop.permute.xlu0 %9892
    %9894 = vrot.lane.b32.xlu0 %v9622, 120
    %v9895 = vpop.permute.xlu0 %9894
    %9896 = vrot.lane.b32.xlu0 %v9623, 120
    %v9897 = vpop.permute.xlu0 %9896
    %9898 = vrot.lane.b32.xlu0 %v9624, 120
    %v9899 = vpop.permute.xlu0 %9898
    %9900 = vrot.lane.b32.xlu0 %v9625, 120
    %v9901 = vpop.permute.xlu0 %9900
    %9902 = vrot.lane.b32.xlu0 %v9626, 120
    %v9903 = vpop.permute.xlu0 %9902
    %9904 = vrot.lane.b32.xlu0 %v9627, 120
    %v9905 = vpop.permute.xlu0 %9904
    %9906 = vrot.lane.b32.xlu0 %v9628, 120
    %v9907 = vpop.permute.xlu0 %9906
    %9908 = vrot.lane.b32.xlu0 %v9629, 120
    %v9909 = vpop.permute.xlu0 %9908
    %9910 = vrot.lane.b32.xlu0 %v9630, 120
    %v9911 = vpop.permute.xlu0 %9910
    %9912 = vrot.lane.b32.xlu0 %v9631, 120
    %v9913 = vpop.permute.xlu0 %9912
    %9914 = vrot.lane.b32.xlu0 %v9632, 120
    %v9915 = vpop.permute.xlu0 %9914
    %9916 = vrot.lane.b32.xlu0 %v9633, 120
    %v9917 = vpop.permute.xlu0 %9916
    %9918 = vrot.lane.b32.xlu0 %v9634, 120
    %v9919 = vpop.permute.xlu0 %9918
    %9920 = vrot.lane.b32.xlu0 %v9635, 120
    %v9921 = vpop.permute.xlu0 %9920
    %9922 = vrot.lane.b32.xlu0 %v9636, 120
    %v9923 = vpop.permute.xlu0 %9922
    %9924 = vrot.lane.b32.xlu0 %v9637, 120
    %v9925 = vpop.permute.xlu0 %9924
    %9926 = vrot.lane.b32.xlu0 %v9638, 120
    %v9927 = vpop.permute.xlu0 %9926
    %9928 = vrot.lane.b32.xlu0 %v9639, 120
    %v9929 = vpop.permute.xlu0 %9928
    %9930 = vrot.lane.b32.xlu0 %v9640, 120
    %v9931 = vpop.permute.xlu0 %9930
    %9932 = vrot.lane.b32.xlu0 %v9641, 120
    %v9933 = vpop.permute.xlu0 %9932
    %9934 = vrot.lane.b32.xlu0 %v9642, 120
    %v9935 = vpop.permute.xlu0 %9934
    %9936 = vrot.lane.b32.xlu0 %v9643, 120
    %v9937 = vpop.permute.xlu0 %9936
    %9938 = vrot.lane.b32.xlu0 %v9644, 120
    %v9939 = vpop.permute.xlu0 %9938
    %9940 = vrot.lane.b32.xlu0 %v9645, 120
    %v9941 = vpop.permute.xlu0 %9940
    %9942 = vrot.lane.b32.xlu0 %v9646, 120
    %v9943 = vpop.permute.xlu0 %9942
    %9944 = vrot.lane.b32.xlu0 %v9647, 120
    %v9945 = vpop.permute.xlu0 %9944
    %9946 = vrot.lane.b32.xlu0 %v9648, 120
    %v9947 = vpop.permute.xlu0 %9946
    %9948 = vrot.lane.b32.xlu0 %v9649, 120
    %v9949 = vpop.permute.xlu0 %9948
    %9950 = vrot.lane.b32.xlu0 %v9650, 120
    %v9951 = vpop.permute.xlu0 %9950
    %9952 = vrot.lane.b32.xlu0 %v9651, 120
    %v9953 = vpop.permute.xlu0 %9952
    %9954 = vrot.lane.b32.xlu0 %v9652, 120
    %v9955 = vpop.permute.xlu0 %9954
    %9956 = vrot.lane.b32.xlu0 %v9653, 120
    %v9957 = vpop.permute.xlu0 %9956
    %9958 = vrot.lane.b32.xlu0 %v9654, 120
    %v9959 = vpop.permute.xlu0 %9958
    %9960 = vrot.lane.b32.xlu0 %v9655, 120
    %v9961 = vpop.permute.xlu0 %9960
    %9962 = vrot.lane.b32.xlu0 %v9656, 120
    %v9963 = vpop.permute.xlu0 %9962
    %9964 = vrot.lane.b32.xlu0 %v9657, 120
    %v9965 = vpop.permute.xlu0 %9964
    %9966 = vrot.lane.b32.xlu0 %v9658, 120
    %v9967 = vpop.permute.xlu0 %9966
    %9968 = vrot.lane.b32.xlu0 %v9659, 120
    %v9969 = vpop.permute.xlu0 %9968
    %9970 = vrot.lane.b32.xlu0 %v9660, 120
    %v9971 = vpop.permute.xlu0 %9970
    %9972 = vrot.lane.b32.xlu0 %v9661, 120
    %v9973 = vpop.permute.xlu0 %9972
    %9974 = vrot.lane.b32.xlu0 %v9662, 120
    %v9975 = vpop.permute.xlu0 %9974
    %9976 = vrot.lane.b32.xlu0 %v9663, 120
    %v9977 = vpop.permute.xlu0 %9976
    %9978 = vrot.lane.b32.xlu0 %v9664, 120
    %v9979 = vpop.permute.xlu0 %9978
    %9980 = vrot.lane.b32.xlu0 %v9665, 120
    %v9981 = vpop.permute.xlu0 %9980
    %9982 = vrot.lane.b32.xlu0 %v9666, 120
    %v9983 = vpop.permute.xlu0 %9982
    %9984 = vrot.lane.b32.xlu0 %v9667, 120
    %v9985 = vpop.permute.xlu0 %9984
    %9986 = vrot.lane.b32.xlu0 %v9668, 120
    %v9987 = vpop.permute.xlu0 %9986
    %9988 = vrot.lane.b32.xlu0 %v9669, 120
    %v9989 = vpop.permute.xlu0 %9988
    %v10054 = vmul.f32 %v5673, %v9863
    %v10055 = vmul.f32 %v5675, %v9865
    %v10056 = vmul.f32 %v5677, %v9867
    %v10057 = vmul.f32 %v5679, %v9869
    %v10058 = vmul.f32 %v5681, %v9871
    %v10059 = vmul.f32 %v5683, %v9873
    %v10060 = vmul.f32 %v5685, %v9875
    %v10061 = vmul.f32 %v5687, %v9877
    %v10062 = vmul.f32 %v5689, %v9879
    %v10063 = vmul.f32 %v5691, %v9881
    %v10064 = vmul.f32 %v5693, %v9883
    %v10065 = vmul.f32 %v5695, %v9885
    %v10066 = vmul.f32 %v5697, %v9887
    %v10067 = vmul.f32 %v5699, %v9889
    %v10068 = vmul.f32 %v5701, %v9891
    %v10069 = vmul.f32 %v5703, %v9893
    %v10070 = vmul.f32 %v5705, %v9895
    %v10071 = vmul.f32 %v5707, %v9897
    %v10072 = vmul.f32 %v5709, %v9899
    %v10073 = vmul.f32 %v5711, %v9901
    %v10074 = vmul.f32 %v5713, %v9903
    %v10075 = vmul.f32 %v5715, %v9905
    %v10076 = vmul.f32 %v5717, %v9907
    %v10077 = vmul.f32 %v5719, %v9909
    %v10078 = vmul.f32 %v5721, %v9911
    %v10079 = vmul.f32 %v5723, %v9913
    %v10080 = vmul.f32 %v5725, %v9915
    %v10081 = vmul.f32 %v5727, %v9917
    %v10082 = vmul.f32 %v5729, %v9919
    %v10083 = vmul.f32 %v5731, %v9921
    %v10084 = vmul.f32 %v5733, %v9923
    %v10085 = vmul.f32 %v5735, %v9925
    %v10086 = vmul.f32 %v5737, %v9927
    %v10087 = vmul.f32 %v5739, %v9929
    %v10088 = vmul.f32 %v5741, %v9931
    %v10089 = vmul.f32 %v5743, %v9933
    %v10090 = vmul.f32 %v5745, %v9935
    %v10091 = vmul.f32 %v5747, %v9937
    %v10092 = vmul.f32 %v5749, %v9939
    %v10093 = vmul.f32 %v5751, %v9941
    %v10094 = vmul.f32 %v5753, %v9943
    %v10095 = vmul.f32 %v5755, %v9945
    %v10096 = vmul.f32 %v5757, %v9947
    %v10097 = vmul.f32 %v5759, %v9949
    %v10098 = vmul.f32 %v5761, %v9951
    %v10099 = vmul.f32 %v5763, %v9953
    %v10100 = vmul.f32 %v5765, %v9955
    %v10101 = vmul.f32 %v5767, %v9957
    %v10102 = vmul.f32 %v5769, %v9959
    %v10103 = vmul.f32 %v5771, %v9961
    %v10104 = vmul.f32 %v5773, %v9963
    %v10105 = vmul.f32 %v5775, %v9965
    %v10106 = vmul.f32 %v5777, %v9967
    %v10107 = vmul.f32 %v5779, %v9969
    %v10108 = vmul.f32 %v5781, %v9971
    %v10109 = vmul.f32 %v5783, %v9973
    %v10110 = vmul.f32 %v5785, %v9975
    %v10111 = vmul.f32 %v5787, %v9977
    %v10112 = vmul.f32 %v5789, %v9979
    %v10113 = vmul.f32 %v5791, %v9981
    %v10114 = vmul.f32 %v5793, %v9983
    %v10115 = vmul.f32 %v5795, %v9985
    %v10116 = vmul.f32 %v5797, %v9987
    %v10117 = vmul.f32 %v5799, %v9989
    %v10118 = vadd.f32 %v9734, %v10054
    %v10119 = vadd.f32 %v9735, %v10055
    %v10120 = vadd.f32 %v9736, %v10056
    %v10121 = vadd.f32 %v9737, %v10057
    %v10122 = vadd.f32 %v9738, %v10058
    %v10123 = vadd.f32 %v9739, %v10059
    %v10124 = vadd.f32 %v9740, %v10060
    %v10125 = vadd.f32 %v9741, %v10061
    %v10126 = vadd.f32 %v9742, %v10062
    %v10127 = vadd.f32 %v9743, %v10063
    %v10128 = vadd.f32 %v9744, %v10064
    %v10129 = vadd.f32 %v9745, %v10065
    %v10130 = vadd.f32 %v9746, %v10066
    %v10131 = vadd.f32 %v9747, %v10067
    %v10132 = vadd.f32 %v9748, %v10068
    %v10133 = vadd.f32 %v9749, %v10069
    %v10134 = vadd.f32 %v9750, %v10070
    %v10135 = vadd.f32 %v9751, %v10071
    %v10136 = vadd.f32 %v9752, %v10072
    %v10137 = vadd.f32 %v9753, %v10073
    %v10138 = vadd.f32 %v9754, %v10074
    %v10139 = vadd.f32 %v9755, %v10075
    %v10140 = vadd.f32 %v9756, %v10076
    %v10141 = vadd.f32 %v9757, %v10077
    %v10142 = vadd.f32 %v9758, %v10078
    %v10143 = vadd.f32 %v9759, %v10079
    %v10144 = vadd.f32 %v9760, %v10080
    %v10145 = vadd.f32 %v9761, %v10081
    %v10146 = vadd.f32 %v9762, %v10082
    %v10147 = vadd.f32 %v9763, %v10083
    %v10148 = vadd.f32 %v9764, %v10084
    %v10149 = vadd.f32 %v9765, %v10085
    %v10150 = vadd.f32 %v9766, %v10086
    %v10151 = vadd.f32 %v9767, %v10087
    %v10152 = vadd.f32 %v9768, %v10088
    %v10153 = vadd.f32 %v9769, %v10089
    %v10154 = vadd.f32 %v9770, %v10090
    %v10155 = vadd.f32 %v9771, %v10091
    %v10156 = vadd.f32 %v9772, %v10092
    %v10157 = vadd.f32 %v9773, %v10093
    %v10158 = vadd.f32 %v9774, %v10094
    %v10159 = vadd.f32 %v9775, %v10095
    %v10160 = vadd.f32 %v9776, %v10096
    %v10161 = vadd.f32 %v9777, %v10097
    %v10162 = vadd.f32 %v9778, %v10098
    %v10163 = vadd.f32 %v9779, %v10099
    %v10164 = vadd.f32 %v9780, %v10100
    %v10165 = vadd.f32 %v9781, %v10101
    %v10166 = vadd.f32 %v9782, %v10102
    %v10167 = vadd.f32 %v9783, %v10103
    %v10168 = vadd.f32 %v9784, %v10104
    %v10169 = vadd.f32 %v9785, %v10105
    %v10170 = vadd.f32 %v9786, %v10106
    %v10171 = vadd.f32 %v9787, %v10107
    %v10172 = vadd.f32 %v9788, %v10108
    %v10173 = vadd.f32 %v9789, %v10109
    %v10174 = vadd.f32 %v9790, %v10110
    %v10175 = vadd.f32 %v9791, %v10111
    %v10176 = vadd.f32 %v9792, %v10112
    %v10177 = vadd.f32 %v9793, %v10113
    %v10178 = vadd.f32 %v9794, %v10114
    %v10179 = vadd.f32 %v9795, %v10115
    %v10180 = vadd.f32 %v9796, %v10116
    %v10181 = vadd.f32 %v9797, %v10117
    %10182 = vxpose.xlu0.b32.start [1/16] %v10118, 128
    %10183 = vxpose.xlu0.b32.cont [2/16] %v10119, 128
    %10184 = vxpose.xlu0.b32.cont [3/16] %v10120, 128
    %10185 = vxpose.xlu0.b32.cont [4/16] %v10121, 128
    %10186 = vxpose.xlu0.b32.cont [5/16] %v10122, 128
    %10187 = vxpose.xlu0.b32.cont [6/16] %v10123, 128
    %10188 = vxpose.xlu0.b32.cont [7/16] %v10124, 128
    %10189 = vxpose.xlu0.b32.cont [8/16] %v10125, 128
    %10190 = vxpose.xlu0.b32.cont [9/16] %v10126, 128
    %10191 = vxpose.xlu0.b32.cont [10/16] %v10127, 128
    %10192 = vxpose.xlu0.b32.cont [11/16] %v10128, 128
    %10193 = vxpose.xlu0.b32.cont [12/16] %v10129, 128
    %10194 = vxpose.xlu0.b32.cont [13/16] %v10130, 128
    %10195 = vxpose.xlu0.b32.cont [14/16] %v10131, 128
    %10196 = vxpose.xlu0.b32.cont [15/16] %v10132, 128
    %10197 = vxpose.xlu0.b32.end [16/16] %v10133, 128
    %v10198 = vpop.trf.xlu0
    %v10199 = vpop.trf.xlu0
    %v10200 = vpop.trf.xlu0
    %v10201 = vpop.trf.xlu0
    %v10202 = vpop.trf.xlu0
    %v10203 = vpop.trf.xlu0
    %v10204 = vpop.trf.xlu0
    %v10205 = vpop.trf.xlu0
    %v10206 = vpop.trf.xlu0
    %v10207 = vpop.trf.xlu0
    %v10208 = vpop.trf.xlu0
    %v10209 = vpop.trf.xlu0
    %v10210 = vpop.trf.xlu0
    %v10211 = vpop.trf.xlu0
    %v10212 = vpop.trf.xlu0
    %v10213 = vpop.trf.xlu0
    %10214 = vxpose.xlu0.b32.start [1/16] %v10134, 128
    %10215 = vxpose.xlu0.b32.cont [2/16] %v10135, 128
    %10216 = vxpose.xlu0.b32.cont [3/16] %v10136, 128
    %10217 = vxpose.xlu0.b32.cont [4/16] %v10137, 128
    %10218 = vxpose.xlu0.b32.cont [5/16] %v10138, 128
    %10219 = vxpose.xlu0.b32.cont [6/16] %v10139, 128
    %10220 = vxpose.xlu0.b32.cont [7/16] %v10140, 128
    %10221 = vxpose.xlu0.b32.cont [8/16] %v10141, 128
    %10222 = vxpose.xlu0.b32.cont [9/16] %v10142, 128
    %10223 = vxpose.xlu0.b32.cont [10/16] %v10143, 128
    %10224 = vxpose.xlu0.b32.cont [11/16] %v10144, 128
    %10225 = vxpose.xlu0.b32.cont [12/16] %v10145, 128
    %10226 = vxpose.xlu0.b32.cont [13/16] %v10146, 128
    %10227 = vxpose.xlu0.b32.cont [14/16] %v10147, 128
    %10228 = vxpose.xlu0.b32.cont [15/16] %v10148, 128
    %10229 = vxpose.xlu0.b32.end [16/16] %v10149, 128
    %v10230 = vpop.trf.xlu0
    %v10231 = vpop.trf.xlu0
    %v10232 = vpop.trf.xlu0
    %v10233 = vpop.trf.xlu0
    %v10234 = vpop.trf.xlu0
    %v10235 = vpop.trf.xlu0
    %v10236 = vpop.trf.xlu0
    %v10237 = vpop.trf.xlu0
    %v10238 = vpop.trf.xlu0
    %v10239 = vpop.trf.xlu0
    %v10240 = vpop.trf.xlu0
    %v10241 = vpop.trf.xlu0
    %v10242 = vpop.trf.xlu0
    %v10243 = vpop.trf.xlu0
    %v10244 = vpop.trf.xlu0
    %v10245 = vpop.trf.xlu0
    %v10248 = vcombine.low %v10198, %v10230
    %10250 = vst [vmem:[#allocation5] sm:$0xff] %v10248
    %10251 = vxpose.xlu0.b32.start [1/16] %v10150, 128
    %10252 = vxpose.xlu0.b32.cont [2/16] %v10151, 128
    %10253 = vxpose.xlu0.b32.cont [3/16] %v10152, 128
    %10254 = vxpose.xlu0.b32.cont [4/16] %v10153, 128
    %10255 = vxpose.xlu0.b32.cont [5/16] %v10154, 128
    %10256 = vxpose.xlu0.b32.cont [6/16] %v10155, 128
    %10257 = vxpose.xlu0.b32.cont [7/16] %v10156, 128
    %10258 = vxpose.xlu0.b32.cont [8/16] %v10157, 128
    %10259 = vxpose.xlu0.b32.cont [9/16] %v10158, 128
    %10260 = vxpose.xlu0.b32.cont [10/16] %v10159, 128
    %10261 = vxpose.xlu0.b32.cont [11/16] %v10160, 128
    %10262 = vxpose.xlu0.b32.cont [12/16] %v10161, 128
    %10263 = vxpose.xlu0.b32.cont [13/16] %v10162, 128
    %10264 = vxpose.xlu0.b32.cont [14/16] %v10163, 128
    %10265 = vxpose.xlu0.b32.cont [15/16] %v10164, 128
    %10266 = vxpose.xlu0.b32.end [16/16] %v10165, 128
    %v10267 = vpop.trf.xlu0
    %v10268 = vpop.trf.xlu0
    %v10269 = vpop.trf.xlu0
    %v10270 = vpop.trf.xlu0
    %v10271 = vpop.trf.xlu0
    %v10272 = vpop.trf.xlu0
    %v10273 = vpop.trf.xlu0
    %v10274 = vpop.trf.xlu0
    %v10275 = vpop.trf.xlu0
    %v10276 = vpop.trf.xlu0
    %v10277 = vpop.trf.xlu0
    %v10278 = vpop.trf.xlu0
    %v10279 = vpop.trf.xlu0
    %v10280 = vpop.trf.xlu0
    %v10281 = vpop.trf.xlu0
    %v10282 = vpop.trf.xlu0
    %10283 = vxpose.xlu0.b32.start [1/16] %v10166, 128
    %10284 = vxpose.xlu0.b32.cont [2/16] %v10167, 128
    %10285 = vxpose.xlu0.b32.cont [3/16] %v10168, 128
    %10286 = vxpose.xlu0.b32.cont [4/16] %v10169, 128
    %10287 = vxpose.xlu0.b32.cont [5/16] %v10170, 128
    %10288 = vxpose.xlu0.b32.cont [6/16] %v10171, 128
    %10289 = vxpose.xlu0.b32.cont [7/16] %v10172, 128
    %10290 = vxpose.xlu0.b32.cont [8/16] %v10173, 128
    %10291 = vxpose.xlu0.b32.cont [9/16] %v10174, 128
    %10292 = vxpose.xlu0.b32.cont [10/16] %v10175, 128
    %10293 = vxpose.xlu0.b32.cont [11/16] %v10176, 128
    %10294 = vxpose.xlu0.b32.cont [12/16] %v10177, 128
    %10295 = vxpose.xlu0.b32.cont [13/16] %v10178, 128
    %10296 = vxpose.xlu0.b32.cont [14/16] %v10179, 128
    %10297 = vxpose.xlu0.b32.cont [15/16] %v10180, 128
    %10298 = vxpose.xlu0.b32.end [16/16] %v10181, 128
    %v10299 = vpop.trf.xlu0
    %v10300 = vpop.trf.xlu0
    %v10301 = vpop.trf.xlu0
    %v10302 = vpop.trf.xlu0
    %v10303 = vpop.trf.xlu0
    %v10304 = vpop.trf.xlu0
    %v10305 = vpop.trf.xlu0
    %v10306 = vpop.trf.xlu0
    %v10307 = vpop.trf.xlu0
    %v10308 = vpop.trf.xlu0
    %v10309 = vpop.trf.xlu0
    %v10310 = vpop.trf.xlu0
    %v10311 = vpop.trf.xlu0
    %v10312 = vpop.trf.xlu0
    %v10313 = vpop.trf.xlu0
    %v10314 = vpop.trf.xlu0
    %v10317 = vcombine.low %v10267, %v10299
    %s10319 = scalar_lea.vmem [#allocation5], 8
    %10320 = vst [vmem:[%s10319] sm:$0xff] %v10317
    // Predicated region
    $region30: #{tpu_custom_call.1} parent=1 // pred_check
      _
    $region31: #{tpu_custom_call.1} parent=1 // pred_check_branch
      %10322 = sbr.rel (0) target = $region33
    $region32: #{tpu_custom_call.1} parent=1 // pred_region
      %s10324 = ssub.s32 256, 256
      %10325 = vsyncadd [#allocation6], %s10324
      %s10326 = sshll.u32 [#allocation5], 4
      %s10327 = int_to_ptr.vmem [resolvable:$true] %s10326
      %10332 = dma.vmem_to_hbm [thread:$0]  %s10327, 256, %s7, [#allocation6], 128, 128, 8
    $region33: #{tpu_custom_call.1} parent=1 // pred_fallthru
      _
    // Predicated region
    $region34: #{tpu_custom_call.1} parent=1 // pred_check
      _
    $region35: #{tpu_custom_call.1} parent=1 // pred_check_branch
      %10334 = sbr.rel (0) target = $region37
    $region36: #{tpu_custom_call.1} parent=1 // pred_region
      %10335 = dma.done [#allocation6], 256
    $region37: #{tpu_custom_call.1} parent=1 // pred_fallthru
      _
    %10336 = vsyncpa [#allocation6], 1

</llo_original>
